<compile_context>
chip_gen: v6e
topology: v6e:2x2x1
jax: 0.10.0
libtpu: 0.0.40
codegen_flags: <defaults>
</compile_context>

<pallas_src>
import functools
import math

import jax
import jax.numpy as jnp
from jax.experimental import pallas as pl
from jax.experimental.pallas import tpu as pltpu


_VMEM_LIMIT = 48 * 1024 * 1024  # explicit scoped-VMEM budget; headroom even on v7x (64 MiB)


# ----------------------------- helpers -----------------------------

def _round_up(x, m):
    return ((x + m - 1) // m) * m


def _pick_tile(dim, pref, align):
    """Pick a tile size (multiple of `align`) and the padded dim (multiple of the tile)."""
    dim_r = _round_up(dim, align)
    if dim_r <= pref:
        return dim_r, dim_r
    t = (pref // align) * align
    while t >= align:
        if dim_r % t == 0:
            return t, dim_r
        t -= align
    return pref, _round_up(dim_r, pref)


# ----------------------------- fused linear kernel -----------------------------
# Computes  o = act( LN(x) @ W + b ) + residual   with every piece optional.
# x/W are fed to the MXU in bf16; accumulation, LayerNorm statistics and the
# activation epilogue are all in f32.

def _linear_kernel(*refs, activation, has_bias, has_res, has_ln, eps):
    refs = list(refs)
    x_ref = refs.pop(0)
    w_ref = refs.pop(0)
    b_ref = refs.pop(0) if has_bias else None
    r_ref = refs.pop(0) if has_res else None
    if has_ln:
        g_ref = refs.pop(0)
        beta_ref = refs.pop(0)
    o_ref = refs.pop(0)
    acc_ref = refs.pop(0)

    if has_ln:
        xf = x_ref[...].astype(jnp.float32)
        mean = jnp.mean(xf, axis=-1, keepdims=True)
        var = jnp.mean(jnp.square(xf - mean), axis=-1, keepdims=True)
        xf = (xf - mean) * jax.lax.rsqrt(var + eps)
        xf = xf * g_ref[...].astype(jnp.float32) + beta_ref[...].astype(jnp.float32)
        xb = xf.astype(jnp.bfloat16)
    else:
        xb = x_ref[...].astype(jnp.bfloat16)
    wb = w_ref[...].astype(jnp.bfloat16)

    @pl.when(pl.program_id(2) == 0)
    def _():
        acc_ref[...] = jnp.zeros_like(acc_ref)

    acc_ref[...] += jnp.dot(xb, wb, preferred_element_type=jnp.float32)

    @pl.when(pl.program_id(2) == pl.num_programs(2) - 1)
    def _():
        acc = acc_ref[...]
        if has_bias:
            acc = acc + b_ref[...].astype(jnp.float32)
        if activation == "gelu":            # exact (erf) GELU, matches nn.GELU
            acc = 0.5 * acc * (1.0 + jax.lax.erf(acc * (1.0 / math.sqrt(2.0))))
        elif activation == "quick_gelu":    # CLIP QuickGELU: x * sigmoid(1.702 x)
            acc = acc * jax.nn.sigmoid(1.702 * acc)
        if has_res:
            acc = acc + r_ref[...].astype(jnp.float32)
        o_ref[...] = acc.astype(o_ref.dtype)


def linear(x, w, b=None, activation="none", residual=None, ln=None,
           tm_pref=256, tn_pref=256, tk_pref=512):
    """(..., K) @ (K, N) (+bias, +activation, +residual), optionally with a fused
    input LayerNorm (ln = (gamma, beta, eps), which forces tk == K)."""
    orig_shape = x.shape
    K = orig_shape[-1]
    N = w.shape[1]
    x2 = x.reshape(-1, K)
    M = x2.shape[0]

    tm, M_pad = _pick_tile(M, tm_pref, 8)
    tn, N_pad = _pick_tile(N, tn_pref, 128)
    if ln is not None:
        tk, K_pad = K, K                       # LN needs the whole row per tile
    else:
        tk, K_pad = _pick_tile(K, tk_pref, 128)

    x_p = x2 if (M_pad == M and K_pad == K) else jnp.pad(x2, ((0, M_pad - M), (0, K_pad - K)))
    w_p = w if (K_pad == K and N_pad == N) else jnp.pad(w, ((0, K_pad - K), (0, N_pad - N)))

    args = [x_p, w_p]
    in_specs = [pl.BlockSpec((tm, tk), lambda i, j, k: (i, k)),
                pl.BlockSpec((tk, tn), lambda i, j, k: (k, j))]

    if b is not None:
        b2 = b.reshape(1, N)
        if N_pad != N:
            b2 = jnp.pad(b2, ((0, 0), (0, N_pad - N)))
        args.append(b2)
        in_specs.append(pl.BlockSpec((1, tn), lambda i, j, k: (0, j)))

    if residual is not None:
        r2 = residual.reshape(-1, N)
        if M_pad != M or N_pad != N:
            r2 = jnp.pad(r2, ((0, M_pad - M), (0, N_pad - N)))
        args.append(r2)
        in_specs.append(pl.BlockSpec((tm, tn), lambda i, j, k: (i, j)))

    eps = 0.0
    if ln is not None:
        g, beta, eps = ln
        args += [g.reshape(1, K), beta.reshape(1, K)]
        in_specs += [pl.BlockSpec((1, K), lambda i, j, k: (0, 0)),
                     pl.BlockSpec((1, K), lambda i, j, k: (0, 0))]

    kernel = functools.partial(
        _linear_kernel, activation=activation, has_bias=b is not None,
        has_res=residual is not None, has_ln=ln is not None, eps=eps)

    out = pl.pallas_call(
        kernel,
        out_shape=jax.ShapeDtypeStruct((M_pad, N_pad), jnp.float32),
        grid=(M_pad // tm, N_pad // tn, K_pad // tk),
        in_specs=in_specs,
        out_specs=pl.BlockSpec((tm, tn), lambda i, j, k: (i, j)),
        scratch_shapes=[pltpu.VMEM((tm, tn), jnp.float32)],
        compiler_params=pltpu.CompilerParams(
            dimension_semantics=("parallel", "parallel", "arbitrary"),
            vmem_limit_bytes=_VMEM_LIMIT),
    )(*args)
    out = out[:M, :N]
    return out.reshape(orig_shape[:-1] + (N,))


# ----------------------------- stand-alone LayerNorm (row-tiled) -----------------------------

def _layernorm_kernel(x_ref, g_ref, b_ref, o_ref, *, eps):
    x = x_ref[...].astype(jnp.float32)
    mean = jnp.mean(x, axis=-1, keepdims=True)
    var = jnp.mean(jnp.square(x - mean), axis=-1, keepdims=True)
    y = (x - mean) * jax.lax.rsqrt(var + eps)
    o_ref[...] = (y * g_ref[...].astype(jnp.float32)
                  + b_ref[...].astype(jnp.float32)).astype(o_ref.dtype)


def layernorm(x, g, b, eps, tm_pref=256):
    orig_shape = x.shape
    D = orig_shape[-1]
    x2 = x.reshape(-1, D)
    M = x2.shape[0]
    tm, M_pad = _pick_tile(M, tm_pref, 8)
    x_p = x2 if M_pad == M else jnp.pad(x2, ((0, M_pad - M), (0, 0)))
    out = pl.pallas_call(
        functools.partial(_layernorm_kernel, eps=eps),
        out_shape=jax.ShapeDtypeStruct((M_pad, D), jnp.float32),
        grid=(M_pad // tm,),
        in_specs=[pl.BlockSpec((tm, D), lambda i: (i, 0)),
                  pl.BlockSpec((1, D), lambda i: (0, 0)),
                  pl.BlockSpec((1, D), lambda i: (0, 0))],
        out_specs=pl.BlockSpec((tm, D), lambda i: (i, 0)),
        compiler_params=pltpu.CompilerParams(
            dimension_semantics=("parallel",), vmem_limit_bytes=_VMEM_LIMIT),
    )(x_p, g.reshape(1, D), b.reshape(1, D))
    return out[:M].reshape(orig_shape)


# ----------------------------- attention kernel -----------------------------
# q/k/v stay in (B, L, D) layout (heads are contiguous chunks of the last dim);
# each grid step handles one batch element and a lane-dense chunk of heads.

def _attention_kernel(q_ref, k_ref, v_ref, o_ref, *, num_heads_blk, head_dim, scale):
    q = q_ref[0].astype(jnp.float32) * scale        # scale folded into q (L x Dh work)
    k = k_ref[0]
    v = v_ref[0]
    outs = []
    for h in range(num_heads_blk):
        sl = slice(h * head_dim, (h + 1) * head_dim)
        qh = q[:, sl].astype(jnp.bfloat16)
        kh = k[:, sl].astype(jnp.bfloat16)
        vh = v[:, sl].astype(jnp.bfloat16)
        # contract on the head dim of both operands -> no explicit k.T transpose
        s = jnp.einsum("qd,kd->qk", qh, kh, preferred_element_type=jnp.float32)
        s = s - jnp.max(s, axis=-1, keepdims=True)
        p = jnp.exp(s)
        inv = pl.reciprocal(jnp.sum(p, axis=-1, keepdims=True), approx=True)
        p = (p * inv).astype(jnp.bfloat16)
        outs.append(jnp.dot(p, vh, preferred_element_type=jnp.float32))
    o = outs[0] if len(outs) == 1 else jnp.concatenate(outs, axis=-1)
    o_ref[0] = o.astype(o_ref.dtype)


def sdpa(q, k, v, num_heads, scale):
    """q,k,v: (B, L, D) with heads laid out contiguously along D -> (B, L, D)."""
    B, L, D = q.shape
    Dh = D // num_heads
    # Pick a head chunk so that the block's last dim is lane-dense (128-aligned)
    # whenever D itself is bigger than a lane tile; else take the whole D.
    if D > 128 and (128 % Dh == 0) and (num_heads % (128 // Dh) == 0):
        Hc = 128 // Dh
    else:
        Hc = num_heads
    n_hc = num_heads // Hc
    blk = (1, L, Hc * Dh)
    out = pl.pallas_call(
        functools.partial(_attention_kernel, num_heads_blk=Hc, head_dim=Dh, scale=scale),
        out_shape=jax.ShapeDtypeStruct((B, L, D), jnp.float32),
        grid=(B, n_hc),
        in_specs=[pl.BlockSpec(blk, lambda b, h: (b, 0, h))] * 3,
        out_specs=pl.BlockSpec(blk, lambda b, h: (b, 0, h)),
        compiler_params=pltpu.CompilerParams(
            dimension_semantics=("parallel", "parallel"),
            vmem_limit_bytes=_VMEM_LIMIT),
    )(q, k, v)
    return out


# ----------------------------- model pieces -----------------------------

def attention_sublayer(x, w_qkv, b_qkv, w_out, b_out, num_heads, ln_params):
    """LN -> MHA -> out-proj (+ residual), with LN fused into the QKV matmul and the
    residual add fused into the out-projection matmul."""
    B, L, D = x.shape
    qkv = linear(x, w_qkv, b_qkv, ln=ln_params)            # (B, L, 3D)
    q = qkv[..., :D]
    k = qkv[..., D:2 * D]
    v = qkv[..., 2 * D:]
    o = sdpa(q, k, v, num_heads, scale=(D // num_heads) ** -0.5)
    return linear(o, w_out, b_out, residual=x)


def transformation_block(p, x, num_heads):
    """timm-style Block (joint space-time attention), drop_path=0, eps=1e-6."""
    x = attention_sublayer(x, p["qkv_w"], p["qkv_b"], p["proj_w"], p["proj_b"],
                           num_heads, (p["norm1_g"], p["norm1_b"], 1e-6))
    h = linear(x, p["fc1_w"], p["fc1_b"], activation="gelu",
               ln=(p["norm2_g"], p["norm2_b"], 1e-6))
    return linear(h, p["fc2_w"], p["fc2_b"], residual=x)


def clip_resblock(p, x, num_heads):
    """CLIP ResidualAttentionBlock (QuickGELU MLP), eps=1e-5."""
    x = attention_sublayer(x, p["in_proj_w"], p["in_proj_b"], p["out_proj_w"], p["out_proj_b"],
                           num_heads, (p["ln1_g"], p["ln1_b"], 1e-5))
    h = linear(x, p["c_fc_w"], p["c_fc_b"], activation="quick_gelu",
               ln=(p["ln2_g"], p["ln2_b"], 1e-5))
    return linear(h, p["c_proj_w"], p["c_proj_b"], residual=x)


def init_params(key, cfg):
    width = cfg["width"]
    ps = cfg["patch_size"]
    ir = cfg["input_resolution"]
    scale = width ** -0.5
    n_tok = (ir // ps) ** 2 + 1
    keys = iter(jax.random.split(key, 64))

    def nrm(shape, std=0.02):
        return (std * jax.random.normal(next(keys), shape)).astype(jnp.float32)

    def block_params():
        return {
            "norm1_g": jnp.ones((width,), jnp.float32), "norm1_b": jnp.zeros((width,), jnp.float32),
            "qkv_w": nrm((width, 3 * width)), "qkv_b": jnp.zeros((3 * width,), jnp.float32),
            "proj_w": nrm((width, width)), "proj_b": jnp.zeros((width,), jnp.float32),
            "norm2_g": jnp.ones((width,), jnp.float32), "norm2_b": jnp.zeros((width,), jnp.float32),
            "fc1_w": nrm((width, 4 * width)), "fc1_b": jnp.zeros((4 * width,), jnp.float32),
            "fc2_w": nrm((4 * width, width)), "fc2_b": jnp.zeros((width,), jnp.float32),
        }

    params = {
        "conv1_w": nrm((3 * ps * ps, width), std=(3 * ps * ps) ** -0.5),
        "class_embedding": (scale * jax.random.normal(next(keys), (width,))).astype(jnp.float32),
        "positional_embedding": (scale * jax.random.normal(next(keys), (n_tok, width))).astype(jnp.float32),
        "ln_pre_g": jnp.ones((width,), jnp.float32), "ln_pre_b": jnp.zeros((width,), jnp.float32),
        "ln_post_g": jnp.ones((width,), jnp.float32), "ln_post_b": jnp.zeros((width,), jnp.float32),
        "proj": (scale * jax.random.normal(next(keys), (width, cfg["output_dim"]))).astype(jnp.float32),
        "resPrompt_token": nrm((1, cfg["num_prompts"], width), std=0.02),
        "head_w": nrm((width, cfg["actual_num_classes"])),
        "head_b": jnp.zeros((cfg["actual_num_classes"],), jnp.float32),
        "transformation": block_params(),
        "transformer": [
            {
                "ln1_g": jnp.ones((width,), jnp.float32), "ln1_b": jnp.zeros((width,), jnp.float32),
                "in_proj_w": nrm((width, 3 * width)), "in_proj_b": jnp.zeros((3 * width,), jnp.float32),
                "out_proj_w": nrm((width, width)), "out_proj_b": jnp.zeros((width,), jnp.float32),
                "ln2_g": jnp.ones((width,), jnp.float32), "ln2_b": jnp.zeros((width,), jnp.float32),
                "c_fc_w": nrm((width, 4 * width)), "c_fc_b": jnp.zeros((4 * width,), jnp.float32),
                "c_proj_w": nrm((4 * width, width)), "c_proj_b": jnp.zeros((width,), jnp.float32),
            }
            for _ in range(cfg["layers"])
        ],
    }
    return params


def res_prompt_clip_forward(params, x, cfg, text_project=False):
    B, C, T, H, W_img = x.shape
    ps, width, heads = cfg["patch_size"], cfg["width"], cfg["heads"]
    num_prompts = cfg["num_prompts"]
    Gh, Gw = H // ps, W_img // ps
    N = Gh * Gw
    Wg = Gw  # torch: W = x.size(-1) after conv1

    # ---- conv1 (patch conv, stride == kernel) as patch-extract + tiled Pallas matmul ----
    xp = jnp.transpose(x, (0, 2, 1, 3, 4)).reshape(B * T, C, H, W_img)          # '(b t) c h w'
    xp = xp.reshape(B * T, C, Gh, ps, Gw, ps)
    xp = jnp.transpose(xp, (0, 2, 4, 1, 3, 5)).reshape(B * T * N, C * ps * ps)  # patch vec ordered (c, ph, pw)
    tok = linear(xp, params["conv1_w"]).reshape(B, T, N, width)

    # rearrange '(b t) n m -> b (n t) m'
    x_nt = jnp.transpose(tok, (0, 2, 1, 3)).reshape(B, N * T, width)

    # ---- transformation Block over all (n t) tokens ----
    transform = transformation_block(params["transformation"], x_nt, heads)
    transform = jnp.transpose(transform.reshape(B, N, T, width), (0, 2, 1, 3)).mean(axis=2)  # (B, T, width)

    # middle-frame spatial tokens
    x_mid = jnp.transpose(x_nt.reshape(B, N, T, width), (0, 2, 1, 3))[:, T // 2]  # (B, N, width)

    # prepend class token
    cls = params["class_embedding"].astype(x_mid.dtype)[None, None, :] \
        + jnp.zeros((B, 1, width), x_mid.dtype)
    xc = jnp.concatenate([cls, x_mid], axis=1)  # (B, N+1, width)

    # positional embedding (replicates the module's size(1)-vs-width check + nearest resize)
    pos = params["positional_embedding"]
    if xc.shape[1] != pos.shape[0]:
        cls_pos = pos[0:1][None]                            # (1, 1, width)
        other = jnp.transpose(pos[1:][None], (0, 2, 1))     # (1, width, N0)
        P = int(round(other.shape[2] ** 0.5))
        Hn = xc.shape[1] // Wg
        other = other.reshape(1, xc.shape[2], P, P)
        rows = (jnp.arange(Hn) * P) // Hn                   # F.interpolate 'nearest'
        cols = (jnp.arange(Wg) * P) // Wg
        other = other[:, :, rows][:, :, :, cols]
        other = other.reshape(1, width, Hn * Wg)
        other = jnp.transpose(other, (0, 2, 1))
        new_pos = jnp.concatenate([cls_pos, other], axis=1)
        xc = xc + new_pos
    else:
        xc = xc + pos[None]

    # prompts: cat(transform, resPrompt_token) then prepend to the sequence
    resPrompt = jnp.broadcast_to(params["resPrompt_token"], (B, num_prompts, width))
    resPrompt = jnp.concatenate([transform, resPrompt], axis=1)        # (B, T+num_prompts, width)
    xall = jnp.concatenate([resPrompt, xc], axis=1)                    # (B, T+num_prompts+N+1, width)

    xall = layernorm(xall, params["ln_pre_g"], params["ln_pre_b"], eps=1e-5)

    # CLIP transformer, collecting layer-wise tokens (batch-first == permute round trip)
    layer_wise = []
    h = xall
    for blk in params["transformer"]:
        h = clip_resblock(blk, h, heads)
        layer_wise.append(h)

    # ---- batched epilogue: one LN + one head matmul for all layers / both token groups ----
    n_front = T + num_prompts
    layers = len(params["transformer"])
    rp_means = jnp.stack([xi[:, :n_front, :].mean(axis=1) for xi in layer_wise], axis=0)  # (layers, B, W)
    cls_toks = jnp.stack([xi[:, n_front, :] for xi in layer_wise], axis=0)                # (layers, B, W)
    stacked = jnp.concatenate([rp_means, cls_toks], axis=0).reshape(2 * layers * B, width)
    stacked = layernorm(stacked, params["ln_post_g"], params["ln_post_b"], eps=1e-5)
    if text_project:
        stacked = linear(stacked, params["proj"])
    heads_out = linear(stacked, params["head_w"], params["head_b"])

    feats = stacked.reshape(2, layers, B, stacked.shape[-1])
    houts = heads_out.reshape(2, layers, B, heads_out.shape[-1])
    x_resPrompt = [feats[0, i] for i in range(layers)]
    x_cls = [feats[1, i] for i in range(layers)]
    head_rp = [houts[0, i] for i in range(layers)]
    head_cls = [houts[1, i] for i in range(layers)]
    return (head_rp, head_cls), (x_cls, x_resPrompt)


if __name__ == "__main__":
    cfg = dict(
        input_resolution=16, patch_size=4, width=32, layers=2, heads=4,
        output_dim=16, num_prompts=4, num_classes=10, num_frames=4,
        actual_num_classes=10, attention_type="joint_space_time",
    )
    key = jax.random.PRNGKey(0)
    pkey, xkey = jax.random.split(key)
    params = init_params(pkey, cfg)

    B, T = 2, cfg["num_frames"]
    x = jax.random.normal(
        xkey, (B, 3, T, cfg["input_resolution"], cfg["input_resolution"]), jnp.float32)

    fwd = jax.jit(lambda p, xx: res_prompt_clip_forward(p, xx, cfg, text_project=False))
    (head_rp, head_cls), (x_cls, x_rp) = fwd(params, x)

    jax.block_until_ready(head_rp[-1])
    jax.block_until_ready(head_cls[-1])
    assert len(head_rp) == cfg["layers"] and len(head_cls) == cfg["layers"]
    assert head_rp[-1].shape == (B, cfg["actual_num_classes"])
    assert head_cls[-1].shape == (B, cfg["actual_num_classes"])
    assert x_cls[-1].shape == (B, cfg["width"]) and x_rp[-1].shape == (B, cfg["width"])
    print("KERNEL_OK")
</pallas_src>

<mosaic_0001>
module attributes {stable_mosaic.version = 11 : i64} {
  func.func @_linear_kernel(%arg0: i32, %arg1: i32, %arg2: i32, %arg3: memref<128x128xf32, #tpu.memory_space<vmem>>, %arg4: memref<128x128xf32, #tpu.memory_space<vmem>>, %arg5: memref<128x128xf32, #tpu.memory_space<vmem>>, %arg6: memref<128x128xf32, #tpu.memory_space<vmem>>) attributes {dimension_semantics = [#tpu.dimension_semantics<parallel>, #tpu.dimension_semantics<parallel>, #tpu.dimension_semantics<arbitrary>], iteration_bounds = array<i64: 1, 1, 1>, scalar_prefetch = 0 : i64, scratch_operands = 1 : i64, tpu.core_type = #tpu.core_type<tc>, window_params = [{transform_indices = @transform_0, window_bounds = array<i64: 128, 128>}, {transform_indices = @transform_1, window_bounds = array<i64: 128, 128>}, {transform_indices = @transform_2, window_bounds = array<i64: 128, 128>}]} {
    %c0 = arith.constant 0 : index
    %c0_0 = arith.constant 0 : index
    %0 = vector.load %arg3[%c0, %c0_0] : memref<128x128xf32, #tpu.memory_space<vmem>>, vector<128x128xf32>
    %1 = arith.truncf %0 : vector<128x128xf32> to vector<128x128xbf16>
    %c0_1 = arith.constant 0 : index
    %c0_2 = arith.constant 0 : index
    %2 = vector.load %arg4[%c0_1, %c0_2] : memref<128x128xf32, #tpu.memory_space<vmem>>, vector<128x128xf32>
    %3 = arith.truncf %2 : vector<128x128xf32> to vector<128x128xbf16>
    %c0_i32 = arith.constant 0 : i32
    %4 = arith.cmpi eq, %arg2, %c0_i32 : i32
    %5 = arith.extui %4 : i1 to i32
    %c0_i32_3 = arith.constant 0 : i32
    %6 = arith.cmpi ne, %5, %c0_i32_3 : i32
    scf.if %6 {
      %cst_10 = arith.constant 0.000000e+00 : f32
      %14 = vector.broadcast %cst_10 : f32 to vector<128x128xf32>
      %c0_11 = arith.constant 0 : index
      %c0_12 = arith.constant 0 : index
      %15 = vector.load %arg6[%c0_11, %c0_12] : memref<128x128xf32, #tpu.memory_space<vmem>>, vector<128x128xf32>
      tpu.vector_store %arg6[%c0_11, %c0_12], %14 {strides = array<i32>} : memref<128x128xf32, #tpu.memory_space<vmem>>, vector<128x128xf32>,
    } else {
    }
    %c0_4 = arith.constant 0 : index
    %c0_5 = arith.constant 0 : index
    %7 = vector.load %arg6[%c0_4, %c0_5] : memref<128x128xf32, #tpu.memory_space<vmem>>, vector<128x128xf32>
    %cst = arith.constant dense<0.000000e+00> : vector<128x128xf32>
    %8 = tpu.matmul %1, %3, %cst {dimension_numbers = #tpu.dot_dimension_numbers<[1], [0], [0], [1], [0, 0, 1, 1], [], []>} : vector<128x128xbf16>, vector<128x128xbf16>, vector<128x128xf32> -> vector<128x128xf32>
    %9 = arith.addf %7, %8 : vector<128x128xf32>
    %c0_6 = arith.constant 0 : index
    %c0_7 = arith.constant 0 : index
    %10 = vector.load %arg6[%c0_6, %c0_7] : memref<128x128xf32, #tpu.memory_space<vmem>>, vector<128x128xf32>
    tpu.vector_store %arg6[%c0_6, %c0_7], %9 {strides = array<i32>} : memref<128x128xf32, #tpu.memory_space<vmem>>, vector<128x128xf32>,
    %c0_i32_8 = arith.constant 0 : i32
    %11 = arith.cmpi eq, %arg2, %c0_i32_8 : i32
    %12 = arith.extui %11 : i1 to i32
    %c0_i32_9 = arith.constant 0 : i32
    %13 = arith.cmpi ne, %12, %c0_i32_9 : i32
    scf.if %13 {
      %c0_10 = arith.constant 0 : index
      %c0_11 = arith.constant 0 : index
      %14 = vector.load %arg6[%c0_10, %c0_11] : memref<128x128xf32, #tpu.memory_space<vmem>>, vector<128x128xf32>
      %c0_12 = arith.constant 0 : index
      %c0_13 = arith.constant 0 : index
      %15 = vector.load %arg5[%c0_12, %c0_13] : memref<128x128xf32, #tpu.memory_space<vmem>>, vector<128x128xf32>
      tpu.vector_store %arg5[%c0_12, %c0_13], %14 {strides = array<i32>} : memref<128x128xf32, #tpu.memory_space<vmem>>, vector<128x128xf32>,
    } else {
    }
    return
  }
  func.func @transform_0(%arg0: i32, %arg1: i32, %arg2: i32) -> (i32, i32) {
    %c0_i32 = arith.constant 0 : i32
    return %arg0, %arg2 : i32, i32
  }
  func.func @transform_1(%arg0: i32, %arg1: i32, %arg2: i32) -> (i32, i32) {
    %c0_i32 = arith.constant 0 : i32
    return %arg2, %arg1 : i32, i32
  }
  func.func @transform_2(%arg0: i32, %arg1: i32, %arg2: i32) -> (i32, i32) {
    %c0_i32 = arith.constant 0 : i32
    return %arg0, %arg1 : i32, i32
  }
}

module attributes {stable_mosaic.version = 11 : i64} {
  func.func @_linear_kernel(%arg0: i32, %arg1: i32, %arg2: i32, %arg3: memref<128x32xf32, #tpu.memory_space<vmem>>, %arg4: memref<32x128xf32, #tpu.memory_space<vmem>>, %arg5: memref<1x128xf32, #tpu.memory_space<vmem>>, %arg6: memref<1x32xf32, #tpu.memory_space<vmem>>, %arg7: memref<1x32xf32, #tpu.memory_space<vmem>>, %arg8: memref<128x128xf32, #tpu.memory_space<vmem>>, %arg9: memref<128x128xf32, #tpu.memory_space<vmem>>) attributes {dimension_semantics = [#tpu.dimension_semantics<parallel>, #tpu.dimension_semantics<parallel>, #tpu.dimension_semantics<arbitrary>], iteration_bounds = array<i64: 1, 1, 1>, scalar_prefetch = 0 : i64, scratch_operands = 1 : i64, tpu.core_type = #tpu.core_type<tc>, window_params = [{transform_indices = @transform_0, window_bounds = array<i64: 128, 32>}, {transform_indices = @transform_1, window_bounds = array<i64: 32, 128>}, {transform_indices = @transform_2, window_bounds = array<i64: 1, 128>}, {pipeline_mode = #tpu.pipeline_mode<synchronous>, transform_indices = @transform_3, window_bounds = array<i64: 1, 32>}, {pipeline_mode = #tpu.pipeline_mode<synchronous>, transform_indices = @transform_4, window_bounds = array<i64: 1, 32>}, {transform_indices = @transform_5, window_bounds = array<i64: 128, 128>}]} {
    %c0 = arith.constant 0 : index
    %c0_0 = arith.constant 0 : index
    %0 = vector.load %arg3[%c0, %c0_0] : memref<128x32xf32, #tpu.memory_space<vmem>>, vector<128x32xf32>
    %cst = arith.constant dense<0.000000e+00> : vector<128xf32>
    %1 = vector.multi_reduction <add>, %0, %cst [1] : vector<128x32xf32> to vector<128xf32>
    %2 = vector.shape_cast %1 : vector<128xf32> to vector<128x1xf32>
    %cst_1 = arith.constant 3.200000e+01 : f32
    %3 = vector.broadcast %cst_1 : f32 to vector<128x1xf32>
    %4 = arith.divf %2, %3 : vector<128x1xf32>
    %5 = vector.broadcast %4 : vector<128x1xf32> to vector<128x32xf32>
    %6 = arith.subf %0, %5 : vector<128x32xf32>
    %7 = arith.mulf %6, %6 : vector<128x32xf32>
    %cst_2 = arith.constant dense<0.000000e+00> : vector<128xf32>
    %8 = vector.multi_reduction <add>, %7, %cst_2 [1] : vector<128x32xf32> to vector<128xf32>
    %9 = vector.shape_cast %8 : vector<128xf32> to vector<128x1xf32>
    %cst_3 = arith.constant 3.200000e+01 : f32
    %10 = vector.broadcast %cst_3 : f32 to vector<128x1xf32>
    %11 = arith.divf %9, %10 : vector<128x1xf32>
    %12 = vector.broadcast %4 : vector<128x1xf32> to vector<128x32xf32>
    %13 = arith.subf %0, %12 : vector<128x32xf32>
    %cst_4 = arith.constant 9.99999997E-7 : f32
    %14 = vector.broadcast %cst_4 : f32 to vector<128x1xf32>
    %15 = arith.addf %11, %14 : vector<128x1xf32>
    %16 = math.rsqrt %15 : vector<128x1xf32>
    %17 = vector.broadcast %16 : vector<128x1xf32> to vector<128x32xf32>
    %18 = arith.mulf %13, %17 : vector<128x32xf32>
    %c0_5 = arith.constant 0 : index
    %c0_6 = arith.constant 0 : index
    %19 = vector.load %arg6[%c0_5, %c0_6] : memref<1x32xf32, #tpu.memory_space<vmem>>, vector<1x32xf32>
    %20 = vector.broadcast %19 : vector<1x32xf32> to vector<128x32xf32>
    %21 = arith.mulf %18, %20 : vector<128x32xf32>
    %c0_7 = arith.constant 0 : index
    %c0_8 = arith.constant 0 : index
    %22 = vector.load %arg7[%c0_7, %c0_8] : memref<1x32xf32, #tpu.memory_space<vmem>>, vector<1x32xf32>
    %23 = vector.broadcast %22 : vector<1x32xf32> to vector<128x32xf32>
    %24 = arith.addf %21, %23 : vector<128x32xf32>
    %25 = arith.truncf %24 : vector<128x32xf32> to vector<128x32xbf16>
    %c0_9 = arith.constant 0 : index
    %c0_10 = arith.constant 0 : index
    %26 = vector.load %arg4[%c0_9, %c0_10] : memref<32x128xf32, #tpu.memory_space<vmem>>, vector<32x128xf32>
    %27 = arith.truncf %26 : vector<32x128xf32> to vector<32x128xbf16>
    %c0_i32 = arith.constant 0 : i32
    %28 = arith.cmpi eq, %arg2, %c0_i32 : i32
    %29 = arith.extui %28 : i1 to i32
    %c0_i32_11 = arith.constant 0 : i32
    %30 = arith.cmpi ne, %29, %c0_i32_11 : i32
    scf.if %30 {
      %cst_19 = arith.constant 0.000000e+00 : f32
      %38 = vector.broadcast %cst_19 : f32 to vector<128x128xf32>
      %c0_20 = arith.constant 0 : index
      %c0_21 = arith.constant 0 : index
      %39 = vector.load %arg9[%c0_20, %c0_21] : memref<128x128xf32, #tpu.memory_space<vmem>>, vector<128x128xf32>
      tpu.vector_store %arg9[%c0_20, %c0_21], %38 {strides = array<i32>} : memref<128x128xf32, #tpu.memory_space<vmem>>, vector<128x128xf32>,
    } else {
    }
    %c0_12 = arith.constant 0 : index
    %c0_13 = arith.constant 0 : index
    %31 = vector.load %arg9[%c0_12, %c0_13] : memref<128x128xf32, #tpu.memory_space<vmem>>, vector<128x128xf32>
    %cst_14 = arith.constant dense<0.000000e+00> : vector<128x128xf32>
    %32 = tpu.matmul %25, %27, %cst_14 {dimension_numbers = #tpu.dot_dimension_numbers<[1], [0], [0], [1], [0, 0, 1, 1], [], []>} : vector<128x32xbf16>, vector<32x128xbf16>, vector<128x128xf32> -> vector<128x128xf32>
    %33 = arith.addf %31, %32 : vector<128x128xf32>
    %c0_15 = arith.constant 0 : index
    %c0_16 = arith.constant 0 : index
    %34 = vector.load %arg9[%c0_15, %c0_16] : memref<128x128xf32, #tpu.memory_space<vmem>>, vector<128x128xf32>
    tpu.vector_store %arg9[%c0_15, %c0_16], %33 {strides = array<i32>} : memref<128x128xf32, #tpu.memory_space<vmem>>, vector<128x128xf32>,
    %c0_i32_17 = arith.constant 0 : i32
    %35 = arith.cmpi eq, %arg2, %c0_i32_17 : i32
    %36 = arith.extui %35 : i1 to i32
    %c0_i32_18 = arith.constant 0 : i32
    %37 = arith.cmpi ne, %36, %c0_i32_18 : i32
    scf.if %37 {
      %c0_19 = arith.constant 0 : index
      %c0_20 = arith.constant 0 : index
      %38 = vector.load %arg9[%c0_19, %c0_20] : memref<128x128xf32, #tpu.memory_space<vmem>>, vector<128x128xf32>
      %c0_21 = arith.constant 0 : index
      %c0_22 = arith.constant 0 : index
      %39 = vector.load %arg5[%c0_21, %c0_22] : memref<1x128xf32, #tpu.memory_space<vmem>>, vector<1x128xf32>
      %40 = vector.broadcast %39 : vector<1x128xf32> to vector<128x128xf32>
      %41 = arith.addf %38, %40 : vector<128x128xf32>
      %c0_23 = arith.constant 0 : index
      %c0_24 = arith.constant 0 : index
      %42 = vector.load %arg8[%c0_23, %c0_24] : memref<128x128xf32, #tpu.memory_space<vmem>>, vector<128x128xf32>
      tpu.vector_store %arg8[%c0_23, %c0_24], %41 {strides = array<i32>} : memref<128x128xf32, #tpu.memory_space<vmem>>, vector<128x128xf32>,
    } else {
    }
    return
  }
  func.func @transform_0(%arg0: i32, %arg1: i32, %arg2: i32) -> (i32, i32) {
    %c0_i32 = arith.constant 0 : i32
    return %arg0, %arg2 : i32, i32
  }
  func.func @transform_1(%arg0: i32, %arg1: i32, %arg2: i32) -> (i32, i32) {
    %c0_i32 = arith.constant 0 : i32
    return %arg2, %arg1 : i32, i32
  }
  func.func @transform_2(%arg0: i32, %arg1: i32, %arg2: i32) -> (i32, i32) {
    %c0_i32 = arith.constant 0 : i32
    %c0_i32_0 = arith.constant 0 : i32
    return %c0_i32, %arg1 : i32, i32
  }
  func.func @transform_3(%arg0: i32, %arg1: i32, %arg2: i32) -> (i32, i32) {
    %c0_i32 = arith.constant 0 : i32
    %c0_i32_0 = arith.constant 0 : i32
    %c0_i32_1 = arith.constant 0 : i32
    return %c0_i32, %c0_i32_0 : i32, i32
  }
  func.func @transform_4(%arg0: i32, %arg1: i32, %arg2: i32) -> (i32, i32) {
    %c0_i32 = arith.constant 0 : i32
    %c0_i32_0 = arith.constant 0 : i32
    %c0_i32_1 = arith.constant 0 : i32
    return %c0_i32, %c0_i32_0 : i32, i32
  }
  func.func @transform_5(%arg0: i32, %arg1: i32, %arg2: i32) -> (i32, i32) {
    %c0_i32 = arith.constant 0 : i32
    return %arg0, %arg1 : i32, i32
  }
}

module attributes {stable_mosaic.version = 11 : i64} {
  func.func @_linear_kernel(%arg0: i32, %arg1: i32, %arg2: i32, %arg3: memref<128x128xf32, #tpu.memory_space<vmem>>, %arg4: memref<128x128xf32, #tpu.memory_space<vmem>>, %arg5: memref<1x128xf32, #tpu.memory_space<vmem>>, %arg6: memref<128x128xf32, #tpu.memory_space<vmem>>, %arg7: memref<128x128xf32, #tpu.memory_space<vmem>>, %arg8: memref<128x128xf32, #tpu.memory_space<vmem>>) attributes {dimension_semantics = [#tpu.dimension_semantics<parallel>, #tpu.dimension_semantics<parallel>, #tpu.dimension_semantics<arbitrary>], iteration_bounds = array<i64: 1, 1, 1>, scalar_prefetch = 0 : i64, scratch_operands = 1 : i64, tpu.core_type = #tpu.core_type<tc>, window_params = [{transform_indices = @transform_0, window_bounds = array<i64: 128, 128>}, {transform_indices = @transform_1, window_bounds = array<i64: 128, 128>}, {transform_indices = @transform_2, window_bounds = array<i64: 1, 128>}, {transform_indices = @transform_3, window_bounds = array<i64: 128, 128>}, {transform_indices = @transform_4, window_bounds = array<i64: 128, 128>}]} {
    %c0 = arith.constant 0 : index
    %c0_0 = arith.constant 0 : index
    %0 = vector.load %arg3[%c0, %c0_0] : memref<128x128xf32, #tpu.memory_space<vmem>>, vector<128x128xf32>
    %1 = arith.truncf %0 : vector<128x128xf32> to vector<128x128xbf16>
    %c0_1 = arith.constant 0 : index
    %c0_2 = arith.constant 0 : index
    %2 = vector.load %arg4[%c0_1, %c0_2] : memref<128x128xf32, #tpu.memory_space<vmem>>, vector<128x128xf32>
    %3 = arith.truncf %2 : vector<128x128xf32> to vector<128x128xbf16>
    %c0_i32 = arith.constant 0 : i32
    %4 = arith.cmpi eq, %arg2, %c0_i32 : i32
    %5 = arith.extui %4 : i1 to i32
    %c0_i32_3 = arith.constant 0 : i32
    %6 = arith.cmpi ne, %5, %c0_i32_3 : i32
    scf.if %6 {
      %cst_10 = arith.constant 0.000000e+00 : f32
      %14 = vector.broadcast %cst_10 : f32 to vector<128x128xf32>
      %c0_11 = arith.constant 0 : index
      %c0_12 = arith.constant 0 : index
      %15 = vector.load %arg8[%c0_11, %c0_12] : memref<128x128xf32, #tpu.memory_space<vmem>>, vector<128x128xf32>
      tpu.vector_store %arg8[%c0_11, %c0_12], %14 {strides = array<i32>} : memref<128x128xf32, #tpu.memory_space<vmem>>, vector<128x128xf32>,
    } else {
    }
    %c0_4 = arith.constant 0 : index
    %c0_5 = arith.constant 0 : index
    %7 = vector.load %arg8[%c0_4, %c0_5] : memref<128x128xf32, #tpu.memory_space<vmem>>, vector<128x128xf32>
    %cst = arith.constant dense<0.000000e+00> : vector<128x128xf32>
    %8 = tpu.matmul %1, %3, %cst {dimension_numbers = #tpu.dot_dimension_numbers<[1], [0], [0], [1], [0, 0, 1, 1], [], []>} : vector<128x128xbf16>, vector<128x128xbf16>, vector<128x128xf32> -> vector<128x128xf32>
    %9 = arith.addf %7, %8 : vector<128x128xf32>
    %c0_6 = arith.constant 0 : index
    %c0_7 = arith.constant 0 : index
    %10 = vector.load %arg8[%c0_6, %c0_7] : memref<128x128xf32, #tpu.memory_space<vmem>>, vector<128x128xf32>
    tpu.vector_store %arg8[%c0_6, %c0_7], %9 {strides = array<i32>} : memref<128x128xf32, #tpu.memory_space<vmem>>, vector<128x128xf32>,
    %c0_i32_8 = arith.constant 0 : i32
    %11 = arith.cmpi eq, %arg2, %c0_i32_8 : i32
    %12 = arith.extui %11 : i1 to i32
    %c0_i32_9 = arith.constant 0 : i32
    %13 = arith.cmpi ne, %12, %c0_i32_9 : i32
    scf.if %13 {
      %c0_10 = arith.constant 0 : index
      %c0_11 = arith.constant 0 : index
      %14 = vector.load %arg8[%c0_10, %c0_11] : memref<128x128xf32, #tpu.memory_space<vmem>>, vector<128x128xf32>
      %c0_12 = arith.constant 0 : index
      %c0_13 = arith.constant 0 : index
      %15 = vector.load %arg5[%c0_12, %c0_13] : memref<1x128xf32, #tpu.memory_space<vmem>>, vector<1x128xf32>
      %16 = vector.broadcast %15 : vector<1x128xf32> to vector<128x128xf32>
      %17 = arith.addf %14, %16 : vector<128x128xf32>
      %c0_14 = arith.constant 0 : index
      %c0_15 = arith.constant 0 : index
      %18 = vector.load %arg6[%c0_14, %c0_15] : memref<128x128xf32, #tpu.memory_space<vmem>>, vector<128x128xf32>
      %19 = arith.addf %17, %18 : vector<128x128xf32>
      %c0_16 = arith.constant 0 : index
      %c0_17 = arith.constant 0 : index
      %20 = vector.load %arg7[%c0_16, %c0_17] : memref<128x128xf32, #tpu.memory_space<vmem>>, vector<128x128xf32>
      tpu.vector_store %arg7[%c0_16, %c0_17], %19 {strides = array<i32>} : memref<128x128xf32, #tpu.memory_space<vmem>>, vector<128x128xf32>,
    } else {
    }
    return
  }
  func.func @transform_0(%arg0: i32, %arg1: i32, %arg2: i32) -> (i32, i32) {
    %c0_i32 = arith.constant 0 : i32
    return %arg0, %arg2 : i32, i32
  }
  func.func @transform_1(%arg0: i32, %arg1: i32, %arg2: i32) -> (i32, i32) {
    %c0_i32 = arith.constant 0 : i32
    return %arg2, %arg1 : i32, i32
  }
  func.func @transform_2(%arg0: i32, %arg1: i32, %arg2: i32) -> (i32, i32) {
    %c0_i32 = arith.constant 0 : i32
    %c0_i32_0 = arith.constant 0 : i32
    return %c0_i32, %arg1 : i32, i32
  }
  func.func @transform_3(%arg0: i32, %arg1: i32, %arg2: i32) -> (i32, i32) {
    %c0_i32 = arith.constant 0 : i32
    return %arg0, %arg1 : i32, i32
  }
  func.func @transform_4(%arg0: i32, %arg1: i32, %arg2: i32) -> (i32, i32) {
    %c0_i32 = arith.constant 0 : i32
    return %arg0, %arg1 : i32, i32
  }
}

module attributes {stable_mosaic.version = 11 : i64} {
  func.func @_attention_kernel(%arg0: i32, %arg1: i32, %arg2: memref<1x64x32xf32, #tpu.memory_space<vmem>>, %arg3: memref<1x64x32xf32, #tpu.memory_space<vmem>>, %arg4: memref<1x64x32xf32, #tpu.memory_space<vmem>>, %arg5: memref<1x64x32xf32, #tpu.memory_space<vmem>>) attributes {dimension_semantics = [#tpu.dimension_semantics<parallel>, #tpu.dimension_semantics<parallel>], iteration_bounds = array<i64: 2, 1>, scalar_prefetch = 0 : i64, scratch_operands = 0 : i64, tpu.core_type = #tpu.core_type<tc>, window_params = [{transform_indices = @transform_0, window_bounds = array<i64: 1, 64, 32>}, {transform_indices = @transform_1, window_bounds = array<i64: 1, 64, 32>}, {transform_indices = @transform_2, window_bounds = array<i64: 1, 64, 32>}, {transform_indices = @transform_3, window_bounds = array<i64: 1, 64, 32>}]} {
    %c0 = arith.constant 0 : index
    %c0_0 = arith.constant 0 : index
    %c0_1 = arith.constant 0 : index
    %0 = vector.load %arg2[%c0, %c0_0, %c0_1] : memref<1x64x32xf32, #tpu.memory_space<vmem>>, vector<1x64x32xf32>
    %1 = vector.shape_cast %0 : vector<1x64x32xf32> to vector<64x32xf32>
    %cst = arith.constant 0.353553385 : f32
    %2 = vector.broadcast %cst : f32 to vector<64x32xf32>
    %3 = arith.mulf %1, %2 : vector<64x32xf32>
    %c0_2 = arith.constant 0 : index
    %c0_3 = arith.constant 0 : index
    %c0_4 = arith.constant 0 : index
    %4 = vector.load %arg3[%c0_2, %c0_3, %c0_4] : memref<1x64x32xf32, #tpu.memory_space<vmem>>, vector<1x64x32xf32>
    %5 = vector.shape_cast %4 : vector<1x64x32xf32> to vector<64x32xf32>
    %c0_5 = arith.constant 0 : index
    %c0_6 = arith.constant 0 : index
    %c0_7 = arith.constant 0 : index
    %6 = vector.load %arg4[%c0_5, %c0_6, %c0_7] : memref<1x64x32xf32, #tpu.memory_space<vmem>>, vector<1x64x32xf32>
    %7 = vector.shape_cast %6 : vector<1x64x32xf32> to vector<64x32xf32>
    %8 = vector.extract_strided_slice %3 {offsets = [0, 0], sizes = [64, 8], strides = [1, 1]} : vector<64x32xf32> to vector<64x8xf32>
    %9 = arith.truncf %8 : vector<64x8xf32> to vector<64x8xbf16>
    %10 = vector.extract_strided_slice %5 {offsets = [0, 0], sizes = [64, 8], strides = [1, 1]} : vector<64x32xf32> to vector<64x8xf32>
    %11 = arith.truncf %10 : vector<64x8xf32> to vector<64x8xbf16>
    %12 = vector.extract_strided_slice %7 {offsets = [0, 0], sizes = [64, 8], strides = [1, 1]} : vector<64x32xf32> to vector<64x8xf32>
    %13 = arith.truncf %12 : vector<64x8xf32> to vector<64x8xbf16>
    "tpu.trace_start"() <{level = 10 : i32, message = "qd,kd->qk"}> : () -> ()
    %cst_8 = arith.constant dense<0.000000e+00> : vector<64x64xf32>
    %14 = tpu.matmul %9, %11, %cst_8 {dimension_numbers = #tpu.dot_dimension_numbers<[1], [1], [0], [0], [0, 0, 1, 0], [], []>} : vector<64x8xbf16>, vector<64x8xbf16>, vector<64x64xf32> -> vector<64x64xf32>
    "tpu.trace_stop"() : () -> ()
    %cst_9 = arith.constant dense<0xFF800000> : vector<64xf32>
    %15 = vector.multi_reduction <maximumf>, %14, %cst_9 [1] : vector<64x64xf32> to vector<64xf32>
    %16 = vector.shape_cast %15 : vector<64xf32> to vector<64x1xf32>
    %17 = vector.broadcast %16 : vector<64x1xf32> to vector<64x64xf32>
    %18 = arith.subf %14, %17 : vector<64x64xf32>
    %19 = math.exp %18 : vector<64x64xf32>
    %cst_10 = arith.constant dense<0.000000e+00> : vector<64xf32>
    %20 = vector.multi_reduction <add>, %19, %cst_10 [1] : vector<64x64xf32> to vector<64xf32>
    %21 = vector.shape_cast %20 : vector<64xf32> to vector<64x1xf32>
    %22 = tpu.reciprocal %21 {approx = true} : vector<64x1xf32> -> vector<64x1xf32>
    %23 = vector.broadcast %22 : vector<64x1xf32> to vector<64x64xf32>
    %24 = arith.mulf %19, %23 : vector<64x64xf32>
    %25 = arith.truncf %24 : vector<64x64xf32> to vector<64x64xbf16>
    %cst_11 = arith.constant dense<0.000000e+00> : vector<64x8xf32>
    %26 = tpu.matmul %25, %13, %cst_11 {dimension_numbers = #tpu.dot_dimension_numbers<[1], [0], [0], [1], [0, 0, 1, 1], [], []>} : vector<64x64xbf16>, vector<64x8xbf16>, vector<64x8xf32> -> vector<64x8xf32>
    %27 = vector.extract_strided_slice %3 {offsets = [0, 8], sizes = [64, 8], strides = [1, 1]} : vector<64x32xf32> to vector<64x8xf32>
    %28 = arith.truncf %27 : vector<64x8xf32> to vector<64x8xbf16>
    %29 = vector.extract_strided_slice %5 {offsets = [0, 8], sizes = [64, 8], strides = [1, 1]} : vector<64x32xf32> to vector<64x8xf32>
    %30 = arith.truncf %29 : vector<64x8xf32> to vector<64x8xbf16>
    %31 = vector.extract_strided_slice %7 {offsets = [0, 8], sizes = [64, 8], strides = [1, 1]} : vector<64x32xf32> to vector<64x8xf32>
    %32 = arith.truncf %31 : vector<64x8xf32> to vector<64x8xbf16>
    "tpu.trace_start"() <{level = 10 : i32, message = "qd,kd->qk"}> : () -> ()
    %cst_12 = arith.constant dense<0.000000e+00> : vector<64x64xf32>
    %33 = tpu.matmul %28, %30, %cst_12 {dimension_numbers = #tpu.dot_dimension_numbers<[1], [1], [0], [0], [0, 0, 1, 0], [], []>} : vector<64x8xbf16>, vector<64x8xbf16>, vector<64x64xf32> -> vector<64x64xf32>
    "tpu.trace_stop"() : () -> ()
    %cst_13 = arith.constant dense<0xFF800000> : vector<64xf32>
    %34 = vector.multi_reduction <maximumf>, %33, %cst_13 [1] : vector<64x64xf32> to vector<64xf32>
    %35 = vector.shape_cast %34 : vector<64xf32> to vector<64x1xf32>
    %36 = vector.broadcast %35 : vector<64x1xf32> to vector<64x64xf32>
    %37 = arith.subf %33, %36 : vector<64x64xf32>
    %38 = math.exp %37 : vector<64x64xf32>
    %cst_14 = arith.constant dense<0.000000e+00> : vector<64xf32>
    %39 = vector.multi_reduction <add>, %38, %cst_14 [1] : vector<64x64xf32> to vector<64xf32>
    %40 = vector.shape_cast %39 : vector<64xf32> to vector<64x1xf32>
    %41 = tpu.reciprocal %40 {approx = true} : vector<64x1xf32> -> vector<64x1xf32>
    %42 = vector.broadcast %41 : vector<64x1xf32> to vector<64x64xf32>
    %43 = arith.mulf %38, %42 : vector<64x64xf32>
    %44 = arith.truncf %43 : vector<64x64xf32> to vector<64x64xbf16>
    %cst_15 = arith.constant dense<0.000000e+00> : vector<64x8xf32>
    %45 = tpu.matmul %44, %32, %cst_15 {dimension_numbers = #tpu.dot_dimension_numbers<[1], [0], [0], [1], [0, 0, 1, 1], [], []>} : vector<64x64xbf16>, vector<64x8xbf16>, vector<64x8xf32> -> vector<64x8xf32>
    %46 = vector.extract_strided_slice %3 {offsets = [0, 16], sizes = [64, 8], strides = [1, 1]} : vector<64x32xf32> to vector<64x8xf32>
    %47 = arith.truncf %46 : vector<64x8xf32> to vector<64x8xbf16>
    %48 = vector.extract_strided_slice %5 {offsets = [0, 16], sizes = [64, 8], strides = [1, 1]} : vector<64x32xf32> to vector<64x8xf32>
    %49 = arith.truncf %48 : vector<64x8xf32> to vector<64x8xbf16>
    %50 = vector.extract_strided_slice %7 {offsets = [0, 16], sizes = [64, 8], strides = [1, 1]} : vector<64x32xf32> to vector<64x8xf32>
    %51 = arith.truncf %50 : vector<64x8xf32> to vector<64x8xbf16>
    "tpu.trace_start"() <{level = 10 : i32, message = "qd,kd->qk"}> : () -> ()
    %cst_16 = arith.constant dense<0.000000e+00> : vector<64x64xf32>
    %52 = tpu.matmul %47, %49, %cst_16 {dimension_numbers = #tpu.dot_dimension_numbers<[1], [1], [0], [0], [0, 0, 1, 0], [], []>} : vector<64x8xbf16>, vector<64x8xbf16>, vector<64x64xf32> -> vector<64x64xf32>
    "tpu.trace_stop"() : () -> ()
    %cst_17 = arith.constant dense<0xFF800000> : vector<64xf32>
    %53 = vector.multi_reduction <maximumf>, %52, %cst_17 [1] : vector<64x64xf32> to vector<64xf32>
    %54 = vector.shape_cast %53 : vector<64xf32> to vector<64x1xf32>
    %55 = vector.broadcast %54 : vector<64x1xf32> to vector<64x64xf32>
    %56 = arith.subf %52, %55 : vector<64x64xf32>
    %57 = math.exp %56 : vector<64x64xf32>
    %cst_18 = arith.constant dense<0.000000e+00> : vector<64xf32>
    %58 = vector.multi_reduction <add>, %57, %cst_18 [1] : vector<64x64xf32> to vector<64xf32>
    %59 = vector.shape_cast %58 : vector<64xf32> to vector<64x1xf32>
    %60 = tpu.reciprocal %59 {approx = true} : vector<64x1xf32> -> vector<64x1xf32>
    %61 = vector.broadcast %60 : vector<64x1xf32> to vector<64x64xf32>
    %62 = arith.mulf %57, %61 : vector<64x64xf32>
    %63 = arith.truncf %62 : vector<64x64xf32> to vector<64x64xbf16>
    %cst_19 = arith.constant dense<0.000000e+00> : vector<64x8xf32>
    %64 = tpu.matmul %63, %51, %cst_19 {dimension_numbers = #tpu.dot_dimension_numbers<[1], [0], [0], [1], [0, 0, 1, 1], [], []>} : vector<64x64xbf16>, vector<64x8xbf16>, vector<64x8xf32> -> vector<64x8xf32>
    %65 = vector.extract_strided_slice %3 {offsets = [0, 24], sizes = [64, 8], strides = [1, 1]} : vector<64x32xf32> to vector<64x8xf32>
    %66 = arith.truncf %65 : vector<64x8xf32> to vector<64x8xbf16>
    %67 = vector.extract_strided_slice %5 {offsets = [0, 24], sizes = [64, 8], strides = [1, 1]} : vector<64x32xf32> to vector<64x8xf32>
    %68 = arith.truncf %67 : vector<64x8xf32> to vector<64x8xbf16>
    %69 = vector.extract_strided_slice %7 {offsets = [0, 24], sizes = [64, 8], strides = [1, 1]} : vector<64x32xf32> to vector<64x8xf32>
    %70 = arith.truncf %69 : vector<64x8xf32> to vector<64x8xbf16>
    "tpu.trace_start"() <{level = 10 : i32, message = "qd,kd->qk"}> : () -> ()
    %cst_20 = arith.constant dense<0.000000e+00> : vector<64x64xf32>
    %71 = tpu.matmul %66, %68, %cst_20 {dimension_numbers = #tpu.dot_dimension_numbers<[1], [1], [0], [0], [0, 0, 1, 0], [], []>} : vector<64x8xbf16>, vector<64x8xbf16>, vector<64x64xf32> -> vector<64x64xf32>
    "tpu.trace_stop"() : () -> ()
    %cst_21 = arith.constant dense<0xFF800000> : vector<64xf32>
    %72 = vector.multi_reduction <maximumf>, %71, %cst_21 [1] : vector<64x64xf32> to vector<64xf32>
    %73 = vector.shape_cast %72 : vector<64xf32> to vector<64x1xf32>
    %74 = vector.broadcast %73 : vector<64x1xf32> to vector<64x64xf32>
    %75 = arith.subf %71, %74 : vector<64x64xf32>
    %76 = math.exp %75 : vector<64x64xf32>
    %cst_22 = arith.constant dense<0.000000e+00> : vector<64xf32>
    %77 = vector.multi_reduction <add>, %76, %cst_22 [1] : vector<64x64xf32> to vector<64xf32>
    %78 = vector.shape_cast %77 : vector<64xf32> to vector<64x1xf32>
    %79 = tpu.reciprocal %78 {approx = true} : vector<64x1xf32> -> vector<64x1xf32>
    %80 = vector.broadcast %79 : vector<64x1xf32> to vector<64x64xf32>
    %81 = arith.mulf %76, %80 : vector<64x64xf32>
    %82 = arith.truncf %81 : vector<64x64xf32> to vector<64x64xbf16>
    %cst_23 = arith.constant dense<0.000000e+00> : vector<64x8xf32>
    %83 = tpu.matmul %82, %70, %cst_23 {dimension_numbers = #tpu.dot_dimension_numbers<[1], [0], [0], [1], [0, 0, 1, 1], [], []>} : vector<64x64xbf16>, vector<64x8xbf16>, vector<64x8xf32> -> vector<64x8xf32>
    %84 = tpu.concatenate %26, %45, %64, %83 in 1 : vector<64x8xf32>, vector<64x8xf32>, vector<64x8xf32>, vector<64x8xf32> -> vector<64x32xf32>
    %c0_24 = arith.constant 0 : index
    %c0_25 = arith.constant 0 : index
    %c0_26 = arith.constant 0 : index
    %85 = vector.load %arg5[%c0_24, %c0_25, %c0_26] : memref<1x64x32xf32, #tpu.memory_space<vmem>>, vector<1x64x32xf32>
    %86 = vector.shape_cast %85 : vector<1x64x32xf32> to vector<64x32xf32>
    %87 = vector.shape_cast %84 : vector<64x32xf32> to vector<1x64x32xf32>
    tpu.vector_store %arg5[%c0_24, %c0_25, %c0_26], %87 {strides = array<i32>} : memref<1x64x32xf32, #tpu.memory_space<vmem>>, vector<1x64x32xf32>,
    return
  }
  func.func @transform_0(%arg0: i32, %arg1: i32) -> (i32, i32, i32) {
    %c0_i32 = arith.constant 0 : i32
    %c0_i32_0 = arith.constant 0 : i32
    return %arg0, %c0_i32, %arg1 : i32, i32, i32
  }
  func.func @transform_1(%arg0: i32, %arg1: i32) -> (i32, i32, i32) {
    %c0_i32 = arith.constant 0 : i32
    %c0_i32_0 = arith.constant 0 : i32
    return %arg0, %c0_i32, %arg1 : i32, i32, i32
  }
  func.func @transform_2(%arg0: i32, %arg1: i32) -> (i32, i32, i32) {
    %c0_i32 = arith.constant 0 : i32
    %c0_i32_0 = arith.constant 0 : i32
    return %arg0, %c0_i32, %arg1 : i32, i32, i32
  }
  func.func @transform_3(%arg0: i32, %arg1: i32) -> (i32, i32, i32) {
    %c0_i32 = arith.constant 0 : i32
    %c0_i32_0 = arith.constant 0 : i32
    return %arg0, %c0_i32, %arg1 : i32, i32, i32
  }
}

module attributes {stable_mosaic.version = 11 : i64} {
  func.func @_linear_kernel(%arg0: i32, %arg1: i32, %arg2: i32, %arg3: memref<128x32xf32, #tpu.memory_space<vmem>>, %arg4: memref<32x128xf32, #tpu.memory_space<vmem>>, %arg5: memref<1x128xf32, #tpu.memory_space<vmem>>, %arg6: memref<1x32xf32, #tpu.memory_space<vmem>>, %arg7: memref<1x32xf32, #tpu.memory_space<vmem>>, %arg8: memref<128x128xf32, #tpu.memory_space<vmem>>, %arg9: memref<128x128xf32, #tpu.memory_space<vmem>>) attributes {dimension_semantics = [#tpu.dimension_semantics<parallel>, #tpu.dimension_semantics<parallel>, #tpu.dimension_semantics<arbitrary>], iteration_bounds = array<i64: 1, 1, 1>, scalar_prefetch = 0 : i64, scratch_operands = 1 : i64, tpu.core_type = #tpu.core_type<tc>, window_params = [{transform_indices = @transform_0, window_bounds = array<i64: 128, 32>}, {transform_indices = @transform_1, window_bounds = array<i64: 32, 128>}, {transform_indices = @transform_2, window_bounds = array<i64: 1, 128>}, {pipeline_mode = #tpu.pipeline_mode<synchronous>, transform_indices = @transform_3, window_bounds = array<i64: 1, 32>}, {pipeline_mode = #tpu.pipeline_mode<synchronous>, transform_indices = @transform_4, window_bounds = array<i64: 1, 32>}, {transform_indices = @transform_5, window_bounds = array<i64: 128, 128>}]} {
    %c0 = arith.constant 0 : index
    %c0_0 = arith.constant 0 : index
    %0 = vector.load %arg3[%c0, %c0_0] : memref<128x32xf32, #tpu.memory_space<vmem>>, vector<128x32xf32>
    %cst = arith.constant dense<0.000000e+00> : vector<128xf32>
    %1 = vector.multi_reduction <add>, %0, %cst [1] : vector<128x32xf32> to vector<128xf32>
    %2 = vector.shape_cast %1 : vector<128xf32> to vector<128x1xf32>
    %cst_1 = arith.constant 3.200000e+01 : f32
    %3 = vector.broadcast %cst_1 : f32 to vector<128x1xf32>
    %4 = arith.divf %2, %3 : vector<128x1xf32>
    %5 = vector.broadcast %4 : vector<128x1xf32> to vector<128x32xf32>
    %6 = arith.subf %0, %5 : vector<128x32xf32>
    %7 = arith.mulf %6, %6 : vector<128x32xf32>
    %cst_2 = arith.constant dense<0.000000e+00> : vector<128xf32>
    %8 = vector.multi_reduction <add>, %7, %cst_2 [1] : vector<128x32xf32> to vector<128xf32>
    %9 = vector.shape_cast %8 : vector<128xf32> to vector<128x1xf32>
    %cst_3 = arith.constant 3.200000e+01 : f32
    %10 = vector.broadcast %cst_3 : f32 to vector<128x1xf32>
    %11 = arith.divf %9, %10 : vector<128x1xf32>
    %12 = vector.broadcast %4 : vector<128x1xf32> to vector<128x32xf32>
    %13 = arith.subf %0, %12 : vector<128x32xf32>
    %cst_4 = arith.constant 9.99999997E-7 : f32
    %14 = vector.broadcast %cst_4 : f32 to vector<128x1xf32>
    %15 = arith.addf %11, %14 : vector<128x1xf32>
    %16 = math.rsqrt %15 : vector<128x1xf32>
    %17 = vector.broadcast %16 : vector<128x1xf32> to vector<128x32xf32>
    %18 = arith.mulf %13, %17 : vector<128x32xf32>
    %c0_5 = arith.constant 0 : index
    %c0_6 = arith.constant 0 : index
    %19 = vector.load %arg6[%c0_5, %c0_6] : memref<1x32xf32, #tpu.memory_space<vmem>>, vector<1x32xf32>
    %20 = vector.broadcast %19 : vector<1x32xf32> to vector<128x32xf32>
    %21 = arith.mulf %18, %20 : vector<128x32xf32>
    %c0_7 = arith.constant 0 : index
    %c0_8 = arith.constant 0 : index
    %22 = vector.load %arg7[%c0_7, %c0_8] : memref<1x32xf32, #tpu.memory_space<vmem>>, vector<1x32xf32>
    %23 = vector.broadcast %22 : vector<1x32xf32> to vector<128x32xf32>
    %24 = arith.addf %21, %23 : vector<128x32xf32>
    %25 = arith.truncf %24 : vector<128x32xf32> to vector<128x32xbf16>
    %c0_9 = arith.constant 0 : index
    %c0_10 = arith.constant 0 : index
    %26 = vector.load %arg4[%c0_9, %c0_10] : memref<32x128xf32, #tpu.memory_space<vmem>>, vector<32x128xf32>
    %27 = arith.truncf %26 : vector<32x128xf32> to vector<32x128xbf16>
    %c0_i32 = arith.constant 0 : i32
    %28 = arith.cmpi eq, %arg2, %c0_i32 : i32
    %29 = arith.extui %28 : i1 to i32
    %c0_i32_11 = arith.constant 0 : i32
    %30 = arith.cmpi ne, %29, %c0_i32_11 : i32
    scf.if %30 {
      %cst_19 = arith.constant 0.000000e+00 : f32
      %38 = vector.broadcast %cst_19 : f32 to vector<128x128xf32>
      %c0_20 = arith.constant 0 : index
      %c0_21 = arith.constant 0 : index
      %39 = vector.load %arg9[%c0_20, %c0_21] : memref<128x128xf32, #tpu.memory_space<vmem>>, vector<128x128xf32>
      tpu.vector_store %arg9[%c0_20, %c0_21], %38 {strides = array<i32>} : memref<128x128xf32, #tpu.memory_space<vmem>>, vector<128x128xf32>,
    } else {
    }
    %c0_12 = arith.constant 0 : index
    %c0_13 = arith.constant 0 : index
    %31 = vector.load %arg9[%c0_12, %c0_13] : memref<128x128xf32, #tpu.memory_space<vmem>>, vector<128x128xf32>
    %cst_14 = arith.constant dense<0.000000e+00> : vector<128x128xf32>
    %32 = tpu.matmul %25, %27, %cst_14 {dimension_numbers = #tpu.dot_dimension_numbers<[1], [0], [0], [1], [0, 0, 1, 1], [], []>} : vector<128x32xbf16>, vector<32x128xbf16>, vector<128x128xf32> -> vector<128x128xf32>
    %33 = arith.addf %31, %32 : vector<128x128xf32>
    %c0_15 = arith.constant 0 : index
    %c0_16 = arith.constant 0 : index
    %34 = vector.load %arg9[%c0_15, %c0_16] : memref<128x128xf32, #tpu.memory_space<vmem>>, vector<128x128xf32>
    tpu.vector_store %arg9[%c0_15, %c0_16], %33 {strides = array<i32>} : memref<128x128xf32, #tpu.memory_space<vmem>>, vector<128x128xf32>,
    %c0_i32_17 = arith.constant 0 : i32
    %35 = arith.cmpi eq, %arg2, %c0_i32_17 : i32
    %36 = arith.extui %35 : i1 to i32
    %c0_i32_18 = arith.constant 0 : i32
    %37 = arith.cmpi ne, %36, %c0_i32_18 : i32
    scf.if %37 {
      %c0_19 = arith.constant 0 : index
      %c0_20 = arith.constant 0 : index
      %38 = vector.load %arg9[%c0_19, %c0_20] : memref<128x128xf32, #tpu.memory_space<vmem>>, vector<128x128xf32>
      %c0_21 = arith.constant 0 : index
      %c0_22 = arith.constant 0 : index
      %39 = vector.load %arg5[%c0_21, %c0_22] : memref<1x128xf32, #tpu.memory_space<vmem>>, vector<1x128xf32>
      %40 = vector.broadcast %39 : vector<1x128xf32> to vector<128x128xf32>
      %41 = arith.addf %38, %40 : vector<128x128xf32>
      %cst_23 = arith.constant 5.000000e-01 : f32
      %42 = vector.broadcast %cst_23 : f32 to vector<128x128xf32>
      %43 = arith.mulf %42, %41 : vector<128x128xf32>
      %cst_24 = arith.constant 0.707106769 : f32
      %44 = vector.broadcast %cst_24 : f32 to vector<128x128xf32>
      %45 = arith.mulf %41, %44 : vector<128x128xf32>
      %46 = math.erf %45 : vector<128x128xf32>
      %cst_25 = arith.constant 1.000000e+00 : f32
      %47 = vector.broadcast %cst_25 : f32 to vector<128x128xf32>
      %48 = arith.addf %47, %46 : vector<128x128xf32>
      %49 = arith.mulf %43, %48 : vector<128x128xf32>
      %c0_26 = arith.constant 0 : index
      %c0_27 = arith.constant 0 : index
      %50 = vector.load %arg8[%c0_26, %c0_27] : memref<128x128xf32, #tpu.memory_space<vmem>>, vector<128x128xf32>
      tpu.vector_store %arg8[%c0_26, %c0_27], %49 {strides = array<i32>} : memref<128x128xf32, #tpu.memory_space<vmem>>, vector<128x128xf32>,
    } else {
    }
    return
  }
  func.func @transform_0(%arg0: i32, %arg1: i32, %arg2: i32) -> (i32, i32) {
    %c0_i32 = arith.constant 0 : i32
    return %arg0, %arg2 : i32, i32
  }
  func.func @transform_1(%arg0: i32, %arg1: i32, %arg2: i32) -> (i32, i32) {
    %c0_i32 = arith.constant 0 : i32
    return %arg2, %arg1 : i32, i32
  }
  func.func @transform_2(%arg0: i32, %arg1: i32, %arg2: i32) -> (i32, i32) {
    %c0_i32 = arith.constant 0 : i32
    %c0_i32_0 = arith.constant 0 : i32
    return %c0_i32, %arg1 : i32, i32
  }
  func.func @transform_3(%arg0: i32, %arg1: i32, %arg2: i32) -> (i32, i32) {
    %c0_i32 = arith.constant 0 : i32
    %c0_i32_0 = arith.constant 0 : i32
    %c0_i32_1 = arith.constant 0 : i32
    return %c0_i32, %c0_i32_0 : i32, i32
  }
  func.func @transform_4(%arg0: i32, %arg1: i32, %arg2: i32) -> (i32, i32) {
    %c0_i32 = arith.constant 0 : i32
    %c0_i32_0 = arith.constant 0 : i32
    %c0_i32_1 = arith.constant 0 : i32
    return %c0_i32, %c0_i32_0 : i32, i32
  }
  func.func @transform_5(%arg0: i32, %arg1: i32, %arg2: i32) -> (i32, i32) {
    %c0_i32 = arith.constant 0 : i32
    return %arg0, %arg1 : i32, i32
  }
}

module attributes {stable_mosaic.version = 11 : i64} {
  func.func @_layernorm_kernel(%arg0: i32, %arg1: memref<56x32xf32, #tpu.memory_space<vmem>>, %arg2: memref<1x32xf32, #tpu.memory_space<vmem>>, %arg3: memref<1x32xf32, #tpu.memory_space<vmem>>, %arg4: memref<56x32xf32, #tpu.memory_space<vmem>>) attributes {dimension_semantics = [#tpu.dimension_semantics<parallel>], iteration_bounds = array<i64: 1>, scalar_prefetch = 0 : i64, scratch_operands = 0 : i64, tpu.core_type = #tpu.core_type<tc>, window_params = [{transform_indices = @transform_0, window_bounds = array<i64: 56, 32>}, {pipeline_mode = #tpu.pipeline_mode<synchronous>, transform_indices = @transform_1, window_bounds = array<i64: 1, 32>}, {pipeline_mode = #tpu.pipeline_mode<synchronous>, transform_indices = @transform_2, window_bounds = array<i64: 1, 32>}, {transform_indices = @transform_3, window_bounds = array<i64: 56, 32>}]} {
    %c0 = arith.constant 0 : index
    %c0_0 = arith.constant 0 : index
    %0 = vector.load %arg1[%c0, %c0_0] : memref<56x32xf32, #tpu.memory_space<vmem>>, vector<56x32xf32>
    %cst = arith.constant dense<0.000000e+00> : vector<56xf32>
    %1 = vector.multi_reduction <add>, %0, %cst [1] : vector<56x32xf32> to vector<56xf32>
    %2 = vector.shape_cast %1 : vector<56xf32> to vector<56x1xf32>
    %cst_1 = arith.constant 3.200000e+01 : f32
    %3 = vector.broadcast %cst_1 : f32 to vector<56x1xf32>
    %4 = arith.divf %2, %3 : vector<56x1xf32>
    %5 = vector.broadcast %4 : vector<56x1xf32> to vector<56x32xf32>
    %6 = arith.subf %0, %5 : vector<56x32xf32>
    %7 = arith.mulf %6, %6 : vector<56x32xf32>
    %cst_2 = arith.constant dense<0.000000e+00> : vector<56xf32>
    %8 = vector.multi_reduction <add>, %7, %cst_2 [1] : vector<56x32xf32> to vector<56xf32>
    %9 = vector.shape_cast %8 : vector<56xf32> to vector<56x1xf32>
    %cst_3 = arith.constant 3.200000e+01 : f32
    %10 = vector.broadcast %cst_3 : f32 to vector<56x1xf32>
    %11 = arith.divf %9, %10 : vector<56x1xf32>
    %12 = vector.broadcast %4 : vector<56x1xf32> to vector<56x32xf32>
    %13 = arith.subf %0, %12 : vector<56x32xf32>
    %cst_4 = arith.constant 9.99999974E-6 : f32
    %14 = vector.broadcast %cst_4 : f32 to vector<56x1xf32>
    %15 = arith.addf %11, %14 : vector<56x1xf32>
    %16 = math.rsqrt %15 : vector<56x1xf32>
    %17 = vector.broadcast %16 : vector<56x1xf32> to vector<56x32xf32>
    %18 = arith.mulf %13, %17 : vector<56x32xf32>
    %c0_5 = arith.constant 0 : index
    %c0_6 = arith.constant 0 : index
    %19 = vector.load %arg2[%c0_5, %c0_6] : memref<1x32xf32, #tpu.memory_space<vmem>>, vector<1x32xf32>
    %20 = vector.broadcast %19 : vector<1x32xf32> to vector<56x32xf32>
    %21 = arith.mulf %18, %20 : vector<56x32xf32>
    %c0_7 = arith.constant 0 : index
    %c0_8 = arith.constant 0 : index
    %22 = vector.load %arg3[%c0_7, %c0_8] : memref<1x32xf32, #tpu.memory_space<vmem>>, vector<1x32xf32>
    %23 = vector.broadcast %22 : vector<1x32xf32> to vector<56x32xf32>
    %24 = arith.addf %21, %23 : vector<56x32xf32>
    %c0_9 = arith.constant 0 : index
    %c0_10 = arith.constant 0 : index
    %25 = vector.load %arg4[%c0_9, %c0_10] : memref<56x32xf32, #tpu.memory_space<vmem>>, vector<56x32xf32>
    tpu.vector_store %arg4[%c0_9, %c0_10], %24 {strides = array<i32>} : memref<56x32xf32, #tpu.memory_space<vmem>>, vector<56x32xf32>,
    return
  }
  func.func @transform_0(%arg0: i32) -> (i32, i32) {
    %c0_i32 = arith.constant 0 : i32
    %c0_i32_0 = arith.constant 0 : i32
    return %arg0, %c0_i32 : i32, i32
  }
  func.func @transform_1(%arg0: i32) -> (i32, i32) {
    %c0_i32 = arith.constant 0 : i32
    %c0_i32_0 = arith.constant 0 : i32
    %c0_i32_1 = arith.constant 0 : i32
    return %c0_i32, %c0_i32_0 : i32, i32
  }
  func.func @transform_2(%arg0: i32) -> (i32, i32) {
    %c0_i32 = arith.constant 0 : i32
    %c0_i32_0 = arith.constant 0 : i32
    %c0_i32_1 = arith.constant 0 : i32
    return %c0_i32, %c0_i32_0 : i32, i32
  }
  func.func @transform_3(%arg0: i32) -> (i32, i32) {
    %c0_i32 = arith.constant 0 : i32
    %c0_i32_0 = arith.constant 0 : i32
    return %arg0, %c0_i32 : i32, i32
  }
}

module attributes {stable_mosaic.version = 11 : i64} {
  func.func @_linear_kernel(%arg0: i32, %arg1: i32, %arg2: i32, %arg3: memref<56x32xf32, #tpu.memory_space<vmem>>, %arg4: memref<32x128xf32, #tpu.memory_space<vmem>>, %arg5: memref<1x128xf32, #tpu.memory_space<vmem>>, %arg6: memref<1x32xf32, #tpu.memory_space<vmem>>, %arg7: memref<1x32xf32, #tpu.memory_space<vmem>>, %arg8: memref<56x128xf32, #tpu.memory_space<vmem>>, %arg9: memref<56x128xf32, #tpu.memory_space<vmem>>) attributes {dimension_semantics = [#tpu.dimension_semantics<parallel>, #tpu.dimension_semantics<parallel>, #tpu.dimension_semantics<arbitrary>], iteration_bounds = array<i64: 1, 1, 1>, scalar_prefetch = 0 : i64, scratch_operands = 1 : i64, tpu.core_type = #tpu.core_type<tc>, window_params = [{transform_indices = @transform_0, window_bounds = array<i64: 56, 32>}, {transform_indices = @transform_1, window_bounds = array<i64: 32, 128>}, {transform_indices = @transform_2, window_bounds = array<i64: 1, 128>}, {pipeline_mode = #tpu.pipeline_mode<synchronous>, transform_indices = @transform_3, window_bounds = array<i64: 1, 32>}, {pipeline_mode = #tpu.pipeline_mode<synchronous>, transform_indices = @transform_4, window_bounds = array<i64: 1, 32>}, {transform_indices = @transform_5, window_bounds = array<i64: 56, 128>}]} {
    %c0 = arith.constant 0 : index
    %c0_0 = arith.constant 0 : index
    %0 = vector.load %arg3[%c0, %c0_0] : memref<56x32xf32, #tpu.memory_space<vmem>>, vector<56x32xf32>
    %cst = arith.constant dense<0.000000e+00> : vector<56xf32>
    %1 = vector.multi_reduction <add>, %0, %cst [1] : vector<56x32xf32> to vector<56xf32>
    %2 = vector.shape_cast %1 : vector<56xf32> to vector<56x1xf32>
    %cst_1 = arith.constant 3.200000e+01 : f32
    %3 = vector.broadcast %cst_1 : f32 to vector<56x1xf32>
    %4 = arith.divf %2, %3 : vector<56x1xf32>
    %5 = vector.broadcast %4 : vector<56x1xf32> to vector<56x32xf32>
    %6 = arith.subf %0, %5 : vector<56x32xf32>
    %7 = arith.mulf %6, %6 : vector<56x32xf32>
    %cst_2 = arith.constant dense<0.000000e+00> : vector<56xf32>
    %8 = vector.multi_reduction <add>, %7, %cst_2 [1] : vector<56x32xf32> to vector<56xf32>
    %9 = vector.shape_cast %8 : vector<56xf32> to vector<56x1xf32>
    %cst_3 = arith.constant 3.200000e+01 : f32
    %10 = vector.broadcast %cst_3 : f32 to vector<56x1xf32>
    %11 = arith.divf %9, %10 : vector<56x1xf32>
    %12 = vector.broadcast %4 : vector<56x1xf32> to vector<56x32xf32>
    %13 = arith.subf %0, %12 : vector<56x32xf32>
    %cst_4 = arith.constant 9.99999974E-6 : f32
    %14 = vector.broadcast %cst_4 : f32 to vector<56x1xf32>
    %15 = arith.addf %11, %14 : vector<56x1xf32>
    %16 = math.rsqrt %15 : vector<56x1xf32>
    %17 = vector.broadcast %16 : vector<56x1xf32> to vector<56x32xf32>
    %18 = arith.mulf %13, %17 : vector<56x32xf32>
    %c0_5 = arith.constant 0 : index
    %c0_6 = arith.constant 0 : index
    %19 = vector.load %arg6[%c0_5, %c0_6] : memref<1x32xf32, #tpu.memory_space<vmem>>, vector<1x32xf32>
    %20 = vector.broadcast %19 : vector<1x32xf32> to vector<56x32xf32>
    %21 = arith.mulf %18, %20 : vector<56x32xf32>
    %c0_7 = arith.constant 0 : index
    %c0_8 = arith.constant 0 : index
    %22 = vector.load %arg7[%c0_7, %c0_8] : memref<1x32xf32, #tpu.memory_space<vmem>>, vector<1x32xf32>
    %23 = vector.broadcast %22 : vector<1x32xf32> to vector<56x32xf32>
    %24 = arith.addf %21, %23 : vector<56x32xf32>
    %25 = arith.truncf %24 : vector<56x32xf32> to vector<56x32xbf16>
    %c0_9 = arith.constant 0 : index
    %c0_10 = arith.constant 0 : index
    %26 = vector.load %arg4[%c0_9, %c0_10] : memref<32x128xf32, #tpu.memory_space<vmem>>, vector<32x128xf32>
    %27 = arith.truncf %26 : vector<32x128xf32> to vector<32x128xbf16>
    %c0_i32 = arith.constant 0 : i32
    %28 = arith.cmpi eq, %arg2, %c0_i32 : i32
    %29 = arith.extui %28 : i1 to i32
    %c0_i32_11 = arith.constant 0 : i32
    %30 = arith.cmpi ne, %29, %c0_i32_11 : i32
    scf.if %30 {
      %cst_19 = arith.constant 0.000000e+00 : f32
      %38 = vector.broadcast %cst_19 : f32 to vector<56x128xf32>
      %c0_20 = arith.constant 0 : index
      %c0_21 = arith.constant 0 : index
      %39 = vector.load %arg9[%c0_20, %c0_21] : memref<56x128xf32, #tpu.memory_space<vmem>>, vector<56x128xf32>
      tpu.vector_store %arg9[%c0_20, %c0_21], %38 {strides = array<i32>} : memref<56x128xf32, #tpu.memory_space<vmem>>, vector<56x128xf32>,
    } else {
    }
    %c0_12 = arith.constant 0 : index
    %c0_13 = arith.constant 0 : index
    %31 = vector.load %arg9[%c0_12, %c0_13] : memref<56x128xf32, #tpu.memory_space<vmem>>, vector<56x128xf32>
    %cst_14 = arith.constant dense<0.000000e+00> : vector<56x128xf32>
    %32 = tpu.matmul %25, %27, %cst_14 {dimension_numbers = #tpu.dot_dimension_numbers<[1], [0], [0], [1], [0, 0, 1, 1], [], []>} : vector<56x32xbf16>, vector<32x128xbf16>, vector<56x128xf32> -> vector<56x128xf32>
    %33 = arith.addf %31, %32 : vector<56x128xf32>
    %c0_15 = arith.constant 0 : index
    %c0_16 = arith.constant 0 : index
    %34 = vector.load %arg9[%c0_15, %c0_16] : memref<56x128xf32, #tpu.memory_space<vmem>>, vector<56x128xf32>
    tpu.vector_store %arg9[%c0_15, %c0_16], %33 {strides = array<i32>} : memref<56x128xf32, #tpu.memory_space<vmem>>, vector<56x128xf32>,
    %c0_i32_17 = arith.constant 0 : i32
    %35 = arith.cmpi eq, %arg2, %c0_i32_17 : i32
    %36 = arith.extui %35 : i1 to i32
    %c0_i32_18 = arith.constant 0 : i32
    %37 = arith.cmpi ne, %36, %c0_i32_18 : i32
    scf.if %37 {
      %c0_19 = arith.constant 0 : index
      %c0_20 = arith.constant 0 : index
      %38 = vector.load %arg9[%c0_19, %c0_20] : memref<56x128xf32, #tpu.memory_space<vmem>>, vector<56x128xf32>
      %c0_21 = arith.constant 0 : index
      %c0_22 = arith.constant 0 : index
      %39 = vector.load %arg5[%c0_21, %c0_22] : memref<1x128xf32, #tpu.memory_space<vmem>>, vector<1x128xf32>
      %40 = vector.broadcast %39 : vector<1x128xf32> to vector<56x128xf32>
      %41 = arith.addf %38, %40 : vector<56x128xf32>
      %c0_23 = arith.constant 0 : index
      %c0_24 = arith.constant 0 : index
      %42 = vector.load %arg8[%c0_23, %c0_24] : memref<56x128xf32, #tpu.memory_space<vmem>>, vector<56x128xf32>
      tpu.vector_store %arg8[%c0_23, %c0_24], %41 {strides = array<i32>} : memref<56x128xf32, #tpu.memory_space<vmem>>, vector<56x128xf32>,
    } else {
    }
    return
  }
  func.func @transform_0(%arg0: i32, %arg1: i32, %arg2: i32) -> (i32, i32) {
    %c0_i32 = arith.constant 0 : i32
    return %arg0, %arg2 : i32, i32
  }
  func.func @transform_1(%arg0: i32, %arg1: i32, %arg2: i32) -> (i32, i32) {
    %c0_i32 = arith.constant 0 : i32
    return %arg2, %arg1 : i32, i32
  }
  func.func @transform_2(%arg0: i32, %arg1: i32, %arg2: i32) -> (i32, i32) {
    %c0_i32 = arith.constant 0 : i32
    %c0_i32_0 = arith.constant 0 : i32
    return %c0_i32, %arg1 : i32, i32
  }
  func.func @transform_3(%arg0: i32, %arg1: i32, %arg2: i32) -> (i32, i32) {
    %c0_i32 = arith.constant 0 : i32
    %c0_i32_0 = arith.constant 0 : i32
    %c0_i32_1 = arith.constant 0 : i32
    return %c0_i32, %c0_i32_0 : i32, i32
  }
  func.func @transform_4(%arg0: i32, %arg1: i32, %arg2: i32) -> (i32, i32) {
    %c0_i32 = arith.constant 0 : i32
    %c0_i32_0 = arith.constant 0 : i32
    %c0_i32_1 = arith.constant 0 : i32
    return %c0_i32, %c0_i32_0 : i32, i32
  }
  func.func @transform_5(%arg0: i32, %arg1: i32, %arg2: i32) -> (i32, i32) {
    %c0_i32 = arith.constant 0 : i32
    return %arg0, %arg1 : i32, i32
  }
}

module attributes {stable_mosaic.version = 11 : i64} {
  func.func @_attention_kernel(%arg0: i32, %arg1: i32, %arg2: memref<1x25x32xf32, #tpu.memory_space<vmem>>, %arg3: memref<1x25x32xf32, #tpu.memory_space<vmem>>, %arg4: memref<1x25x32xf32, #tpu.memory_space<vmem>>, %arg5: memref<1x25x32xf32, #tpu.memory_space<vmem>>) attributes {dimension_semantics = [#tpu.dimension_semantics<parallel>, #tpu.dimension_semantics<parallel>], iteration_bounds = array<i64: 2, 1>, scalar_prefetch = 0 : i64, scratch_operands = 0 : i64, tpu.core_type = #tpu.core_type<tc>, window_params = [{transform_indices = @transform_0, window_bounds = array<i64: 1, 25, 32>}, {transform_indices = @transform_1, window_bounds = array<i64: 1, 25, 32>}, {transform_indices = @transform_2, window_bounds = array<i64: 1, 25, 32>}, {transform_indices = @transform_3, window_bounds = array<i64: 1, 25, 32>}]} {
    %c0 = arith.constant 0 : index
    %c0_0 = arith.constant 0 : index
    %c0_1 = arith.constant 0 : index
    %0 = vector.load %arg2[%c0, %c0_0, %c0_1] : memref<1x25x32xf32, #tpu.memory_space<vmem>>, vector<1x25x32xf32>
    %1 = vector.shape_cast %0 : vector<1x25x32xf32> to vector<25x32xf32>
    %cst = arith.constant 0.353553385 : f32
    %2 = vector.broadcast %cst : f32 to vector<25x32xf32>
    %3 = arith.mulf %1, %2 : vector<25x32xf32>
    %c0_2 = arith.constant 0 : index
    %c0_3 = arith.constant 0 : index
    %c0_4 = arith.constant 0 : index
    %4 = vector.load %arg3[%c0_2, %c0_3, %c0_4] : memref<1x25x32xf32, #tpu.memory_space<vmem>>, vector<1x25x32xf32>
    %5 = vector.shape_cast %4 : vector<1x25x32xf32> to vector<25x32xf32>
    %c0_5 = arith.constant 0 : index
    %c0_6 = arith.constant 0 : index
    %c0_7 = arith.constant 0 : index
    %6 = vector.load %arg4[%c0_5, %c0_6, %c0_7] : memref<1x25x32xf32, #tpu.memory_space<vmem>>, vector<1x25x32xf32>
    %7 = vector.shape_cast %6 : vector<1x25x32xf32> to vector<25x32xf32>
    %8 = vector.extract_strided_slice %3 {offsets = [0, 0], sizes = [25, 8], strides = [1, 1]} : vector<25x32xf32> to vector<25x8xf32>
    %9 = arith.truncf %8 : vector<25x8xf32> to vector<25x8xbf16>
    %10 = vector.extract_strided_slice %5 {offsets = [0, 0], sizes = [25, 8], strides = [1, 1]} : vector<25x32xf32> to vector<25x8xf32>
    %11 = arith.truncf %10 : vector<25x8xf32> to vector<25x8xbf16>
    %12 = vector.extract_strided_slice %7 {offsets = [0, 0], sizes = [25, 8], strides = [1, 1]} : vector<25x32xf32> to vector<25x8xf32>
    %13 = arith.truncf %12 : vector<25x8xf32> to vector<25x8xbf16>
    "tpu.trace_start"() <{level = 10 : i32, message = "qd,kd->qk"}> : () -> ()
    %cst_8 = arith.constant dense<0.000000e+00> : vector<25x25xf32>
    %14 = tpu.matmul %9, %11, %cst_8 {dimension_numbers = #tpu.dot_dimension_numbers<[1], [1], [0], [0], [0, 0, 1, 0], [], []>} : vector<25x8xbf16>, vector<25x8xbf16>, vector<25x25xf32> -> vector<25x25xf32>
    "tpu.trace_stop"() : () -> ()
    %cst_9 = arith.constant dense<0xFF800000> : vector<25xf32>
    %15 = vector.multi_reduction <maximumf>, %14, %cst_9 [1] : vector<25x25xf32> to vector<25xf32>
    %16 = vector.shape_cast %15 : vector<25xf32> to vector<25x1xf32>
    %17 = vector.broadcast %16 : vector<25x1xf32> to vector<25x25xf32>
    %18 = arith.subf %14, %17 : vector<25x25xf32>
    %19 = math.exp %18 : vector<25x25xf32>
    %cst_10 = arith.constant dense<0.000000e+00> : vector<25xf32>
    %20 = vector.multi_reduction <add>, %19, %cst_10 [1] : vector<25x25xf32> to vector<25xf32>
    %21 = vector.shape_cast %20 : vector<25xf32> to vector<25x1xf32>
    %22 = tpu.reciprocal %21 {approx = true} : vector<25x1xf32> -> vector<25x1xf32>
    %23 = vector.broadcast %22 : vector<25x1xf32> to vector<25x25xf32>
    %24 = arith.mulf %19, %23 : vector<25x25xf32>
    %25 = arith.truncf %24 : vector<25x25xf32> to vector<25x25xbf16>
    %cst_11 = arith.constant dense<0.000000e+00> : vector<25x8xf32>
    %26 = tpu.matmul %25, %13, %cst_11 {dimension_numbers = #tpu.dot_dimension_numbers<[1], [0], [0], [1], [0, 0, 1, 1], [], []>} : vector<25x25xbf16>, vector<25x8xbf16>, vector<25x8xf32> -> vector<25x8xf32>
    %27 = vector.extract_strided_slice %3 {offsets = [0, 8], sizes = [25, 8], strides = [1, 1]} : vector<25x32xf32> to vector<25x8xf32>
    %28 = arith.truncf %27 : vector<25x8xf32> to vector<25x8xbf16>
    %29 = vector.extract_strided_slice %5 {offsets = [0, 8], sizes = [25, 8], strides = [1, 1]} : vector<25x32xf32> to vector<25x8xf32>
    %30 = arith.truncf %29 : vector<25x8xf32> to vector<25x8xbf16>
    %31 = vector.extract_strided_slice %7 {offsets = [0, 8], sizes = [25, 8], strides = [1, 1]} : vector<25x32xf32> to vector<25x8xf32>
    %32 = arith.truncf %31 : vector<25x8xf32> to vector<25x8xbf16>
    "tpu.trace_start"() <{level = 10 : i32, message = "qd,kd->qk"}> : () -> ()
    %cst_12 = arith.constant dense<0.000000e+00> : vector<25x25xf32>
    %33 = tpu.matmul %28, %30, %cst_12 {dimension_numbers = #tpu.dot_dimension_numbers<[1], [1], [0], [0], [0, 0, 1, 0], [], []>} : vector<25x8xbf16>, vector<25x8xbf16>, vector<25x25xf32> -> vector<25x25xf32>
    "tpu.trace_stop"() : () -> ()
    %cst_13 = arith.constant dense<0xFF800000> : vector<25xf32>
    %34 = vector.multi_reduction <maximumf>, %33, %cst_13 [1] : vector<25x25xf32> to vector<25xf32>
    %35 = vector.shape_cast %34 : vector<25xf32> to vector<25x1xf32>
    %36 = vector.broadcast %35 : vector<25x1xf32> to vector<25x25xf32>
    %37 = arith.subf %33, %36 : vector<25x25xf32>
    %38 = math.exp %37 : vector<25x25xf32>
    %cst_14 = arith.constant dense<0.000000e+00> : vector<25xf32>
    %39 = vector.multi_reduction <add>, %38, %cst_14 [1] : vector<25x25xf32> to vector<25xf32>
    %40 = vector.shape_cast %39 : vector<25xf32> to vector<25x1xf32>
    %41 = tpu.reciprocal %40 {approx = true} : vector<25x1xf32> -> vector<25x1xf32>
    %42 = vector.broadcast %41 : vector<25x1xf32> to vector<25x25xf32>
    %43 = arith.mulf %38, %42 : vector<25x25xf32>
    %44 = arith.truncf %43 : vector<25x25xf32> to vector<25x25xbf16>
    %cst_15 = arith.constant dense<0.000000e+00> : vector<25x8xf32>
    %45 = tpu.matmul %44, %32, %cst_15 {dimension_numbers = #tpu.dot_dimension_numbers<[1], [0], [0], [1], [0, 0, 1, 1], [], []>} : vector<25x25xbf16>, vector<25x8xbf16>, vector<25x8xf32> -> vector<25x8xf32>
    %46 = vector.extract_strided_slice %3 {offsets = [0, 16], sizes = [25, 8], strides = [1, 1]} : vector<25x32xf32> to vector<25x8xf32>
    %47 = arith.truncf %46 : vector<25x8xf32> to vector<25x8xbf16>
    %48 = vector.extract_strided_slice %5 {offsets = [0, 16], sizes = [25, 8], strides = [1, 1]} : vector<25x32xf32> to vector<25x8xf32>
    %49 = arith.truncf %48 : vector<25x8xf32> to vector<25x8xbf16>
    %50 = vector.extract_strided_slice %7 {offsets = [0, 16], sizes = [25, 8], strides = [1, 1]} : vector<25x32xf32> to vector<25x8xf32>
    %51 = arith.truncf %50 : vector<25x8xf32> to vector<25x8xbf16>
    "tpu.trace_start"() <{level = 10 : i32, message = "qd,kd->qk"}> : () -> ()
    %cst_16 = arith.constant dense<0.000000e+00> : vector<25x25xf32>
    %52 = tpu.matmul %47, %49, %cst_16 {dimension_numbers = #tpu.dot_dimension_numbers<[1], [1], [0], [0], [0, 0, 1, 0], [], []>} : vector<25x8xbf16>, vector<25x8xbf16>, vector<25x25xf32> -> vector<25x25xf32>
    "tpu.trace_stop"() : () -> ()
    %cst_17 = arith.constant dense<0xFF800000> : vector<25xf32>
    %53 = vector.multi_reduction <maximumf>, %52, %cst_17 [1] : vector<25x25xf32> to vector<25xf32>
    %54 = vector.shape_cast %53 : vector<25xf32> to vector<25x1xf32>
    %55 = vector.broadcast %54 : vector<25x1xf32> to vector<25x25xf32>
    %56 = arith.subf %52, %55 : vector<25x25xf32>
    %57 = math.exp %56 : vector<25x25xf32>
    %cst_18 = arith.constant dense<0.000000e+00> : vector<25xf32>
    %58 = vector.multi_reduction <add>, %57, %cst_18 [1] : vector<25x25xf32> to vector<25xf32>
    %59 = vector.shape_cast %58 : vector<25xf32> to vector<25x1xf32>
    %60 = tpu.reciprocal %59 {approx = true} : vector<25x1xf32> -> vector<25x1xf32>
    %61 = vector.broadcast %60 : vector<25x1xf32> to vector<25x25xf32>
    %62 = arith.mulf %57, %61 : vector<25x25xf32>
    %63 = arith.truncf %62 : vector<25x25xf32> to vector<25x25xbf16>
    %cst_19 = arith.constant dense<0.000000e+00> : vector<25x8xf32>
    %64 = tpu.matmul %63, %51, %cst_19 {dimension_numbers = #tpu.dot_dimension_numbers<[1], [0], [0], [1], [0, 0, 1, 1], [], []>} : vector<25x25xbf16>, vector<25x8xbf16>, vector<25x8xf32> -> vector<25x8xf32>
    %65 = vector.extract_strided_slice %3 {offsets = [0, 24], sizes = [25, 8], strides = [1, 1]} : vector<25x32xf32> to vector<25x8xf32>
    %66 = arith.truncf %65 : vector<25x8xf32> to vector<25x8xbf16>
    %67 = vector.extract_strided_slice %5 {offsets = [0, 24], sizes = [25, 8], strides = [1, 1]} : vector<25x32xf32> to vector<25x8xf32>
    %68 = arith.truncf %67 : vector<25x8xf32> to vector<25x8xbf16>
    %69 = vector.extract_strided_slice %7 {offsets = [0, 24], sizes = [25, 8], strides = [1, 1]} : vector<25x32xf32> to vector<25x8xf32>
    %70 = arith.truncf %69 : vector<25x8xf32> to vector<25x8xbf16>
    "tpu.trace_start"() <{level = 10 : i32, message = "qd,kd->qk"}> : () -> ()
    %cst_20 = arith.constant dense<0.000000e+00> : vector<25x25xf32>
    %71 = tpu.matmul %66, %68, %cst_20 {dimension_numbers = #tpu.dot_dimension_numbers<[1], [1], [0], [0], [0, 0, 1, 0], [], []>} : vector<25x8xbf16>, vector<25x8xbf16>, vector<25x25xf32> -> vector<25x25xf32>
    "tpu.trace_stop"() : () -> ()
    %cst_21 = arith.constant dense<0xFF800000> : vector<25xf32>
    %72 = vector.multi_reduction <maximumf>, %71, %cst_21 [1] : vector<25x25xf32> to vector<25xf32>
    %73 = vector.shape_cast %72 : vector<25xf32> to vector<25x1xf32>
    %74 = vector.broadcast %73 : vector<25x1xf32> to vector<25x25xf32>
    %75 = arith.subf %71, %74 : vector<25x25xf32>
    %76 = math.exp %75 : vector<25x25xf32>
    %cst_22 = arith.constant dense<0.000000e+00> : vector<25xf32>
    %77 = vector.multi_reduction <add>, %76, %cst_22 [1] : vector<25x25xf32> to vector<25xf32>
    %78 = vector.shape_cast %77 : vector<25xf32> to vector<25x1xf32>
    %79 = tpu.reciprocal %78 {approx = true} : vector<25x1xf32> -> vector<25x1xf32>
    %80 = vector.broadcast %79 : vector<25x1xf32> to vector<25x25xf32>
    %81 = arith.mulf %76, %80 : vector<25x25xf32>
    %82 = arith.truncf %81 : vector<25x25xf32> to vector<25x25xbf16>
    %cst_23 = arith.constant dense<0.000000e+00> : vector<25x8xf32>
    %83 = tpu.matmul %82, %70, %cst_23 {dimension_numbers = #tpu.dot_dimension_numbers<[1], [0], [0], [1], [0, 0, 1, 1], [], []>} : vector<25x25xbf16>, vector<25x8xbf16>, vector<25x8xf32> -> vector<25x8xf32>
    %84 = tpu.concatenate %26, %45, %64, %83 in 1 : vector<25x8xf32>, vector<25x8xf32>, vector<25x8xf32>, vector<25x8xf32> -> vector<25x32xf32>
    %c0_24 = arith.constant 0 : index
    %c0_25 = arith.constant 0 : index
    %c0_26 = arith.constant 0 : index
    %85 = vector.load %arg5[%c0_24, %c0_25, %c0_26] : memref<1x25x32xf32, #tpu.memory_space<vmem>>, vector<1x25x32xf32>
    %86 = vector.shape_cast %85 : vector<1x25x32xf32> to vector<25x32xf32>
    %87 = vector.shape_cast %84 : vector<25x32xf32> to vector<1x25x32xf32>
    tpu.vector_store %arg5[%c0_24, %c0_25, %c0_26], %87 {strides = array<i32>} : memref<1x25x32xf32, #tpu.memory_space<vmem>>, vector<1x25x32xf32>,
    return
  }
  func.func @transform_0(%arg0: i32, %arg1: i32) -> (i32, i32, i32) {
    %c0_i32 = arith.constant 0 : i32
    %c0_i32_0 = arith.constant 0 : i32
    return %arg0, %c0_i32, %arg1 : i32, i32, i32
  }
  func.func @transform_1(%arg0: i32, %arg1: i32) -> (i32, i32, i32) {
    %c0_i32 = arith.constant 0 : i32
    %c0_i32_0 = arith.constant 0 : i32
    return %arg0, %c0_i32, %arg1 : i32, i32, i32
  }
  func.func @transform_2(%arg0: i32, %arg1: i32) -> (i32, i32, i32) {
    %c0_i32 = arith.constant 0 : i32
    %c0_i32_0 = arith.constant 0 : i32
    return %arg0, %c0_i32, %arg1 : i32, i32, i32
  }
  func.func @transform_3(%arg0: i32, %arg1: i32) -> (i32, i32, i32) {
    %c0_i32 = arith.constant 0 : i32
    %c0_i32_0 = arith.constant 0 : i32
    return %arg0, %c0_i32, %arg1 : i32, i32, i32
  }
}

module attributes {stable_mosaic.version = 11 : i64} {
  func.func @_linear_kernel(%arg0: i32, %arg1: i32, %arg2: i32, %arg3: memref<56x128xf32, #tpu.memory_space<vmem>>, %arg4: memref<128x128xf32, #tpu.memory_space<vmem>>, %arg5: memref<1x128xf32, #tpu.memory_space<vmem>>, %arg6: memref<56x128xf32, #tpu.memory_space<vmem>>, %arg7: memref<56x128xf32, #tpu.memory_space<vmem>>, %arg8: memref<56x128xf32, #tpu.memory_space<vmem>>) attributes {dimension_semantics = [#tpu.dimension_semantics<parallel>, #tpu.dimension_semantics<parallel>, #tpu.dimension_semantics<arbitrary>], iteration_bounds = array<i64: 1, 1, 1>, scalar_prefetch = 0 : i64, scratch_operands = 1 : i64, tpu.core_type = #tpu.core_type<tc>, window_params = [{transform_indices = @transform_0, window_bounds = array<i64: 56, 128>}, {transform_indices = @transform_1, window_bounds = array<i64: 128, 128>}, {transform_indices = @transform_2, window_bounds = array<i64: 1, 128>}, {transform_indices = @transform_3, window_bounds = array<i64: 56, 128>}, {transform_indices = @transform_4, window_bounds = array<i64: 56, 128>}]} {
    %c0 = arith.constant 0 : index
    %c0_0 = arith.constant 0 : index
    %0 = vector.load %arg3[%c0, %c0_0] : memref<56x128xf32, #tpu.memory_space<vmem>>, vector<56x128xf32>
    %1 = arith.truncf %0 : vector<56x128xf32> to vector<56x128xbf16>
    %c0_1 = arith.constant 0 : index
    %c0_2 = arith.constant 0 : index
    %2 = vector.load %arg4[%c0_1, %c0_2] : memref<128x128xf32, #tpu.memory_space<vmem>>, vector<128x128xf32>
    %3 = arith.truncf %2 : vector<128x128xf32> to vector<128x128xbf16>
    %c0_i32 = arith.constant 0 : i32
    %4 = arith.cmpi eq, %arg2, %c0_i32 : i32
    %5 = arith.extui %4 : i1 to i32
    %c0_i32_3 = arith.constant 0 : i32
    %6 = arith.cmpi ne, %5, %c0_i32_3 : i32
    scf.if %6 {
      %cst_10 = arith.constant 0.000000e+00 : f32
      %14 = vector.broadcast %cst_10 : f32 to vector<56x128xf32>
      %c0_11 = arith.constant 0 : index
      %c0_12 = arith.constant 0 : index
      %15 = vector.load %arg8[%c0_11, %c0_12] : memref<56x128xf32, #tpu.memory_space<vmem>>, vector<56x128xf32>
      tpu.vector_store %arg8[%c0_11, %c0_12], %14 {strides = array<i32>} : memref<56x128xf32, #tpu.memory_space<vmem>>, vector<56x128xf32>,
    } else {
    }
    %c0_4 = arith.constant 0 : index
    %c0_5 = arith.constant 0 : index
    %7 = vector.load %arg8[%c0_4, %c0_5] : memref<56x128xf32, #tpu.memory_space<vmem>>, vector<56x128xf32>
    %cst = arith.constant dense<0.000000e+00> : vector<56x128xf32>
    %8 = tpu.matmul %1, %3, %cst {dimension_numbers = #tpu.dot_dimension_numbers<[1], [0], [0], [1], [0, 0, 1, 1], [], []>} : vector<56x128xbf16>, vector<128x128xbf16>, vector<56x128xf32> -> vector<56x128xf32>
    %9 = arith.addf %7, %8 : vector<56x128xf32>
    %c0_6 = arith.constant 0 : index
    %c0_7 = arith.constant 0 : index
    %10 = vector.load %arg8[%c0_6, %c0_7] : memref<56x128xf32, #tpu.memory_space<vmem>>, vector<56x128xf32>
    tpu.vector_store %arg8[%c0_6, %c0_7], %9 {strides = array<i32>} : memref<56x128xf32, #tpu.memory_space<vmem>>, vector<56x128xf32>,
    %c0_i32_8 = arith.constant 0 : i32
    %11 = arith.cmpi eq, %arg2, %c0_i32_8 : i32
    %12 = arith.extui %11 : i1 to i32
    %c0_i32_9 = arith.constant 0 : i32
    %13 = arith.cmpi ne, %12, %c0_i32_9 : i32
    scf.if %13 {
      %c0_10 = arith.constant 0 : index
      %c0_11 = arith.constant 0 : index
      %14 = vector.load %arg8[%c0_10, %c0_11] : memref<56x128xf32, #tpu.memory_space<vmem>>, vector<56x128xf32>
      %c0_12 = arith.constant 0 : index
      %c0_13 = arith.constant 0 : index
      %15 = vector.load %arg5[%c0_12, %c0_13] : memref<1x128xf32, #tpu.memory_space<vmem>>, vector<1x128xf32>
      %16 = vector.broadcast %15 : vector<1x128xf32> to vector<56x128xf32>
      %17 = arith.addf %14, %16 : vector<56x128xf32>
      %c0_14 = arith.constant 0 : index
      %c0_15 = arith.constant 0 : index
      %18 = vector.load %arg6[%c0_14, %c0_15] : memref<56x128xf32, #tpu.memory_space<vmem>>, vector<56x128xf32>
      %19 = arith.addf %17, %18 : vector<56x128xf32>
      %c0_16 = arith.constant 0 : index
      %c0_17 = arith.constant 0 : index
      %20 = vector.load %arg7[%c0_16, %c0_17] : memref<56x128xf32, #tpu.memory_space<vmem>>, vector<56x128xf32>
      tpu.vector_store %arg7[%c0_16, %c0_17], %19 {strides = array<i32>} : memref<56x128xf32, #tpu.memory_space<vmem>>, vector<56x128xf32>,
    } else {
    }
    return
  }
  func.func @transform_0(%arg0: i32, %arg1: i32, %arg2: i32) -> (i32, i32) {
    %c0_i32 = arith.constant 0 : i32
    return %arg0, %arg2 : i32, i32
  }
  func.func @transform_1(%arg0: i32, %arg1: i32, %arg2: i32) -> (i32, i32) {
    %c0_i32 = arith.constant 0 : i32
    return %arg2, %arg1 : i32, i32
  }
  func.func @transform_2(%arg0: i32, %arg1: i32, %arg2: i32) -> (i32, i32) {
    %c0_i32 = arith.constant 0 : i32
    %c0_i32_0 = arith.constant 0 : i32
    return %c0_i32, %arg1 : i32, i32
  }
  func.func @transform_3(%arg0: i32, %arg1: i32, %arg2: i32) -> (i32, i32) {
    %c0_i32 = arith.constant 0 : i32
    return %arg0, %arg1 : i32, i32
  }
  func.func @transform_4(%arg0: i32, %arg1: i32, %arg2: i32) -> (i32, i32) {
    %c0_i32 = arith.constant 0 : i32
    return %arg0, %arg1 : i32, i32
  }
}

module attributes {stable_mosaic.version = 11 : i64} {
  func.func @_linear_kernel(%arg0: i32, %arg1: i32, %arg2: i32, %arg3: memref<56x32xf32, #tpu.memory_space<vmem>>, %arg4: memref<32x128xf32, #tpu.memory_space<vmem>>, %arg5: memref<1x128xf32, #tpu.memory_space<vmem>>, %arg6: memref<1x32xf32, #tpu.memory_space<vmem>>, %arg7: memref<1x32xf32, #tpu.memory_space<vmem>>, %arg8: memref<56x128xf32, #tpu.memory_space<vmem>>, %arg9: memref<56x128xf32, #tpu.memory_space<vmem>>) attributes {dimension_semantics = [#tpu.dimension_semantics<parallel>, #tpu.dimension_semantics<parallel>, #tpu.dimension_semantics<arbitrary>], iteration_bounds = array<i64: 1, 1, 1>, scalar_prefetch = 0 : i64, scratch_operands = 1 : i64, tpu.core_type = #tpu.core_type<tc>, window_params = [{transform_indices = @transform_0, window_bounds = array<i64: 56, 32>}, {transform_indices = @transform_1, window_bounds = array<i64: 32, 128>}, {transform_indices = @transform_2, window_bounds = array<i64: 1, 128>}, {pipeline_mode = #tpu.pipeline_mode<synchronous>, transform_indices = @transform_3, window_bounds = array<i64: 1, 32>}, {pipeline_mode = #tpu.pipeline_mode<synchronous>, transform_indices = @transform_4, window_bounds = array<i64: 1, 32>}, {transform_indices = @transform_5, window_bounds = array<i64: 56, 128>}]} {
    %c0 = arith.constant 0 : index
    %c0_0 = arith.constant 0 : index
    %0 = vector.load %arg3[%c0, %c0_0] : memref<56x32xf32, #tpu.memory_space<vmem>>, vector<56x32xf32>
    %cst = arith.constant dense<0.000000e+00> : vector<56xf32>
    %1 = vector.multi_reduction <add>, %0, %cst [1] : vector<56x32xf32> to vector<56xf32>
    %2 = vector.shape_cast %1 : vector<56xf32> to vector<56x1xf32>
    %cst_1 = arith.constant 3.200000e+01 : f32
    %3 = vector.broadcast %cst_1 : f32 to vector<56x1xf32>
    %4 = arith.divf %2, %3 : vector<56x1xf32>
    %5 = vector.broadcast %4 : vector<56x1xf32> to vector<56x32xf32>
    %6 = arith.subf %0, %5 : vector<56x32xf32>
    %7 = arith.mulf %6, %6 : vector<56x32xf32>
    %cst_2 = arith.constant dense<0.000000e+00> : vector<56xf32>
    %8 = vector.multi_reduction <add>, %7, %cst_2 [1] : vector<56x32xf32> to vector<56xf32>
    %9 = vector.shape_cast %8 : vector<56xf32> to vector<56x1xf32>
    %cst_3 = arith.constant 3.200000e+01 : f32
    %10 = vector.broadcast %cst_3 : f32 to vector<56x1xf32>
    %11 = arith.divf %9, %10 : vector<56x1xf32>
    %12 = vector.broadcast %4 : vector<56x1xf32> to vector<56x32xf32>
    %13 = arith.subf %0, %12 : vector<56x32xf32>
    %cst_4 = arith.constant 9.99999974E-6 : f32
    %14 = vector.broadcast %cst_4 : f32 to vector<56x1xf32>
    %15 = arith.addf %11, %14 : vector<56x1xf32>
    %16 = math.rsqrt %15 : vector<56x1xf32>
    %17 = vector.broadcast %16 : vector<56x1xf32> to vector<56x32xf32>
    %18 = arith.mulf %13, %17 : vector<56x32xf32>
    %c0_5 = arith.constant 0 : index
    %c0_6 = arith.constant 0 : index
    %19 = vector.load %arg6[%c0_5, %c0_6] : memref<1x32xf32, #tpu.memory_space<vmem>>, vector<1x32xf32>
    %20 = vector.broadcast %19 : vector<1x32xf32> to vector<56x32xf32>
    %21 = arith.mulf %18, %20 : vector<56x32xf32>
    %c0_7 = arith.constant 0 : index
    %c0_8 = arith.constant 0 : index
    %22 = vector.load %arg7[%c0_7, %c0_8] : memref<1x32xf32, #tpu.memory_space<vmem>>, vector<1x32xf32>
    %23 = vector.broadcast %22 : vector<1x32xf32> to vector<56x32xf32>
    %24 = arith.addf %21, %23 : vector<56x32xf32>
    %25 = arith.truncf %24 : vector<56x32xf32> to vector<56x32xbf16>
    %c0_9 = arith.constant 0 : index
    %c0_10 = arith.constant 0 : index
    %26 = vector.load %arg4[%c0_9, %c0_10] : memref<32x128xf32, #tpu.memory_space<vmem>>, vector<32x128xf32>
    %27 = arith.truncf %26 : vector<32x128xf32> to vector<32x128xbf16>
    %c0_i32 = arith.constant 0 : i32
    %28 = arith.cmpi eq, %arg2, %c0_i32 : i32
    %29 = arith.extui %28 : i1 to i32
    %c0_i32_11 = arith.constant 0 : i32
    %30 = arith.cmpi ne, %29, %c0_i32_11 : i32
    scf.if %30 {
      %cst_19 = arith.constant 0.000000e+00 : f32
      %38 = vector.broadcast %cst_19 : f32 to vector<56x128xf32>
      %c0_20 = arith.constant 0 : index
      %c0_21 = arith.constant 0 : index
      %39 = vector.load %arg9[%c0_20, %c0_21] : memref<56x128xf32, #tpu.memory_space<vmem>>, vector<56x128xf32>
      tpu.vector_store %arg9[%c0_20, %c0_21], %38 {strides = array<i32>} : memref<56x128xf32, #tpu.memory_space<vmem>>, vector<56x128xf32>,
    } else {
    }
    %c0_12 = arith.constant 0 : index
    %c0_13 = arith.constant 0 : index
    %31 = vector.load %arg9[%c0_12, %c0_13] : memref<56x128xf32, #tpu.memory_space<vmem>>, vector<56x128xf32>
    %cst_14 = arith.constant dense<0.000000e+00> : vector<56x128xf32>
    %32 = tpu.matmul %25, %27, %cst_14 {dimension_numbers = #tpu.dot_dimension_numbers<[1], [0], [0], [1], [0, 0, 1, 1], [], []>} : vector<56x32xbf16>, vector<32x128xbf16>, vector<56x128xf32> -> vector<56x128xf32>
    %33 = arith.addf %31, %32 : vector<56x128xf32>
    %c0_15 = arith.constant 0 : index
    %c0_16 = arith.constant 0 : index
    %34 = vector.load %arg9[%c0_15, %c0_16] : memref<56x128xf32, #tpu.memory_space<vmem>>, vector<56x128xf32>
    tpu.vector_store %arg9[%c0_15, %c0_16], %33 {strides = array<i32>} : memref<56x128xf32, #tpu.memory_space<vmem>>, vector<56x128xf32>,
    %c0_i32_17 = arith.constant 0 : i32
    %35 = arith.cmpi eq, %arg2, %c0_i32_17 : i32
    %36 = arith.extui %35 : i1 to i32
    %c0_i32_18 = arith.constant 0 : i32
    %37 = arith.cmpi ne, %36, %c0_i32_18 : i32
    scf.if %37 {
      %c0_19 = arith.constant 0 : index
      %c0_20 = arith.constant 0 : index
      %38 = vector.load %arg9[%c0_19, %c0_20] : memref<56x128xf32, #tpu.memory_space<vmem>>, vector<56x128xf32>
      %c0_21 = arith.constant 0 : index
      %c0_22 = arith.constant 0 : index
      %39 = vector.load %arg5[%c0_21, %c0_22] : memref<1x128xf32, #tpu.memory_space<vmem>>, vector<1x128xf32>
      %40 = vector.broadcast %39 : vector<1x128xf32> to vector<56x128xf32>
      %41 = arith.addf %38, %40 : vector<56x128xf32>
      %cst_23 = arith.constant 1.702000e+00 : f32
      %42 = vector.broadcast %cst_23 : f32 to vector<56x128xf32>
      %43 = arith.mulf %42, %41 : vector<56x128xf32>
      %44 = arith.negf %43 : vector<56x128xf32>
      %45 = math.exp %44 : vector<56x128xf32>
      %cst_24 = arith.constant 1.000000e+00 : f32
      %46 = vector.broadcast %cst_24 : f32 to vector<56x128xf32>
      %47 = arith.addf %46, %45 : vector<56x128xf32>
      %48 = arith.divf %46, %47 : vector<56x128xf32>
      %49 = arith.mulf %41, %48 : vector<56x128xf32>
      %c0_25 = arith.constant 0 : index
      %c0_26 = arith.constant 0 : index
      %50 = vector.load %arg8[%c0_25, %c0_26] : memref<56x128xf32, #tpu.memory_space<vmem>>, vector<56x128xf32>
      tpu.vector_store %arg8[%c0_25, %c0_26], %49 {strides = array<i32>} : memref<56x128xf32, #tpu.memory_space<vmem>>, vector<56x128xf32>,
    } else {
    }
    return
  }
  func.func @transform_0(%arg0: i32, %arg1: i32, %arg2: i32) -> (i32, i32) {
    %c0_i32 = arith.constant 0 : i32
    return %arg0, %arg2 : i32, i32
  }
  func.func @transform_1(%arg0: i32, %arg1: i32, %arg2: i32) -> (i32, i32) {
    %c0_i32 = arith.constant 0 : i32
    return %arg2, %arg1 : i32, i32
  }
  func.func @transform_2(%arg0: i32, %arg1: i32, %arg2: i32) -> (i32, i32) {
    %c0_i32 = arith.constant 0 : i32
    %c0_i32_0 = arith.constant 0 : i32
    return %c0_i32, %arg1 : i32, i32
  }
  func.func @transform_3(%arg0: i32, %arg1: i32, %arg2: i32) -> (i32, i32) {
    %c0_i32 = arith.constant 0 : i32
    %c0_i32_0 = arith.constant 0 : i32
    %c0_i32_1 = arith.constant 0 : i32
    return %c0_i32, %c0_i32_0 : i32, i32
  }
  func.func @transform_4(%arg0: i32, %arg1: i32, %arg2: i32) -> (i32, i32) {
    %c0_i32 = arith.constant 0 : i32
    %c0_i32_0 = arith.constant 0 : i32
    %c0_i32_1 = arith.constant 0 : i32
    return %c0_i32, %c0_i32_0 : i32, i32
  }
  func.func @transform_5(%arg0: i32, %arg1: i32, %arg2: i32) -> (i32, i32) {
    %c0_i32 = arith.constant 0 : i32
    return %arg0, %arg1 : i32, i32
  }
}

module attributes {stable_mosaic.version = 11 : i64} {
  func.func @_layernorm_kernel(%arg0: i32, %arg1: memref<8x32xf32, #tpu.memory_space<vmem>>, %arg2: memref<1x32xf32, #tpu.memory_space<vmem>>, %arg3: memref<1x32xf32, #tpu.memory_space<vmem>>, %arg4: memref<8x32xf32, #tpu.memory_space<vmem>>) attributes {dimension_semantics = [#tpu.dimension_semantics<parallel>], iteration_bounds = array<i64: 1>, scalar_prefetch = 0 : i64, scratch_operands = 0 : i64, tpu.core_type = #tpu.core_type<tc>, window_params = [{transform_indices = @transform_0, window_bounds = array<i64: 8, 32>}, {pipeline_mode = #tpu.pipeline_mode<synchronous>, transform_indices = @transform_1, window_bounds = array<i64: 1, 32>}, {pipeline_mode = #tpu.pipeline_mode<synchronous>, transform_indices = @transform_2, window_bounds = array<i64: 1, 32>}, {transform_indices = @transform_3, window_bounds = array<i64: 8, 32>}]} {
    %c0 = arith.constant 0 : index
    %c0_0 = arith.constant 0 : index
    %0 = vector.load %arg1[%c0, %c0_0] : memref<8x32xf32, #tpu.memory_space<vmem>>, vector<8x32xf32>
    %cst = arith.constant dense<0.000000e+00> : vector<8xf32>
    %1 = vector.multi_reduction <add>, %0, %cst [1] : vector<8x32xf32> to vector<8xf32>
    %2 = vector.shape_cast %1 : vector<8xf32> to vector<8x1xf32>
    %cst_1 = arith.constant 3.200000e+01 : f32
    %3 = vector.broadcast %cst_1 : f32 to vector<8x1xf32>
    %4 = arith.divf %2, %3 : vector<8x1xf32>
    %5 = vector.broadcast %4 : vector<8x1xf32> to vector<8x32xf32>
    %6 = arith.subf %0, %5 : vector<8x32xf32>
    %7 = arith.mulf %6, %6 : vector<8x32xf32>
    %cst_2 = arith.constant dense<0.000000e+00> : vector<8xf32>
    %8 = vector.multi_reduction <add>, %7, %cst_2 [1] : vector<8x32xf32> to vector<8xf32>
    %9 = vector.shape_cast %8 : vector<8xf32> to vector<8x1xf32>
    %cst_3 = arith.constant 3.200000e+01 : f32
    %10 = vector.broadcast %cst_3 : f32 to vector<8x1xf32>
    %11 = arith.divf %9, %10 : vector<8x1xf32>
    %12 = vector.broadcast %4 : vector<8x1xf32> to vector<8x32xf32>
    %13 = arith.subf %0, %12 : vector<8x32xf32>
    %cst_4 = arith.constant 9.99999974E-6 : f32
    %14 = vector.broadcast %cst_4 : f32 to vector<8x1xf32>
    %15 = arith.addf %11, %14 : vector<8x1xf32>
    %16 = math.rsqrt %15 : vector<8x1xf32>
    %17 = vector.broadcast %16 : vector<8x1xf32> to vector<8x32xf32>
    %18 = arith.mulf %13, %17 : vector<8x32xf32>
    %c0_5 = arith.constant 0 : index
    %c0_6 = arith.constant 0 : index
    %19 = vector.load %arg2[%c0_5, %c0_6] : memref<1x32xf32, #tpu.memory_space<vmem>>, vector<1x32xf32>
    %20 = vector.broadcast %19 : vector<1x32xf32> to vector<8x32xf32>
    %21 = arith.mulf %18, %20 : vector<8x32xf32>
    %c0_7 = arith.constant 0 : index
    %c0_8 = arith.constant 0 : index
    %22 = vector.load %arg3[%c0_7, %c0_8] : memref<1x32xf32, #tpu.memory_space<vmem>>, vector<1x32xf32>
    %23 = vector.broadcast %22 : vector<1x32xf32> to vector<8x32xf32>
    %24 = arith.addf %21, %23 : vector<8x32xf32>
    %c0_9 = arith.constant 0 : index
    %c0_10 = arith.constant 0 : index
    %25 = vector.load %arg4[%c0_9, %c0_10] : memref<8x32xf32, #tpu.memory_space<vmem>>, vector<8x32xf32>
    tpu.vector_store %arg4[%c0_9, %c0_10], %24 {strides = array<i32>} : memref<8x32xf32, #tpu.memory_space<vmem>>, vector<8x32xf32>,
    return
  }
  func.func @transform_0(%arg0: i32) -> (i32, i32) {
    %c0_i32 = arith.constant 0 : i32
    %c0_i32_0 = arith.constant 0 : i32
    return %arg0, %c0_i32 : i32, i32
  }
  func.func @transform_1(%arg0: i32) -> (i32, i32) {
    %c0_i32 = arith.constant 0 : i32
    %c0_i32_0 = arith.constant 0 : i32
    %c0_i32_1 = arith.constant 0 : i32
    return %c0_i32, %c0_i32_0 : i32, i32
  }
  func.func @transform_2(%arg0: i32) -> (i32, i32) {
    %c0_i32 = arith.constant 0 : i32
    %c0_i32_0 = arith.constant 0 : i32
    %c0_i32_1 = arith.constant 0 : i32
    return %c0_i32, %c0_i32_0 : i32, i32
  }
  func.func @transform_3(%arg0: i32) -> (i32, i32) {
    %c0_i32 = arith.constant 0 : i32
    %c0_i32_0 = arith.constant 0 : i32
    return %arg0, %c0_i32 : i32, i32
  }
}

module attributes {stable_mosaic.version = 11 : i64} {
  func.func @_linear_kernel(%arg0: i32, %arg1: i32, %arg2: i32, %arg3: memref<8x128xf32, #tpu.memory_space<vmem>>, %arg4: memref<128x128xf32, #tpu.memory_space<vmem>>, %arg5: memref<1x128xf32, #tpu.memory_space<vmem>>, %arg6: memref<8x128xf32, #tpu.memory_space<vmem>>, %arg7: memref<8x128xf32, #tpu.memory_space<vmem>>) attributes {dimension_semantics = [#tpu.dimension_semantics<parallel>, #tpu.dimension_semantics<parallel>, #tpu.dimension_semantics<arbitrary>], iteration_bounds = array<i64: 1, 1, 1>, scalar_prefetch = 0 : i64, scratch_operands = 1 : i64, tpu.core_type = #tpu.core_type<tc>, window_params = [{transform_indices = @transform_0, window_bounds = array<i64: 8, 128>}, {transform_indices = @transform_1, window_bounds = array<i64: 128, 128>}, {transform_indices = @transform_2, window_bounds = array<i64: 1, 128>}, {transform_indices = @transform_3, window_bounds = array<i64: 8, 128>}]} {
    %c0 = arith.constant 0 : index
    %c0_0 = arith.constant 0 : index
    %0 = vector.load %arg3[%c0, %c0_0] : memref<8x128xf32, #tpu.memory_space<vmem>>, vector<8x128xf32>
    %1 = arith.truncf %0 : vector<8x128xf32> to vector<8x128xbf16>
    %c0_1 = arith.constant 0 : index
    %c0_2 = arith.constant 0 : index
    %2 = vector.load %arg4[%c0_1, %c0_2] : memref<128x128xf32, #tpu.memory_space<vmem>>, vector<128x128xf32>
    %3 = arith.truncf %2 : vector<128x128xf32> to vector<128x128xbf16>
    %c0_i32 = arith.constant 0 : i32
    %4 = arith.cmpi eq, %arg2, %c0_i32 : i32
    %5 = arith.extui %4 : i1 to i32
    %c0_i32_3 = arith.constant 0 : i32
    %6 = arith.cmpi ne, %5, %c0_i32_3 : i32
    scf.if %6 {
      %cst_10 = arith.constant 0.000000e+00 : f32
      %14 = vector.broadcast %cst_10 : f32 to vector<8x128xf32>
      %c0_11 = arith.constant 0 : index
      %c0_12 = arith.constant 0 : index
      %15 = vector.load %arg7[%c0_11, %c0_12] : memref<8x128xf32, #tpu.memory_space<vmem>>, vector<8x128xf32>
      tpu.vector_store %arg7[%c0_11, %c0_12], %14 {strides = array<i32>} : memref<8x128xf32, #tpu.memory_space<vmem>>, vector<8x128xf32>,
    } else {
    }
    %c0_4 = arith.constant 0 : index
    %c0_5 = arith.constant 0 : index
    %7 = vector.load %arg7[%c0_4, %c0_5] : memref<8x128xf32, #tpu.memory_space<vmem>>, vector<8x128xf32>
    %cst = arith.constant dense<0.000000e+00> : vector<8x128xf32>
    %8 = tpu.matmul %1, %3, %cst {dimension_numbers = #tpu.dot_dimension_numbers<[1], [0], [0], [1], [0, 0, 1, 1], [], []>} : vector<8x128xbf16>, vector<128x128xbf16>, vector<8x128xf32> -> vector<8x128xf32>
    %9 = arith.addf %7, %8 : vector<8x128xf32>
    %c0_6 = arith.constant 0 : index
    %c0_7 = arith.constant 0 : index
    %10 = vector.load %arg7[%c0_6, %c0_7] : memref<8x128xf32, #tpu.memory_space<vmem>>, vector<8x128xf32>
    tpu.vector_store %arg7[%c0_6, %c0_7], %9 {strides = array<i32>} : memref<8x128xf32, #tpu.memory_space<vmem>>, vector<8x128xf32>,
    %c0_i32_8 = arith.constant 0 : i32
    %11 = arith.cmpi eq, %arg2, %c0_i32_8 : i32
    %12 = arith.extui %11 : i1 to i32
    %c0_i32_9 = arith.constant 0 : i32
    %13 = arith.cmpi ne, %12, %c0_i32_9 : i32
    scf.if %13 {
      %c0_10 = arith.constant 0 : index
      %c0_11 = arith.constant 0 : index
      %14 = vector.load %arg7[%c0_10, %c0_11] : memref<8x128xf32, #tpu.memory_space<vmem>>, vector<8x128xf32>
      %c0_12 = arith.constant 0 : index
      %c0_13 = arith.constant 0 : index
      %15 = vector.load %arg5[%c0_12, %c0_13] : memref<1x128xf32, #tpu.memory_space<vmem>>, vector<1x128xf32>
      %16 = vector.broadcast %15 : vector<1x128xf32> to vector<8x128xf32>
      %17 = arith.addf %14, %16 : vector<8x128xf32>
      %c0_14 = arith.constant 0 : index
      %c0_15 = arith.constant 0 : index
      %18 = vector.load %arg6[%c0_14, %c0_15] : memref<8x128xf32, #tpu.memory_space<vmem>>, vector<8x128xf32>
      tpu.vector_store %arg6[%c0_14, %c0_15], %17 {strides = array<i32>} : memref<8x128xf32, #tpu.memory_space<vmem>>, vector<8x128xf32>,
    } else {
    }
    return
  }
  func.func @transform_0(%arg0: i32, %arg1: i32, %arg2: i32) -> (i32, i32) {
    %c0_i32 = arith.constant 0 : i32
    return %arg0, %arg2 : i32, i32
  }
  func.func @transform_1(%arg0: i32, %arg1: i32, %arg2: i32) -> (i32, i32) {
    %c0_i32 = arith.constant 0 : i32
    return %arg2, %arg1 : i32, i32
  }
  func.func @transform_2(%arg0: i32, %arg1: i32, %arg2: i32) -> (i32, i32) {
    %c0_i32 = arith.constant 0 : i32
    %c0_i32_0 = arith.constant 0 : i32
    return %c0_i32, %arg1 : i32, i32
  }
  func.func @transform_3(%arg0: i32, %arg1: i32, %arg2: i32) -> (i32, i32) {
    %c0_i32 = arith.constant 0 : i32
    return %arg0, %arg1 : i32, i32
  }
}

</mosaic_0001>

<llo_original>
// kernel: _lambda_.19
$region0: #{_lambda_.19}
  #allocation0 [shape = 'u32[]', space=smem, size = 0x4, offset = 0x4, fixed_abs, tag = 'smem constant byte address 0x4 - core index']
  #allocation1 [shape = 'u32[144,128]{1,0:T(1,128)}', space=vmem, size = 0x12000, scoped, tag = 'internal scratch']
  #allocation2 [shape = 'f32[128,128]{1,0:T(8,128)}', space=vmem, size = 0x10000, scoped, tag = 'scratch operand']
  %s0 = inlined_call_operand.vmem [shape: f32[128,128], index: 0, kind: input, shape index: {}]
  %s1 = inlined_call_operand.vmem [shape: f32[128,128], index: 1, kind: input, shape index: {}]
  %s2 = inlined_call_operand.vmem [shape: f32[128,128], index: 2, kind: output, shape index: {}]
  %s3 = sld [smem:[#allocation0]]
  $region26: #{_lambda_.19} parent=0
    _
  %s5 = ssub.s32 1, %s3
  %s6 = scalar_select 0, %s5, %s3
  // Predicated region
  $region2: #{_lambda_.19} parent=0 // pred_check
    _
  $region3: #{_lambda_.19} parent=0 // pred_check_branch
    %8 = sbr.rel (0) target = $region5
  $region4: #{_lambda_.19} parent=0 // pred_region
    _
  $region5: #{_lambda_.19} parent=0 // pred_fallthru
    _
  // Predicated region
  $region6: #{_lambda_.19} parent=0 // pred_check
    _
  $region7: #{_lambda_.19} parent=0 // pred_check_branch
    %10 = sbr.rel (0) target = $region9
  $region8: #{_lambda_.19} parent=0 // pred_region
    _
  $region9: #{_lambda_.19} parent=0 // pred_fallthru
    _
  %v12 = vld [vmem:[%s0] sm:$0xff]
  %v13 = vld [vmem:[%s0 + $0x8] sm:$0xff]
  %v14 = vld [vmem:[%s0 + $0x10] sm:$0xff]
  %v15 = vld [vmem:[%s0 + $0x18] sm:$0xff]
  %v16 = vld [vmem:[%s0 + $0x20] sm:$0xff]
  %v17 = vld [vmem:[%s0 + $0x28] sm:$0xff]
  %v18 = vld [vmem:[%s0 + $0x30] sm:$0xff]
  %v19 = vld [vmem:[%s0 + $0x38] sm:$0xff]
  %v20 = vld [vmem:[%s0 + $0x40] sm:$0xff]
  %v21 = vld [vmem:[%s0 + $0x48] sm:$0xff]
  %v22 = vld [vmem:[%s0 + $0x50] sm:$0xff]
  %v23 = vld [vmem:[%s0 + $0x58] sm:$0xff]
  %v24 = vld [vmem:[%s0 + $0x60] sm:$0xff]
  %v25 = vld [vmem:[%s0 + $0x68] sm:$0xff]
  %v26 = vld [vmem:[%s0 + $0x70] sm:$0xff]
  %v27 = vld [vmem:[%s0 + $0x78] sm:$0xff]
  %v28 = vpack.c.bf16 %v13, %v12
  %v29 = vpack.c.bf16 %v15, %v14
  %v30 = vpack.c.bf16 %v17, %v16
  %v31 = vpack.c.bf16 %v19, %v18
  %v32 = vpack.c.bf16 %v21, %v20
  %v33 = vpack.c.bf16 %v23, %v22
  %v34 = vpack.c.bf16 %v25, %v24
  %v35 = vpack.c.bf16 %v27, %v26
  %v36 = vld [vmem:[%s1] sm:$0xff]
  %v37 = vld [vmem:[%s1 + $0x8] sm:$0xff]
  %v38 = vld [vmem:[%s1 + $0x10] sm:$0xff]
  %v39 = vld [vmem:[%s1 + $0x18] sm:$0xff]
  %v40 = vld [vmem:[%s1 + $0x20] sm:$0xff]
  %v41 = vld [vmem:[%s1 + $0x28] sm:$0xff]
  %v42 = vld [vmem:[%s1 + $0x30] sm:$0xff]
  %v43 = vld [vmem:[%s1 + $0x38] sm:$0xff]
  %v44 = vld [vmem:[%s1 + $0x40] sm:$0xff]
  %v45 = vld [vmem:[%s1 + $0x48] sm:$0xff]
  %v46 = vld [vmem:[%s1 + $0x50] sm:$0xff]
  %v47 = vld [vmem:[%s1 + $0x58] sm:$0xff]
  %v48 = vld [vmem:[%s1 + $0x60] sm:$0xff]
  %v49 = vld [vmem:[%s1 + $0x68] sm:$0xff]
  %v50 = vld [vmem:[%s1 + $0x70] sm:$0xff]
  %v51 = vld [vmem:[%s1 + $0x78] sm:$0xff]
  %v52 = vpack.c.bf16 %v37, %v36
  %v53 = vpack.c.bf16 %v39, %v38
  %v54 = vpack.c.bf16 %v41, %v40
  %v55 = vpack.c.bf16 %v43, %v42
  %v56 = vpack.c.bf16 %v45, %v44
  %v57 = vpack.c.bf16 %v47, %v46
  %v58 = vpack.c.bf16 %v49, %v48
  %v59 = vpack.c.bf16 %v51, %v50
  %p60 = scmp.eq.s32.totalorder 0, 0
  // Predicated region
  $region10: #{_lambda_.19} parent=0 // pred_check
    %p61 = pneg %p60
  $region11: #{_lambda_.19} parent=0 // pred_check_branch
    %63 = sbr.rel (%p61) target = $region13
  $region12: #{_lambda_.19} parent=0 // pred_region
    %64 = vst [vmem:[#allocation2] sm:$0xff] 0.0
    %65 = vst [vmem:[#allocation2 + $0x8] sm:$0xff] 0.0
    %66 = vst [vmem:[#allocation2 + $0x10] sm:$0xff] 0.0
    %67 = vst [vmem:[#allocation2 + $0x18] sm:$0xff] 0.0
    %68 = vst [vmem:[#allocation2 + $0x20] sm:$0xff] 0.0
    %69 = vst [vmem:[#allocation2 + $0x28] sm:$0xff] 0.0
    %70 = vst [vmem:[#allocation2 + $0x30] sm:$0xff] 0.0
    %71 = vst [vmem:[#allocation2 + $0x38] sm:$0xff] 0.0
    %72 = vst [vmem:[#allocation2 + $0x40] sm:$0xff] 0.0
    %73 = vst [vmem:[#allocation2 + $0x48] sm:$0xff] 0.0
    %74 = vst [vmem:[#allocation2 + $0x50] sm:$0xff] 0.0
    %75 = vst [vmem:[#allocation2 + $0x58] sm:$0xff] 0.0
    %76 = vst [vmem:[#allocation2 + $0x60] sm:$0xff] 0.0
    %77 = vst [vmem:[#allocation2 + $0x68] sm:$0xff] 0.0
    %78 = vst [vmem:[#allocation2 + $0x70] sm:$0xff] 0.0
    %79 = vst [vmem:[#allocation2 + $0x78] sm:$0xff] 0.0
  $region13: #{_lambda_.19} parent=0 // pred_fallthru
    _
  %v80 = vld [vmem:[#allocation2] sm:$0xff]
  %v81 = vld [vmem:[#allocation2 + $0x8] sm:$0xff]
  %v82 = vld [vmem:[#allocation2 + $0x10] sm:$0xff]
  %v83 = vld [vmem:[#allocation2 + $0x18] sm:$0xff]
  %v84 = vld [vmem:[#allocation2 + $0x20] sm:$0xff]
  %v85 = vld [vmem:[#allocation2 + $0x28] sm:$0xff]
  %v86 = vld [vmem:[#allocation2 + $0x30] sm:$0xff]
  %v87 = vld [vmem:[#allocation2 + $0x38] sm:$0xff]
  %v88 = vld [vmem:[#allocation2 + $0x40] sm:$0xff]
  %v89 = vld [vmem:[#allocation2 + $0x48] sm:$0xff]
  %v90 = vld [vmem:[#allocation2 + $0x50] sm:$0xff]
  %v91 = vld [vmem:[#allocation2 + $0x58] sm:$0xff]
  %v92 = vld [vmem:[#allocation2 + $0x60] sm:$0xff]
  %v93 = vld [vmem:[#allocation2 + $0x68] sm:$0xff]
  %v94 = vld [vmem:[#allocation2 + $0x70] sm:$0xff]
  %v95 = vld [vmem:[#allocation2 + $0x78] sm:$0xff]
  %96 = vmatprep.subr.bf16.mxu0 0
  %97 = vmatpush1.bf16.msra.mxu0 %v59
  %98 = vmatprep.subr.bf16.mxu0 0
  %99 = vmatpush1.bf16.msra.mxu0 %v58
  %100 = vmatprep.subr.bf16.mxu0 0
  %101 = vmatpush1.bf16.msra.mxu0 %v57
  %102 = vmatprep.subr.bf16.mxu0 0
  %103 = vmatpush1.bf16.msra.mxu0 %v56
  %104 = vmatprep.subr.bf16.mxu0 0
  %105 = vmatpush1.bf16.msra.mxu0 %v55
  %106 = vmatprep.subr.bf16.mxu0 0
  %107 = vmatpush1.bf16.msra.mxu0 %v54
  %108 = vmatprep.subr.bf16.mxu0 0
  %109 = vmatpush1.bf16.msra.mxu0 %v53
  %110 = vmatprep.subr.bf16.mxu0 0
  %111 = vmatpush1.bf16.msra.mxu0 %v52
  %112 = vmatprep.subr.bf16.mxu0 0
  %113 = vmatpush2.bf16.msra.mxu0 0
  %114 = vmatprep.subr.bf16.mxu0 0
  %115 = vmatpush2.bf16.msra.mxu0 0
  %116 = vmatprep.subr.bf16.mxu0 0
  %117 = vmatpush2.bf16.msra.mxu0 0
  %118 = vmatprep.subr.bf16.mxu0 0
  %119 = vmatpush2.bf16.msra.mxu0 0
  %120 = vmatprep.subr.bf16.mxu0 0
  %121 = vmatpush2.bf16.msra.mxu0 0
  %122 = vmatprep.subr.bf16.mxu0 0
  %123 = vmatpush2.bf16.msra.mxu0 0
  %124 = vmatprep.subr.bf16.mxu0 0
  %125 = vmatpush2.bf16.msra.mxu0 0
  %126 = vmatprep.subr.bf16.mxu0 0
  %127 = vmatpush2.bf16.msra.mxu0 0
  %128 = vmatprep.mubr.bf16.mxu0 0
  %129 = vmatmul.mubr.bf16.gmra.mxu0 %v28
  %v130 = vpop.f32.mrf.mxu0
  %v131 = vadd.f32 0.0, %v130
  %v132 = vpop.f32.mrf.mxu0
  %v133 = vpop.f32.mrf.mxu0
  %v134 = vadd.f32 0.0, %v133
  %v135 = vpop.f32.mrf.mxu0
  %136 = vmatprep.mubr.bf16.mxu0 0
  %137 = vmatmul.mubr.bf16.gmra.mxu0 %v29
  %v138 = vpop.f32.mrf.mxu0
  %v139 = vadd.f32 0.0, %v138
  %v140 = vpop.f32.mrf.mxu0
  %v141 = vpop.f32.mrf.mxu0
  %v142 = vadd.f32 0.0, %v141
  %v143 = vpop.f32.mrf.mxu0
  %144 = vmatprep.mubr.bf16.mxu0 0
  %145 = vmatmul.mubr.bf16.gmra.mxu0 %v30
  %v146 = vpop.f32.mrf.mxu0
  %v147 = vadd.f32 0.0, %v146
  %v148 = vpop.f32.mrf.mxu0
  %v149 = vpop.f32.mrf.mxu0
  %v150 = vadd.f32 0.0, %v149
  %v151 = vpop.f32.mrf.mxu0
  %152 = vmatprep.mubr.bf16.mxu0 0
  %153 = vmatmul.mubr.bf16.gmra.mxu0 %v31
  %v154 = vpop.f32.mrf.mxu0
  %v155 = vadd.f32 0.0, %v154
  %v156 = vpop.f32.mrf.mxu0
  %v157 = vpop.f32.mrf.mxu0
  %v158 = vadd.f32 0.0, %v157
  %v159 = vpop.f32.mrf.mxu0
  %160 = vmatprep.mubr.bf16.mxu0 0
  %161 = vmatmul.mubr.bf16.gmra.mxu0 %v32
  %v162 = vpop.f32.mrf.mxu0
  %v163 = vadd.f32 0.0, %v162
  %v164 = vpop.f32.mrf.mxu0
  %v165 = vpop.f32.mrf.mxu0
  %v166 = vadd.f32 0.0, %v165
  %v167 = vpop.f32.mrf.mxu0
  %168 = vmatprep.mubr.bf16.mxu0 0
  %169 = vmatmul.mubr.bf16.gmra.mxu0 %v33
  %v170 = vpop.f32.mrf.mxu0
  %v171 = vadd.f32 0.0, %v170
  %v172 = vpop.f32.mrf.mxu0
  %v173 = vpop.f32.mrf.mxu0
  %v174 = vadd.f32 0.0, %v173
  %v175 = vpop.f32.mrf.mxu0
  %176 = vmatprep.mubr.bf16.mxu0 0
  %177 = vmatmul.mubr.bf16.gmra.mxu0 %v34
  %v178 = vpop.f32.mrf.mxu0
  %v179 = vadd.f32 0.0, %v178
  %v180 = vpop.f32.mrf.mxu0
  %v181 = vpop.f32.mrf.mxu0
  %v182 = vadd.f32 0.0, %v181
  %v183 = vpop.f32.mrf.mxu0
  %184 = vmatprep.mubr.bf16.mxu0 0
  %185 = vmatmul.mubr.bf16.gmra.mxu0 %v35
  %v186 = vpop.f32.mrf.mxu0
  %v187 = vadd.f32 0.0, %v186
  %v188 = vpop.f32.mrf.mxu0
  %v189 = vpop.f32.mrf.mxu0
  %v190 = vadd.f32 0.0, %v189
  %v191 = vpop.f32.mrf.mxu0
  %192 = vdwg.mxu0
  %v193 = vadd.f32 %v80, %v131
  %v194 = vadd.f32 %v81, %v134
  %v195 = vadd.f32 %v82, %v139
  %v196 = vadd.f32 %v83, %v142
  %v197 = vadd.f32 %v84, %v147
  %v198 = vadd.f32 %v85, %v150
  %v199 = vadd.f32 %v86, %v155
  %v200 = vadd.f32 %v87, %v158
  %v201 = vadd.f32 %v88, %v163
  %v202 = vadd.f32 %v89, %v166
  %v203 = vadd.f32 %v90, %v171
  %v204 = vadd.f32 %v91, %v174
  %v205 = vadd.f32 %v92, %v179
  %v206 = vadd.f32 %v93, %v182
  %v207 = vadd.f32 %v94, %v187
  %v208 = vadd.f32 %v95, %v190
  %209 = vst [vmem:[#allocation2] sm:$0xff] %v193
  %210 = vst [vmem:[#allocation2 + $0x8] sm:$0xff] %v194
  %211 = vst [vmem:[#allocation2 + $0x10] sm:$0xff] %v195
  %212 = vst [vmem:[#allocation2 + $0x18] sm:$0xff] %v196
  %213 = vst [vmem:[#allocation2 + $0x20] sm:$0xff] %v197
  %214 = vst [vmem:[#allocation2 + $0x28] sm:$0xff] %v198
  %215 = vst [vmem:[#allocation2 + $0x30] sm:$0xff] %v199
  %216 = vst [vmem:[#allocation2 + $0x38] sm:$0xff] %v200
  %217 = vst [vmem:[#allocation2 + $0x40] sm:$0xff] %v201
  %218 = vst [vmem:[#allocation2 + $0x48] sm:$0xff] %v202
  %219 = vst [vmem:[#allocation2 + $0x50] sm:$0xff] %v203
  %220 = vst [vmem:[#allocation2 + $0x58] sm:$0xff] %v204
  %221 = vst [vmem:[#allocation2 + $0x60] sm:$0xff] %v205
  %222 = vst [vmem:[#allocation2 + $0x68] sm:$0xff] %v206
  %223 = vst [vmem:[#allocation2 + $0x70] sm:$0xff] %v207
  %224 = vst [vmem:[#allocation2 + $0x78] sm:$0xff] %v208
  // Predicated region
  $region14: #{_lambda_.19} parent=0 // pred_check
    %p225 = pneg %p60
  $region15: #{_lambda_.19} parent=0 // pred_check_branch
    %227 = sbr.rel (%p225) target = $region17
  $region16: #{_lambda_.19} parent=0 // pred_region
    %v228 = vld [vmem:[#allocation2] sm:$0xff]
    %v229 = vld [vmem:[#allocation2 + $0x8] sm:$0xff]
    %v230 = vld [vmem:[#allocation2 + $0x10] sm:$0xff]
    %v231 = vld [vmem:[#allocation2 + $0x18] sm:$0xff]
    %v232 = vld [vmem:[#allocation2 + $0x20] sm:$0xff]
    %v233 = vld [vmem:[#allocation2 + $0x28] sm:$0xff]
    %v234 = vld [vmem:[#allocation2 + $0x30] sm:$0xff]
    %v235 = vld [vmem:[#allocation2 + $0x38] sm:$0xff]
    %v236 = vld [vmem:[#allocation2 + $0x40] sm:$0xff]
    %v237 = vld [vmem:[#allocation2 + $0x48] sm:$0xff]
    %v238 = vld [vmem:[#allocation2 + $0x50] sm:$0xff]
    %v239 = vld [vmem:[#allocation2 + $0x58] sm:$0xff]
    %v240 = vld [vmem:[#allocation2 + $0x60] sm:$0xff]
    %v241 = vld [vmem:[#allocation2 + $0x68] sm:$0xff]
    %v242 = vld [vmem:[#allocation2 + $0x70] sm:$0xff]
    %v243 = vld [vmem:[#allocation2 + $0x78] sm:$0xff]
    %244 = vst [vmem:[%s2] sm:$0xff] %v228
    %245 = vst [vmem:[%s2 + $0x8] sm:$0xff] %v229
    %246 = vst [vmem:[%s2 + $0x10] sm:$0xff] %v230
    %247 = vst [vmem:[%s2 + $0x18] sm:$0xff] %v231
    %248 = vst [vmem:[%s2 + $0x20] sm:$0xff] %v232
    %249 = vst [vmem:[%s2 + $0x28] sm:$0xff] %v233
    %250 = vst [vmem:[%s2 + $0x30] sm:$0xff] %v234
    %251 = vst [vmem:[%s2 + $0x38] sm:$0xff] %v235
    %252 = vst [vmem:[%s2 + $0x40] sm:$0xff] %v236
    %253 = vst [vmem:[%s2 + $0x48] sm:$0xff] %v237
    %254 = vst [vmem:[%s2 + $0x50] sm:$0xff] %v238
    %255 = vst [vmem:[%s2 + $0x58] sm:$0xff] %v239
    %256 = vst [vmem:[%s2 + $0x60] sm:$0xff] %v240
    %257 = vst [vmem:[%s2 + $0x68] sm:$0xff] %v241
    %258 = vst [vmem:[%s2 + $0x70] sm:$0xff] %v242
    %259 = vst [vmem:[%s2 + $0x78] sm:$0xff] %v243
  $region17: #{_lambda_.19} parent=0 // pred_fallthru
    _
  // Predicated region
  $region18: #{_lambda_.19} parent=0 // pred_check
    _
  $region19: #{_lambda_.19} parent=0 // pred_check_branch
    %261 = sbr.rel (0) target = $region21
  $region20: #{_lambda_.19} parent=0 // pred_region
    _
  $region21: #{_lambda_.19} parent=0 // pred_fallthru
    _
  // Predicated region
  $region22: #{_lambda_.19} parent=0 // pred_check
    _
  $region23: #{_lambda_.19} parent=0 // pred_check_branch
    %263 = sbr.rel (0) target = $region25
  $region24: #{_lambda_.19} parent=0 // pred_region
    _
  $region25: #{_lambda_.19} parent=0 // pred_fallthru
    _

// kernel: _lambda_.20
$region0: #{_lambda_.20}
  #allocation0 [shape = 'u32[]', space=smem, size = 0x4, offset = 0x4, fixed_abs, tag = 'smem constant byte address 0x4 - core index']
  #allocation1 [shape = 'u32[144,128]{1,0:T(1,128)}', space=vmem, size = 0x12000, scoped, tag = 'internal scratch']
  #allocation2 [shape = 'f32[128,128]{1,0:T(8,128)}', space=vmem, size = 0x10000, scoped, tag = 'scratch operand']
  %s0 = inlined_call_operand.vmem [shape: f32[128,32], index: 0, kind: input, shape index: {}]
  %s1 = inlined_call_operand.vmem [shape: f32[32,128], index: 1, kind: input, shape index: {}]
  %s2 = inlined_call_operand.vmem [shape: f32[1,128], index: 2, kind: input, shape index: {}]
  %s3 = inlined_call_operand.vmem [shape: f32[1,32], index: 3, kind: input, shape index: {}]
  %s4 = inlined_call_operand.vmem [shape: f32[1,32], index: 4, kind: input, shape index: {}]
  %s5 = inlined_call_operand.vmem [shape: f32[128,128], index: 5, kind: output, shape index: {}]
  %s6 = sld [smem:[#allocation0]]
  $region38: #{_lambda_.20} parent=0
    _
  %s8 = ssub.s32 1, %s6
  %s9 = scalar_select 0, %s8, %s6
  // Predicated region
  $region2: #{_lambda_.20} parent=0 // pred_check
    _
  $region3: #{_lambda_.20} parent=0 // pred_check_branch
    %11 = sbr.rel (0) target = $region5
  $region4: #{_lambda_.20} parent=0 // pred_region
    _
  $region5: #{_lambda_.20} parent=0 // pred_fallthru
    _
  // Predicated region
  $region6: #{_lambda_.20} parent=0 // pred_check
    _
  $region7: #{_lambda_.20} parent=0 // pred_check_branch
    %13 = sbr.rel (0) target = $region9
  $region8: #{_lambda_.20} parent=0 // pred_region
    _
  $region9: #{_lambda_.20} parent=0 // pred_fallthru
    _
  // Predicated region
  $region10: #{_lambda_.20} parent=0 // pred_check
    _
  $region11: #{_lambda_.20} parent=0 // pred_check_branch
    %15 = sbr.rel (0) target = $region13
  $region12: #{_lambda_.20} parent=0 // pred_region
    _
  $region13: #{_lambda_.20} parent=0 // pred_fallthru
    _
  // Predicated region
  $region14: #{_lambda_.20} parent=0 // pred_check
    _
  $region15: #{_lambda_.20} parent=0 // pred_check_branch
    %17 = sbr.rel (0) target = $region17
  $region16: #{_lambda_.20} parent=0 // pred_region
    _
  $region17: #{_lambda_.20} parent=0 // pred_fallthru
    _
  // Predicated region
  $region18: #{_lambda_.20} parent=0 // pred_check
    _
  $region19: #{_lambda_.20} parent=0 // pred_check_branch
    %19 = sbr.rel (0) target = $region21
  $region20: #{_lambda_.20} parent=0 // pred_region
    _
  $region21: #{_lambda_.20} parent=0 // pred_fallthru
    _
  %v21 = vld [vmem:[%s0] sm:$0xff]
  %v22 = vld [vmem:[%s0 + $0x8] sm:$0xff]
  %v23 = vld [vmem:[%s0 + $0x10] sm:$0xff]
  %v24 = vld [vmem:[%s0 + $0x18] sm:$0xff]
  %v25 = vld [vmem:[%s0 + $0x20] sm:$0xff]
  %v26 = vld [vmem:[%s0 + $0x28] sm:$0xff]
  %v27 = vld [vmem:[%s0 + $0x30] sm:$0xff]
  %v28 = vld [vmem:[%s0 + $0x38] sm:$0xff]
  %v29 = vld [vmem:[%s0 + $0x40] sm:$0xff]
  %v30 = vld [vmem:[%s0 + $0x48] sm:$0xff]
  %v31 = vld [vmem:[%s0 + $0x50] sm:$0xff]
  %v32 = vld [vmem:[%s0 + $0x58] sm:$0xff]
  %v33 = vld [vmem:[%s0 + $0x60] sm:$0xff]
  %v34 = vld [vmem:[%s0 + $0x68] sm:$0xff]
  %v35 = vld [vmem:[%s0 + $0x70] sm:$0xff]
  %v36 = vld [vmem:[%s0 + $0x78] sm:$0xff]
  %vm37 = vcmask 261120
  %v38 = vsel %vm37, %v21, 0.0
  %39 = vadd.xlane.f32.xlu0 %v38
  %v40 = vpop.xlane.xlu0 %39
  %v41 = vsel %vm37, %v22, 0.0
  %42 = vadd.xlane.f32.xlu0 %v41
  %v43 = vpop.xlane.xlu0 %42
  %v44 = vsel %vm37, %v23, 0.0
  %45 = vadd.xlane.f32.xlu0 %v44
  %v46 = vpop.xlane.xlu0 %45
  %v47 = vsel %vm37, %v24, 0.0
  %48 = vadd.xlane.f32.xlu0 %v47
  %v49 = vpop.xlane.xlu0 %48
  %v50 = vsel %vm37, %v25, 0.0
  %51 = vadd.xlane.f32.xlu0 %v50
  %v52 = vpop.xlane.xlu0 %51
  %v53 = vsel %vm37, %v26, 0.0
  %54 = vadd.xlane.f32.xlu0 %v53
  %v55 = vpop.xlane.xlu0 %54
  %v56 = vsel %vm37, %v27, 0.0
  %57 = vadd.xlane.f32.xlu0 %v56
  %v58 = vpop.xlane.xlu0 %57
  %v59 = vsel %vm37, %v28, 0.0
  %60 = vadd.xlane.f32.xlu0 %v59
  %v61 = vpop.xlane.xlu0 %60
  %v62 = vsel %vm37, %v29, 0.0
  %63 = vadd.xlane.f32.xlu0 %v62
  %v64 = vpop.xlane.xlu0 %63
  %v65 = vsel %vm37, %v30, 0.0
  %66 = vadd.xlane.f32.xlu0 %v65
  %v67 = vpop.xlane.xlu0 %66
  %v68 = vsel %vm37, %v31, 0.0
  %69 = vadd.xlane.f32.xlu0 %v68
  %v70 = vpop.xlane.xlu0 %69
  %v71 = vsel %vm37, %v32, 0.0
  %72 = vadd.xlane.f32.xlu0 %v71
  %v73 = vpop.xlane.xlu0 %72
  %v74 = vsel %vm37, %v33, 0.0
  %75 = vadd.xlane.f32.xlu0 %v74
  %v76 = vpop.xlane.xlu0 %75
  %v77 = vsel %vm37, %v34, 0.0
  %78 = vadd.xlane.f32.xlu0 %v77
  %v79 = vpop.xlane.xlu0 %78
  %v80 = vsel %vm37, %v35, 0.0
  %81 = vadd.xlane.f32.xlu0 %v80
  %v82 = vpop.xlane.xlu0 %81
  %v83 = vsel %vm37, %v36, 0.0
  %84 = vadd.xlane.f32.xlu0 %v83
  %v85 = vpop.xlane.xlu0 %84
  %v86 = vrcp.pop 32.0
  %v87 = vmul.f32 %v40, %v86
  %v88 = vmul.f32 %v43, %v86
  %v89 = vmul.f32 %v46, %v86
  %v90 = vmul.f32 %v49, %v86
  %v91 = vmul.f32 %v52, %v86
  %v92 = vmul.f32 %v55, %v86
  %v93 = vmul.f32 %v58, %v86
  %v94 = vmul.f32 %v61, %v86
  %v95 = vmul.f32 %v64, %v86
  %v96 = vmul.f32 %v67, %v86
  %v97 = vmul.f32 %v70, %v86
  %v98 = vmul.f32 %v73, %v86
  %v99 = vmul.f32 %v76, %v86
  %v100 = vmul.f32 %v79, %v86
  %v101 = vmul.f32 %v82, %v86
  %v102 = vmul.f32 %v85, %v86
  %v103 = vsub.f32 %v21, %v87
  %v104 = vsub.f32 %v22, %v88
  %v105 = vsub.f32 %v23, %v89
  %v106 = vsub.f32 %v24, %v90
  %v107 = vsub.f32 %v25, %v91
  %v108 = vsub.f32 %v26, %v92
  %v109 = vsub.f32 %v27, %v93
  %v110 = vsub.f32 %v28, %v94
  %v111 = vsub.f32 %v29, %v95
  %v112 = vsub.f32 %v30, %v96
  %v113 = vsub.f32 %v31, %v97
  %v114 = vsub.f32 %v32, %v98
  %v115 = vsub.f32 %v33, %v99
  %v116 = vsub.f32 %v34, %v100
  %v117 = vsub.f32 %v35, %v101
  %v118 = vsub.f32 %v36, %v102
  %v119 = vmul.f32 %v103, %v103
  %v120 = vmul.f32 %v104, %v104
  %v121 = vmul.f32 %v105, %v105
  %v122 = vmul.f32 %v106, %v106
  %v123 = vmul.f32 %v107, %v107
  %v124 = vmul.f32 %v108, %v108
  %v125 = vmul.f32 %v109, %v109
  %v126 = vmul.f32 %v110, %v110
  %v127 = vmul.f32 %v111, %v111
  %v128 = vmul.f32 %v112, %v112
  %v129 = vmul.f32 %v113, %v113
  %v130 = vmul.f32 %v114, %v114
  %v131 = vmul.f32 %v115, %v115
  %v132 = vmul.f32 %v116, %v116
  %v133 = vmul.f32 %v117, %v117
  %v134 = vmul.f32 %v118, %v118
  %v135 = vsel %vm37, %v119, 0.0
  %136 = vadd.xlane.f32.xlu0 %v135
  %v137 = vpop.xlane.xlu0 %136
  %v138 = vsel %vm37, %v120, 0.0
  %139 = vadd.xlane.f32.xlu0 %v138
  %v140 = vpop.xlane.xlu0 %139
  %v141 = vsel %vm37, %v121, 0.0
  %142 = vadd.xlane.f32.xlu0 %v141
  %v143 = vpop.xlane.xlu0 %142
  %v144 = vsel %vm37, %v122, 0.0
  %145 = vadd.xlane.f32.xlu0 %v144
  %v146 = vpop.xlane.xlu0 %145
  %v147 = vsel %vm37, %v123, 0.0
  %148 = vadd.xlane.f32.xlu0 %v147
  %v149 = vpop.xlane.xlu0 %148
  %v150 = vsel %vm37, %v124, 0.0
  %151 = vadd.xlane.f32.xlu0 %v150
  %v152 = vpop.xlane.xlu0 %151
  %v153 = vsel %vm37, %v125, 0.0
  %154 = vadd.xlane.f32.xlu0 %v153
  %v155 = vpop.xlane.xlu0 %154
  %v156 = vsel %vm37, %v126, 0.0
  %157 = vadd.xlane.f32.xlu0 %v156
  %v158 = vpop.xlane.xlu0 %157
  %v159 = vsel %vm37, %v127, 0.0
  %160 = vadd.xlane.f32.xlu0 %v159
  %v161 = vpop.xlane.xlu0 %160
  %v162 = vsel %vm37, %v128, 0.0
  %163 = vadd.xlane.f32.xlu0 %v162
  %v164 = vpop.xlane.xlu0 %163
  %v165 = vsel %vm37, %v129, 0.0
  %166 = vadd.xlane.f32.xlu0 %v165
  %v167 = vpop.xlane.xlu0 %166
  %v168 = vsel %vm37, %v130, 0.0
  %169 = vadd.xlane.f32.xlu0 %v168
  %v170 = vpop.xlane.xlu0 %169
  %v171 = vsel %vm37, %v131, 0.0
  %172 = vadd.xlane.f32.xlu0 %v171
  %v173 = vpop.xlane.xlu0 %172
  %v174 = vsel %vm37, %v132, 0.0
  %175 = vadd.xlane.f32.xlu0 %v174
  %v176 = vpop.xlane.xlu0 %175
  %v177 = vsel %vm37, %v133, 0.0
  %178 = vadd.xlane.f32.xlu0 %v177
  %v179 = vpop.xlane.xlu0 %178
  %v180 = vsel %vm37, %v134, 0.0
  %181 = vadd.xlane.f32.xlu0 %v180
  %v182 = vpop.xlane.xlu0 %181
  %v183 = vmul.f32 %v137, %v86
  %v184 = vmul.f32 %v140, %v86
  %v185 = vmul.f32 %v143, %v86
  %v186 = vmul.f32 %v146, %v86
  %v187 = vmul.f32 %v149, %v86
  %v188 = vmul.f32 %v152, %v86
  %v189 = vmul.f32 %v155, %v86
  %v190 = vmul.f32 %v158, %v86
  %v191 = vmul.f32 %v161, %v86
  %v192 = vmul.f32 %v164, %v86
  %v193 = vmul.f32 %v167, %v86
  %v194 = vmul.f32 %v170, %v86
  %v195 = vmul.f32 %v173, %v86
  %v196 = vmul.f32 %v176, %v86
  %v197 = vmul.f32 %v179, %v86
  %v198 = vmul.f32 %v182, %v86
  %v199 = vadd.f32 %v183, 1e-06
  %v200 = vadd.f32 %v184, 1e-06
  %v201 = vadd.f32 %v185, 1e-06
  %v202 = vadd.f32 %v186, 1e-06
  %v203 = vadd.f32 %v187, 1e-06
  %v204 = vadd.f32 %v188, 1e-06
  %v205 = vadd.f32 %v189, 1e-06
  %v206 = vadd.f32 %v190, 1e-06
  %v207 = vadd.f32 %v191, 1e-06
  %v208 = vadd.f32 %v192, 1e-06
  %v209 = vadd.f32 %v193, 1e-06
  %v210 = vadd.f32 %v194, 1e-06
  %v211 = vadd.f32 %v195, 1e-06
  %v212 = vadd.f32 %v196, 1e-06
  %v213 = vadd.f32 %v197, 1e-06
  %v214 = vadd.f32 %v198, 1e-06
  %v215 = vrsqrt.pop %v199
  %v216 = vrsqrt.pop %v200
  %v217 = vrsqrt.pop %v201
  %v218 = vrsqrt.pop %v202
  %v219 = vrsqrt.pop %v203
  %v220 = vrsqrt.pop %v204
  %v221 = vrsqrt.pop %v205
  %v222 = vrsqrt.pop %v206
  %v223 = vrsqrt.pop %v207
  %v224 = vrsqrt.pop %v208
  %v225 = vrsqrt.pop %v209
  %v226 = vrsqrt.pop %v210
  %v227 = vrsqrt.pop %v211
  %v228 = vrsqrt.pop %v212
  %v229 = vrsqrt.pop %v213
  %v230 = vrsqrt.pop %v214
  %v231 = vmul.f32 %v103, %v215
  %v232 = vmul.f32 %v104, %v216
  %v233 = vmul.f32 %v105, %v217
  %v234 = vmul.f32 %v106, %v218
  %v235 = vmul.f32 %v107, %v219
  %v236 = vmul.f32 %v108, %v220
  %v237 = vmul.f32 %v109, %v221
  %v238 = vmul.f32 %v110, %v222
  %v239 = vmul.f32 %v111, %v223
  %v240 = vmul.f32 %v112, %v224
  %v241 = vmul.f32 %v113, %v225
  %v242 = vmul.f32 %v114, %v226
  %v243 = vmul.f32 %v115, %v227
  %v244 = vmul.f32 %v116, %v228
  %v245 = vmul.f32 %v117, %v229
  %v246 = vmul.f32 %v118, %v230
  %v247 = vld [vmem:[%s3] sm:$0x1]
  %v249 = vlaneseq
  %v250 = vshrl.u32 %v249, 7
  %v251 = vsub.s32 0, %v250
  %v252 = vrot.slane %v247, %v251
  %v254 = vmul.f32 %v231, %v252
  %v255 = vmul.f32 %v232, %v252
  %v256 = vmul.f32 %v233, %v252
  %v257 = vmul.f32 %v234, %v252
  %v258 = vmul.f32 %v235, %v252
  %v259 = vmul.f32 %v236, %v252
  %v260 = vmul.f32 %v237, %v252
  %v261 = vmul.f32 %v238, %v252
  %v262 = vmul.f32 %v239, %v252
  %v263 = vmul.f32 %v240, %v252
  %v264 = vmul.f32 %v241, %v252
  %v265 = vmul.f32 %v242, %v252
  %v266 = vmul.f32 %v243, %v252
  %v267 = vmul.f32 %v244, %v252
  %v268 = vmul.f32 %v245, %v252
  %v269 = vmul.f32 %v246, %v252
  %v270 = vld [vmem:[%s4] sm:$0x1]
  %v272 = vlaneseq
  %v273 = vshrl.u32 %v272, 7
  %v274 = vsub.s32 0, %v273
  %v275 = vrot.slane %v270, %v274
  %v277 = vadd.f32 %v254, %v275
  %v278 = vadd.f32 %v255, %v275
  %v279 = vadd.f32 %v256, %v275
  %v280 = vadd.f32 %v257, %v275
  %v281 = vadd.f32 %v258, %v275
  %v282 = vadd.f32 %v259, %v275
  %v283 = vadd.f32 %v260, %v275
  %v284 = vadd.f32 %v261, %v275
  %v285 = vadd.f32 %v262, %v275
  %v286 = vadd.f32 %v263, %v275
  %v287 = vadd.f32 %v264, %v275
  %v288 = vadd.f32 %v265, %v275
  %v289 = vadd.f32 %v266, %v275
  %v290 = vadd.f32 %v267, %v275
  %v291 = vadd.f32 %v268, %v275
  %v292 = vadd.f32 %v269, %v275
  %v293 = vpack.c.bf16 %v278, %v277
  %v294 = vpack.c.bf16 %v280, %v279
  %v295 = vpack.c.bf16 %v282, %v281
  %v296 = vpack.c.bf16 %v284, %v283
  %v297 = vpack.c.bf16 %v286, %v285
  %v298 = vpack.c.bf16 %v288, %v287
  %v299 = vpack.c.bf16 %v290, %v289
  %v300 = vpack.c.bf16 %v292, %v291
  %v301 = vld [vmem:[%s1] sm:$0xff]
  %v302 = vld [vmem:[%s1 + $0x8] sm:$0xff]
  %v303 = vld [vmem:[%s1 + $0x10] sm:$0xff]
  %v304 = vld [vmem:[%s1 + $0x18] sm:$0xff]
  %v305 = vpack.c.bf16 %v302, %v301
  %v306 = vpack.c.bf16 %v304, %v303
  %p307 = scmp.eq.s32.totalorder 0, 0
  // Predicated region
  $region22: #{_lambda_.20} parent=0 // pred_check
    %p308 = pneg %p307
  $region23: #{_lambda_.20} parent=0 // pred_check_branch
    %310 = sbr.rel (%p308) target = $region25
  $region24: #{_lambda_.20} parent=0 // pred_region
    %311 = vst [vmem:[#allocation2] sm:$0xff] 0.0
    %312 = vst [vmem:[#allocation2 + $0x8] sm:$0xff] 0.0
    %313 = vst [vmem:[#allocation2 + $0x10] sm:$0xff] 0.0
    %314 = vst [vmem:[#allocation2 + $0x18] sm:$0xff] 0.0
    %315 = vst [vmem:[#allocation2 + $0x20] sm:$0xff] 0.0
    %316 = vst [vmem:[#allocation2 + $0x28] sm:$0xff] 0.0
    %317 = vst [vmem:[#allocation2 + $0x30] sm:$0xff] 0.0
    %318 = vst [vmem:[#allocation2 + $0x38] sm:$0xff] 0.0
    %319 = vst [vmem:[#allocation2 + $0x40] sm:$0xff] 0.0
    %320 = vst [vmem:[#allocation2 + $0x48] sm:$0xff] 0.0
    %321 = vst [vmem:[#allocation2 + $0x50] sm:$0xff] 0.0
    %322 = vst [vmem:[#allocation2 + $0x58] sm:$0xff] 0.0
    %323 = vst [vmem:[#allocation2 + $0x60] sm:$0xff] 0.0
    %324 = vst [vmem:[#allocation2 + $0x68] sm:$0xff] 0.0
    %325 = vst [vmem:[#allocation2 + $0x70] sm:$0xff] 0.0
    %326 = vst [vmem:[#allocation2 + $0x78] sm:$0xff] 0.0
  $region25: #{_lambda_.20} parent=0 // pred_fallthru
    _
  %v327 = vld [vmem:[#allocation2] sm:$0xff]
  %v328 = vld [vmem:[#allocation2 + $0x8] sm:$0xff]
  %v329 = vld [vmem:[#allocation2 + $0x10] sm:$0xff]
  %v330 = vld [vmem:[#allocation2 + $0x18] sm:$0xff]
  %v331 = vld [vmem:[#allocation2 + $0x20] sm:$0xff]
  %v332 = vld [vmem:[#allocation2 + $0x28] sm:$0xff]
  %v333 = vld [vmem:[#allocation2 + $0x30] sm:$0xff]
  %v334 = vld [vmem:[#allocation2 + $0x38] sm:$0xff]
  %v335 = vld [vmem:[#allocation2 + $0x40] sm:$0xff]
  %v336 = vld [vmem:[#allocation2 + $0x48] sm:$0xff]
  %v337 = vld [vmem:[#allocation2 + $0x50] sm:$0xff]
  %v338 = vld [vmem:[#allocation2 + $0x58] sm:$0xff]
  %v339 = vld [vmem:[#allocation2 + $0x60] sm:$0xff]
  %v340 = vld [vmem:[#allocation2 + $0x68] sm:$0xff]
  %v341 = vld [vmem:[#allocation2 + $0x70] sm:$0xff]
  %v342 = vld [vmem:[#allocation2 + $0x78] sm:$0xff]
  %v344 = vsel %vm37, %v293, 0
  %v347 = vsel %vm37, %v294, 0
  %v350 = vsel %vm37, %v295, 0
  %v353 = vsel %vm37, %v296, 0
  %v356 = vsel %vm37, %v297, 0
  %v359 = vsel %vm37, %v298, 0
  %v362 = vsel %vm37, %v299, 0
  %v365 = vsel %vm37, %v300, 0
  %367 = vmatprep.subr.bf16.mxu0 0
  %368 = vmatpush1.bf16.msra.mxu0 0
  %369 = vmatprep.subr.bf16.mxu0 0
  %370 = vmatpush1.bf16.msra.mxu0 0
  %371 = vmatprep.subr.bf16.mxu0 0
  %372 = vmatpush1.bf16.msra.mxu0 0
  %373 = vmatprep.subr.bf16.mxu0 0
  %374 = vmatpush1.bf16.msra.mxu0 0
  %375 = vmatprep.subr.bf16.mxu0 0
  %376 = vmatpush1.bf16.msra.mxu0 0
  %377 = vmatprep.subr.bf16.mxu0 0
  %378 = vmatpush1.bf16.msra.mxu0 0
  %379 = vmatprep.subr.bf16.mxu0 0
  %380 = vmatpush1.bf16.msra.mxu0 %v306
  %381 = vmatprep.subr.bf16.mxu0 0
  %382 = vmatpush1.bf16.msra.mxu0 %v305
  %383 = vmatprep.subr.bf16.mxu0 0
  %384 = vmatpush2.bf16.msra.mxu0 0
  %385 = vmatprep.subr.bf16.mxu0 0
  %386 = vmatpush2.bf16.msra.mxu0 0
  %387 = vmatprep.subr.bf16.mxu0 0
  %388 = vmatpush2.bf16.msra.mxu0 0
  %389 = vmatprep.subr.bf16.mxu0 0
  %390 = vmatpush2.bf16.msra.mxu0 0
  %391 = vmatprep.subr.bf16.mxu0 0
  %392 = vmatpush2.bf16.msra.mxu0 0
  %393 = vmatprep.subr.bf16.mxu0 0
  %394 = vmatpush2.bf16.msra.mxu0 0
  %395 = vmatprep.subr.bf16.mxu0 0
  %396 = vmatpush2.bf16.msra.mxu0 0
  %397 = vmatprep.subr.bf16.mxu0 0
  %398 = vmatpush2.bf16.msra.mxu0 0
  %399 = vmatprep.mubr.bf16.mxu0 0
  %400 = vmatmul.mubr.bf16.gmra.mxu0 %v344
  %v401 = vpop.f32.mrf.mxu0
  %v402 = vadd.f32 0.0, %v401
  %v403 = vpop.f32.mrf.mxu0
  %v404 = vpop.f32.mrf.mxu0
  %v405 = vadd.f32 0.0, %v404
  %v406 = vpop.f32.mrf.mxu0
  %407 = vmatprep.mubr.bf16.mxu0 0
  %408 = vmatmul.mubr.bf16.gmra.mxu0 %v347
  %v409 = vpop.f32.mrf.mxu0
  %v410 = vadd.f32 0.0, %v409
  %v411 = vpop.f32.mrf.mxu0
  %v412 = vpop.f32.mrf.mxu0
  %v413 = vadd.f32 0.0, %v412
  %v414 = vpop.f32.mrf.mxu0
  %415 = vmatprep.mubr.bf16.mxu0 0
  %416 = vmatmul.mubr.bf16.gmra.mxu0 %v350
  %v417 = vpop.f32.mrf.mxu0
  %v418 = vadd.f32 0.0, %v417
  %v419 = vpop.f32.mrf.mxu0
  %v420 = vpop.f32.mrf.mxu0
  %v421 = vadd.f32 0.0, %v420
  %v422 = vpop.f32.mrf.mxu0
  %423 = vmatprep.mubr.bf16.mxu0 0
  %424 = vmatmul.mubr.bf16.gmra.mxu0 %v353
  %v425 = vpop.f32.mrf.mxu0
  %v426 = vadd.f32 0.0, %v425
  %v427 = vpop.f32.mrf.mxu0
  %v428 = vpop.f32.mrf.mxu0
  %v429 = vadd.f32 0.0, %v428
  %v430 = vpop.f32.mrf.mxu0
  %431 = vmatprep.mubr.bf16.mxu0 0
  %432 = vmatmul.mubr.bf16.gmra.mxu0 %v356
  %v433 = vpop.f32.mrf.mxu0
  %v434 = vadd.f32 0.0, %v433
  %v435 = vpop.f32.mrf.mxu0
  %v436 = vpop.f32.mrf.mxu0
  %v437 = vadd.f32 0.0, %v436
  %v438 = vpop.f32.mrf.mxu0
  %439 = vmatprep.mubr.bf16.mxu0 0
  %440 = vmatmul.mubr.bf16.gmra.mxu0 %v359
  %v441 = vpop.f32.mrf.mxu0
  %v442 = vadd.f32 0.0, %v441
  %v443 = vpop.f32.mrf.mxu0
  %v444 = vpop.f32.mrf.mxu0
  %v445 = vadd.f32 0.0, %v444
  %v446 = vpop.f32.mrf.mxu0
  %447 = vmatprep.mubr.bf16.mxu0 0
  %448 = vmatmul.mubr.bf16.gmra.mxu0 %v362
  %v449 = vpop.f32.mrf.mxu0
  %v450 = vadd.f32 0.0, %v449
  %v451 = vpop.f32.mrf.mxu0
  %v452 = vpop.f32.mrf.mxu0
  %v453 = vadd.f32 0.0, %v452
  %v454 = vpop.f32.mrf.mxu0
  %455 = vmatprep.mubr.bf16.mxu0 0
  %456 = vmatmul.mubr.bf16.gmra.mxu0 %v365
  %v457 = vpop.f32.mrf.mxu0
  %v458 = vadd.f32 0.0, %v457
  %v459 = vpop.f32.mrf.mxu0
  %v460 = vpop.f32.mrf.mxu0
  %v461 = vadd.f32 0.0, %v460
  %v462 = vpop.f32.mrf.mxu0
  %463 = vdwg.mxu0
  %v464 = vadd.f32 %v327, %v402
  %v465 = vadd.f32 %v328, %v405
  %v466 = vadd.f32 %v329, %v410
  %v467 = vadd.f32 %v330, %v413
  %v468 = vadd.f32 %v331, %v418
  %v469 = vadd.f32 %v332, %v421
  %v470 = vadd.f32 %v333, %v426
  %v471 = vadd.f32 %v334, %v429
  %v472 = vadd.f32 %v335, %v434
  %v473 = vadd.f32 %v336, %v437
  %v474 = vadd.f32 %v337, %v442
  %v475 = vadd.f32 %v338, %v445
  %v476 = vadd.f32 %v339, %v450
  %v477 = vadd.f32 %v340, %v453
  %v478 = vadd.f32 %v341, %v458
  %v479 = vadd.f32 %v342, %v461
  %480 = vst [vmem:[#allocation2] sm:$0xff] %v464
  %481 = vst [vmem:[#allocation2 + $0x8] sm:$0xff] %v465
  %482 = vst [vmem:[#allocation2 + $0x10] sm:$0xff] %v466
  %483 = vst [vmem:[#allocation2 + $0x18] sm:$0xff] %v467
  %484 = vst [vmem:[#allocation2 + $0x20] sm:$0xff] %v468
  %485 = vst [vmem:[#allocation2 + $0x28] sm:$0xff] %v469
  %486 = vst [vmem:[#allocation2 + $0x30] sm:$0xff] %v470
  %487 = vst [vmem:[#allocation2 + $0x38] sm:$0xff] %v471
  %488 = vst [vmem:[#allocation2 + $0x40] sm:$0xff] %v472
  %489 = vst [vmem:[#allocation2 + $0x48] sm:$0xff] %v473
  %490 = vst [vmem:[#allocation2 + $0x50] sm:$0xff] %v474
  %491 = vst [vmem:[#allocation2 + $0x58] sm:$0xff] %v475
  %492 = vst [vmem:[#allocation2 + $0x60] sm:$0xff] %v476
  %493 = vst [vmem:[#allocation2 + $0x68] sm:$0xff] %v477
  %494 = vst [vmem:[#allocation2 + $0x70] sm:$0xff] %v478
  %495 = vst [vmem:[#allocation2 + $0x78] sm:$0xff] %v479
  // Predicated region
  $region26: #{_lambda_.20} parent=0 // pred_check
    %p496 = pneg %p307
  $region27: #{_lambda_.20} parent=0 // pred_check_branch
    %498 = sbr.rel (%p496) target = $region29
  $region28: #{_lambda_.20} parent=0 // pred_region
    %v499 = vld [vmem:[#allocation2] sm:$0xff]
    %v500 = vld [vmem:[#allocation2 + $0x8] sm:$0xff]
    %v501 = vld [vmem:[#allocation2 + $0x10] sm:$0xff]
    %v502 = vld [vmem:[#allocation2 + $0x18] sm:$0xff]
    %v503 = vld [vmem:[#allocation2 + $0x20] sm:$0xff]
    %v504 = vld [vmem:[#allocation2 + $0x28] sm:$0xff]
    %v505 = vld [vmem:[#allocation2 + $0x30] sm:$0xff]
    %v506 = vld [vmem:[#allocation2 + $0x38] sm:$0xff]
    %v507 = vld [vmem:[#allocation2 + $0x40] sm:$0xff]
    %v508 = vld [vmem:[#allocation2 + $0x48] sm:$0xff]
    %v509 = vld [vmem:[#allocation2 + $0x50] sm:$0xff]
    %v510 = vld [vmem:[#allocation2 + $0x58] sm:$0xff]
    %v511 = vld [vmem:[#allocation2 + $0x60] sm:$0xff]
    %v512 = vld [vmem:[#allocation2 + $0x68] sm:$0xff]
    %v513 = vld [vmem:[#allocation2 + $0x70] sm:$0xff]
    %v514 = vld [vmem:[#allocation2 + $0x78] sm:$0xff]
    %v515 = vld [vmem:[%s2] sm:$0x1]
    %v517 = vlaneseq
    %v518 = vshrl.u32 %v517, 7
    %v519 = vsub.s32 0, %v518
    %v520 = vrot.slane %v515, %v519
    %v522 = vadd.f32 %v499, %v520
    %v523 = vadd.f32 %v500, %v520
    %v524 = vadd.f32 %v501, %v520
    %v525 = vadd.f32 %v502, %v520
    %v526 = vadd.f32 %v503, %v520
    %v527 = vadd.f32 %v504, %v520
    %v528 = vadd.f32 %v505, %v520
    %v529 = vadd.f32 %v506, %v520
    %v530 = vadd.f32 %v507, %v520
    %v531 = vadd.f32 %v508, %v520
    %v532 = vadd.f32 %v509, %v520
    %v533 = vadd.f32 %v510, %v520
    %v534 = vadd.f32 %v511, %v520
    %v535 = vadd.f32 %v512, %v520
    %v536 = vadd.f32 %v513, %v520
    %v537 = vadd.f32 %v514, %v520
    %538 = vst [vmem:[%s5] sm:$0xff] %v522
    %539 = vst [vmem:[%s5 + $0x8] sm:$0xff] %v523
    %540 = vst [vmem:[%s5 + $0x10] sm:$0xff] %v524
    %541 = vst [vmem:[%s5 + $0x18] sm:$0xff] %v525
    %542 = vst [vmem:[%s5 + $0x20] sm:$0xff] %v526
    %543 = vst [vmem:[%s5 + $0x28] sm:$0xff] %v527
    %544 = vst [vmem:[%s5 + $0x30] sm:$0xff] %v528
    %545 = vst [vmem:[%s5 + $0x38] sm:$0xff] %v529
    %546 = vst [vmem:[%s5 + $0x40] sm:$0xff] %v530
    %547 = vst [vmem:[%s5 + $0x48] sm:$0xff] %v531
    %548 = vst [vmem:[%s5 + $0x50] sm:$0xff] %v532
    %549 = vst [vmem:[%s5 + $0x58] sm:$0xff] %v533
    %550 = vst [vmem:[%s5 + $0x60] sm:$0xff] %v534
    %551 = vst [vmem:[%s5 + $0x68] sm:$0xff] %v535
    %552 = vst [vmem:[%s5 + $0x70] sm:$0xff] %v536
    %553 = vst [vmem:[%s5 + $0x78] sm:$0xff] %v537
  $region29: #{_lambda_.20} parent=0 // pred_fallthru
    _
  // Predicated region
  $region30: #{_lambda_.20} parent=0 // pred_check
    _
  $region31: #{_lambda_.20} parent=0 // pred_check_branch
    %555 = sbr.rel (0) target = $region33
  $region32: #{_lambda_.20} parent=0 // pred_region
    _
  $region33: #{_lambda_.20} parent=0 // pred_fallthru
    _
  // Predicated region
  $region34: #{_lambda_.20} parent=0 // pred_check
    _
  $region35: #{_lambda_.20} parent=0 // pred_check_branch
    %557 = sbr.rel (0) target = $region37
  $region36: #{_lambda_.20} parent=0 // pred_region
    _
  $region37: #{_lambda_.20} parent=0 // pred_fallthru
    _

// kernel: _lambda_.22
$region0: #{_lambda_.22}
  #allocation0 [shape = 'u32[]', space=smem, size = 0x4, offset = 0x4, fixed_abs, tag = 'smem constant byte address 0x4 - core index']
  #allocation1 [shape = 'u32[144,128]{1,0:T(1,128)}', space=vmem, size = 0x12000, scoped, tag = 'internal scratch']
  #allocation2 [shape = 'f32[128,128]{1,0:T(8,128)}', space=vmem, size = 0x10000, scoped, tag = 'scratch operand']
  %s0 = inlined_call_operand.vmem [shape: f32[128,128], index: 0, kind: input, shape index: {}]
  %s1 = inlined_call_operand.vmem [shape: f32[128,128], index: 1, kind: input, shape index: {}]
  %s2 = inlined_call_operand.vmem [shape: f32[1,128], index: 2, kind: input, shape index: {}]
  %s3 = inlined_call_operand.vmem [shape: f32[128,128], index: 3, kind: input, shape index: {}]
  %s4 = inlined_call_operand.vmem [shape: f32[128,128], index: 4, kind: output, shape index: {}]
  %s5 = sld [smem:[#allocation0]]
  $region34: #{_lambda_.22} parent=0
    _
  %s7 = ssub.s32 1, %s5
  %s8 = scalar_select 0, %s7, %s5
  // Predicated region
  $region2: #{_lambda_.22} parent=0 // pred_check
    _
  $region3: #{_lambda_.22} parent=0 // pred_check_branch
    %10 = sbr.rel (0) target = $region5
  $region4: #{_lambda_.22} parent=0 // pred_region
    _
  $region5: #{_lambda_.22} parent=0 // pred_fallthru
    _
  // Predicated region
  $region6: #{_lambda_.22} parent=0 // pred_check
    _
  $region7: #{_lambda_.22} parent=0 // pred_check_branch
    %12 = sbr.rel (0) target = $region9
  $region8: #{_lambda_.22} parent=0 // pred_region
    _
  $region9: #{_lambda_.22} parent=0 // pred_fallthru
    _
  // Predicated region
  $region10: #{_lambda_.22} parent=0 // pred_check
    _
  $region11: #{_lambda_.22} parent=0 // pred_check_branch
    %14 = sbr.rel (0) target = $region13
  $region12: #{_lambda_.22} parent=0 // pred_region
    _
  $region13: #{_lambda_.22} parent=0 // pred_fallthru
    _
  // Predicated region
  $region14: #{_lambda_.22} parent=0 // pred_check
    _
  $region15: #{_lambda_.22} parent=0 // pred_check_branch
    %16 = sbr.rel (0) target = $region17
  $region16: #{_lambda_.22} parent=0 // pred_region
    _
  $region17: #{_lambda_.22} parent=0 // pred_fallthru
    _
  %v18 = vld [vmem:[%s0] sm:$0xff]
  %v19 = vld [vmem:[%s0 + $0x8] sm:$0xff]
  %v20 = vld [vmem:[%s0 + $0x10] sm:$0xff]
  %v21 = vld [vmem:[%s0 + $0x18] sm:$0xff]
  %v22 = vld [vmem:[%s0 + $0x20] sm:$0xff]
  %v23 = vld [vmem:[%s0 + $0x28] sm:$0xff]
  %v24 = vld [vmem:[%s0 + $0x30] sm:$0xff]
  %v25 = vld [vmem:[%s0 + $0x38] sm:$0xff]
  %v26 = vld [vmem:[%s0 + $0x40] sm:$0xff]
  %v27 = vld [vmem:[%s0 + $0x48] sm:$0xff]
  %v28 = vld [vmem:[%s0 + $0x50] sm:$0xff]
  %v29 = vld [vmem:[%s0 + $0x58] sm:$0xff]
  %v30 = vld [vmem:[%s0 + $0x60] sm:$0xff]
  %v31 = vld [vmem:[%s0 + $0x68] sm:$0xff]
  %v32 = vld [vmem:[%s0 + $0x70] sm:$0xff]
  %v33 = vld [vmem:[%s0 + $0x78] sm:$0xff]
  %v34 = vpack.c.bf16 %v19, %v18
  %v35 = vpack.c.bf16 %v21, %v20
  %v36 = vpack.c.bf16 %v23, %v22
  %v37 = vpack.c.bf16 %v25, %v24
  %v38 = vpack.c.bf16 %v27, %v26
  %v39 = vpack.c.bf16 %v29, %v28
  %v40 = vpack.c.bf16 %v31, %v30
  %v41 = vpack.c.bf16 %v33, %v32
  %v42 = vld [vmem:[%s1] sm:$0xff]
  %v43 = vld [vmem:[%s1 + $0x8] sm:$0xff]
  %v44 = vld [vmem:[%s1 + $0x10] sm:$0xff]
  %v45 = vld [vmem:[%s1 + $0x18] sm:$0xff]
  %v46 = vld [vmem:[%s1 + $0x20] sm:$0xff]
  %v47 = vld [vmem:[%s1 + $0x28] sm:$0xff]
  %v48 = vld [vmem:[%s1 + $0x30] sm:$0xff]
  %v49 = vld [vmem:[%s1 + $0x38] sm:$0xff]
  %v50 = vld [vmem:[%s1 + $0x40] sm:$0xff]
  %v51 = vld [vmem:[%s1 + $0x48] sm:$0xff]
  %v52 = vld [vmem:[%s1 + $0x50] sm:$0xff]
  %v53 = vld [vmem:[%s1 + $0x58] sm:$0xff]
  %v54 = vld [vmem:[%s1 + $0x60] sm:$0xff]
  %v55 = vld [vmem:[%s1 + $0x68] sm:$0xff]
  %v56 = vld [vmem:[%s1 + $0x70] sm:$0xff]
  %v57 = vld [vmem:[%s1 + $0x78] sm:$0xff]
  %v58 = vpack.c.bf16 %v43, %v42
  %v59 = vpack.c.bf16 %v45, %v44
  %v60 = vpack.c.bf16 %v47, %v46
  %v61 = vpack.c.bf16 %v49, %v48
  %v62 = vpack.c.bf16 %v51, %v50
  %v63 = vpack.c.bf16 %v53, %v52
  %v64 = vpack.c.bf16 %v55, %v54
  %v65 = vpack.c.bf16 %v57, %v56
  %p66 = scmp.eq.s32.totalorder 0, 0
  // Predicated region
  $region18: #{_lambda_.22} parent=0 // pred_check
    %p67 = pneg %p66
  $region19: #{_lambda_.22} parent=0 // pred_check_branch
    %69 = sbr.rel (%p67) target = $region21
  $region20: #{_lambda_.22} parent=0 // pred_region
    %70 = vst [vmem:[#allocation2] sm:$0xff] 0.0
    %71 = vst [vmem:[#allocation2 + $0x8] sm:$0xff] 0.0
    %72 = vst [vmem:[#allocation2 + $0x10] sm:$0xff] 0.0
    %73 = vst [vmem:[#allocation2 + $0x18] sm:$0xff] 0.0
    %74 = vst [vmem:[#allocation2 + $0x20] sm:$0xff] 0.0
    %75 = vst [vmem:[#allocation2 + $0x28] sm:$0xff] 0.0
    %76 = vst [vmem:[#allocation2 + $0x30] sm:$0xff] 0.0
    %77 = vst [vmem:[#allocation2 + $0x38] sm:$0xff] 0.0
    %78 = vst [vmem:[#allocation2 + $0x40] sm:$0xff] 0.0
    %79 = vst [vmem:[#allocation2 + $0x48] sm:$0xff] 0.0
    %80 = vst [vmem:[#allocation2 + $0x50] sm:$0xff] 0.0
    %81 = vst [vmem:[#allocation2 + $0x58] sm:$0xff] 0.0
    %82 = vst [vmem:[#allocation2 + $0x60] sm:$0xff] 0.0
    %83 = vst [vmem:[#allocation2 + $0x68] sm:$0xff] 0.0
    %84 = vst [vmem:[#allocation2 + $0x70] sm:$0xff] 0.0
    %85 = vst [vmem:[#allocation2 + $0x78] sm:$0xff] 0.0
  $region21: #{_lambda_.22} parent=0 // pred_fallthru
    _
  %v86 = vld [vmem:[#allocation2] sm:$0xff]
  %v87 = vld [vmem:[#allocation2 + $0x8] sm:$0xff]
  %v88 = vld [vmem:[#allocation2 + $0x10] sm:$0xff]
  %v89 = vld [vmem:[#allocation2 + $0x18] sm:$0xff]
  %v90 = vld [vmem:[#allocation2 + $0x20] sm:$0xff]
  %v91 = vld [vmem:[#allocation2 + $0x28] sm:$0xff]
  %v92 = vld [vmem:[#allocation2 + $0x30] sm:$0xff]
  %v93 = vld [vmem:[#allocation2 + $0x38] sm:$0xff]
  %v94 = vld [vmem:[#allocation2 + $0x40] sm:$0xff]
  %v95 = vld [vmem:[#allocation2 + $0x48] sm:$0xff]
  %v96 = vld [vmem:[#allocation2 + $0x50] sm:$0xff]
  %v97 = vld [vmem:[#allocation2 + $0x58] sm:$0xff]
  %v98 = vld [vmem:[#allocation2 + $0x60] sm:$0xff]
  %v99 = vld [vmem:[#allocation2 + $0x68] sm:$0xff]
  %v100 = vld [vmem:[#allocation2 + $0x70] sm:$0xff]
  %v101 = vld [vmem:[#allocation2 + $0x78] sm:$0xff]
  %102 = vmatprep.subr.bf16.mxu0 0
  %103 = vmatpush1.bf16.msra.mxu0 %v65
  %104 = vmatprep.subr.bf16.mxu0 0
  %105 = vmatpush1.bf16.msra.mxu0 %v64
  %106 = vmatprep.subr.bf16.mxu0 0
  %107 = vmatpush1.bf16.msra.mxu0 %v63
  %108 = vmatprep.subr.bf16.mxu0 0
  %109 = vmatpush1.bf16.msra.mxu0 %v62
  %110 = vmatprep.subr.bf16.mxu0 0
  %111 = vmatpush1.bf16.msra.mxu0 %v61
  %112 = vmatprep.subr.bf16.mxu0 0
  %113 = vmatpush1.bf16.msra.mxu0 %v60
  %114 = vmatprep.subr.bf16.mxu0 0
  %115 = vmatpush1.bf16.msra.mxu0 %v59
  %116 = vmatprep.subr.bf16.mxu0 0
  %117 = vmatpush1.bf16.msra.mxu0 %v58
  %118 = vmatprep.subr.bf16.mxu0 0
  %119 = vmatpush2.bf16.msra.mxu0 0
  %120 = vmatprep.subr.bf16.mxu0 0
  %121 = vmatpush2.bf16.msra.mxu0 0
  %122 = vmatprep.subr.bf16.mxu0 0
  %123 = vmatpush2.bf16.msra.mxu0 0
  %124 = vmatprep.subr.bf16.mxu0 0
  %125 = vmatpush2.bf16.msra.mxu0 0
  %126 = vmatprep.subr.bf16.mxu0 0
  %127 = vmatpush2.bf16.msra.mxu0 0
  %128 = vmatprep.subr.bf16.mxu0 0
  %129 = vmatpush2.bf16.msra.mxu0 0
  %130 = vmatprep.subr.bf16.mxu0 0
  %131 = vmatpush2.bf16.msra.mxu0 0
  %132 = vmatprep.subr.bf16.mxu0 0
  %133 = vmatpush2.bf16.msra.mxu0 0
  %134 = vmatprep.mubr.bf16.mxu0 0
  %135 = vmatmul.mubr.bf16.gmra.mxu0 %v34
  %v136 = vpop.f32.mrf.mxu0
  %v137 = vadd.f32 0.0, %v136
  %v138 = vpop.f32.mrf.mxu0
  %v139 = vpop.f32.mrf.mxu0
  %v140 = vadd.f32 0.0, %v139
  %v141 = vpop.f32.mrf.mxu0
  %142 = vmatprep.mubr.bf16.mxu0 0
  %143 = vmatmul.mubr.bf16.gmra.mxu0 %v35
  %v144 = vpop.f32.mrf.mxu0
  %v145 = vadd.f32 0.0, %v144
  %v146 = vpop.f32.mrf.mxu0
  %v147 = vpop.f32.mrf.mxu0
  %v148 = vadd.f32 0.0, %v147
  %v149 = vpop.f32.mrf.mxu0
  %150 = vmatprep.mubr.bf16.mxu0 0
  %151 = vmatmul.mubr.bf16.gmra.mxu0 %v36
  %v152 = vpop.f32.mrf.mxu0
  %v153 = vadd.f32 0.0, %v152
  %v154 = vpop.f32.mrf.mxu0
  %v155 = vpop.f32.mrf.mxu0
  %v156 = vadd.f32 0.0, %v155
  %v157 = vpop.f32.mrf.mxu0
  %158 = vmatprep.mubr.bf16.mxu0 0
  %159 = vmatmul.mubr.bf16.gmra.mxu0 %v37
  %v160 = vpop.f32.mrf.mxu0
  %v161 = vadd.f32 0.0, %v160
  %v162 = vpop.f32.mrf.mxu0
  %v163 = vpop.f32.mrf.mxu0
  %v164 = vadd.f32 0.0, %v163
  %v165 = vpop.f32.mrf.mxu0
  %166 = vmatprep.mubr.bf16.mxu0 0
  %167 = vmatmul.mubr.bf16.gmra.mxu0 %v38
  %v168 = vpop.f32.mrf.mxu0
  %v169 = vadd.f32 0.0, %v168
  %v170 = vpop.f32.mrf.mxu0
  %v171 = vpop.f32.mrf.mxu0
  %v172 = vadd.f32 0.0, %v171
  %v173 = vpop.f32.mrf.mxu0
  %174 = vmatprep.mubr.bf16.mxu0 0
  %175 = vmatmul.mubr.bf16.gmra.mxu0 %v39
  %v176 = vpop.f32.mrf.mxu0
  %v177 = vadd.f32 0.0, %v176
  %v178 = vpop.f32.mrf.mxu0
  %v179 = vpop.f32.mrf.mxu0
  %v180 = vadd.f32 0.0, %v179
  %v181 = vpop.f32.mrf.mxu0
  %182 = vmatprep.mubr.bf16.mxu0 0
  %183 = vmatmul.mubr.bf16.gmra.mxu0 %v40
  %v184 = vpop.f32.mrf.mxu0
  %v185 = vadd.f32 0.0, %v184
  %v186 = vpop.f32.mrf.mxu0
  %v187 = vpop.f32.mrf.mxu0
  %v188 = vadd.f32 0.0, %v187
  %v189 = vpop.f32.mrf.mxu0
  %190 = vmatprep.mubr.bf16.mxu0 0
  %191 = vmatmul.mubr.bf16.gmra.mxu0 %v41
  %v192 = vpop.f32.mrf.mxu0
  %v193 = vadd.f32 0.0, %v192
  %v194 = vpop.f32.mrf.mxu0
  %v195 = vpop.f32.mrf.mxu0
  %v196 = vadd.f32 0.0, %v195
  %v197 = vpop.f32.mrf.mxu0
  %198 = vdwg.mxu0
  %v199 = vadd.f32 %v86, %v137
  %v200 = vadd.f32 %v87, %v140
  %v201 = vadd.f32 %v88, %v145
  %v202 = vadd.f32 %v89, %v148
  %v203 = vadd.f32 %v90, %v153
  %v204 = vadd.f32 %v91, %v156
  %v205 = vadd.f32 %v92, %v161
  %v206 = vadd.f32 %v93, %v164
  %v207 = vadd.f32 %v94, %v169
  %v208 = vadd.f32 %v95, %v172
  %v209 = vadd.f32 %v96, %v177
  %v210 = vadd.f32 %v97, %v180
  %v211 = vadd.f32 %v98, %v185
  %v212 = vadd.f32 %v99, %v188
  %v213 = vadd.f32 %v100, %v193
  %v214 = vadd.f32 %v101, %v196
  %215 = vst [vmem:[#allocation2] sm:$0xff] %v199
  %216 = vst [vmem:[#allocation2 + $0x8] sm:$0xff] %v200
  %217 = vst [vmem:[#allocation2 + $0x10] sm:$0xff] %v201
  %218 = vst [vmem:[#allocation2 + $0x18] sm:$0xff] %v202
  %219 = vst [vmem:[#allocation2 + $0x20] sm:$0xff] %v203
  %220 = vst [vmem:[#allocation2 + $0x28] sm:$0xff] %v204
  %221 = vst [vmem:[#allocation2 + $0x30] sm:$0xff] %v205
  %222 = vst [vmem:[#allocation2 + $0x38] sm:$0xff] %v206
  %223 = vst [vmem:[#allocation2 + $0x40] sm:$0xff] %v207
  %224 = vst [vmem:[#allocation2 + $0x48] sm:$0xff] %v208
  %225 = vst [vmem:[#allocation2 + $0x50] sm:$0xff] %v209
  %226 = vst [vmem:[#allocation2 + $0x58] sm:$0xff] %v210
  %227 = vst [vmem:[#allocation2 + $0x60] sm:$0xff] %v211
  %228 = vst [vmem:[#allocation2 + $0x68] sm:$0xff] %v212
  %229 = vst [vmem:[#allocation2 + $0x70] sm:$0xff] %v213
  %230 = vst [vmem:[#allocation2 + $0x78] sm:$0xff] %v214
  // Predicated region
  $region22: #{_lambda_.22} parent=0 // pred_check
    %p231 = pneg %p66
  $region23: #{_lambda_.22} parent=0 // pred_check_branch
    %233 = sbr.rel (%p231) target = $region25
  $region24: #{_lambda_.22} parent=0 // pred_region
    %v234 = vld [vmem:[#allocation2] sm:$0xff]
    %v235 = vld [vmem:[#allocation2 + $0x8] sm:$0xff]
    %v236 = vld [vmem:[#allocation2 + $0x10] sm:$0xff]
    %v237 = vld [vmem:[#allocation2 + $0x18] sm:$0xff]
    %v238 = vld [vmem:[#allocation2 + $0x20] sm:$0xff]
    %v239 = vld [vmem:[#allocation2 + $0x28] sm:$0xff]
    %v240 = vld [vmem:[#allocation2 + $0x30] sm:$0xff]
    %v241 = vld [vmem:[#allocation2 + $0x38] sm:$0xff]
    %v242 = vld [vmem:[#allocation2 + $0x40] sm:$0xff]
    %v243 = vld [vmem:[#allocation2 + $0x48] sm:$0xff]
    %v244 = vld [vmem:[#allocation2 + $0x50] sm:$0xff]
    %v245 = vld [vmem:[#allocation2 + $0x58] sm:$0xff]
    %v246 = vld [vmem:[#allocation2 + $0x60] sm:$0xff]
    %v247 = vld [vmem:[#allocation2 + $0x68] sm:$0xff]
    %v248 = vld [vmem:[#allocation2 + $0x70] sm:$0xff]
    %v249 = vld [vmem:[#allocation2 + $0x78] sm:$0xff]
    %v250 = vld [vmem:[%s2] sm:$0x1]
    %v252 = vlaneseq
    %v253 = vshrl.u32 %v252, 7
    %v254 = vsub.s32 0, %v253
    %v255 = vrot.slane %v250, %v254
    %v257 = vadd.f32 %v234, %v255
    %v258 = vadd.f32 %v235, %v255
    %v259 = vadd.f32 %v236, %v255
    %v260 = vadd.f32 %v237, %v255
    %v261 = vadd.f32 %v238, %v255
    %v262 = vadd.f32 %v239, %v255
    %v263 = vadd.f32 %v240, %v255
    %v264 = vadd.f32 %v241, %v255
    %v265 = vadd.f32 %v242, %v255
    %v266 = vadd.f32 %v243, %v255
    %v267 = vadd.f32 %v244, %v255
    %v268 = vadd.f32 %v245, %v255
    %v269 = vadd.f32 %v246, %v255
    %v270 = vadd.f32 %v247, %v255
    %v271 = vadd.f32 %v248, %v255
    %v272 = vadd.f32 %v249, %v255
    %v273 = vld [vmem:[%s3] sm:$0xff]
    %v274 = vld [vmem:[%s3 + $0x8] sm:$0xff]
    %v275 = vld [vmem:[%s3 + $0x10] sm:$0xff]
    %v276 = vld [vmem:[%s3 + $0x18] sm:$0xff]
    %v277 = vld [vmem:[%s3 + $0x20] sm:$0xff]
    %v278 = vld [vmem:[%s3 + $0x28] sm:$0xff]
    %v279 = vld [vmem:[%s3 + $0x30] sm:$0xff]
    %v280 = vld [vmem:[%s3 + $0x38] sm:$0xff]
    %v281 = vld [vmem:[%s3 + $0x40] sm:$0xff]
    %v282 = vld [vmem:[%s3 + $0x48] sm:$0xff]
    %v283 = vld [vmem:[%s3 + $0x50] sm:$0xff]
    %v284 = vld [vmem:[%s3 + $0x58] sm:$0xff]
    %v285 = vld [vmem:[%s3 + $0x60] sm:$0xff]
    %v286 = vld [vmem:[%s3 + $0x68] sm:$0xff]
    %v287 = vld [vmem:[%s3 + $0x70] sm:$0xff]
    %v288 = vld [vmem:[%s3 + $0x78] sm:$0xff]
    %v289 = vadd.f32 %v257, %v273
    %v290 = vadd.f32 %v258, %v274
    %v291 = vadd.f32 %v259, %v275
    %v292 = vadd.f32 %v260, %v276
    %v293 = vadd.f32 %v261, %v277
    %v294 = vadd.f32 %v262, %v278
    %v295 = vadd.f32 %v263, %v279
    %v296 = vadd.f32 %v264, %v280
    %v297 = vadd.f32 %v265, %v281
    %v298 = vadd.f32 %v266, %v282
    %v299 = vadd.f32 %v267, %v283
    %v300 = vadd.f32 %v268, %v284
    %v301 = vadd.f32 %v269, %v285
    %v302 = vadd.f32 %v270, %v286
    %v303 = vadd.f32 %v271, %v287
    %v304 = vadd.f32 %v272, %v288
    %305 = vst [vmem:[%s4] sm:$0xff] %v289
    %306 = vst [vmem:[%s4 + $0x8] sm:$0xff] %v290
    %307 = vst [vmem:[%s4 + $0x10] sm:$0xff] %v291
    %308 = vst [vmem:[%s4 + $0x18] sm:$0xff] %v292
    %309 = vst [vmem:[%s4 + $0x20] sm:$0xff] %v293
    %310 = vst [vmem:[%s4 + $0x28] sm:$0xff] %v294
    %311 = vst [vmem:[%s4 + $0x30] sm:$0xff] %v295
    %312 = vst [vmem:[%s4 + $0x38] sm:$0xff] %v296
    %313 = vst [vmem:[%s4 + $0x40] sm:$0xff] %v297
    %314 = vst [vmem:[%s4 + $0x48] sm:$0xff] %v298
    %315 = vst [vmem:[%s4 + $0x50] sm:$0xff] %v299
    %316 = vst [vmem:[%s4 + $0x58] sm:$0xff] %v300
    %317 = vst [vmem:[%s4 + $0x60] sm:$0xff] %v301
    %318 = vst [vmem:[%s4 + $0x68] sm:$0xff] %v302
    %319 = vst [vmem:[%s4 + $0x70] sm:$0xff] %v303
    %320 = vst [vmem:[%s4 + $0x78] sm:$0xff] %v304
  $region25: #{_lambda_.22} parent=0 // pred_fallthru
    _
  // Predicated region
  $region26: #{_lambda_.22} parent=0 // pred_check
    _
  $region27: #{_lambda_.22} parent=0 // pred_check_branch
    %322 = sbr.rel (0) target = $region29
  $region28: #{_lambda_.22} parent=0 // pred_region
    _
  $region29: #{_lambda_.22} parent=0 // pred_fallthru
    _
  // Predicated region
  $region30: #{_lambda_.22} parent=0 // pred_check
    _
  $region31: #{_lambda_.22} parent=0 // pred_check_branch
    %324 = sbr.rel (0) target = $region33
  $region32: #{_lambda_.22} parent=0 // pred_region
    _
  $region33: #{_lambda_.22} parent=0 // pred_fallthru
    _

// kernel: _lambda_.21
$region0: #{_lambda_.21}
  #allocation0 [shape = 'u32[]', space=smem, size = 0x4, offset = 0x4, fixed_abs, tag = 'smem constant byte address 0x4 - core index']
  #allocation1 [shape = 'u32[144,128]{1,0:T(1,128)}', space=vmem, size = 0x12000, scoped, tag = 'internal scratch']
  %s0 = inlined_call_operand.vmem [shape: f32[2,64,32], index: 0, kind: input, shape index: {}]
  %s1 = inlined_call_operand.vmem [shape: f32[2,64,32], index: 1, kind: input, shape index: {}]
  %s2 = inlined_call_operand.vmem [shape: f32[2,64,32], index: 2, kind: input, shape index: {}]
  %s3 = inlined_call_operand.vmem [shape: f32[2,64,32], index: 3, kind: output, shape index: {}]
  %s4 = sld [smem:[#allocation0]]
  $region45: #{_lambda_.21} parent=0
    _
  %s6 = ssub.s32 1, %s4
  %s7 = scalar_select 0, %s6, %s4
  loop: start=0, step=1, limit=4
  $region2: #{_lambda_.21} parent=0 // loop_pre_header
    _
  $region3: #{_lambda_.21} parent=0 // loop_header
    %s9 = sphi 0, %s13
    %p10 = scmp.ge.s32.totalorder %s9, 4
    %s16 = sphi 0, %s28
    %s17 = sphi 0, %s24
    %s18 = sphi 0, %s16
    %s19 = sphi 0, %s17
    %s20 = sphi 0, %s18
    %s21 = sphi 0, %s19
    %s33 = sphi 0, %s35
    %s36 = sphi 0, %s33
    %s37 = sphi 0, %s36
    %s53 = sphi 0, %s37
    %s61 = sphi 0, %s63
    %s64 = sphi 0, %s61
    %s65 = sphi 0, %s64
    %s81 = sphi 0, %s65
    %s89 = sphi 0, %s91
    %s92 = sphi 0, %s89
    %s93 = sphi 0, %s92
    %s109 = sphi 0, %s93
    %s117 = sphi 0, %s119
    %s120 = sphi 0, %s117
    %s121 = sphi 0, %s120
    %s137 = sphi 0, %s121
  $region4: #{_lambda_.21} parent=0 // loop_header_branch
    %12 = sbr.rel (%p10) target = $region8
  $region5: #{_lambda_.21} parent=0 // loop_body
    %s14 = ssub.s32 %s9, 1
    %s15 = ssub.s32 %s9, 2
    %s22 = sadd.s32 1, %s17
    %p23 = scmp.ge.s32.totalorder %s22, 1
    %s24 = scalar_select %p23, 0, %s22
    %s25 = sadd.s32 1, %s16
    %s26 = scalar_select %p23, %s25, %s16
    %p27 = scmp.ge.s32.totalorder %s26, 2
    %s28 = scalar_select %p27, 0, %s26
    %s29 = ssub.s32 %s16, %s28
    %s30 = ssub.s32 %s17, %s24
    %s31 = sor.u32 %s29, %s30
    %p32 = scmp.eq.s32.totalorder %s31, 0
    %s34 = sadd.s32 %s33, 1
    %s35 = scalar_select %p32, %s33, %s34
    %p38 = pneg %p32
    %p39 = scmp.eq.s32.totalorder %s9, 1
    %p40 = por %p38, %p39
    %p41 = scmp.ne.s32.totalorder %s33, %s36
    %p42 = scmp.eq.s32.totalorder %s9, 0
    %p43 = por %p41, %p42
    %p44 = scmp.ne.s32.totalorder %s33, %s36
    %p45 = scmp.eq.s32.totalorder %s14, 1
    %p46 = por %p44, %p45
    %p47 = scmp.ne.s32.totalorder %s36, %s37
    %p48 = scmp.eq.s32.totalorder %s14, 0
    %p49 = por %p47, %p48
    %p50 = scmp.ne.s32.totalorder %s36, %s37
    %p51 = scmp.eq.s32.totalorder %s15, 1
    %p52 = por %p50, %p51
    %p54 = scmp.ne.s32.totalorder %s37, %s53
    %p55 = scmp.eq.s32.totalorder %s15, 0
    %p56 = por %p54, %p55
    %s57 = ssub.s32 %s16, %s28
    %s58 = ssub.s32 %s17, %s24
    %s59 = sor.u32 %s57, %s58
    %p60 = scmp.eq.s32.totalorder %s59, 0
    %s62 = sadd.s32 %s61, 1
    %s63 = scalar_select %p60, %s61, %s62
    %p66 = pneg %p60
    %p67 = scmp.eq.s32.totalorder %s9, 1
    %p68 = por %p66, %p67
    %p69 = scmp.ne.s32.totalorder %s61, %s64
    %p70 = scmp.eq.s32.totalorder %s9, 0
    %p71 = por %p69, %p70
    %p72 = scmp.ne.s32.totalorder %s61, %s64
    %p73 = scmp.eq.s32.totalorder %s14, 1
    %p74 = por %p72, %p73
    %p75 = scmp.ne.s32.totalorder %s64, %s65
    %p76 = scmp.eq.s32.totalorder %s14, 0
    %p77 = por %p75, %p76
    %p78 = scmp.ne.s32.totalorder %s64, %s65
    %p79 = scmp.eq.s32.totalorder %s15, 1
    %p80 = por %p78, %p79
    %p82 = scmp.ne.s32.totalorder %s65, %s81
    %p83 = scmp.eq.s32.totalorder %s15, 0
    %p84 = por %p82, %p83
    %s85 = ssub.s32 %s16, %s28
    %s86 = ssub.s32 %s17, %s24
    %s87 = sor.u32 %s85, %s86
    %p88 = scmp.eq.s32.totalorder %s87, 0
    %s90 = sadd.s32 %s89, 1
    %s91 = scalar_select %p88, %s89, %s90
    %p94 = pneg %p88
    %p95 = scmp.eq.s32.totalorder %s9, 1
    %p96 = por %p94, %p95
    %p97 = scmp.ne.s32.totalorder %s89, %s92
    %p98 = scmp.eq.s32.totalorder %s9, 0
    %p99 = por %p97, %p98
    %p100 = scmp.ne.s32.totalorder %s89, %s92
    %p101 = scmp.eq.s32.totalorder %s14, 1
    %p102 = por %p100, %p101
    %p103 = scmp.ne.s32.totalorder %s92, %s93
    %p104 = scmp.eq.s32.totalorder %s14, 0
    %p105 = por %p103, %p104
    %p106 = scmp.ne.s32.totalorder %s92, %s93
    %p107 = scmp.eq.s32.totalorder %s15, 1
    %p108 = por %p106, %p107
    %p110 = scmp.ne.s32.totalorder %s93, %s109
    %p111 = scmp.eq.s32.totalorder %s15, 0
    %p112 = por %p110, %p111
    %s113 = ssub.s32 %s16, %s28
    %s114 = ssub.s32 %s17, %s24
    %s115 = sor.u32 %s113, %s114
    %p116 = scmp.eq.s32.totalorder %s115, 0
    %s118 = sadd.s32 %s117, 1
    %s119 = scalar_select %p116, %s117, %s118
    %p122 = pneg %p116
    %p123 = scmp.eq.s32.totalorder %s9, 1
    %p124 = por %p122, %p123
    %p125 = scmp.ne.s32.totalorder %s117, %s120
    %p126 = scmp.eq.s32.totalorder %s9, 0
    %p127 = por %p125, %p126
    %p128 = scmp.ne.s32.totalorder %s117, %s120
    %p129 = scmp.eq.s32.totalorder %s14, 1
    %p130 = por %p128, %p129
    %p131 = scmp.ne.s32.totalorder %s120, %s121
    %p132 = scmp.eq.s32.totalorder %s14, 0
    %p133 = por %p131, %p132
    %p134 = scmp.ne.s32.totalorder %s120, %s121
    %p135 = scmp.eq.s32.totalorder %s15, 1
    %p136 = por %p134, %p135
    %p138 = scmp.ne.s32.totalorder %s121, %s137
    %p139 = scmp.eq.s32.totalorder %s15, 0
    %p140 = por %p138, %p139
    %p141 = scmp.le.s32.totalorder 1, %s9
    %p142 = scmp.lt.s32.totalorder %s9, 3
    %p143 = pnand %p141, %p142
    %p144 = pneg %p143
    // Predicated region
    $region9: #{_lambda_.21} parent=5 // pred_check
      _
    $region10: #{_lambda_.21} parent=5 // pred_check_branch
      %146 = sbr.rel (%p143) target = $region12
    $region11: #{_lambda_.21} parent=5 // pred_region
      %s147 = ssub.s32 %s9, 1
    $region12: #{_lambda_.21} parent=5 // pred_fallthru
      _
    %p148 = scmp.lt.s32.totalorder %s9, 2
    // Predicated region
    $region13: #{_lambda_.21} parent=5 // pred_check
      %p149 = pneg %p148
    $region14: #{_lambda_.21} parent=5 // pred_check_branch
      %151 = sbr.rel (%p149) target = $region16
    $region15: #{_lambda_.21} parent=5 // pred_region
      // Predicated region
      $region17: #{_lambda_.21} parent=15 // pred_check
        %p152 = pneg %p43
      $region18: #{_lambda_.21} parent=15 // pred_check_branch
        %154 = sbr.rel (%p152) target = $region20
      $region19: #{_lambda_.21} parent=15 // pred_region
        %p155 = scmp.lt.s32.totalorder %s16, 1
        %s156 = scalar_select %p155, %s16, 1
        %p157 = scmp.lt.s32.totalorder %s17, 0
        %s158 = scalar_select %p157, %s17, 0
        %s159 = smul.addr %s156, 8
        %s160 = sadd.s32 %s158, %s159
        %s161 = smul.addr %s160, 8
        %s162 = scalar_lea.vmem %s0, %s161
      $region20: #{_lambda_.21} parent=15 // pred_fallthru
        _
      // Predicated region
      $region21: #{_lambda_.21} parent=15 // pred_check
        %p163 = pneg %p71
      $region22: #{_lambda_.21} parent=15 // pred_check_branch
        %165 = sbr.rel (%p163) target = $region24
      $region23: #{_lambda_.21} parent=15 // pred_region
        %p166 = scmp.lt.s32.totalorder %s16, 1
        %s167 = scalar_select %p166, %s16, 1
        %p168 = scmp.lt.s32.totalorder %s17, 0
        %s169 = scalar_select %p168, %s17, 0
        %s170 = smul.addr %s167, 8
        %s171 = sadd.s32 %s169, %s170
        %s172 = smul.addr %s171, 8
        %s173 = scalar_lea.vmem %s1, %s172
      $region24: #{_lambda_.21} parent=15 // pred_fallthru
        _
      // Predicated region
      $region25: #{_lambda_.21} parent=15 // pred_check
        %p174 = pneg %p99
      $region26: #{_lambda_.21} parent=15 // pred_check_branch
        %176 = sbr.rel (%p174) target = $region28
      $region27: #{_lambda_.21} parent=15 // pred_region
        %p177 = scmp.lt.s32.totalorder %s16, 1
        %s178 = scalar_select %p177, %s16, 1
        %p179 = scmp.lt.s32.totalorder %s17, 0
        %s180 = scalar_select %p179, %s17, 0
        %s181 = smul.addr %s178, 8
        %s182 = sadd.s32 %s180, %s181
        %s183 = smul.addr %s182, 8
        %s184 = scalar_lea.vmem %s2, %s183
      $region28: #{_lambda_.21} parent=15 // pred_fallthru
        _
    $region16: #{_lambda_.21} parent=5 // pred_fallthru
      _
    %p185 = scmp.le.s32.totalorder 1, %s9
    %p186 = scmp.lt.s32.totalorder %s9, 3
    %p187 = pnand %p185, %p186
    %p188 = pneg %p187
    // Predicated region
    $region29: #{_lambda_.21} parent=5 // pred_check
      _
    $region30: #{_lambda_.21} parent=5 // pred_check_branch
      %190 = sbr.rel (%p187) target = $region32
    $region31: #{_lambda_.21} parent=5 // pred_region
      %s191 = ssub.s32 %s9, 1
      %p192 = scmp.lt.s32.totalorder %s18, 1
      %s193 = scalar_select %p192, %s18, 1
      %p194 = scmp.lt.s32.totalorder %s19, 0
      %s195 = scalar_select %p194, %s19, 0
      %s196 = smul.addr %s193, 8
      %s197 = sadd.s32 %s195, %s196
      %s198 = smul.addr %s197, 8
      %s199 = scalar_lea.vmem %s0, %s198
      %p200 = pneg %p49
      %p201 = pneg %p46
      %p202 = scmp.lt.s32.totalorder %s18, 1
      %s203 = scalar_select %p202, %s18, 1
      %p204 = scmp.lt.s32.totalorder %s19, 0
      %s205 = scalar_select %p204, %s19, 0
      %s206 = smul.addr %s203, 8
      %s207 = sadd.s32 %s205, %s206
      %s208 = smul.addr %s207, 8
      %s209 = scalar_lea.vmem %s1, %s208
      %p210 = pneg %p77
      %p211 = pneg %p74
      %p212 = scmp.lt.s32.totalorder %s18, 1
      %s213 = scalar_select %p212, %s18, 1
      %p214 = scmp.lt.s32.totalorder %s19, 0
      %s215 = scalar_select %p214, %s19, 0
      %s216 = smul.addr %s213, 8
      %s217 = sadd.s32 %s215, %s216
      %s218 = smul.addr %s217, 8
      %s219 = scalar_lea.vmem %s2, %s218
      %p220 = pneg %p105
      %p221 = pneg %p102
      %p222 = pneg %p133
      %p223 = pneg %p130
      %p224 = scmp.lt.s32.totalorder %s18, 1
      %s225 = scalar_select %p224, %s18, 1
      %p226 = scmp.lt.s32.totalorder %s19, 0
      %s227 = scalar_select %p226, %s19, 0
      %s228 = smul.addr %s225, 8
      %s229 = sadd.s32 %s227, %s228
      %s230 = smul.addr %s229, 8
      %s231 = scalar_lea.vmem %s3, %s230
      %p232 = scmp.lt.s32.totalorder %s18, 1
      %s233 = scalar_select %p232, %s18, 1
      %p234 = scmp.lt.s32.totalorder %s19, 0
      %s235 = scalar_select %p234, %s19, 0
      %s236 = smul.addr %s233, 8
      %s237 = sadd.s32 %s235, %s236
      %s238 = smul.addr %s237, 8
      %s239 = scalar_lea.vmem %s0, %s238
      %p240 = scmp.lt.s32.totalorder %s18, 1
      %s241 = scalar_select %p240, %s18, 1
      %p242 = scmp.lt.s32.totalorder %s19, 0
      %s243 = scalar_select %p242, %s19, 0
      %s244 = smul.addr %s241, 8
      %s245 = sadd.s32 %s243, %s244
      %s246 = smul.addr %s245, 8
      %s247 = scalar_lea.vmem %s1, %s246
      %p248 = scmp.lt.s32.totalorder %s18, 1
      %s249 = scalar_select %p248, %s18, 1
      %p250 = scmp.lt.s32.totalorder %s19, 0
      %s251 = scalar_select %p250, %s19, 0
      %s252 = smul.addr %s249, 8
      %s253 = sadd.s32 %s251, %s252
      %s254 = smul.addr %s253, 8
      %s255 = scalar_lea.vmem %s2, %s254
      %p256 = scmp.lt.s32.totalorder %s18, 1
      %s257 = scalar_select %p256, %s18, 1
      %p258 = scmp.lt.s32.totalorder %s19, 0
      %s259 = scalar_select %p258, %s19, 0
      %s260 = smul.addr %s257, 8
      %s261 = sadd.s32 %s259, %s260
      %s262 = smul.addr %s261, 8
      %s263 = scalar_lea.vmem %s3, %s262
      %v265 = vld [vmem:[%s239] sm:$0xff]
      %v266 = vld [vmem:[%s239 + $0x8] sm:$0xff]
      %v267 = vld [vmem:[%s239 + $0x10] sm:$0xff]
      %v268 = vld [vmem:[%s239 + $0x18] sm:$0xff]
      %v269 = vld [vmem:[%s239 + $0x20] sm:$0xff]
      %v270 = vld [vmem:[%s239 + $0x28] sm:$0xff]
      %v271 = vld [vmem:[%s239 + $0x30] sm:$0xff]
      %v272 = vld [vmem:[%s239 + $0x38] sm:$0xff]
      %v273 = vmul.f32 %v265, 0.35355338
      %v274 = vmul.f32 %v266, 0.35355338
      %v275 = vmul.f32 %v267, 0.35355338
      %v276 = vmul.f32 %v268, 0.35355338
      %v277 = vmul.f32 %v269, 0.35355338
      %v278 = vmul.f32 %v270, 0.35355338
      %v279 = vmul.f32 %v271, 0.35355338
      %v280 = vmul.f32 %v272, 0.35355338
      %v281 = vld [vmem:[%s247] sm:$0xff]
      %v282 = vld [vmem:[%s247 + $0x8] sm:$0xff]
      %v283 = vld [vmem:[%s247 + $0x10] sm:$0xff]
      %v284 = vld [vmem:[%s247 + $0x18] sm:$0xff]
      %v285 = vld [vmem:[%s247 + $0x20] sm:$0xff]
      %v286 = vld [vmem:[%s247 + $0x28] sm:$0xff]
      %v287 = vld [vmem:[%s247 + $0x30] sm:$0xff]
      %v288 = vld [vmem:[%s247 + $0x38] sm:$0xff]
      %v289 = vld [vmem:[%s255] sm:$0xff]
      %v290 = vld [vmem:[%s255 + $0x8] sm:$0xff]
      %v291 = vld [vmem:[%s255 + $0x10] sm:$0xff]
      %v292 = vld [vmem:[%s255 + $0x18] sm:$0xff]
      %v293 = vld [vmem:[%s255 + $0x20] sm:$0xff]
      %v294 = vld [vmem:[%s255 + $0x28] sm:$0xff]
      %v295 = vld [vmem:[%s255 + $0x30] sm:$0xff]
      %v296 = vld [vmem:[%s255 + $0x38] sm:$0xff]
      %v297 = vpack.c.bf16 %v274, %v273
      %v298 = vpack.c.bf16 %v276, %v275
      %v299 = vpack.c.bf16 %v278, %v277
      %v300 = vpack.c.bf16 %v280, %v279
      %v301 = vpack.c.bf16 %v282, %v281
      %v302 = vpack.c.bf16 %v284, %v283
      %v303 = vpack.c.bf16 %v286, %v285
      %v304 = vpack.c.bf16 %v288, %v287
      %v305 = vpack.c.bf16 %v290, %v289
      %v306 = vpack.c.bf16 %v292, %v291
      %v307 = vpack.c.bf16 %v294, %v293
      %v308 = vpack.c.bf16 %v296, %v295
      %vm309 = vcmask 64512
      %v311 = vsel %vm309, %v297, 0
      %v314 = vsel %vm309, %v298, 0
      %v317 = vsel %vm309, %v299, 0
      %v320 = vsel %vm309, %v300, 0
      %v323 = vsel %vm309, %v301, 0
      %v326 = vsel %vm309, %v302, 0
      %v329 = vsel %vm309, %v303, 0
      %v332 = vsel %vm309, %v304, 0
      %334 = vmatprep.subr.bf16.mxu0 0
      %335 = vmatpush1.bf16.xpose.msra.mxu0 0
      %336 = vmatprep.subr.bf16.mxu0 0
      %337 = vmatpush1.bf16.xpose.msra.mxu0 0
      %338 = vmatprep.subr.bf16.mxu0 0
      %339 = vmatpush1.bf16.xpose.msra.mxu0 0
      %340 = vmatprep.subr.bf16.mxu0 0
      %341 = vmatpush1.bf16.xpose.msra.mxu0 0
      %342 = vmatprep.subr.bf16.mxu0 0
      %343 = vmatpush1.bf16.xpose.msra.mxu0 %v332
      %344 = vmatprep.subr.bf16.mxu0 0
      %345 = vmatpush1.bf16.xpose.msra.mxu0 %v329
      %346 = vmatprep.subr.bf16.mxu0 0
      %347 = vmatpush1.bf16.xpose.msra.mxu0 %v326
      %348 = vmatprep.subr.bf16.mxu0 0
      %349 = vmatpush1.bf16.xpose.msra.mxu0 %v323
      %350 = vmatprep.subr.bf16.mxu0 0
      %351 = vmatpush2.bf16.xpose.msra.mxu0 0
      %352 = vmatprep.subr.bf16.mxu0 0
      %353 = vmatpush2.bf16.xpose.msra.mxu0 0
      %354 = vmatprep.subr.bf16.mxu0 0
      %355 = vmatpush2.bf16.xpose.msra.mxu0 0
      %356 = vmatprep.subr.bf16.mxu0 0
      %357 = vmatpush2.bf16.xpose.msra.mxu0 0
      %358 = vmatprep.subr.bf16.mxu0 0
      %359 = vmatpush2.bf16.xpose.msra.mxu0 0
      %360 = vmatprep.subr.bf16.mxu0 0
      %361 = vmatpush2.bf16.xpose.msra.mxu0 0
      %362 = vmatprep.subr.bf16.mxu0 0
      %363 = vmatpush2.bf16.xpose.msra.mxu0 0
      %364 = vmatprep.subr.bf16.mxu0 0
      %365 = vmatpush2.bf16.xpose.msra.mxu0 0
      %366 = vmatprep.mubr.bf16.mxu0 0
      %367 = vmatmul.mubr.bf16.gmra.mxu0 %v311
      %v368 = vpop.f32.mrf.mxu0
      %v369 = vadd.f32 0.0, %v368
      %v370 = vpop.f32.mrf.mxu0
      %v371 = vpop.f32.mrf.mxu0
      %v372 = vadd.f32 0.0, %v371
      %v373 = vpop.f32.mrf.mxu0
      %374 = vmatprep.mubr.bf16.mxu0 0
      %375 = vmatmul.mubr.bf16.gmra.mxu0 %v314
      %v376 = vpop.f32.mrf.mxu0
      %v377 = vadd.f32 0.0, %v376
      %v378 = vpop.f32.mrf.mxu0
      %v379 = vpop.f32.mrf.mxu0
      %v380 = vadd.f32 0.0, %v379
      %v381 = vpop.f32.mrf.mxu0
      %382 = vmatprep.mubr.bf16.mxu0 0
      %383 = vmatmul.mubr.bf16.gmra.mxu0 %v317
      %v384 = vpop.f32.mrf.mxu0
      %v385 = vadd.f32 0.0, %v384
      %v386 = vpop.f32.mrf.mxu0
      %v387 = vpop.f32.mrf.mxu0
      %v388 = vadd.f32 0.0, %v387
      %v389 = vpop.f32.mrf.mxu0
      %390 = vmatprep.mubr.bf16.mxu0 0
      %391 = vmatmul.mubr.bf16.gmra.mxu0 %v320
      %v392 = vpop.f32.mrf.mxu0
      %v393 = vadd.f32 0.0, %v392
      %v394 = vpop.f32.mrf.mxu0
      %v395 = vpop.f32.mrf.mxu0
      %v396 = vadd.f32 0.0, %v395
      %v397 = vpop.f32.mrf.mxu0
      %398 = vdwg.mxu0
      %vm399 = vcmask 523264
      %v400 = vsel %vm399, %v369, -inf
      %401 = vmax.xlane.f32.xlu0 %v400
      %v402 = vpop.xlane.xlu0 %401
      %v403 = vsel %vm399, %v372, -inf
      %404 = vmax.xlane.f32.xlu0 %v403
      %v405 = vpop.xlane.xlu0 %404
      %v406 = vsel %vm399, %v377, -inf
      %407 = vmax.xlane.f32.xlu0 %v406
      %v408 = vpop.xlane.xlu0 %407
      %v409 = vsel %vm399, %v380, -inf
      %410 = vmax.xlane.f32.xlu0 %v409
      %v411 = vpop.xlane.xlu0 %410
      %v412 = vsel %vm399, %v385, -inf
      %413 = vmax.xlane.f32.xlu0 %v412
      %v414 = vpop.xlane.xlu0 %413
      %v415 = vsel %vm399, %v388, -inf
      %416 = vmax.xlane.f32.xlu0 %v415
      %v417 = vpop.xlane.xlu0 %416
      %v418 = vsel %vm399, %v393, -inf
      %419 = vmax.xlane.f32.xlu0 %v418
      %v420 = vpop.xlane.xlu0 %419
      %v421 = vsel %vm399, %v396, -inf
      %422 = vmax.xlane.f32.xlu0 %v421
      %v423 = vpop.xlane.xlu0 %422
      %v424 = vsub.f32 %v369, %v402
      %v425 = vsub.f32 %v372, %v405
      %v426 = vsub.f32 %v377, %v408
      %v427 = vsub.f32 %v380, %v411
      %v428 = vsub.f32 %v385, %v414
      %v429 = vsub.f32 %v388, %v417
      %v430 = vsub.f32 %v393, %v420
      %v431 = vsub.f32 %v396, %v423
      %v432 = vmul.f32 %v424, 1.442695
      %v433 = vpow.pop %v432
      %v434 = vmul.f32 %v425, 1.442695
      %v435 = vpow.pop %v434
      %v436 = vmul.f32 %v426, 1.442695
      %v437 = vpow.pop %v436
      %v438 = vmul.f32 %v427, 1.442695
      %v439 = vpow.pop %v438
      %v440 = vmul.f32 %v428, 1.442695
      %v441 = vpow.pop %v440
      %v442 = vmul.f32 %v429, 1.442695
      %v443 = vpow.pop %v442
      %v444 = vmul.f32 %v430, 1.442695
      %v445 = vpow.pop %v444
      %v446 = vmul.f32 %v431, 1.442695
      %v447 = vpow.pop %v446
      %v448 = vsel %vm399, %v433, 0.0
      %449 = vadd.xlane.f32.xlu0 %v448
      %v450 = vpop.xlane.xlu0 %449
      %v451 = vsel %vm399, %v435, 0.0
      %452 = vadd.xlane.f32.xlu0 %v451
      %v453 = vpop.xlane.xlu0 %452
      %v454 = vsel %vm399, %v437, 0.0
      %455 = vadd.xlane.f32.xlu0 %v454
      %v456 = vpop.xlane.xlu0 %455
      %v457 = vsel %vm399, %v439, 0.0
      %458 = vadd.xlane.f32.xlu0 %v457
      %v459 = vpop.xlane.xlu0 %458
      %v460 = vsel %vm399, %v441, 0.0
      %461 = vadd.xlane.f32.xlu0 %v460
      %v462 = vpop.xlane.xlu0 %461
      %v463 = vsel %vm399, %v443, 0.0
      %464 = vadd.xlane.f32.xlu0 %v463
      %v465 = vpop.xlane.xlu0 %464
      %v466 = vsel %vm399, %v445, 0.0
      %467 = vadd.xlane.f32.xlu0 %v466
      %v468 = vpop.xlane.xlu0 %467
      %v469 = vsel %vm399, %v447, 0.0
      %470 = vadd.xlane.f32.xlu0 %v469
      %v471 = vpop.xlane.xlu0 %470
      %v472 = vrcp.pop %v450
      %v473 = vrcp.pop %v453
      %v474 = vrcp.pop %v456
      %v475 = vrcp.pop %v459
      %v476 = vrcp.pop %v462
      %v477 = vrcp.pop %v465
      %v478 = vrcp.pop %v468
      %v479 = vrcp.pop %v471
      %v480 = vmul.f32 %v433, %v472
      %v481 = vmul.f32 %v435, %v473
      %v482 = vmul.f32 %v437, %v474
      %v483 = vmul.f32 %v439, %v475
      %v484 = vmul.f32 %v441, %v476
      %v485 = vmul.f32 %v443, %v477
      %v486 = vmul.f32 %v445, %v478
      %v487 = vmul.f32 %v447, %v479
      %v488 = vpack.c.bf16 %v481, %v480
      %v489 = vpack.c.bf16 %v483, %v482
      %v490 = vpack.c.bf16 %v485, %v484
      %v491 = vpack.c.bf16 %v487, %v486
      %v493 = vsel %vm399, %v488, 0
      %v496 = vsel %vm399, %v489, 0
      %v499 = vsel %vm399, %v490, 0
      %v502 = vsel %vm399, %v491, 0
      %504 = vmatprep.subr.bf16.mxu0 0
      %505 = vmatpush1.bf16.msra.mxu0 0
      %506 = vmatprep.subr.bf16.mxu0 0
      %507 = vmatpush1.bf16.msra.mxu0 0
      %508 = vmatprep.subr.bf16.mxu0 0
      %509 = vmatpush1.bf16.msra.mxu0 0
      %510 = vmatprep.subr.bf16.mxu0 0
      %511 = vmatpush1.bf16.msra.mxu0 0
      %512 = vmatprep.subr.bf16.mxu0 0
      %513 = vmatpush1.bf16.msra.mxu0 %v308
      %514 = vmatprep.subr.bf16.mxu0 0
      %515 = vmatpush1.bf16.msra.mxu0 %v307
      %516 = vmatprep.subr.bf16.mxu0 0
      %517 = vmatpush1.bf16.msra.mxu0 %v306
      %518 = vmatprep.subr.bf16.mxu0 0
      %519 = vmatpush1.bf16.msra.mxu0 %v305
      %520 = vmatprep.subr.bf16.mxu0 0
      %521 = vmatpush2.bf16.msra.mxu0 0
      %522 = vmatprep.subr.bf16.mxu0 0
      %523 = vmatpush2.bf16.msra.mxu0 0
      %524 = vmatprep.subr.bf16.mxu0 0
      %525 = vmatpush2.bf16.msra.mxu0 0
      %526 = vmatprep.subr.bf16.mxu0 0
      %527 = vmatpush2.bf16.msra.mxu0 0
      %528 = vmatprep.subr.bf16.mxu0 0
      %529 = vmatpush2.bf16.msra.mxu0 0
      %530 = vmatprep.subr.bf16.mxu0 0
      %531 = vmatpush2.bf16.msra.mxu0 0
      %532 = vmatprep.subr.bf16.mxu0 0
      %533 = vmatpush2.bf16.msra.mxu0 0
      %534 = vmatprep.subr.bf16.mxu0 0
      %535 = vmatpush2.bf16.msra.mxu0 0
      %536 = vmatprep.mubr.bf16.mxu0 0
      %537 = vmatmul.mubr.bf16.gmra.mxu0 %v493
      %v538 = vpop.f32.mrf.mxu0
      %v539 = vadd.f32 0.0, %v538
      %v540 = vpop.f32.mrf.mxu0
      %v541 = vpop.f32.mrf.mxu0
      %v542 = vadd.f32 0.0, %v541
      %v543 = vpop.f32.mrf.mxu0
      %544 = vmatprep.mubr.bf16.mxu0 0
      %545 = vmatmul.mubr.bf16.gmra.mxu0 %v496
      %v546 = vpop.f32.mrf.mxu0
      %v547 = vadd.f32 0.0, %v546
      %v548 = vpop.f32.mrf.mxu0
      %v549 = vpop.f32.mrf.mxu0
      %v550 = vadd.f32 0.0, %v549
      %v551 = vpop.f32.mrf.mxu0
      %552 = vmatprep.mubr.bf16.mxu0 0
      %553 = vmatmul.mubr.bf16.gmra.mxu0 %v499
      %v554 = vpop.f32.mrf.mxu0
      %v555 = vadd.f32 0.0, %v554
      %v556 = vpop.f32.mrf.mxu0
      %v557 = vpop.f32.mrf.mxu0
      %v558 = vadd.f32 0.0, %v557
      %v559 = vpop.f32.mrf.mxu0
      %560 = vmatprep.mubr.bf16.mxu0 0
      %561 = vmatmul.mubr.bf16.gmra.mxu0 %v502
      %v562 = vpop.f32.mrf.mxu0
      %v563 = vadd.f32 0.0, %v562
      %v564 = vpop.f32.mrf.mxu0
      %v565 = vpop.f32.mrf.mxu0
      %v566 = vadd.f32 0.0, %v565
      %v567 = vpop.f32.mrf.mxu0
      %568 = vdwg.mxu0
      %573 = vrot.lane.b32.xlu0 %v297, 120
      %v574 = vpop.permute.xlu0 %573
      %575 = vrot.lane.b32.xlu0 %v298, 120
      %v576 = vpop.permute.xlu0 %575
      %577 = vrot.lane.b32.xlu0 %v299, 120
      %v578 = vpop.permute.xlu0 %577
      %579 = vrot.lane.b32.xlu0 %v300, 120
      %v580 = vpop.permute.xlu0 %579
      %585 = vrot.lane.b32.xlu0 %v301, 120
      %v586 = vpop.permute.xlu0 %585
      %587 = vrot.lane.b32.xlu0 %v302, 120
      %v588 = vpop.permute.xlu0 %587
      %589 = vrot.lane.b32.xlu0 %v303, 120
      %v590 = vpop.permute.xlu0 %589
      %591 = vrot.lane.b32.xlu0 %v304, 120
      %v592 = vpop.permute.xlu0 %591
      %v594 = vsel %vm309, %v574, 0
      %v597 = vsel %vm309, %v576, 0
      %v600 = vsel %vm309, %v578, 0
      %v603 = vsel %vm309, %v580, 0
      %v606 = vsel %vm309, %v586, 0
      %v609 = vsel %vm309, %v588, 0
      %v612 = vsel %vm309, %v590, 0
      %v615 = vsel %vm309, %v592, 0
      %617 = vmatprep.subr.bf16.mxu0 0
      %618 = vmatpush1.bf16.xpose.msra.mxu0 0
      %619 = vmatprep.subr.bf16.mxu0 0
      %620 = vmatpush1.bf16.xpose.msra.mxu0 0
      %621 = vmatprep.subr.bf16.mxu0 0
      %622 = vmatpush1.bf16.xpose.msra.mxu0 0
      %623 = vmatprep.subr.bf16.mxu0 0
      %624 = vmatpush1.bf16.xpose.msra.mxu0 0
      %625 = vmatprep.subr.bf16.mxu0 0
      %626 = vmatpush1.bf16.xpose.msra.mxu0 %v615
      %627 = vmatprep.subr.bf16.mxu0 0
      %628 = vmatpush1.bf16.xpose.msra.mxu0 %v612
      %629 = vmatprep.subr.bf16.mxu0 0
      %630 = vmatpush1.bf16.xpose.msra.mxu0 %v609
      %631 = vmatprep.subr.bf16.mxu0 0
      %632 = vmatpush1.bf16.xpose.msra.mxu0 %v606
      %633 = vmatprep.subr.bf16.mxu0 0
      %634 = vmatpush2.bf16.xpose.msra.mxu0 0
      %635 = vmatprep.subr.bf16.mxu0 0
      %636 = vmatpush2.bf16.xpose.msra.mxu0 0
      %637 = vmatprep.subr.bf16.mxu0 0
      %638 = vmatpush2.bf16.xpose.msra.mxu0 0
      %639 = vmatprep.subr.bf16.mxu0 0
      %640 = vmatpush2.bf16.xpose.msra.mxu0 0
      %641 = vmatprep.subr.bf16.mxu0 0
      %642 = vmatpush2.bf16.xpose.msra.mxu0 0
      %643 = vmatprep.subr.bf16.mxu0 0
      %644 = vmatpush2.bf16.xpose.msra.mxu0 0
      %645 = vmatprep.subr.bf16.mxu0 0
      %646 = vmatpush2.bf16.xpose.msra.mxu0 0
      %647 = vmatprep.subr.bf16.mxu0 0
      %648 = vmatpush2.bf16.xpose.msra.mxu0 0
      %649 = vmatprep.mubr.bf16.mxu0 0
      %650 = vmatmul.mubr.bf16.gmra.mxu0 %v594
      %v651 = vpop.f32.mrf.mxu0
      %v652 = vadd.f32 0.0, %v651
      %v653 = vpop.f32.mrf.mxu0
      %v654 = vpop.f32.mrf.mxu0
      %v655 = vadd.f32 0.0, %v654
      %v656 = vpop.f32.mrf.mxu0
      %657 = vmatprep.mubr.bf16.mxu0 0
      %658 = vmatmul.mubr.bf16.gmra.mxu0 %v597
      %v659 = vpop.f32.mrf.mxu0
      %v660 = vadd.f32 0.0, %v659
      %v661 = vpop.f32.mrf.mxu0
      %v662 = vpop.f32.mrf.mxu0
      %v663 = vadd.f32 0.0, %v662
      %v664 = vpop.f32.mrf.mxu0
      %665 = vmatprep.mubr.bf16.mxu0 0
      %666 = vmatmul.mubr.bf16.gmra.mxu0 %v600
      %v667 = vpop.f32.mrf.mxu0
      %v668 = vadd.f32 0.0, %v667
      %v669 = vpop.f32.mrf.mxu0
      %v670 = vpop.f32.mrf.mxu0
      %v671 = vadd.f32 0.0, %v670
      %v672 = vpop.f32.mrf.mxu0
      %673 = vmatprep.mubr.bf16.mxu0 0
      %674 = vmatmul.mubr.bf16.gmra.mxu0 %v603
      %v675 = vpop.f32.mrf.mxu0
      %v676 = vadd.f32 0.0, %v675
      %v677 = vpop.f32.mrf.mxu0
      %v678 = vpop.f32.mrf.mxu0
      %v679 = vadd.f32 0.0, %v678
      %v680 = vpop.f32.mrf.mxu0
      %681 = vdwg.mxu0
      %v682 = vsel %vm399, %v652, -inf
      %683 = vmax.xlane.f32.xlu0 %v682
      %v684 = vpop.xlane.xlu0 %683
      %v685 = vsel %vm399, %v655, -inf
      %686 = vmax.xlane.f32.xlu0 %v685
      %v687 = vpop.xlane.xlu0 %686
      %v688 = vsel %vm399, %v660, -inf
      %689 = vmax.xlane.f32.xlu0 %v688
      %v690 = vpop.xlane.xlu0 %689
      %v691 = vsel %vm399, %v663, -inf
      %692 = vmax.xlane.f32.xlu0 %v691
      %v693 = vpop.xlane.xlu0 %692
      %v694 = vsel %vm399, %v668, -inf
      %695 = vmax.xlane.f32.xlu0 %v694
      %v696 = vpop.xlane.xlu0 %695
      %v697 = vsel %vm399, %v671, -inf
      %698 = vmax.xlane.f32.xlu0 %v697
      %v699 = vpop.xlane.xlu0 %698
      %v700 = vsel %vm399, %v676, -inf
      %701 = vmax.xlane.f32.xlu0 %v700
      %v702 = vpop.xlane.xlu0 %701
      %v703 = vsel %vm399, %v679, -inf
      %704 = vmax.xlane.f32.xlu0 %v703
      %v705 = vpop.xlane.xlu0 %704
      %v706 = vsub.f32 %v652, %v684
      %v707 = vsub.f32 %v655, %v687
      %v708 = vsub.f32 %v660, %v690
      %v709 = vsub.f32 %v663, %v693
      %v710 = vsub.f32 %v668, %v696
      %v711 = vsub.f32 %v671, %v699
      %v712 = vsub.f32 %v676, %v702
      %v713 = vsub.f32 %v679, %v705
      %v714 = vmul.f32 %v706, 1.442695
      %v715 = vpow.pop %v714
      %v716 = vmul.f32 %v707, 1.442695
      %v717 = vpow.pop %v716
      %v718 = vmul.f32 %v708, 1.442695
      %v719 = vpow.pop %v718
      %v720 = vmul.f32 %v709, 1.442695
      %v721 = vpow.pop %v720
      %v722 = vmul.f32 %v710, 1.442695
      %v723 = vpow.pop %v722
      %v724 = vmul.f32 %v711, 1.442695
      %v725 = vpow.pop %v724
      %v726 = vmul.f32 %v712, 1.442695
      %v727 = vpow.pop %v726
      %v728 = vmul.f32 %v713, 1.442695
      %v729 = vpow.pop %v728
      %v730 = vsel %vm399, %v715, 0.0
      %731 = vadd.xlane.f32.xlu0 %v730
      %v732 = vpop.xlane.xlu0 %731
      %v733 = vsel %vm399, %v717, 0.0
      %734 = vadd.xlane.f32.xlu0 %v733
      %v735 = vpop.xlane.xlu0 %734
      %v736 = vsel %vm399, %v719, 0.0
      %737 = vadd.xlane.f32.xlu0 %v736
      %v738 = vpop.xlane.xlu0 %737
      %v739 = vsel %vm399, %v721, 0.0
      %740 = vadd.xlane.f32.xlu0 %v739
      %v741 = vpop.xlane.xlu0 %740
      %v742 = vsel %vm399, %v723, 0.0
      %743 = vadd.xlane.f32.xlu0 %v742
      %v744 = vpop.xlane.xlu0 %743
      %v745 = vsel %vm399, %v725, 0.0
      %746 = vadd.xlane.f32.xlu0 %v745
      %v747 = vpop.xlane.xlu0 %746
      %v748 = vsel %vm399, %v727, 0.0
      %749 = vadd.xlane.f32.xlu0 %v748
      %v750 = vpop.xlane.xlu0 %749
      %v751 = vsel %vm399, %v729, 0.0
      %752 = vadd.xlane.f32.xlu0 %v751
      %v753 = vpop.xlane.xlu0 %752
      %v754 = vrcp.pop %v732
      %v755 = vrcp.pop %v735
      %v756 = vrcp.pop %v738
      %v757 = vrcp.pop %v741
      %v758 = vrcp.pop %v744
      %v759 = vrcp.pop %v747
      %v760 = vrcp.pop %v750
      %v761 = vrcp.pop %v753
      %v762 = vmul.f32 %v715, %v754
      %v763 = vmul.f32 %v717, %v755
      %v764 = vmul.f32 %v719, %v756
      %v765 = vmul.f32 %v721, %v757
      %v766 = vmul.f32 %v723, %v758
      %v767 = vmul.f32 %v725, %v759
      %v768 = vmul.f32 %v727, %v760
      %v769 = vmul.f32 %v729, %v761
      %v770 = vpack.c.bf16 %v763, %v762
      %v771 = vpack.c.bf16 %v765, %v764
      %v772 = vpack.c.bf16 %v767, %v766
      %v773 = vpack.c.bf16 %v769, %v768
      %778 = vrot.lane.b32.xlu0 %v305, 120
      %v779 = vpop.permute.xlu0 %778
      %780 = vrot.lane.b32.xlu0 %v306, 120
      %v781 = vpop.permute.xlu0 %780
      %782 = vrot.lane.b32.xlu0 %v307, 120
      %v783 = vpop.permute.xlu0 %782
      %784 = vrot.lane.b32.xlu0 %v308, 120
      %v785 = vpop.permute.xlu0 %784
      %v791 = vsel %vm399, %v770, 0
      %v794 = vsel %vm399, %v771, 0
      %v797 = vsel %vm399, %v772, 0
      %v800 = vsel %vm399, %v773, 0
      %802 = vmatprep.subr.bf16.mxu0 0
      %803 = vmatpush1.bf16.msra.mxu0 0
      %804 = vmatprep.subr.bf16.mxu0 0
      %805 = vmatpush1.bf16.msra.mxu0 0
      %806 = vmatprep.subr.bf16.mxu0 0
      %807 = vmatpush1.bf16.msra.mxu0 0
      %808 = vmatprep.subr.bf16.mxu0 0
      %809 = vmatpush1.bf16.msra.mxu0 0
      %810 = vmatprep.subr.bf16.mxu0 0
      %811 = vmatpush1.bf16.msra.mxu0 %v785
      %812 = vmatprep.subr.bf16.mxu0 0
      %813 = vmatpush1.bf16.msra.mxu0 %v783
      %814 = vmatprep.subr.bf16.mxu0 0
      %815 = vmatpush1.bf16.msra.mxu0 %v781
      %816 = vmatprep.subr.bf16.mxu0 0
      %817 = vmatpush1.bf16.msra.mxu0 %v779
      %818 = vmatprep.subr.bf16.mxu0 0
      %819 = vmatpush2.bf16.msra.mxu0 0
      %820 = vmatprep.subr.bf16.mxu0 0
      %821 = vmatpush2.bf16.msra.mxu0 0
      %822 = vmatprep.subr.bf16.mxu0 0
      %823 = vmatpush2.bf16.msra.mxu0 0
      %824 = vmatprep.subr.bf16.mxu0 0
      %825 = vmatpush2.bf16.msra.mxu0 0
      %826 = vmatprep.subr.bf16.mxu0 0
      %827 = vmatpush2.bf16.msra.mxu0 0
      %828 = vmatprep.subr.bf16.mxu0 0
      %829 = vmatpush2.bf16.msra.mxu0 0
      %830 = vmatprep.subr.bf16.mxu0 0
      %831 = vmatpush2.bf16.msra.mxu0 0
      %832 = vmatprep.subr.bf16.mxu0 0
      %833 = vmatpush2.bf16.msra.mxu0 0
      %834 = vmatprep.mubr.bf16.mxu0 0
      %835 = vmatmul.mubr.bf16.gmra.mxu0 %v791
      %v836 = vpop.f32.mrf.mxu0
      %v837 = vadd.f32 0.0, %v836
      %v838 = vpop.f32.mrf.mxu0
      %v839 = vpop.f32.mrf.mxu0
      %v840 = vadd.f32 0.0, %v839
      %v841 = vpop.f32.mrf.mxu0
      %842 = vmatprep.mubr.bf16.mxu0 0
      %843 = vmatmul.mubr.bf16.gmra.mxu0 %v794
      %v844 = vpop.f32.mrf.mxu0
      %v845 = vadd.f32 0.0, %v844
      %v846 = vpop.f32.mrf.mxu0
      %v847 = vpop.f32.mrf.mxu0
      %v848 = vadd.f32 0.0, %v847
      %v849 = vpop.f32.mrf.mxu0
      %850 = vmatprep.mubr.bf16.mxu0 0
      %851 = vmatmul.mubr.bf16.gmra.mxu0 %v797
      %v852 = vpop.f32.mrf.mxu0
      %v853 = vadd.f32 0.0, %v852
      %v854 = vpop.f32.mrf.mxu0
      %v855 = vpop.f32.mrf.mxu0
      %v856 = vadd.f32 0.0, %v855
      %v857 = vpop.f32.mrf.mxu0
      %858 = vmatprep.mubr.bf16.mxu0 0
      %859 = vmatmul.mubr.bf16.gmra.mxu0 %v800
      %v860 = vpop.f32.mrf.mxu0
      %v861 = vadd.f32 0.0, %v860
      %v862 = vpop.f32.mrf.mxu0
      %v863 = vpop.f32.mrf.mxu0
      %v864 = vadd.f32 0.0, %v863
      %v865 = vpop.f32.mrf.mxu0
      %866 = vdwg.mxu0
      %867 = vrot.lane.b32.xlu0 %v297, 112
      %v868 = vpop.permute.xlu0 %867
      %869 = vrot.lane.b32.xlu0 %v298, 112
      %v870 = vpop.permute.xlu0 %869
      %871 = vrot.lane.b32.xlu0 %v299, 112
      %v872 = vpop.permute.xlu0 %871
      %873 = vrot.lane.b32.xlu0 %v300, 112
      %v874 = vpop.permute.xlu0 %873
      %875 = vrot.lane.b32.xlu0 %v301, 112
      %v876 = vpop.permute.xlu0 %875
      %877 = vrot.lane.b32.xlu0 %v302, 112
      %v878 = vpop.permute.xlu0 %877
      %879 = vrot.lane.b32.xlu0 %v303, 112
      %v880 = vpop.permute.xlu0 %879
      %881 = vrot.lane.b32.xlu0 %v304, 112
      %v882 = vpop.permute.xlu0 %881
      %v884 = vsel %vm309, %v868, 0
      %v887 = vsel %vm309, %v870, 0
      %v890 = vsel %vm309, %v872, 0
      %v893 = vsel %vm309, %v874, 0
      %v896 = vsel %vm309, %v876, 0
      %v899 = vsel %vm309, %v878, 0
      %v902 = vsel %vm309, %v880, 0
      %v905 = vsel %vm309, %v882, 0
      %907 = vmatprep.subr.bf16.mxu0 0
      %908 = vmatpush1.bf16.xpose.msra.mxu0 0
      %909 = vmatprep.subr.bf16.mxu0 0
      %910 = vmatpush1.bf16.xpose.msra.mxu0 0
      %911 = vmatprep.subr.bf16.mxu0 0
      %912 = vmatpush1.bf16.xpose.msra.mxu0 0
      %913 = vmatprep.subr.bf16.mxu0 0
      %914 = vmatpush1.bf16.xpose.msra.mxu0 0
      %915 = vmatprep.subr.bf16.mxu0 0
      %916 = vmatpush1.bf16.xpose.msra.mxu0 %v905
      %917 = vmatprep.subr.bf16.mxu0 0
      %918 = vmatpush1.bf16.xpose.msra.mxu0 %v902
      %919 = vmatprep.subr.bf16.mxu0 0
      %920 = vmatpush1.bf16.xpose.msra.mxu0 %v899
      %921 = vmatprep.subr.bf16.mxu0 0
      %922 = vmatpush1.bf16.xpose.msra.mxu0 %v896
      %923 = vmatprep.subr.bf16.mxu0 0
      %924 = vmatpush2.bf16.xpose.msra.mxu0 0
      %925 = vmatprep.subr.bf16.mxu0 0
      %926 = vmatpush2.bf16.xpose.msra.mxu0 0
      %927 = vmatprep.subr.bf16.mxu0 0
      %928 = vmatpush2.bf16.xpose.msra.mxu0 0
      %929 = vmatprep.subr.bf16.mxu0 0
      %930 = vmatpush2.bf16.xpose.msra.mxu0 0
      %931 = vmatprep.subr.bf16.mxu0 0
      %932 = vmatpush2.bf16.xpose.msra.mxu0 0
      %933 = vmatprep.subr.bf16.mxu0 0
      %934 = vmatpush2.bf16.xpose.msra.mxu0 0
      %935 = vmatprep.subr.bf16.mxu0 0
      %936 = vmatpush2.bf16.xpose.msra.mxu0 0
      %937 = vmatprep.subr.bf16.mxu0 0
      %938 = vmatpush2.bf16.xpose.msra.mxu0 0
      %939 = vmatprep.mubr.bf16.mxu0 0
      %940 = vmatmul.mubr.bf16.gmra.mxu0 %v884
      %v941 = vpop.f32.mrf.mxu0
      %v942 = vadd.f32 0.0, %v941
      %v943 = vpop.f32.mrf.mxu0
      %v944 = vpop.f32.mrf.mxu0
      %v945 = vadd.f32 0.0, %v944
      %v946 = vpop.f32.mrf.mxu0
      %947 = vmatprep.mubr.bf16.mxu0 0
      %948 = vmatmul.mubr.bf16.gmra.mxu0 %v887
      %v949 = vpop.f32.mrf.mxu0
      %v950 = vadd.f32 0.0, %v949
      %v951 = vpop.f32.mrf.mxu0
      %v952 = vpop.f32.mrf.mxu0
      %v953 = vadd.f32 0.0, %v952
      %v954 = vpop.f32.mrf.mxu0
      %955 = vmatprep.mubr.bf16.mxu0 0
      %956 = vmatmul.mubr.bf16.gmra.mxu0 %v890
      %v957 = vpop.f32.mrf.mxu0
      %v958 = vadd.f32 0.0, %v957
      %v959 = vpop.f32.mrf.mxu0
      %v960 = vpop.f32.mrf.mxu0
      %v961 = vadd.f32 0.0, %v960
      %v962 = vpop.f32.mrf.mxu0
      %963 = vmatprep.mubr.bf16.mxu0 0
      %964 = vmatmul.mubr.bf16.gmra.mxu0 %v893
      %v965 = vpop.f32.mrf.mxu0
      %v966 = vadd.f32 0.0, %v965
      %v967 = vpop.f32.mrf.mxu0
      %v968 = vpop.f32.mrf.mxu0
      %v969 = vadd.f32 0.0, %v968
      %v970 = vpop.f32.mrf.mxu0
      %971 = vdwg.mxu0
      %v972 = vsel %vm399, %v942, -inf
      %973 = vmax.xlane.f32.xlu0 %v972
      %v974 = vpop.xlane.xlu0 %973
      %v975 = vsel %vm399, %v945, -inf
      %976 = vmax.xlane.f32.xlu0 %v975
      %v977 = vpop.xlane.xlu0 %976
      %v978 = vsel %vm399, %v950, -inf
      %979 = vmax.xlane.f32.xlu0 %v978
      %v980 = vpop.xlane.xlu0 %979
      %v981 = vsel %vm399, %v953, -inf
      %982 = vmax.xlane.f32.xlu0 %v981
      %v983 = vpop.xlane.xlu0 %982
      %v984 = vsel %vm399, %v958, -inf
      %985 = vmax.xlane.f32.xlu0 %v984
      %v986 = vpop.xlane.xlu0 %985
      %v987 = vsel %vm399, %v961, -inf
      %988 = vmax.xlane.f32.xlu0 %v987
      %v989 = vpop.xlane.xlu0 %988
      %v990 = vsel %vm399, %v966, -inf
      %991 = vmax.xlane.f32.xlu0 %v990
      %v992 = vpop.xlane.xlu0 %991
      %v993 = vsel %vm399, %v969, -inf
      %994 = vmax.xlane.f32.xlu0 %v993
      %v995 = vpop.xlane.xlu0 %994
      %v996 = vsub.f32 %v942, %v974
      %v997 = vsub.f32 %v945, %v977
      %v998 = vsub.f32 %v950, %v980
      %v999 = vsub.f32 %v953, %v983
      %v1000 = vsub.f32 %v958, %v986
      %v1001 = vsub.f32 %v961, %v989
      %v1002 = vsub.f32 %v966, %v992
      %v1003 = vsub.f32 %v969, %v995
      %v1004 = vmul.f32 %v996, 1.442695
      %v1005 = vpow.pop %v1004
      %v1006 = vmul.f32 %v997, 1.442695
      %v1007 = vpow.pop %v1006
      %v1008 = vmul.f32 %v998, 1.442695
      %v1009 = vpow.pop %v1008
      %v1010 = vmul.f32 %v999, 1.442695
      %v1011 = vpow.pop %v1010
      %v1012 = vmul.f32 %v1000, 1.442695
      %v1013 = vpow.pop %v1012
      %v1014 = vmul.f32 %v1001, 1.442695
      %v1015 = vpow.pop %v1014
      %v1016 = vmul.f32 %v1002, 1.442695
      %v1017 = vpow.pop %v1016
      %v1018 = vmul.f32 %v1003, 1.442695
      %v1019 = vpow.pop %v1018
      %v1020 = vsel %vm399, %v1005, 0.0
      %1021 = vadd.xlane.f32.xlu0 %v1020
      %v1022 = vpop.xlane.xlu0 %1021
      %v1023 = vsel %vm399, %v1007, 0.0
      %1024 = vadd.xlane.f32.xlu0 %v1023
      %v1025 = vpop.xlane.xlu0 %1024
      %v1026 = vsel %vm399, %v1009, 0.0
      %1027 = vadd.xlane.f32.xlu0 %v1026
      %v1028 = vpop.xlane.xlu0 %1027
      %v1029 = vsel %vm399, %v1011, 0.0
      %1030 = vadd.xlane.f32.xlu0 %v1029
      %v1031 = vpop.xlane.xlu0 %1030
      %v1032 = vsel %vm399, %v1013, 0.0
      %1033 = vadd.xlane.f32.xlu0 %v1032
      %v1034 = vpop.xlane.xlu0 %1033
      %v1035 = vsel %vm399, %v1015, 0.0
      %1036 = vadd.xlane.f32.xlu0 %v1035
      %v1037 = vpop.xlane.xlu0 %1036
      %v1038 = vsel %vm399, %v1017, 0.0
      %1039 = vadd.xlane.f32.xlu0 %v1038
      %v1040 = vpop.xlane.xlu0 %1039
      %v1041 = vsel %vm399, %v1019, 0.0
      %1042 = vadd.xlane.f32.xlu0 %v1041
      %v1043 = vpop.xlane.xlu0 %1042
      %v1044 = vrcp.pop %v1022
      %v1045 = vrcp.pop %v1025
      %v1046 = vrcp.pop %v1028
      %v1047 = vrcp.pop %v1031
      %v1048 = vrcp.pop %v1034
      %v1049 = vrcp.pop %v1037
      %v1050 = vrcp.pop %v1040
      %v1051 = vrcp.pop %v1043
      %v1052 = vmul.f32 %v1005, %v1044
      %v1053 = vmul.f32 %v1007, %v1045
      %v1054 = vmul.f32 %v1009, %v1046
      %v1055 = vmul.f32 %v1011, %v1047
      %v1056 = vmul.f32 %v1013, %v1048
      %v1057 = vmul.f32 %v1015, %v1049
      %v1058 = vmul.f32 %v1017, %v1050
      %v1059 = vmul.f32 %v1019, %v1051
      %v1060 = vpack.c.bf16 %v1053, %v1052
      %v1061 = vpack.c.bf16 %v1055, %v1054
      %v1062 = vpack.c.bf16 %v1057, %v1056
      %v1063 = vpack.c.bf16 %v1059, %v1058
      %1064 = vrot.lane.b32.xlu0 %v305, 112
      %v1065 = vpop.permute.xlu0 %1064
      %1066 = vrot.lane.b32.xlu0 %v306, 112
      %v1067 = vpop.permute.xlu0 %1066
      %1068 = vrot.lane.b32.xlu0 %v307, 112
      %v1069 = vpop.permute.xlu0 %1068
      %1070 = vrot.lane.b32.xlu0 %v308, 112
      %v1071 = vpop.permute.xlu0 %1070
      %v1077 = vsel %vm399, %v1060, 0
      %v1080 = vsel %vm399, %v1061, 0
      %v1083 = vsel %vm399, %v1062, 0
      %v1086 = vsel %vm399, %v1063, 0
      %1088 = vmatprep.subr.bf16.mxu0 0
      %1089 = vmatpush1.bf16.msra.mxu0 0
      %1090 = vmatprep.subr.bf16.mxu0 0
      %1091 = vmatpush1.bf16.msra.mxu0 0
      %1092 = vmatprep.subr.bf16.mxu0 0
      %1093 = vmatpush1.bf16.msra.mxu0 0
      %1094 = vmatprep.subr.bf16.mxu0 0
      %1095 = vmatpush1.bf16.msra.mxu0 0
      %1096 = vmatprep.subr.bf16.mxu0 0
      %1097 = vmatpush1.bf16.msra.mxu0 %v1071
      %1098 = vmatprep.subr.bf16.mxu0 0
      %1099 = vmatpush1.bf16.msra.mxu0 %v1069
      %1100 = vmatprep.subr.bf16.mxu0 0
      %1101 = vmatpush1.bf16.msra.mxu0 %v1067
      %1102 = vmatprep.subr.bf16.mxu0 0
      %1103 = vmatpush1.bf16.msra.mxu0 %v1065
      %1104 = vmatprep.subr.bf16.mxu0 0
      %1105 = vmatpush2.bf16.msra.mxu0 0
      %1106 = vmatprep.subr.bf16.mxu0 0
      %1107 = vmatpush2.bf16.msra.mxu0 0
      %1108 = vmatprep.subr.bf16.mxu0 0
      %1109 = vmatpush2.bf16.msra.mxu0 0
      %1110 = vmatprep.subr.bf16.mxu0 0
      %1111 = vmatpush2.bf16.msra.mxu0 0
      %1112 = vmatprep.subr.bf16.mxu0 0
      %1113 = vmatpush2.bf16.msra.mxu0 0
      %1114 = vmatprep.subr.bf16.mxu0 0
      %1115 = vmatpush2.bf16.msra.mxu0 0
      %1116 = vmatprep.subr.bf16.mxu0 0
      %1117 = vmatpush2.bf16.msra.mxu0 0
      %1118 = vmatprep.subr.bf16.mxu0 0
      %1119 = vmatpush2.bf16.msra.mxu0 0
      %1120 = vmatprep.mubr.bf16.mxu0 0
      %1121 = vmatmul.mubr.bf16.gmra.mxu0 %v1077
      %v1122 = vpop.f32.mrf.mxu0
      %v1123 = vadd.f32 0.0, %v1122
      %v1124 = vpop.f32.mrf.mxu0
      %v1125 = vpop.f32.mrf.mxu0
      %v1126 = vadd.f32 0.0, %v1125
      %v1127 = vpop.f32.mrf.mxu0
      %1128 = vmatprep.mubr.bf16.mxu0 0
      %1129 = vmatmul.mubr.bf16.gmra.mxu0 %v1080
      %v1130 = vpop.f32.mrf.mxu0
      %v1131 = vadd.f32 0.0, %v1130
      %v1132 = vpop.f32.mrf.mxu0
      %v1133 = vpop.f32.mrf.mxu0
      %v1134 = vadd.f32 0.0, %v1133
      %v1135 = vpop.f32.mrf.mxu0
      %1136 = vmatprep.mubr.bf16.mxu0 0
      %1137 = vmatmul.mubr.bf16.gmra.mxu0 %v1083
      %v1138 = vpop.f32.mrf.mxu0
      %v1139 = vadd.f32 0.0, %v1138
      %v1140 = vpop.f32.mrf.mxu0
      %v1141 = vpop.f32.mrf.mxu0
      %v1142 = vadd.f32 0.0, %v1141
      %v1143 = vpop.f32.mrf.mxu0
      %1144 = vmatprep.mubr.bf16.mxu0 0
      %1145 = vmatmul.mubr.bf16.gmra.mxu0 %v1086
      %v1146 = vpop.f32.mrf.mxu0
      %v1147 = vadd.f32 0.0, %v1146
      %v1148 = vpop.f32.mrf.mxu0
      %v1149 = vpop.f32.mrf.mxu0
      %v1150 = vadd.f32 0.0, %v1149
      %v1151 = vpop.f32.mrf.mxu0
      %1152 = vdwg.mxu0
      %1153 = vrot.lane.b32.xlu0 %v297, 104
      %v1154 = vpop.permute.xlu0 %1153
      %1155 = vrot.lane.b32.xlu0 %v298, 104
      %v1156 = vpop.permute.xlu0 %1155
      %1157 = vrot.lane.b32.xlu0 %v299, 104
      %v1158 = vpop.permute.xlu0 %1157
      %1159 = vrot.lane.b32.xlu0 %v300, 104
      %v1160 = vpop.permute.xlu0 %1159
      %1161 = vrot.lane.b32.xlu0 %v301, 104
      %v1162 = vpop.permute.xlu0 %1161
      %1163 = vrot.lane.b32.xlu0 %v302, 104
      %v1164 = vpop.permute.xlu0 %1163
      %1165 = vrot.lane.b32.xlu0 %v303, 104
      %v1166 = vpop.permute.xlu0 %1165
      %1167 = vrot.lane.b32.xlu0 %v304, 104
      %v1168 = vpop.permute.xlu0 %1167
      %v1170 = vsel %vm309, %v1154, 0
      %v1173 = vsel %vm309, %v1156, 0
      %v1176 = vsel %vm309, %v1158, 0
      %v1179 = vsel %vm309, %v1160, 0
      %v1182 = vsel %vm309, %v1162, 0
      %v1185 = vsel %vm309, %v1164, 0
      %v1188 = vsel %vm309, %v1166, 0
      %v1191 = vsel %vm309, %v1168, 0
      %1193 = vmatprep.subr.bf16.mxu0 0
      %1194 = vmatpush1.bf16.xpose.msra.mxu0 0
      %1195 = vmatprep.subr.bf16.mxu0 0
      %1196 = vmatpush1.bf16.xpose.msra.mxu0 0
      %1197 = vmatprep.subr.bf16.mxu0 0
      %1198 = vmatpush1.bf16.xpose.msra.mxu0 0
      %1199 = vmatprep.subr.bf16.mxu0 0
      %1200 = vmatpush1.bf16.xpose.msra.mxu0 0
      %1201 = vmatprep.subr.bf16.mxu0 0
      %1202 = vmatpush1.bf16.xpose.msra.mxu0 %v1191
      %1203 = vmatprep.subr.bf16.mxu0 0
      %1204 = vmatpush1.bf16.xpose.msra.mxu0 %v1188
      %1205 = vmatprep.subr.bf16.mxu0 0
      %1206 = vmatpush1.bf16.xpose.msra.mxu0 %v1185
      %1207 = vmatprep.subr.bf16.mxu0 0
      %1208 = vmatpush1.bf16.xpose.msra.mxu0 %v1182
      %1209 = vmatprep.subr.bf16.mxu0 0
      %1210 = vmatpush2.bf16.xpose.msra.mxu0 0
      %1211 = vmatprep.subr.bf16.mxu0 0
      %1212 = vmatpush2.bf16.xpose.msra.mxu0 0
      %1213 = vmatprep.subr.bf16.mxu0 0
      %1214 = vmatpush2.bf16.xpose.msra.mxu0 0
      %1215 = vmatprep.subr.bf16.mxu0 0
      %1216 = vmatpush2.bf16.xpose.msra.mxu0 0
      %1217 = vmatprep.subr.bf16.mxu0 0
      %1218 = vmatpush2.bf16.xpose.msra.mxu0 0
      %1219 = vmatprep.subr.bf16.mxu0 0
      %1220 = vmatpush2.bf16.xpose.msra.mxu0 0
      %1221 = vmatprep.subr.bf16.mxu0 0
      %1222 = vmatpush2.bf16.xpose.msra.mxu0 0
      %1223 = vmatprep.subr.bf16.mxu0 0
      %1224 = vmatpush2.bf16.xpose.msra.mxu0 0
      %1225 = vmatprep.mubr.bf16.mxu0 0
      %1226 = vmatmul.mubr.bf16.gmra.mxu0 %v1170
      %v1227 = vpop.f32.mrf.mxu0
      %v1228 = vadd.f32 0.0, %v1227
      %v1229 = vpop.f32.mrf.mxu0
      %v1230 = vpop.f32.mrf.mxu0
      %v1231 = vadd.f32 0.0, %v1230
      %v1232 = vpop.f32.mrf.mxu0
      %1233 = vmatprep.mubr.bf16.mxu0 0
      %1234 = vmatmul.mubr.bf16.gmra.mxu0 %v1173
      %v1235 = vpop.f32.mrf.mxu0
      %v1236 = vadd.f32 0.0, %v1235
      %v1237 = vpop.f32.mrf.mxu0
      %v1238 = vpop.f32.mrf.mxu0
      %v1239 = vadd.f32 0.0, %v1238
      %v1240 = vpop.f32.mrf.mxu0
      %1241 = vmatprep.mubr.bf16.mxu0 0
      %1242 = vmatmul.mubr.bf16.gmra.mxu0 %v1176
      %v1243 = vpop.f32.mrf.mxu0
      %v1244 = vadd.f32 0.0, %v1243
      %v1245 = vpop.f32.mrf.mxu0
      %v1246 = vpop.f32.mrf.mxu0
      %v1247 = vadd.f32 0.0, %v1246
      %v1248 = vpop.f32.mrf.mxu0
      %1249 = vmatprep.mubr.bf16.mxu0 0
      %1250 = vmatmul.mubr.bf16.gmra.mxu0 %v1179
      %v1251 = vpop.f32.mrf.mxu0
      %v1252 = vadd.f32 0.0, %v1251
      %v1253 = vpop.f32.mrf.mxu0
      %v1254 = vpop.f32.mrf.mxu0
      %v1255 = vadd.f32 0.0, %v1254
      %v1256 = vpop.f32.mrf.mxu0
      %1257 = vdwg.mxu0
      %v1258 = vsel %vm399, %v1228, -inf
      %1259 = vmax.xlane.f32.xlu0 %v1258
      %v1260 = vpop.xlane.xlu0 %1259
      %v1261 = vsel %vm399, %v1231, -inf
      %1262 = vmax.xlane.f32.xlu0 %v1261
      %v1263 = vpop.xlane.xlu0 %1262
      %v1264 = vsel %vm399, %v1236, -inf
      %1265 = vmax.xlane.f32.xlu0 %v1264
      %v1266 = vpop.xlane.xlu0 %1265
      %v1267 = vsel %vm399, %v1239, -inf
      %1268 = vmax.xlane.f32.xlu0 %v1267
      %v1269 = vpop.xlane.xlu0 %1268
      %v1270 = vsel %vm399, %v1244, -inf
      %1271 = vmax.xlane.f32.xlu0 %v1270
      %v1272 = vpop.xlane.xlu0 %1271
      %v1273 = vsel %vm399, %v1247, -inf
      %1274 = vmax.xlane.f32.xlu0 %v1273
      %v1275 = vpop.xlane.xlu0 %1274
      %v1276 = vsel %vm399, %v1252, -inf
      %1277 = vmax.xlane.f32.xlu0 %v1276
      %v1278 = vpop.xlane.xlu0 %1277
      %v1279 = vsel %vm399, %v1255, -inf
      %1280 = vmax.xlane.f32.xlu0 %v1279
      %v1281 = vpop.xlane.xlu0 %1280
      %v1282 = vsub.f32 %v1228, %v1260
      %v1283 = vsub.f32 %v1231, %v1263
      %v1284 = vsub.f32 %v1236, %v1266
      %v1285 = vsub.f32 %v1239, %v1269
      %v1286 = vsub.f32 %v1244, %v1272
      %v1287 = vsub.f32 %v1247, %v1275
      %v1288 = vsub.f32 %v1252, %v1278
      %v1289 = vsub.f32 %v1255, %v1281
      %v1290 = vmul.f32 %v1282, 1.442695
      %v1291 = vpow.pop %v1290
      %v1292 = vmul.f32 %v1283, 1.442695
      %v1293 = vpow.pop %v1292
      %v1294 = vmul.f32 %v1284, 1.442695
      %v1295 = vpow.pop %v1294
      %v1296 = vmul.f32 %v1285, 1.442695
      %v1297 = vpow.pop %v1296
      %v1298 = vmul.f32 %v1286, 1.442695
      %v1299 = vpow.pop %v1298
      %v1300 = vmul.f32 %v1287, 1.442695
      %v1301 = vpow.pop %v1300
      %v1302 = vmul.f32 %v1288, 1.442695
      %v1303 = vpow.pop %v1302
      %v1304 = vmul.f32 %v1289, 1.442695
      %v1305 = vpow.pop %v1304
      %v1306 = vsel %vm399, %v1291, 0.0
      %1307 = vadd.xlane.f32.xlu0 %v1306
      %v1308 = vpop.xlane.xlu0 %1307
      %v1309 = vsel %vm399, %v1293, 0.0
      %1310 = vadd.xlane.f32.xlu0 %v1309
      %v1311 = vpop.xlane.xlu0 %1310
      %v1312 = vsel %vm399, %v1295, 0.0
      %1313 = vadd.xlane.f32.xlu0 %v1312
      %v1314 = vpop.xlane.xlu0 %1313
      %v1315 = vsel %vm399, %v1297, 0.0
      %1316 = vadd.xlane.f32.xlu0 %v1315
      %v1317 = vpop.xlane.xlu0 %1316
      %v1318 = vsel %vm399, %v1299, 0.0
      %1319 = vadd.xlane.f32.xlu0 %v1318
      %v1320 = vpop.xlane.xlu0 %1319
      %v1321 = vsel %vm399, %v1301, 0.0
      %1322 = vadd.xlane.f32.xlu0 %v1321
      %v1323 = vpop.xlane.xlu0 %1322
      %v1324 = vsel %vm399, %v1303, 0.0
      %1325 = vadd.xlane.f32.xlu0 %v1324
      %v1326 = vpop.xlane.xlu0 %1325
      %v1327 = vsel %vm399, %v1305, 0.0
      %1328 = vadd.xlane.f32.xlu0 %v1327
      %v1329 = vpop.xlane.xlu0 %1328
      %v1330 = vrcp.pop %v1308
      %v1331 = vrcp.pop %v1311
      %v1332 = vrcp.pop %v1314
      %v1333 = vrcp.pop %v1317
      %v1334 = vrcp.pop %v1320
      %v1335 = vrcp.pop %v1323
      %v1336 = vrcp.pop %v1326
      %v1337 = vrcp.pop %v1329
      %v1338 = vmul.f32 %v1291, %v1330
      %v1339 = vmul.f32 %v1293, %v1331
      %v1340 = vmul.f32 %v1295, %v1332
      %v1341 = vmul.f32 %v1297, %v1333
      %v1342 = vmul.f32 %v1299, %v1334
      %v1343 = vmul.f32 %v1301, %v1335
      %v1344 = vmul.f32 %v1303, %v1336
      %v1345 = vmul.f32 %v1305, %v1337
      %v1346 = vpack.c.bf16 %v1339, %v1338
      %v1347 = vpack.c.bf16 %v1341, %v1340
      %v1348 = vpack.c.bf16 %v1343, %v1342
      %v1349 = vpack.c.bf16 %v1345, %v1344
      %1350 = vrot.lane.b32.xlu0 %v305, 104
      %v1351 = vpop.permute.xlu0 %1350
      %1352 = vrot.lane.b32.xlu0 %v306, 104
      %v1353 = vpop.permute.xlu0 %1352
      %1354 = vrot.lane.b32.xlu0 %v307, 104
      %v1355 = vpop.permute.xlu0 %1354
      %1356 = vrot.lane.b32.xlu0 %v308, 104
      %v1357 = vpop.permute.xlu0 %1356
      %v1363 = vsel %vm399, %v1346, 0
      %v1366 = vsel %vm399, %v1347, 0
      %v1369 = vsel %vm399, %v1348, 0
      %v1372 = vsel %vm399, %v1349, 0
      %1374 = vmatprep.subr.bf16.mxu0 0
      %1375 = vmatpush1.bf16.msra.mxu0 0
      %1376 = vmatprep.subr.bf16.mxu0 0
      %1377 = vmatpush1.bf16.msra.mxu0 0
      %1378 = vmatprep.subr.bf16.mxu0 0
      %1379 = vmatpush1.bf16.msra.mxu0 0
      %1380 = vmatprep.subr.bf16.mxu0 0
      %1381 = vmatpush1.bf16.msra.mxu0 0
      %1382 = vmatprep.subr.bf16.mxu0 0
      %1383 = vmatpush1.bf16.msra.mxu0 %v1357
      %1384 = vmatprep.subr.bf16.mxu0 0
      %1385 = vmatpush1.bf16.msra.mxu0 %v1355
      %1386 = vmatprep.subr.bf16.mxu0 0
      %1387 = vmatpush1.bf16.msra.mxu0 %v1353
      %1388 = vmatprep.subr.bf16.mxu0 0
      %1389 = vmatpush1.bf16.msra.mxu0 %v1351
      %1390 = vmatprep.subr.bf16.mxu0 0
      %1391 = vmatpush2.bf16.msra.mxu0 0
      %1392 = vmatprep.subr.bf16.mxu0 0
      %1393 = vmatpush2.bf16.msra.mxu0 0
      %1394 = vmatprep.subr.bf16.mxu0 0
      %1395 = vmatpush2.bf16.msra.mxu0 0
      %1396 = vmatprep.subr.bf16.mxu0 0
      %1397 = vmatpush2.bf16.msra.mxu0 0
      %1398 = vmatprep.subr.bf16.mxu0 0
      %1399 = vmatpush2.bf16.msra.mxu0 0
      %1400 = vmatprep.subr.bf16.mxu0 0
      %1401 = vmatpush2.bf16.msra.mxu0 0
      %1402 = vmatprep.subr.bf16.mxu0 0
      %1403 = vmatpush2.bf16.msra.mxu0 0
      %1404 = vmatprep.subr.bf16.mxu0 0
      %1405 = vmatpush2.bf16.msra.mxu0 0
      %1406 = vmatprep.mubr.bf16.mxu0 0
      %1407 = vmatmul.mubr.bf16.gmra.mxu0 %v1363
      %v1408 = vpop.f32.mrf.mxu0
      %v1409 = vadd.f32 0.0, %v1408
      %v1410 = vpop.f32.mrf.mxu0
      %v1411 = vpop.f32.mrf.mxu0
      %v1412 = vadd.f32 0.0, %v1411
      %v1413 = vpop.f32.mrf.mxu0
      %1414 = vmatprep.mubr.bf16.mxu0 0
      %1415 = vmatmul.mubr.bf16.gmra.mxu0 %v1366
      %v1416 = vpop.f32.mrf.mxu0
      %v1417 = vadd.f32 0.0, %v1416
      %v1418 = vpop.f32.mrf.mxu0
      %v1419 = vpop.f32.mrf.mxu0
      %v1420 = vadd.f32 0.0, %v1419
      %v1421 = vpop.f32.mrf.mxu0
      %1422 = vmatprep.mubr.bf16.mxu0 0
      %1423 = vmatmul.mubr.bf16.gmra.mxu0 %v1369
      %v1424 = vpop.f32.mrf.mxu0
      %v1425 = vadd.f32 0.0, %v1424
      %v1426 = vpop.f32.mrf.mxu0
      %v1427 = vpop.f32.mrf.mxu0
      %v1428 = vadd.f32 0.0, %v1427
      %v1429 = vpop.f32.mrf.mxu0
      %1430 = vmatprep.mubr.bf16.mxu0 0
      %1431 = vmatmul.mubr.bf16.gmra.mxu0 %v1372
      %v1432 = vpop.f32.mrf.mxu0
      %v1433 = vadd.f32 0.0, %v1432
      %v1434 = vpop.f32.mrf.mxu0
      %v1435 = vpop.f32.mrf.mxu0
      %v1436 = vadd.f32 0.0, %v1435
      %v1437 = vpop.f32.mrf.mxu0
      %1438 = vdwg.mxu0
      %1447 = vrot.lane.b32.xlu0 %v837, 8
      %v1448 = vpop.permute.xlu0 %1447
      %1449 = vrot.lane.b32.xlu0 %v840, 8
      %v1450 = vpop.permute.xlu0 %1449
      %1451 = vrot.lane.b32.xlu0 %v845, 8
      %v1452 = vpop.permute.xlu0 %1451
      %1453 = vrot.lane.b32.xlu0 %v848, 8
      %v1454 = vpop.permute.xlu0 %1453
      %1455 = vrot.lane.b32.xlu0 %v853, 8
      %v1456 = vpop.permute.xlu0 %1455
      %1457 = vrot.lane.b32.xlu0 %v856, 8
      %v1458 = vpop.permute.xlu0 %1457
      %1459 = vrot.lane.b32.xlu0 %v861, 8
      %v1460 = vpop.permute.xlu0 %1459
      %1461 = vrot.lane.b32.xlu0 %v864, 8
      %v1462 = vpop.permute.xlu0 %1461
      %1479 = vrot.lane.b32.xlu0 %v1123, 16
      %v1480 = vpop.permute.xlu0 %1479
      %1481 = vrot.lane.b32.xlu0 %v1126, 16
      %v1482 = vpop.permute.xlu0 %1481
      %1483 = vrot.lane.b32.xlu0 %v1131, 16
      %v1484 = vpop.permute.xlu0 %1483
      %1485 = vrot.lane.b32.xlu0 %v1134, 16
      %v1486 = vpop.permute.xlu0 %1485
      %1487 = vrot.lane.b32.xlu0 %v1139, 16
      %v1488 = vpop.permute.xlu0 %1487
      %1489 = vrot.lane.b32.xlu0 %v1142, 16
      %v1490 = vpop.permute.xlu0 %1489
      %1491 = vrot.lane.b32.xlu0 %v1147, 16
      %v1492 = vpop.permute.xlu0 %1491
      %1493 = vrot.lane.b32.xlu0 %v1150, 16
      %v1494 = vpop.permute.xlu0 %1493
      %1511 = vrot.lane.b32.xlu0 %v1409, 24
      %v1512 = vpop.permute.xlu0 %1511
      %1513 = vrot.lane.b32.xlu0 %v1412, 24
      %v1514 = vpop.permute.xlu0 %1513
      %1515 = vrot.lane.b32.xlu0 %v1417, 24
      %v1516 = vpop.permute.xlu0 %1515
      %1517 = vrot.lane.b32.xlu0 %v1420, 24
      %v1518 = vpop.permute.xlu0 %1517
      %1519 = vrot.lane.b32.xlu0 %v1425, 24
      %v1520 = vpop.permute.xlu0 %1519
      %1521 = vrot.lane.b32.xlu0 %v1428, 24
      %v1522 = vpop.permute.xlu0 %1521
      %1523 = vrot.lane.b32.xlu0 %v1433, 24
      %v1524 = vpop.permute.xlu0 %1523
      %1525 = vrot.lane.b32.xlu0 %v1436, 24
      %v1526 = vpop.permute.xlu0 %1525
      %v1535 = vsel %vm309, %v539, %v1448
      %v1536 = vsel %vm309, %v542, %v1450
      %v1537 = vsel %vm309, %v547, %v1452
      %v1538 = vsel %vm309, %v550, %v1454
      %v1539 = vsel %vm309, %v555, %v1456
      %v1540 = vsel %vm309, %v558, %v1458
      %v1541 = vsel %vm309, %v563, %v1460
      %v1542 = vsel %vm309, %v566, %v1462
      %vm1543 = vcmask 130048
      %v1544 = vsel %vm1543, %v1535, %v1480
      %v1545 = vsel %vm1543, %v1536, %v1482
      %v1546 = vsel %vm1543, %v1537, %v1484
      %v1547 = vsel %vm1543, %v1538, %v1486
      %v1548 = vsel %vm1543, %v1539, %v1488
      %v1549 = vsel %vm1543, %v1540, %v1490
      %v1550 = vsel %vm1543, %v1541, %v1492
      %v1551 = vsel %vm1543, %v1542, %v1494
      %vm1552 = vcmask 195584
      %v1553 = vsel %vm1552, %v1544, %v1512
      %v1554 = vsel %vm1552, %v1545, %v1514
      %v1555 = vsel %vm1552, %v1546, %v1516
      %v1556 = vsel %vm1552, %v1547, %v1518
      %v1557 = vsel %vm1552, %v1548, %v1520
      %v1558 = vsel %vm1552, %v1549, %v1522
      %v1559 = vsel %vm1552, %v1550, %v1524
      %v1560 = vsel %vm1552, %v1551, %v1526
      %vm1561 = vcmask 261120
      %1562 = vst.msk [vmem:[%s263] sm:$0xff] %vm1561, %v1553
      %1563 = vst.msk [vmem:[%s263 + $0x8] sm:$0xff] %vm1561, %v1554
      %1564 = vst.msk [vmem:[%s263 + $0x10] sm:$0xff] %vm1561, %v1555
      %1565 = vst.msk [vmem:[%s263 + $0x18] sm:$0xff] %vm1561, %v1556
      %1566 = vst.msk [vmem:[%s263 + $0x20] sm:$0xff] %vm1561, %v1557
      %1567 = vst.msk [vmem:[%s263 + $0x28] sm:$0xff] %vm1561, %v1558
      %1568 = vst.msk [vmem:[%s263 + $0x30] sm:$0xff] %vm1561, %v1559
      %1569 = vst.msk [vmem:[%s263 + $0x38] sm:$0xff] %vm1561, %v1560
      %p1570 = scmp.lt.s32.totalorder %s18, 1
      %s1571 = scalar_select %p1570, %s18, 1
      %p1572 = scmp.lt.s32.totalorder %s19, 0
      %s1573 = scalar_select %p1572, %s19, 0
      %s1574 = smul.addr %s1571, 8
      %s1575 = sadd.s32 %s1573, %s1574
      %s1576 = smul.addr %s1575, 8
      %s1577 = scalar_lea.vmem %s3, %s1576
      // Predicated region
      $region33: #{_lambda_.21} parent=31 // pred_check
        %p1578 = pneg %p130
      $region34: #{_lambda_.21} parent=31 // pred_check_branch
        %1580 = sbr.rel (%p1578) target = $region36
      $region35: #{_lambda_.21} parent=31 // pred_region
        _
      $region36: #{_lambda_.21} parent=31 // pred_fallthru
        _
    $region32: #{_lambda_.21} parent=5 // pred_fallthru
      _
    %p1581 = scmp.le.s32.totalorder 2, %s9
    // Predicated region
    $region37: #{_lambda_.21} parent=5 // pred_check
      %p1582 = pneg %p1581
    $region38: #{_lambda_.21} parent=5 // pred_check_branch
      %1584 = sbr.rel (%p1582) target = $region40
    $region39: #{_lambda_.21} parent=5 // pred_region
      %s1585 = ssub.s32 %s9, 2
      // Predicated region
      $region41: #{_lambda_.21} parent=39 // pred_check
        %p1586 = pneg %p136
      $region42: #{_lambda_.21} parent=39 // pred_check_branch
        %1588 = sbr.rel (%p1586) target = $region44
      $region43: #{_lambda_.21} parent=39 // pred_region
        %p1589 = scmp.lt.s32.totalorder %s20, 1
        %s1590 = scalar_select %p1589, %s20, 1
        %p1591 = scmp.lt.s32.totalorder %s21, 0
        %s1592 = scalar_select %p1591, %s21, 0
        %s1593 = smul.addr %s1590, 8
        %s1594 = sadd.s32 %s1592, %s1593
        %s1595 = smul.addr %s1594, 8
        %s1596 = scalar_lea.vmem %s3, %s1595
      $region44: #{_lambda_.21} parent=39 // pred_fallthru
        _
    $region40: #{_lambda_.21} parent=5 // pred_fallthru
      _
  $region6: #{_lambda_.21} parent=0 // loop_footer
    %s13 = sadd.s32 1, %s9
  $region7: #{_lambda_.21} parent=0 // loop_footer_branch
    %8 = sbr.rel target = $region3
  $region8: #{_lambda_.21} parent=0 // loop_exit
    _

// kernel: _lambda_.23
$region0: #{_lambda_.23}
  #allocation0 [shape = 'u32[]', space=smem, size = 0x4, offset = 0x4, fixed_abs, tag = 'smem constant byte address 0x4 - core index']
  #allocation1 [shape = 'u32[144,128]{1,0:T(1,128)}', space=vmem, size = 0x12000, scoped, tag = 'internal scratch']
  #allocation2 [shape = 'f32[128,128]{1,0:T(8,128)}', space=vmem, size = 0x10000, scoped, tag = 'scratch operand']
  %s0 = inlined_call_operand.vmem [shape: f32[128,32], index: 0, kind: input, shape index: {}]
  %s1 = inlined_call_operand.vmem [shape: f32[32,128], index: 1, kind: input, shape index: {}]
  %s2 = inlined_call_operand.vmem [shape: f32[1,128], index: 2, kind: input, shape index: {}]
  %s3 = inlined_call_operand.vmem [shape: f32[1,32], index: 3, kind: input, shape index: {}]
  %s4 = inlined_call_operand.vmem [shape: f32[1,32], index: 4, kind: input, shape index: {}]
  %s5 = inlined_call_operand.vmem [shape: f32[128,128], index: 5, kind: output, shape index: {}]
  %s6 = sld [smem:[#allocation0]]
  $region38: #{_lambda_.23} parent=0
    _
  %s8 = ssub.s32 1, %s6
  %s9 = scalar_select 0, %s8, %s6
  // Predicated region
  $region2: #{_lambda_.23} parent=0 // pred_check
    _
  $region3: #{_lambda_.23} parent=0 // pred_check_branch
    %11 = sbr.rel (0) target = $region5
  $region4: #{_lambda_.23} parent=0 // pred_region
    _
  $region5: #{_lambda_.23} parent=0 // pred_fallthru
    _
  // Predicated region
  $region6: #{_lambda_.23} parent=0 // pred_check
    _
  $region7: #{_lambda_.23} parent=0 // pred_check_branch
    %13 = sbr.rel (0) target = $region9
  $region8: #{_lambda_.23} parent=0 // pred_region
    _
  $region9: #{_lambda_.23} parent=0 // pred_fallthru
    _
  // Predicated region
  $region10: #{_lambda_.23} parent=0 // pred_check
    _
  $region11: #{_lambda_.23} parent=0 // pred_check_branch
    %15 = sbr.rel (0) target = $region13
  $region12: #{_lambda_.23} parent=0 // pred_region
    _
  $region13: #{_lambda_.23} parent=0 // pred_fallthru
    _
  // Predicated region
  $region14: #{_lambda_.23} parent=0 // pred_check
    _
  $region15: #{_lambda_.23} parent=0 // pred_check_branch
    %17 = sbr.rel (0) target = $region17
  $region16: #{_lambda_.23} parent=0 // pred_region
    _
  $region17: #{_lambda_.23} parent=0 // pred_fallthru
    _
  // Predicated region
  $region18: #{_lambda_.23} parent=0 // pred_check
    _
  $region19: #{_lambda_.23} parent=0 // pred_check_branch
    %19 = sbr.rel (0) target = $region21
  $region20: #{_lambda_.23} parent=0 // pred_region
    _
  $region21: #{_lambda_.23} parent=0 // pred_fallthru
    _
  %v21 = vld [vmem:[%s0] sm:$0xff]
  %v22 = vld [vmem:[%s0 + $0x8] sm:$0xff]
  %v23 = vld [vmem:[%s0 + $0x10] sm:$0xff]
  %v24 = vld [vmem:[%s0 + $0x18] sm:$0xff]
  %v25 = vld [vmem:[%s0 + $0x20] sm:$0xff]
  %v26 = vld [vmem:[%s0 + $0x28] sm:$0xff]
  %v27 = vld [vmem:[%s0 + $0x30] sm:$0xff]
  %v28 = vld [vmem:[%s0 + $0x38] sm:$0xff]
  %v29 = vld [vmem:[%s0 + $0x40] sm:$0xff]
  %v30 = vld [vmem:[%s0 + $0x48] sm:$0xff]
  %v31 = vld [vmem:[%s0 + $0x50] sm:$0xff]
  %v32 = vld [vmem:[%s0 + $0x58] sm:$0xff]
  %v33 = vld [vmem:[%s0 + $0x60] sm:$0xff]
  %v34 = vld [vmem:[%s0 + $0x68] sm:$0xff]
  %v35 = vld [vmem:[%s0 + $0x70] sm:$0xff]
  %v36 = vld [vmem:[%s0 + $0x78] sm:$0xff]
  %vm37 = vcmask 261120
  %v38 = vsel %vm37, %v21, 0.0
  %39 = vadd.xlane.f32.xlu0 %v38
  %v40 = vpop.xlane.xlu0 %39
  %v41 = vsel %vm37, %v22, 0.0
  %42 = vadd.xlane.f32.xlu0 %v41
  %v43 = vpop.xlane.xlu0 %42
  %v44 = vsel %vm37, %v23, 0.0
  %45 = vadd.xlane.f32.xlu0 %v44
  %v46 = vpop.xlane.xlu0 %45
  %v47 = vsel %vm37, %v24, 0.0
  %48 = vadd.xlane.f32.xlu0 %v47
  %v49 = vpop.xlane.xlu0 %48
  %v50 = vsel %vm37, %v25, 0.0
  %51 = vadd.xlane.f32.xlu0 %v50
  %v52 = vpop.xlane.xlu0 %51
  %v53 = vsel %vm37, %v26, 0.0
  %54 = vadd.xlane.f32.xlu0 %v53
  %v55 = vpop.xlane.xlu0 %54
  %v56 = vsel %vm37, %v27, 0.0
  %57 = vadd.xlane.f32.xlu0 %v56
  %v58 = vpop.xlane.xlu0 %57
  %v59 = vsel %vm37, %v28, 0.0
  %60 = vadd.xlane.f32.xlu0 %v59
  %v61 = vpop.xlane.xlu0 %60
  %v62 = vsel %vm37, %v29, 0.0
  %63 = vadd.xlane.f32.xlu0 %v62
  %v64 = vpop.xlane.xlu0 %63
  %v65 = vsel %vm37, %v30, 0.0
  %66 = vadd.xlane.f32.xlu0 %v65
  %v67 = vpop.xlane.xlu0 %66
  %v68 = vsel %vm37, %v31, 0.0
  %69 = vadd.xlane.f32.xlu0 %v68
  %v70 = vpop.xlane.xlu0 %69
  %v71 = vsel %vm37, %v32, 0.0
  %72 = vadd.xlane.f32.xlu0 %v71
  %v73 = vpop.xlane.xlu0 %72
  %v74 = vsel %vm37, %v33, 0.0
  %75 = vadd.xlane.f32.xlu0 %v74
  %v76 = vpop.xlane.xlu0 %75
  %v77 = vsel %vm37, %v34, 0.0
  %78 = vadd.xlane.f32.xlu0 %v77
  %v79 = vpop.xlane.xlu0 %78
  %v80 = vsel %vm37, %v35, 0.0
  %81 = vadd.xlane.f32.xlu0 %v80
  %v82 = vpop.xlane.xlu0 %81
  %v83 = vsel %vm37, %v36, 0.0
  %84 = vadd.xlane.f32.xlu0 %v83
  %v85 = vpop.xlane.xlu0 %84
  %v86 = vrcp.pop 32.0
  %v87 = vmul.f32 %v40, %v86
  %v88 = vmul.f32 %v43, %v86
  %v89 = vmul.f32 %v46, %v86
  %v90 = vmul.f32 %v49, %v86
  %v91 = vmul.f32 %v52, %v86
  %v92 = vmul.f32 %v55, %v86
  %v93 = vmul.f32 %v58, %v86
  %v94 = vmul.f32 %v61, %v86
  %v95 = vmul.f32 %v64, %v86
  %v96 = vmul.f32 %v67, %v86
  %v97 = vmul.f32 %v70, %v86
  %v98 = vmul.f32 %v73, %v86
  %v99 = vmul.f32 %v76, %v86
  %v100 = vmul.f32 %v79, %v86
  %v101 = vmul.f32 %v82, %v86
  %v102 = vmul.f32 %v85, %v86
  %v103 = vsub.f32 %v21, %v87
  %v104 = vsub.f32 %v22, %v88
  %v105 = vsub.f32 %v23, %v89
  %v106 = vsub.f32 %v24, %v90
  %v107 = vsub.f32 %v25, %v91
  %v108 = vsub.f32 %v26, %v92
  %v109 = vsub.f32 %v27, %v93
  %v110 = vsub.f32 %v28, %v94
  %v111 = vsub.f32 %v29, %v95
  %v112 = vsub.f32 %v30, %v96
  %v113 = vsub.f32 %v31, %v97
  %v114 = vsub.f32 %v32, %v98
  %v115 = vsub.f32 %v33, %v99
  %v116 = vsub.f32 %v34, %v100
  %v117 = vsub.f32 %v35, %v101
  %v118 = vsub.f32 %v36, %v102
  %v119 = vmul.f32 %v103, %v103
  %v120 = vmul.f32 %v104, %v104
  %v121 = vmul.f32 %v105, %v105
  %v122 = vmul.f32 %v106, %v106
  %v123 = vmul.f32 %v107, %v107
  %v124 = vmul.f32 %v108, %v108
  %v125 = vmul.f32 %v109, %v109
  %v126 = vmul.f32 %v110, %v110
  %v127 = vmul.f32 %v111, %v111
  %v128 = vmul.f32 %v112, %v112
  %v129 = vmul.f32 %v113, %v113
  %v130 = vmul.f32 %v114, %v114
  %v131 = vmul.f32 %v115, %v115
  %v132 = vmul.f32 %v116, %v116
  %v133 = vmul.f32 %v117, %v117
  %v134 = vmul.f32 %v118, %v118
  %v135 = vsel %vm37, %v119, 0.0
  %136 = vadd.xlane.f32.xlu0 %v135
  %v137 = vpop.xlane.xlu0 %136
  %v138 = vsel %vm37, %v120, 0.0
  %139 = vadd.xlane.f32.xlu0 %v138
  %v140 = vpop.xlane.xlu0 %139
  %v141 = vsel %vm37, %v121, 0.0
  %142 = vadd.xlane.f32.xlu0 %v141
  %v143 = vpop.xlane.xlu0 %142
  %v144 = vsel %vm37, %v122, 0.0
  %145 = vadd.xlane.f32.xlu0 %v144
  %v146 = vpop.xlane.xlu0 %145
  %v147 = vsel %vm37, %v123, 0.0
  %148 = vadd.xlane.f32.xlu0 %v147
  %v149 = vpop.xlane.xlu0 %148
  %v150 = vsel %vm37, %v124, 0.0
  %151 = vadd.xlane.f32.xlu0 %v150
  %v152 = vpop.xlane.xlu0 %151
  %v153 = vsel %vm37, %v125, 0.0
  %154 = vadd.xlane.f32.xlu0 %v153
  %v155 = vpop.xlane.xlu0 %154
  %v156 = vsel %vm37, %v126, 0.0
  %157 = vadd.xlane.f32.xlu0 %v156
  %v158 = vpop.xlane.xlu0 %157
  %v159 = vsel %vm37, %v127, 0.0
  %160 = vadd.xlane.f32.xlu0 %v159
  %v161 = vpop.xlane.xlu0 %160
  %v162 = vsel %vm37, %v128, 0.0
  %163 = vadd.xlane.f32.xlu0 %v162
  %v164 = vpop.xlane.xlu0 %163
  %v165 = vsel %vm37, %v129, 0.0
  %166 = vadd.xlane.f32.xlu0 %v165
  %v167 = vpop.xlane.xlu0 %166
  %v168 = vsel %vm37, %v130, 0.0
  %169 = vadd.xlane.f32.xlu0 %v168
  %v170 = vpop.xlane.xlu0 %169
  %v171 = vsel %vm37, %v131, 0.0
  %172 = vadd.xlane.f32.xlu0 %v171
  %v173 = vpop.xlane.xlu0 %172
  %v174 = vsel %vm37, %v132, 0.0
  %175 = vadd.xlane.f32.xlu0 %v174
  %v176 = vpop.xlane.xlu0 %175
  %v177 = vsel %vm37, %v133, 0.0
  %178 = vadd.xlane.f32.xlu0 %v177
  %v179 = vpop.xlane.xlu0 %178
  %v180 = vsel %vm37, %v134, 0.0
  %181 = vadd.xlane.f32.xlu0 %v180
  %v182 = vpop.xlane.xlu0 %181
  %v183 = vmul.f32 %v137, %v86
  %v184 = vmul.f32 %v140, %v86
  %v185 = vmul.f32 %v143, %v86
  %v186 = vmul.f32 %v146, %v86
  %v187 = vmul.f32 %v149, %v86
  %v188 = vmul.f32 %v152, %v86
  %v189 = vmul.f32 %v155, %v86
  %v190 = vmul.f32 %v158, %v86
  %v191 = vmul.f32 %v161, %v86
  %v192 = vmul.f32 %v164, %v86
  %v193 = vmul.f32 %v167, %v86
  %v194 = vmul.f32 %v170, %v86
  %v195 = vmul.f32 %v173, %v86
  %v196 = vmul.f32 %v176, %v86
  %v197 = vmul.f32 %v179, %v86
  %v198 = vmul.f32 %v182, %v86
  %v199 = vadd.f32 %v183, 1e-06
  %v200 = vadd.f32 %v184, 1e-06
  %v201 = vadd.f32 %v185, 1e-06
  %v202 = vadd.f32 %v186, 1e-06
  %v203 = vadd.f32 %v187, 1e-06
  %v204 = vadd.f32 %v188, 1e-06
  %v205 = vadd.f32 %v189, 1e-06
  %v206 = vadd.f32 %v190, 1e-06
  %v207 = vadd.f32 %v191, 1e-06
  %v208 = vadd.f32 %v192, 1e-06
  %v209 = vadd.f32 %v193, 1e-06
  %v210 = vadd.f32 %v194, 1e-06
  %v211 = vadd.f32 %v195, 1e-06
  %v212 = vadd.f32 %v196, 1e-06
  %v213 = vadd.f32 %v197, 1e-06
  %v214 = vadd.f32 %v198, 1e-06
  %v215 = vrsqrt.pop %v199
  %v216 = vrsqrt.pop %v200
  %v217 = vrsqrt.pop %v201
  %v218 = vrsqrt.pop %v202
  %v219 = vrsqrt.pop %v203
  %v220 = vrsqrt.pop %v204
  %v221 = vrsqrt.pop %v205
  %v222 = vrsqrt.pop %v206
  %v223 = vrsqrt.pop %v207
  %v224 = vrsqrt.pop %v208
  %v225 = vrsqrt.pop %v209
  %v226 = vrsqrt.pop %v210
  %v227 = vrsqrt.pop %v211
  %v228 = vrsqrt.pop %v212
  %v229 = vrsqrt.pop %v213
  %v230 = vrsqrt.pop %v214
  %v231 = vmul.f32 %v103, %v215
  %v232 = vmul.f32 %v104, %v216
  %v233 = vmul.f32 %v105, %v217
  %v234 = vmul.f32 %v106, %v218
  %v235 = vmul.f32 %v107, %v219
  %v236 = vmul.f32 %v108, %v220
  %v237 = vmul.f32 %v109, %v221
  %v238 = vmul.f32 %v110, %v222
  %v239 = vmul.f32 %v111, %v223
  %v240 = vmul.f32 %v112, %v224
  %v241 = vmul.f32 %v113, %v225
  %v242 = vmul.f32 %v114, %v226
  %v243 = vmul.f32 %v115, %v227
  %v244 = vmul.f32 %v116, %v228
  %v245 = vmul.f32 %v117, %v229
  %v246 = vmul.f32 %v118, %v230
  %v247 = vld [vmem:[%s3] sm:$0x1]
  %v249 = vlaneseq
  %v250 = vshrl.u32 %v249, 7
  %v251 = vsub.s32 0, %v250
  %v252 = vrot.slane %v247, %v251
  %v254 = vmul.f32 %v231, %v252
  %v255 = vmul.f32 %v232, %v252
  %v256 = vmul.f32 %v233, %v252
  %v257 = vmul.f32 %v234, %v252
  %v258 = vmul.f32 %v235, %v252
  %v259 = vmul.f32 %v236, %v252
  %v260 = vmul.f32 %v237, %v252
  %v261 = vmul.f32 %v238, %v252
  %v262 = vmul.f32 %v239, %v252
  %v263 = vmul.f32 %v240, %v252
  %v264 = vmul.f32 %v241, %v252
  %v265 = vmul.f32 %v242, %v252
  %v266 = vmul.f32 %v243, %v252
  %v267 = vmul.f32 %v244, %v252
  %v268 = vmul.f32 %v245, %v252
  %v269 = vmul.f32 %v246, %v252
  %v270 = vld [vmem:[%s4] sm:$0x1]
  %v272 = vlaneseq
  %v273 = vshrl.u32 %v272, 7
  %v274 = vsub.s32 0, %v273
  %v275 = vrot.slane %v270, %v274
  %v277 = vadd.f32 %v254, %v275
  %v278 = vadd.f32 %v255, %v275
  %v279 = vadd.f32 %v256, %v275
  %v280 = vadd.f32 %v257, %v275
  %v281 = vadd.f32 %v258, %v275
  %v282 = vadd.f32 %v259, %v275
  %v283 = vadd.f32 %v260, %v275
  %v284 = vadd.f32 %v261, %v275
  %v285 = vadd.f32 %v262, %v275
  %v286 = vadd.f32 %v263, %v275
  %v287 = vadd.f32 %v264, %v275
  %v288 = vadd.f32 %v265, %v275
  %v289 = vadd.f32 %v266, %v275
  %v290 = vadd.f32 %v267, %v275
  %v291 = vadd.f32 %v268, %v275
  %v292 = vadd.f32 %v269, %v275
  %v293 = vpack.c.bf16 %v278, %v277
  %v294 = vpack.c.bf16 %v280, %v279
  %v295 = vpack.c.bf16 %v282, %v281
  %v296 = vpack.c.bf16 %v284, %v283
  %v297 = vpack.c.bf16 %v286, %v285
  %v298 = vpack.c.bf16 %v288, %v287
  %v299 = vpack.c.bf16 %v290, %v289
  %v300 = vpack.c.bf16 %v292, %v291
  %v301 = vld [vmem:[%s1] sm:$0xff]
  %v302 = vld [vmem:[%s1 + $0x8] sm:$0xff]
  %v303 = vld [vmem:[%s1 + $0x10] sm:$0xff]
  %v304 = vld [vmem:[%s1 + $0x18] sm:$0xff]
  %v305 = vpack.c.bf16 %v302, %v301
  %v306 = vpack.c.bf16 %v304, %v303
  %p307 = scmp.eq.s32.totalorder 0, 0
  // Predicated region
  $region22: #{_lambda_.23} parent=0 // pred_check
    %p308 = pneg %p307
  $region23: #{_lambda_.23} parent=0 // pred_check_branch
    %310 = sbr.rel (%p308) target = $region25
  $region24: #{_lambda_.23} parent=0 // pred_region
    %311 = vst [vmem:[#allocation2] sm:$0xff] 0.0
    %312 = vst [vmem:[#allocation2 + $0x8] sm:$0xff] 0.0
    %313 = vst [vmem:[#allocation2 + $0x10] sm:$0xff] 0.0
    %314 = vst [vmem:[#allocation2 + $0x18] sm:$0xff] 0.0
    %315 = vst [vmem:[#allocation2 + $0x20] sm:$0xff] 0.0
    %316 = vst [vmem:[#allocation2 + $0x28] sm:$0xff] 0.0
    %317 = vst [vmem:[#allocation2 + $0x30] sm:$0xff] 0.0
    %318 = vst [vmem:[#allocation2 + $0x38] sm:$0xff] 0.0
    %319 = vst [vmem:[#allocation2 + $0x40] sm:$0xff] 0.0
    %320 = vst [vmem:[#allocation2 + $0x48] sm:$0xff] 0.0
    %321 = vst [vmem:[#allocation2 + $0x50] sm:$0xff] 0.0
    %322 = vst [vmem:[#allocation2 + $0x58] sm:$0xff] 0.0
    %323 = vst [vmem:[#allocation2 + $0x60] sm:$0xff] 0.0
    %324 = vst [vmem:[#allocation2 + $0x68] sm:$0xff] 0.0
    %325 = vst [vmem:[#allocation2 + $0x70] sm:$0xff] 0.0
    %326 = vst [vmem:[#allocation2 + $0x78] sm:$0xff] 0.0
  $region25: #{_lambda_.23} parent=0 // pred_fallthru
    _
  %v327 = vld [vmem:[#allocation2] sm:$0xff]
  %v328 = vld [vmem:[#allocation2 + $0x8] sm:$0xff]
  %v329 = vld [vmem:[#allocation2 + $0x10] sm:$0xff]
  %v330 = vld [vmem:[#allocation2 + $0x18] sm:$0xff]
  %v331 = vld [vmem:[#allocation2 + $0x20] sm:$0xff]
  %v332 = vld [vmem:[#allocation2 + $0x28] sm:$0xff]
  %v333 = vld [vmem:[#allocation2 + $0x30] sm:$0xff]
  %v334 = vld [vmem:[#allocation2 + $0x38] sm:$0xff]
  %v335 = vld [vmem:[#allocation2 + $0x40] sm:$0xff]
  %v336 = vld [vmem:[#allocation2 + $0x48] sm:$0xff]
  %v337 = vld [vmem:[#allocation2 + $0x50] sm:$0xff]
  %v338 = vld [vmem:[#allocation2 + $0x58] sm:$0xff]
  %v339 = vld [vmem:[#allocation2 + $0x60] sm:$0xff]
  %v340 = vld [vmem:[#allocation2 + $0x68] sm:$0xff]
  %v341 = vld [vmem:[#allocation2 + $0x70] sm:$0xff]
  %v342 = vld [vmem:[#allocation2 + $0x78] sm:$0xff]
  %v344 = vsel %vm37, %v293, 0
  %v347 = vsel %vm37, %v294, 0
  %v350 = vsel %vm37, %v295, 0
  %v353 = vsel %vm37, %v296, 0
  %v356 = vsel %vm37, %v297, 0
  %v359 = vsel %vm37, %v298, 0
  %v362 = vsel %vm37, %v299, 0
  %v365 = vsel %vm37, %v300, 0
  %367 = vmatprep.subr.bf16.mxu0 0
  %368 = vmatpush1.bf16.msra.mxu0 0
  %369 = vmatprep.subr.bf16.mxu0 0
  %370 = vmatpush1.bf16.msra.mxu0 0
  %371 = vmatprep.subr.bf16.mxu0 0
  %372 = vmatpush1.bf16.msra.mxu0 0
  %373 = vmatprep.subr.bf16.mxu0 0
  %374 = vmatpush1.bf16.msra.mxu0 0
  %375 = vmatprep.subr.bf16.mxu0 0
  %376 = vmatpush1.bf16.msra.mxu0 0
  %377 = vmatprep.subr.bf16.mxu0 0
  %378 = vmatpush1.bf16.msra.mxu0 0
  %379 = vmatprep.subr.bf16.mxu0 0
  %380 = vmatpush1.bf16.msra.mxu0 %v306
  %381 = vmatprep.subr.bf16.mxu0 0
  %382 = vmatpush1.bf16.msra.mxu0 %v305
  %383 = vmatprep.subr.bf16.mxu0 0
  %384 = vmatpush2.bf16.msra.mxu0 0
  %385 = vmatprep.subr.bf16.mxu0 0
  %386 = vmatpush2.bf16.msra.mxu0 0
  %387 = vmatprep.subr.bf16.mxu0 0
  %388 = vmatpush2.bf16.msra.mxu0 0
  %389 = vmatprep.subr.bf16.mxu0 0
  %390 = vmatpush2.bf16.msra.mxu0 0
  %391 = vmatprep.subr.bf16.mxu0 0
  %392 = vmatpush2.bf16.msra.mxu0 0
  %393 = vmatprep.subr.bf16.mxu0 0
  %394 = vmatpush2.bf16.msra.mxu0 0
  %395 = vmatprep.subr.bf16.mxu0 0
  %396 = vmatpush2.bf16.msra.mxu0 0
  %397 = vmatprep.subr.bf16.mxu0 0
  %398 = vmatpush2.bf16.msra.mxu0 0
  %399 = vmatprep.mubr.bf16.mxu0 0
  %400 = vmatmul.mubr.bf16.gmra.mxu0 %v344
  %v401 = vpop.f32.mrf.mxu0
  %v402 = vadd.f32 0.0, %v401
  %v403 = vpop.f32.mrf.mxu0
  %v404 = vpop.f32.mrf.mxu0
  %v405 = vadd.f32 0.0, %v404
  %v406 = vpop.f32.mrf.mxu0
  %407 = vmatprep.mubr.bf16.mxu0 0
  %408 = vmatmul.mubr.bf16.gmra.mxu0 %v347
  %v409 = vpop.f32.mrf.mxu0
  %v410 = vadd.f32 0.0, %v409
  %v411 = vpop.f32.mrf.mxu0
  %v412 = vpop.f32.mrf.mxu0
  %v413 = vadd.f32 0.0, %v412
  %v414 = vpop.f32.mrf.mxu0
  %415 = vmatprep.mubr.bf16.mxu0 0
  %416 = vmatmul.mubr.bf16.gmra.mxu0 %v350
  %v417 = vpop.f32.mrf.mxu0
  %v418 = vadd.f32 0.0, %v417
  %v419 = vpop.f32.mrf.mxu0
  %v420 = vpop.f32.mrf.mxu0
  %v421 = vadd.f32 0.0, %v420
  %v422 = vpop.f32.mrf.mxu0
  %423 = vmatprep.mubr.bf16.mxu0 0
  %424 = vmatmul.mubr.bf16.gmra.mxu0 %v353
  %v425 = vpop.f32.mrf.mxu0
  %v426 = vadd.f32 0.0, %v425
  %v427 = vpop.f32.mrf.mxu0
  %v428 = vpop.f32.mrf.mxu0
  %v429 = vadd.f32 0.0, %v428
  %v430 = vpop.f32.mrf.mxu0
  %431 = vmatprep.mubr.bf16.mxu0 0
  %432 = vmatmul.mubr.bf16.gmra.mxu0 %v356
  %v433 = vpop.f32.mrf.mxu0
  %v434 = vadd.f32 0.0, %v433
  %v435 = vpop.f32.mrf.mxu0
  %v436 = vpop.f32.mrf.mxu0
  %v437 = vadd.f32 0.0, %v436
  %v438 = vpop.f32.mrf.mxu0
  %439 = vmatprep.mubr.bf16.mxu0 0
  %440 = vmatmul.mubr.bf16.gmra.mxu0 %v359
  %v441 = vpop.f32.mrf.mxu0
  %v442 = vadd.f32 0.0, %v441
  %v443 = vpop.f32.mrf.mxu0
  %v444 = vpop.f32.mrf.mxu0
  %v445 = vadd.f32 0.0, %v444
  %v446 = vpop.f32.mrf.mxu0
  %447 = vmatprep.mubr.bf16.mxu0 0
  %448 = vmatmul.mubr.bf16.gmra.mxu0 %v362
  %v449 = vpop.f32.mrf.mxu0
  %v450 = vadd.f32 0.0, %v449
  %v451 = vpop.f32.mrf.mxu0
  %v452 = vpop.f32.mrf.mxu0
  %v453 = vadd.f32 0.0, %v452
  %v454 = vpop.f32.mrf.mxu0
  %455 = vmatprep.mubr.bf16.mxu0 0
  %456 = vmatmul.mubr.bf16.gmra.mxu0 %v365
  %v457 = vpop.f32.mrf.mxu0
  %v458 = vadd.f32 0.0, %v457
  %v459 = vpop.f32.mrf.mxu0
  %v460 = vpop.f32.mrf.mxu0
  %v461 = vadd.f32 0.0, %v460
  %v462 = vpop.f32.mrf.mxu0
  %463 = vdwg.mxu0
  %v464 = vadd.f32 %v327, %v402
  %v465 = vadd.f32 %v328, %v405
  %v466 = vadd.f32 %v329, %v410
  %v467 = vadd.f32 %v330, %v413
  %v468 = vadd.f32 %v331, %v418
  %v469 = vadd.f32 %v332, %v421
  %v470 = vadd.f32 %v333, %v426
  %v471 = vadd.f32 %v334, %v429
  %v472 = vadd.f32 %v335, %v434
  %v473 = vadd.f32 %v336, %v437
  %v474 = vadd.f32 %v337, %v442
  %v475 = vadd.f32 %v338, %v445
  %v476 = vadd.f32 %v339, %v450
  %v477 = vadd.f32 %v340, %v453
  %v478 = vadd.f32 %v341, %v458
  %v479 = vadd.f32 %v342, %v461
  %480 = vst [vmem:[#allocation2] sm:$0xff] %v464
  %481 = vst [vmem:[#allocation2 + $0x8] sm:$0xff] %v465
  %482 = vst [vmem:[#allocation2 + $0x10] sm:$0xff] %v466
  %483 = vst [vmem:[#allocation2 + $0x18] sm:$0xff] %v467
  %484 = vst [vmem:[#allocation2 + $0x20] sm:$0xff] %v468
  %485 = vst [vmem:[#allocation2 + $0x28] sm:$0xff] %v469
  %486 = vst [vmem:[#allocation2 + $0x30] sm:$0xff] %v470
  %487 = vst [vmem:[#allocation2 + $0x38] sm:$0xff] %v471
  %488 = vst [vmem:[#allocation2 + $0x40] sm:$0xff] %v472
  %489 = vst [vmem:[#allocation2 + $0x48] sm:$0xff] %v473
  %490 = vst [vmem:[#allocation2 + $0x50] sm:$0xff] %v474
  %491 = vst [vmem:[#allocation2 + $0x58] sm:$0xff] %v475
  %492 = vst [vmem:[#allocation2 + $0x60] sm:$0xff] %v476
  %493 = vst [vmem:[#allocation2 + $0x68] sm:$0xff] %v477
  %494 = vst [vmem:[#allocation2 + $0x70] sm:$0xff] %v478
  %495 = vst [vmem:[#allocation2 + $0x78] sm:$0xff] %v479
  // Predicated region
  $region26: #{_lambda_.23} parent=0 // pred_check
    %p496 = pneg %p307
  $region27: #{_lambda_.23} parent=0 // pred_check_branch
    %498 = sbr.rel (%p496) target = $region29
  $region28: #{_lambda_.23} parent=0 // pred_region
    %v499 = vld [vmem:[#allocation2] sm:$0xff]
    %v500 = vld [vmem:[#allocation2 + $0x8] sm:$0xff]
    %v501 = vld [vmem:[#allocation2 + $0x10] sm:$0xff]
    %v502 = vld [vmem:[#allocation2 + $0x18] sm:$0xff]
    %v503 = vld [vmem:[#allocation2 + $0x20] sm:$0xff]
    %v504 = vld [vmem:[#allocation2 + $0x28] sm:$0xff]
    %v505 = vld [vmem:[#allocation2 + $0x30] sm:$0xff]
    %v506 = vld [vmem:[#allocation2 + $0x38] sm:$0xff]
    %v507 = vld [vmem:[#allocation2 + $0x40] sm:$0xff]
    %v508 = vld [vmem:[#allocation2 + $0x48] sm:$0xff]
    %v509 = vld [vmem:[#allocation2 + $0x50] sm:$0xff]
    %v510 = vld [vmem:[#allocation2 + $0x58] sm:$0xff]
    %v511 = vld [vmem:[#allocation2 + $0x60] sm:$0xff]
    %v512 = vld [vmem:[#allocation2 + $0x68] sm:$0xff]
    %v513 = vld [vmem:[#allocation2 + $0x70] sm:$0xff]
    %v514 = vld [vmem:[#allocation2 + $0x78] sm:$0xff]
    %v515 = vld [vmem:[%s2] sm:$0x1]
    %v517 = vlaneseq
    %v518 = vshrl.u32 %v517, 7
    %v519 = vsub.s32 0, %v518
    %v520 = vrot.slane %v515, %v519
    %v522 = vadd.f32 %v499, %v520
    %v523 = vadd.f32 %v500, %v520
    %v524 = vadd.f32 %v501, %v520
    %v525 = vadd.f32 %v502, %v520
    %v526 = vadd.f32 %v503, %v520
    %v527 = vadd.f32 %v504, %v520
    %v528 = vadd.f32 %v505, %v520
    %v529 = vadd.f32 %v506, %v520
    %v530 = vadd.f32 %v507, %v520
    %v531 = vadd.f32 %v508, %v520
    %v532 = vadd.f32 %v509, %v520
    %v533 = vadd.f32 %v510, %v520
    %v534 = vadd.f32 %v511, %v520
    %v535 = vadd.f32 %v512, %v520
    %v536 = vadd.f32 %v513, %v520
    %v537 = vadd.f32 %v514, %v520
    %v538 = vmul.f32 %v522, 0.5
    %v539 = vmul.f32 %v523, 0.5
    %v540 = vmul.f32 %v524, 0.5
    %v541 = vmul.f32 %v525, 0.5
    %v542 = vmul.f32 %v526, 0.5
    %v543 = vmul.f32 %v527, 0.5
    %v544 = vmul.f32 %v528, 0.5
    %v545 = vmul.f32 %v529, 0.5
    %v546 = vmul.f32 %v530, 0.5
    %v547 = vmul.f32 %v531, 0.5
    %v548 = vmul.f32 %v532, 0.5
    %v549 = vmul.f32 %v533, 0.5
    %v550 = vmul.f32 %v534, 0.5
    %v551 = vmul.f32 %v535, 0.5
    %v552 = vmul.f32 %v536, 0.5
    %v553 = vmul.f32 %v537, 0.5
    %v554 = vmul.f32 %v522, 0.70710677
    %v555 = vmul.f32 %v523, 0.70710677
    %v556 = vmul.f32 %v524, 0.70710677
    %v557 = vmul.f32 %v525, 0.70710677
    %v558 = vmul.f32 %v526, 0.70710677
    %v559 = vmul.f32 %v527, 0.70710677
    %v560 = vmul.f32 %v528, 0.70710677
    %v561 = vmul.f32 %v529, 0.70710677
    %v562 = vmul.f32 %v530, 0.70710677
    %v563 = vmul.f32 %v531, 0.70710677
    %v564 = vmul.f32 %v532, 0.70710677
    %v565 = vmul.f32 %v533, 0.70710677
    %v566 = vmul.f32 %v534, 0.70710677
    %v567 = vmul.f32 %v535, 0.70710677
    %v568 = vmul.f32 %v536, 0.70710677
    %v569 = vmul.f32 %v537, 0.70710677
    %v570 = verf.f32.pop %v554
    %v571 = verf.f32.pop %v555
    %v572 = verf.f32.pop %v556
    %v573 = verf.f32.pop %v557
    %v574 = verf.f32.pop %v558
    %v575 = verf.f32.pop %v559
    %v576 = verf.f32.pop %v560
    %v577 = verf.f32.pop %v561
    %v578 = verf.f32.pop %v562
    %v579 = verf.f32.pop %v563
    %v580 = verf.f32.pop %v564
    %v581 = verf.f32.pop %v565
    %v582 = verf.f32.pop %v566
    %v583 = verf.f32.pop %v567
    %v584 = verf.f32.pop %v568
    %v585 = verf.f32.pop %v569
    %v586 = vadd.f32 %v570, 1.0
    %v587 = vadd.f32 %v571, 1.0
    %v588 = vadd.f32 %v572, 1.0
    %v589 = vadd.f32 %v573, 1.0
    %v590 = vadd.f32 %v574, 1.0
    %v591 = vadd.f32 %v575, 1.0
    %v592 = vadd.f32 %v576, 1.0
    %v593 = vadd.f32 %v577, 1.0
    %v594 = vadd.f32 %v578, 1.0
    %v595 = vadd.f32 %v579, 1.0
    %v596 = vadd.f32 %v580, 1.0
    %v597 = vadd.f32 %v581, 1.0
    %v598 = vadd.f32 %v582, 1.0
    %v599 = vadd.f32 %v583, 1.0
    %v600 = vadd.f32 %v584, 1.0
    %v601 = vadd.f32 %v585, 1.0
    %v602 = vmul.f32 %v538, %v586
    %v603 = vmul.f32 %v539, %v587
    %v604 = vmul.f32 %v540, %v588
    %v605 = vmul.f32 %v541, %v589
    %v606 = vmul.f32 %v542, %v590
    %v607 = vmul.f32 %v543, %v591
    %v608 = vmul.f32 %v544, %v592
    %v609 = vmul.f32 %v545, %v593
    %v610 = vmul.f32 %v546, %v594
    %v611 = vmul.f32 %v547, %v595
    %v612 = vmul.f32 %v548, %v596
    %v613 = vmul.f32 %v549, %v597
    %v614 = vmul.f32 %v550, %v598
    %v615 = vmul.f32 %v551, %v599
    %v616 = vmul.f32 %v552, %v600
    %v617 = vmul.f32 %v553, %v601
    %618 = vst [vmem:[%s5] sm:$0xff] %v602
    %619 = vst [vmem:[%s5 + $0x8] sm:$0xff] %v603
    %620 = vst [vmem:[%s5 + $0x10] sm:$0xff] %v604
    %621 = vst [vmem:[%s5 + $0x18] sm:$0xff] %v605
    %622 = vst [vmem:[%s5 + $0x20] sm:$0xff] %v606
    %623 = vst [vmem:[%s5 + $0x28] sm:$0xff] %v607
    %624 = vst [vmem:[%s5 + $0x30] sm:$0xff] %v608
    %625 = vst [vmem:[%s5 + $0x38] sm:$0xff] %v609
    %626 = vst [vmem:[%s5 + $0x40] sm:$0xff] %v610
    %627 = vst [vmem:[%s5 + $0x48] sm:$0xff] %v611
    %628 = vst [vmem:[%s5 + $0x50] sm:$0xff] %v612
    %629 = vst [vmem:[%s5 + $0x58] sm:$0xff] %v613
    %630 = vst [vmem:[%s5 + $0x60] sm:$0xff] %v614
    %631 = vst [vmem:[%s5 + $0x68] sm:$0xff] %v615
    %632 = vst [vmem:[%s5 + $0x70] sm:$0xff] %v616
    %633 = vst [vmem:[%s5 + $0x78] sm:$0xff] %v617
  $region29: #{_lambda_.23} parent=0 // pred_fallthru
    _
  // Predicated region
  $region30: #{_lambda_.23} parent=0 // pred_check
    _
  $region31: #{_lambda_.23} parent=0 // pred_check_branch
    %635 = sbr.rel (0) target = $region33
  $region32: #{_lambda_.23} parent=0 // pred_region
    _
  $region33: #{_lambda_.23} parent=0 // pred_fallthru
    _
  // Predicated region
  $region34: #{_lambda_.23} parent=0 // pred_check
    _
  $region35: #{_lambda_.23} parent=0 // pred_check_branch
    %637 = sbr.rel (0) target = $region37
  $region36: #{_lambda_.23} parent=0 // pred_region
    _
  $region37: #{_lambda_.23} parent=0 // pred_fallthru
    _

// kernel: _lambda_.25
$region0: #{_lambda_.25}
  #allocation0 [shape = 'u32[]', space=smem, size = 0x4, offset = 0x4, fixed_abs, tag = 'smem constant byte address 0x4 - core index']
  #allocation1 [shape = 'u32[144,128]{1,0:T(1,128)}', space=vmem, size = 0x12000, scoped, tag = 'internal scratch']
  %s0 = inlined_call_operand.vmem [shape: f32[56,32], index: 0, kind: input, shape index: {}]
  %s1 = inlined_call_operand.vmem [shape: f32[1,32], index: 1, kind: input, shape index: {}]
  %s2 = inlined_call_operand.vmem [shape: f32[1,32], index: 2, kind: input, shape index: {}]
  %s3 = inlined_call_operand.vmem [shape: f32[56,32], index: 3, kind: output, shape index: {}]
  %s4 = sld [smem:[#allocation0]]
  $region22: #{_lambda_.25} parent=0
    _
  %s6 = ssub.s32 1, %s4
  %s7 = scalar_select 0, %s6, %s4
  // Predicated region
  $region2: #{_lambda_.25} parent=0 // pred_check
    _
  $region3: #{_lambda_.25} parent=0 // pred_check_branch
    %9 = sbr.rel (0) target = $region5
  $region4: #{_lambda_.25} parent=0 // pred_region
    _
  $region5: #{_lambda_.25} parent=0 // pred_fallthru
    _
  // Predicated region
  $region6: #{_lambda_.25} parent=0 // pred_check
    _
  $region7: #{_lambda_.25} parent=0 // pred_check_branch
    %11 = sbr.rel (0) target = $region9
  $region8: #{_lambda_.25} parent=0 // pred_region
    _
  $region9: #{_lambda_.25} parent=0 // pred_fallthru
    _
  // Predicated region
  $region10: #{_lambda_.25} parent=0 // pred_check
    _
  $region11: #{_lambda_.25} parent=0 // pred_check_branch
    %13 = sbr.rel (0) target = $region13
  $region12: #{_lambda_.25} parent=0 // pred_region
    _
  $region13: #{_lambda_.25} parent=0 // pred_fallthru
    _
  %v14 = vld [vmem:[%s0] sm:$0xff]
  %v15 = vld [vmem:[%s0 + $0x8] sm:$0xff]
  %v16 = vld [vmem:[%s0 + $0x10] sm:$0xff]
  %v17 = vld [vmem:[%s0 + $0x18] sm:$0xff]
  %v18 = vld [vmem:[%s0 + $0x20] sm:$0xff]
  %v19 = vld [vmem:[%s0 + $0x28] sm:$0xff]
  %v20 = vld [vmem:[%s0 + $0x30] sm:$0xff]
  %vm21 = vcmask 261120
  %v22 = vsel %vm21, %v14, 0.0
  %23 = vadd.xlane.f32.xlu0 %v22
  %v24 = vpop.xlane.xlu0 %23
  %v25 = vsel %vm21, %v15, 0.0
  %26 = vadd.xlane.f32.xlu0 %v25
  %v27 = vpop.xlane.xlu0 %26
  %v28 = vsel %vm21, %v16, 0.0
  %29 = vadd.xlane.f32.xlu0 %v28
  %v30 = vpop.xlane.xlu0 %29
  %v31 = vsel %vm21, %v17, 0.0
  %32 = vadd.xlane.f32.xlu0 %v31
  %v33 = vpop.xlane.xlu0 %32
  %v34 = vsel %vm21, %v18, 0.0
  %35 = vadd.xlane.f32.xlu0 %v34
  %v36 = vpop.xlane.xlu0 %35
  %v37 = vsel %vm21, %v19, 0.0
  %38 = vadd.xlane.f32.xlu0 %v37
  %v39 = vpop.xlane.xlu0 %38
  %v40 = vsel %vm21, %v20, 0.0
  %41 = vadd.xlane.f32.xlu0 %v40
  %v42 = vpop.xlane.xlu0 %41
  %v43 = vrcp.pop 32.0
  %v44 = vmul.f32 %v24, %v43
  %v45 = vmul.f32 %v27, %v43
  %v46 = vmul.f32 %v30, %v43
  %v47 = vmul.f32 %v33, %v43
  %v48 = vmul.f32 %v36, %v43
  %v49 = vmul.f32 %v39, %v43
  %v50 = vmul.f32 %v42, %v43
  %v51 = vsub.f32 %v14, %v44
  %v52 = vsub.f32 %v15, %v45
  %v53 = vsub.f32 %v16, %v46
  %v54 = vsub.f32 %v17, %v47
  %v55 = vsub.f32 %v18, %v48
  %v56 = vsub.f32 %v19, %v49
  %v57 = vsub.f32 %v20, %v50
  %v58 = vmul.f32 %v51, %v51
  %v59 = vmul.f32 %v52, %v52
  %v60 = vmul.f32 %v53, %v53
  %v61 = vmul.f32 %v54, %v54
  %v62 = vmul.f32 %v55, %v55
  %v63 = vmul.f32 %v56, %v56
  %v64 = vmul.f32 %v57, %v57
  %v65 = vsel %vm21, %v58, 0.0
  %66 = vadd.xlane.f32.xlu0 %v65
  %v67 = vpop.xlane.xlu0 %66
  %v68 = vsel %vm21, %v59, 0.0
  %69 = vadd.xlane.f32.xlu0 %v68
  %v70 = vpop.xlane.xlu0 %69
  %v71 = vsel %vm21, %v60, 0.0
  %72 = vadd.xlane.f32.xlu0 %v71
  %v73 = vpop.xlane.xlu0 %72
  %v74 = vsel %vm21, %v61, 0.0
  %75 = vadd.xlane.f32.xlu0 %v74
  %v76 = vpop.xlane.xlu0 %75
  %v77 = vsel %vm21, %v62, 0.0
  %78 = vadd.xlane.f32.xlu0 %v77
  %v79 = vpop.xlane.xlu0 %78
  %v80 = vsel %vm21, %v63, 0.0
  %81 = vadd.xlane.f32.xlu0 %v80
  %v82 = vpop.xlane.xlu0 %81
  %v83 = vsel %vm21, %v64, 0.0
  %84 = vadd.xlane.f32.xlu0 %v83
  %v85 = vpop.xlane.xlu0 %84
  %v86 = vmul.f32 %v67, %v43
  %v87 = vmul.f32 %v70, %v43
  %v88 = vmul.f32 %v73, %v43
  %v89 = vmul.f32 %v76, %v43
  %v90 = vmul.f32 %v79, %v43
  %v91 = vmul.f32 %v82, %v43
  %v92 = vmul.f32 %v85, %v43
  %v93 = vadd.f32 %v86, 1e-05
  %v94 = vadd.f32 %v87, 1e-05
  %v95 = vadd.f32 %v88, 1e-05
  %v96 = vadd.f32 %v89, 1e-05
  %v97 = vadd.f32 %v90, 1e-05
  %v98 = vadd.f32 %v91, 1e-05
  %v99 = vadd.f32 %v92, 1e-05
  %v100 = vrsqrt.pop %v93
  %v101 = vrsqrt.pop %v94
  %v102 = vrsqrt.pop %v95
  %v103 = vrsqrt.pop %v96
  %v104 = vrsqrt.pop %v97
  %v105 = vrsqrt.pop %v98
  %v106 = vrsqrt.pop %v99
  %v107 = vmul.f32 %v51, %v100
  %v108 = vmul.f32 %v52, %v101
  %v109 = vmul.f32 %v53, %v102
  %v110 = vmul.f32 %v54, %v103
  %v111 = vmul.f32 %v55, %v104
  %v112 = vmul.f32 %v56, %v105
  %v113 = vmul.f32 %v57, %v106
  %v114 = vld [vmem:[%s1] sm:$0x1]
  %v116 = vlaneseq
  %v117 = vshrl.u32 %v116, 7
  %v118 = vsub.s32 0, %v117
  %v119 = vrot.slane %v114, %v118
  %v121 = vmul.f32 %v107, %v119
  %v122 = vmul.f32 %v108, %v119
  %v123 = vmul.f32 %v109, %v119
  %v124 = vmul.f32 %v110, %v119
  %v125 = vmul.f32 %v111, %v119
  %v126 = vmul.f32 %v112, %v119
  %v127 = vmul.f32 %v113, %v119
  %v128 = vld [vmem:[%s2] sm:$0x1]
  %v130 = vlaneseq
  %v131 = vshrl.u32 %v130, 7
  %v132 = vsub.s32 0, %v131
  %v133 = vrot.slane %v128, %v132
  %v135 = vadd.f32 %v121, %v133
  %v136 = vadd.f32 %v122, %v133
  %v137 = vadd.f32 %v123, %v133
  %v138 = vadd.f32 %v124, %v133
  %v139 = vadd.f32 %v125, %v133
  %v140 = vadd.f32 %v126, %v133
  %v141 = vadd.f32 %v127, %v133
  %142 = vst.msk [vmem:[%s3] sm:$0xff] %vm21, %v135
  %143 = vst.msk [vmem:[%s3 + $0x8] sm:$0xff] %vm21, %v136
  %144 = vst.msk [vmem:[%s3 + $0x10] sm:$0xff] %vm21, %v137
  %145 = vst.msk [vmem:[%s3 + $0x18] sm:$0xff] %vm21, %v138
  %146 = vst.msk [vmem:[%s3 + $0x20] sm:$0xff] %vm21, %v139
  %147 = vst.msk [vmem:[%s3 + $0x28] sm:$0xff] %vm21, %v140
  %148 = vst.msk [vmem:[%s3 + $0x30] sm:$0xff] %vm21, %v141
  // Predicated region
  $region14: #{_lambda_.25} parent=0 // pred_check
    _
  $region15: #{_lambda_.25} parent=0 // pred_check_branch
    %150 = sbr.rel (0) target = $region17
  $region16: #{_lambda_.25} parent=0 // pred_region
    _
  $region17: #{_lambda_.25} parent=0 // pred_fallthru
    _
  // Predicated region
  $region18: #{_lambda_.25} parent=0 // pred_check
    _
  $region19: #{_lambda_.25} parent=0 // pred_check_branch
    %152 = sbr.rel (0) target = $region21
  $region20: #{_lambda_.25} parent=0 // pred_region
    _
  $region21: #{_lambda_.25} parent=0 // pred_fallthru
    _

// kernel: _lambda_.26
$region0: #{_lambda_.26}
  #allocation0 [shape = 'u32[]', space=smem, size = 0x4, offset = 0x4, fixed_abs, tag = 'smem constant byte address 0x4 - core index']
  #allocation1 [shape = 'u32[144,128]{1,0:T(1,128)}', space=vmem, size = 0x12000, scoped, tag = 'internal scratch']
  #allocation2 [shape = 'f32[56,128]{1,0:T(8,128)}', space=vmem, size = 0x7000, scoped, tag = 'scratch operand']
  %s0 = inlined_call_operand.vmem [shape: f32[56,32], index: 0, kind: input, shape index: {}]
  %s1 = inlined_call_operand.vmem [shape: f32[32,128], index: 1, kind: input, shape index: {}]
  %s2 = inlined_call_operand.vmem [shape: f32[1,128], index: 2, kind: input, shape index: {}]
  %s3 = inlined_call_operand.vmem [shape: f32[1,32], index: 3, kind: input, shape index: {}]
  %s4 = inlined_call_operand.vmem [shape: f32[1,32], index: 4, kind: input, shape index: {}]
  %s5 = inlined_call_operand.vmem [shape: f32[56,128], index: 5, kind: output, shape index: {}]
  %s6 = sld [smem:[#allocation0]]
  $region38: #{_lambda_.26} parent=0
    _
  %s8 = ssub.s32 1, %s6
  %s9 = scalar_select 0, %s8, %s6
  // Predicated region
  $region2: #{_lambda_.26} parent=0 // pred_check
    _
  $region3: #{_lambda_.26} parent=0 // pred_check_branch
    %11 = sbr.rel (0) target = $region5
  $region4: #{_lambda_.26} parent=0 // pred_region
    _
  $region5: #{_lambda_.26} parent=0 // pred_fallthru
    _
  // Predicated region
  $region6: #{_lambda_.26} parent=0 // pred_check
    _
  $region7: #{_lambda_.26} parent=0 // pred_check_branch
    %13 = sbr.rel (0) target = $region9
  $region8: #{_lambda_.26} parent=0 // pred_region
    _
  $region9: #{_lambda_.26} parent=0 // pred_fallthru
    _
  // Predicated region
  $region10: #{_lambda_.26} parent=0 // pred_check
    _
  $region11: #{_lambda_.26} parent=0 // pred_check_branch
    %15 = sbr.rel (0) target = $region13
  $region12: #{_lambda_.26} parent=0 // pred_region
    _
  $region13: #{_lambda_.26} parent=0 // pred_fallthru
    _
  // Predicated region
  $region14: #{_lambda_.26} parent=0 // pred_check
    _
  $region15: #{_lambda_.26} parent=0 // pred_check_branch
    %17 = sbr.rel (0) target = $region17
  $region16: #{_lambda_.26} parent=0 // pred_region
    _
  $region17: #{_lambda_.26} parent=0 // pred_fallthru
    _
  // Predicated region
  $region18: #{_lambda_.26} parent=0 // pred_check
    _
  $region19: #{_lambda_.26} parent=0 // pred_check_branch
    %19 = sbr.rel (0) target = $region21
  $region20: #{_lambda_.26} parent=0 // pred_region
    _
  $region21: #{_lambda_.26} parent=0 // pred_fallthru
    _
  %v21 = vld [vmem:[%s0] sm:$0xff]
  %v22 = vld [vmem:[%s0 + $0x8] sm:$0xff]
  %v23 = vld [vmem:[%s0 + $0x10] sm:$0xff]
  %v24 = vld [vmem:[%s0 + $0x18] sm:$0xff]
  %v25 = vld [vmem:[%s0 + $0x20] sm:$0xff]
  %v26 = vld [vmem:[%s0 + $0x28] sm:$0xff]
  %v27 = vld [vmem:[%s0 + $0x30] sm:$0xff]
  %vm28 = vcmask 261120
  %v29 = vsel %vm28, %v21, 0.0
  %30 = vadd.xlane.f32.xlu0 %v29
  %v31 = vpop.xlane.xlu0 %30
  %v32 = vsel %vm28, %v22, 0.0
  %33 = vadd.xlane.f32.xlu0 %v32
  %v34 = vpop.xlane.xlu0 %33
  %v35 = vsel %vm28, %v23, 0.0
  %36 = vadd.xlane.f32.xlu0 %v35
  %v37 = vpop.xlane.xlu0 %36
  %v38 = vsel %vm28, %v24, 0.0
  %39 = vadd.xlane.f32.xlu0 %v38
  %v40 = vpop.xlane.xlu0 %39
  %v41 = vsel %vm28, %v25, 0.0
  %42 = vadd.xlane.f32.xlu0 %v41
  %v43 = vpop.xlane.xlu0 %42
  %v44 = vsel %vm28, %v26, 0.0
  %45 = vadd.xlane.f32.xlu0 %v44
  %v46 = vpop.xlane.xlu0 %45
  %v47 = vsel %vm28, %v27, 0.0
  %48 = vadd.xlane.f32.xlu0 %v47
  %v49 = vpop.xlane.xlu0 %48
  %v50 = vrcp.pop 32.0
  %v51 = vmul.f32 %v31, %v50
  %v52 = vmul.f32 %v34, %v50
  %v53 = vmul.f32 %v37, %v50
  %v54 = vmul.f32 %v40, %v50
  %v55 = vmul.f32 %v43, %v50
  %v56 = vmul.f32 %v46, %v50
  %v57 = vmul.f32 %v49, %v50
  %v58 = vsub.f32 %v21, %v51
  %v59 = vsub.f32 %v22, %v52
  %v60 = vsub.f32 %v23, %v53
  %v61 = vsub.f32 %v24, %v54
  %v62 = vsub.f32 %v25, %v55
  %v63 = vsub.f32 %v26, %v56
  %v64 = vsub.f32 %v27, %v57
  %v65 = vmul.f32 %v58, %v58
  %v66 = vmul.f32 %v59, %v59
  %v67 = vmul.f32 %v60, %v60
  %v68 = vmul.f32 %v61, %v61
  %v69 = vmul.f32 %v62, %v62
  %v70 = vmul.f32 %v63, %v63
  %v71 = vmul.f32 %v64, %v64
  %v72 = vsel %vm28, %v65, 0.0
  %73 = vadd.xlane.f32.xlu0 %v72
  %v74 = vpop.xlane.xlu0 %73
  %v75 = vsel %vm28, %v66, 0.0
  %76 = vadd.xlane.f32.xlu0 %v75
  %v77 = vpop.xlane.xlu0 %76
  %v78 = vsel %vm28, %v67, 0.0
  %79 = vadd.xlane.f32.xlu0 %v78
  %v80 = vpop.xlane.xlu0 %79
  %v81 = vsel %vm28, %v68, 0.0
  %82 = vadd.xlane.f32.xlu0 %v81
  %v83 = vpop.xlane.xlu0 %82
  %v84 = vsel %vm28, %v69, 0.0
  %85 = vadd.xlane.f32.xlu0 %v84
  %v86 = vpop.xlane.xlu0 %85
  %v87 = vsel %vm28, %v70, 0.0
  %88 = vadd.xlane.f32.xlu0 %v87
  %v89 = vpop.xlane.xlu0 %88
  %v90 = vsel %vm28, %v71, 0.0
  %91 = vadd.xlane.f32.xlu0 %v90
  %v92 = vpop.xlane.xlu0 %91
  %v93 = vmul.f32 %v74, %v50
  %v94 = vmul.f32 %v77, %v50
  %v95 = vmul.f32 %v80, %v50
  %v96 = vmul.f32 %v83, %v50
  %v97 = vmul.f32 %v86, %v50
  %v98 = vmul.f32 %v89, %v50
  %v99 = vmul.f32 %v92, %v50
  %v100 = vadd.f32 %v93, 1e-05
  %v101 = vadd.f32 %v94, 1e-05
  %v102 = vadd.f32 %v95, 1e-05
  %v103 = vadd.f32 %v96, 1e-05
  %v104 = vadd.f32 %v97, 1e-05
  %v105 = vadd.f32 %v98, 1e-05
  %v106 = vadd.f32 %v99, 1e-05
  %v107 = vrsqrt.pop %v100
  %v108 = vrsqrt.pop %v101
  %v109 = vrsqrt.pop %v102
  %v110 = vrsqrt.pop %v103
  %v111 = vrsqrt.pop %v104
  %v112 = vrsqrt.pop %v105
  %v113 = vrsqrt.pop %v106
  %v114 = vmul.f32 %v58, %v107
  %v115 = vmul.f32 %v59, %v108
  %v116 = vmul.f32 %v60, %v109
  %v117 = vmul.f32 %v61, %v110
  %v118 = vmul.f32 %v62, %v111
  %v119 = vmul.f32 %v63, %v112
  %v120 = vmul.f32 %v64, %v113
  %v121 = vld [vmem:[%s3] sm:$0x1]
  %v123 = vlaneseq
  %v124 = vshrl.u32 %v123, 7
  %v125 = vsub.s32 0, %v124
  %v126 = vrot.slane %v121, %v125
  %v128 = vmul.f32 %v114, %v126
  %v129 = vmul.f32 %v115, %v126
  %v130 = vmul.f32 %v116, %v126
  %v131 = vmul.f32 %v117, %v126
  %v132 = vmul.f32 %v118, %v126
  %v133 = vmul.f32 %v119, %v126
  %v134 = vmul.f32 %v120, %v126
  %v135 = vld [vmem:[%s4] sm:$0x1]
  %v137 = vlaneseq
  %v138 = vshrl.u32 %v137, 7
  %v139 = vsub.s32 0, %v138
  %v140 = vrot.slane %v135, %v139
  %v142 = vadd.f32 %v128, %v140
  %v143 = vadd.f32 %v129, %v140
  %v144 = vadd.f32 %v130, %v140
  %v145 = vadd.f32 %v131, %v140
  %v146 = vadd.f32 %v132, %v140
  %v147 = vadd.f32 %v133, %v140
  %v148 = vadd.f32 %v134, %v140
  %v149 = vpack.c.bf16 %v143, %v142
  %v150 = vpack.c.bf16 %v145, %v144
  %v151 = vpack.c.bf16 %v147, %v146
  %v152 = vpack.c.bf16 %v148, %v148
  %v153 = vld [vmem:[%s1] sm:$0xff]
  %v154 = vld [vmem:[%s1 + $0x8] sm:$0xff]
  %v155 = vld [vmem:[%s1 + $0x10] sm:$0xff]
  %v156 = vld [vmem:[%s1 + $0x18] sm:$0xff]
  %v157 = vpack.c.bf16 %v154, %v153
  %v158 = vpack.c.bf16 %v156, %v155
  %p159 = scmp.eq.s32.totalorder 0, 0
  // Predicated region
  $region22: #{_lambda_.26} parent=0 // pred_check
    %p160 = pneg %p159
  $region23: #{_lambda_.26} parent=0 // pred_check_branch
    %162 = sbr.rel (%p160) target = $region25
  $region24: #{_lambda_.26} parent=0 // pred_region
    %163 = vst [vmem:[#allocation2] sm:$0xff] 0.0
    %164 = vst [vmem:[#allocation2 + $0x8] sm:$0xff] 0.0
    %165 = vst [vmem:[#allocation2 + $0x10] sm:$0xff] 0.0
    %166 = vst [vmem:[#allocation2 + $0x18] sm:$0xff] 0.0
    %167 = vst [vmem:[#allocation2 + $0x20] sm:$0xff] 0.0
    %168 = vst [vmem:[#allocation2 + $0x28] sm:$0xff] 0.0
    %169 = vst [vmem:[#allocation2 + $0x30] sm:$0xff] 0.0
  $region25: #{_lambda_.26} parent=0 // pred_fallthru
    _
  %v170 = vld [vmem:[#allocation2] sm:$0xff]
  %v171 = vld [vmem:[#allocation2 + $0x8] sm:$0xff]
  %v172 = vld [vmem:[#allocation2 + $0x10] sm:$0xff]
  %v173 = vld [vmem:[#allocation2 + $0x18] sm:$0xff]
  %v174 = vld [vmem:[#allocation2 + $0x20] sm:$0xff]
  %v175 = vld [vmem:[#allocation2 + $0x28] sm:$0xff]
  %v176 = vld [vmem:[#allocation2 + $0x30] sm:$0xff]
  %v178 = vsel %vm28, %v149, 0
  %v181 = vsel %vm28, %v150, 0
  %v184 = vsel %vm28, %v151, 0
  %v187 = vsel %vm28, %v152, 0
  %189 = vmatprep.subr.bf16.mxu0 0
  %190 = vmatpush1.bf16.msra.mxu0 0
  %191 = vmatprep.subr.bf16.mxu0 0
  %192 = vmatpush1.bf16.msra.mxu0 0
  %193 = vmatprep.subr.bf16.mxu0 0
  %194 = vmatpush1.bf16.msra.mxu0 0
  %195 = vmatprep.subr.bf16.mxu0 0
  %196 = vmatpush1.bf16.msra.mxu0 0
  %197 = vmatprep.subr.bf16.mxu0 0
  %198 = vmatpush1.bf16.msra.mxu0 0
  %199 = vmatprep.subr.bf16.mxu0 0
  %200 = vmatpush1.bf16.msra.mxu0 0
  %201 = vmatprep.subr.bf16.mxu0 0
  %202 = vmatpush1.bf16.msra.mxu0 %v158
  %203 = vmatprep.subr.bf16.mxu0 0
  %204 = vmatpush1.bf16.msra.mxu0 %v157
  %205 = vmatprep.subr.bf16.mxu0 0
  %206 = vmatpush2.bf16.msra.mxu0 0
  %207 = vmatprep.subr.bf16.mxu0 0
  %208 = vmatpush2.bf16.msra.mxu0 0
  %209 = vmatprep.subr.bf16.mxu0 0
  %210 = vmatpush2.bf16.msra.mxu0 0
  %211 = vmatprep.subr.bf16.mxu0 0
  %212 = vmatpush2.bf16.msra.mxu0 0
  %213 = vmatprep.subr.bf16.mxu0 0
  %214 = vmatpush2.bf16.msra.mxu0 0
  %215 = vmatprep.subr.bf16.mxu0 0
  %216 = vmatpush2.bf16.msra.mxu0 0
  %217 = vmatprep.subr.bf16.mxu0 0
  %218 = vmatpush2.bf16.msra.mxu0 0
  %219 = vmatprep.subr.bf16.mxu0 0
  %220 = vmatpush2.bf16.msra.mxu0 0
  %221 = vmatprep.mubr.bf16.mxu0 0
  %222 = vmatmul.mubr.bf16.gmra.mxu0 %v178
  %v223 = vpop.f32.mrf.mxu0
  %v224 = vadd.f32 0.0, %v223
  %v225 = vpop.f32.mrf.mxu0
  %v226 = vpop.f32.mrf.mxu0
  %v227 = vadd.f32 0.0, %v226
  %v228 = vpop.f32.mrf.mxu0
  %229 = vmatprep.mubr.bf16.mxu0 0
  %230 = vmatmul.mubr.bf16.gmra.mxu0 %v181
  %v231 = vpop.f32.mrf.mxu0
  %v232 = vadd.f32 0.0, %v231
  %v233 = vpop.f32.mrf.mxu0
  %v234 = vpop.f32.mrf.mxu0
  %v235 = vadd.f32 0.0, %v234
  %v236 = vpop.f32.mrf.mxu0
  %237 = vmatprep.mubr.bf16.mxu0 0
  %238 = vmatmul.mubr.bf16.gmra.mxu0 %v184
  %v239 = vpop.f32.mrf.mxu0
  %v240 = vadd.f32 0.0, %v239
  %v241 = vpop.f32.mrf.mxu0
  %v242 = vpop.f32.mrf.mxu0
  %v243 = vadd.f32 0.0, %v242
  %v244 = vpop.f32.mrf.mxu0
  %245 = vmatprep.mubr.bf16.mxu0 0
  %246 = vmatmul.mubr.bf16.gmra.mxu0 %v187
  %v247 = vpop.f32.mrf.mxu0
  %v248 = vadd.f32 0.0, %v247
  %v249 = vpop.f32.mrf.mxu0
  %v250 = vpop.f32.mrf.mxu0
  %v251 = vpop.f32.mrf.mxu0
  %252 = vdwg.mxu0
  %v253 = vadd.f32 %v170, %v224
  %v254 = vadd.f32 %v171, %v227
  %v255 = vadd.f32 %v172, %v232
  %v256 = vadd.f32 %v173, %v235
  %v257 = vadd.f32 %v174, %v240
  %v258 = vadd.f32 %v175, %v243
  %v259 = vadd.f32 %v176, %v248
  %260 = vst [vmem:[#allocation2] sm:$0xff] %v253
  %261 = vst [vmem:[#allocation2 + $0x8] sm:$0xff] %v254
  %262 = vst [vmem:[#allocation2 + $0x10] sm:$0xff] %v255
  %263 = vst [vmem:[#allocation2 + $0x18] sm:$0xff] %v256
  %264 = vst [vmem:[#allocation2 + $0x20] sm:$0xff] %v257
  %265 = vst [vmem:[#allocation2 + $0x28] sm:$0xff] %v258
  %266 = vst [vmem:[#allocation2 + $0x30] sm:$0xff] %v259
  // Predicated region
  $region26: #{_lambda_.26} parent=0 // pred_check
    %p267 = pneg %p159
  $region27: #{_lambda_.26} parent=0 // pred_check_branch
    %269 = sbr.rel (%p267) target = $region29
  $region28: #{_lambda_.26} parent=0 // pred_region
    %v270 = vld [vmem:[#allocation2] sm:$0xff]
    %v271 = vld [vmem:[#allocation2 + $0x8] sm:$0xff]
    %v272 = vld [vmem:[#allocation2 + $0x10] sm:$0xff]
    %v273 = vld [vmem:[#allocation2 + $0x18] sm:$0xff]
    %v274 = vld [vmem:[#allocation2 + $0x20] sm:$0xff]
    %v275 = vld [vmem:[#allocation2 + $0x28] sm:$0xff]
    %v276 = vld [vmem:[#allocation2 + $0x30] sm:$0xff]
    %v277 = vld [vmem:[%s2] sm:$0x1]
    %v279 = vlaneseq
    %v280 = vshrl.u32 %v279, 7
    %v281 = vsub.s32 0, %v280
    %v282 = vrot.slane %v277, %v281
    %v284 = vadd.f32 %v270, %v282
    %v285 = vadd.f32 %v271, %v282
    %v286 = vadd.f32 %v272, %v282
    %v287 = vadd.f32 %v273, %v282
    %v288 = vadd.f32 %v274, %v282
    %v289 = vadd.f32 %v275, %v282
    %v290 = vadd.f32 %v276, %v282
    %291 = vst [vmem:[%s5] sm:$0xff] %v284
    %292 = vst [vmem:[%s5 + $0x8] sm:$0xff] %v285
    %293 = vst [vmem:[%s5 + $0x10] sm:$0xff] %v286
    %294 = vst [vmem:[%s5 + $0x18] sm:$0xff] %v287
    %295 = vst [vmem:[%s5 + $0x20] sm:$0xff] %v288
    %296 = vst [vmem:[%s5 + $0x28] sm:$0xff] %v289
    %297 = vst [vmem:[%s5 + $0x30] sm:$0xff] %v290
  $region29: #{_lambda_.26} parent=0 // pred_fallthru
    _
  // Predicated region
  $region30: #{_lambda_.26} parent=0 // pred_check
    _
  $region31: #{_lambda_.26} parent=0 // pred_check_branch
    %299 = sbr.rel (0) target = $region33
  $region32: #{_lambda_.26} parent=0 // pred_region
    _
  $region33: #{_lambda_.26} parent=0 // pred_fallthru
    _
  // Predicated region
  $region34: #{_lambda_.26} parent=0 // pred_check
    _
  $region35: #{_lambda_.26} parent=0 // pred_check_branch
    %301 = sbr.rel (0) target = $region37
  $region36: #{_lambda_.26} parent=0 // pred_region
    _
  $region37: #{_lambda_.26} parent=0 // pred_fallthru
    _

// kernel: _lambda_.27
$region0: #{_lambda_.27}
  #allocation0 [shape = 'u32[]', space=smem, size = 0x4, offset = 0x4, fixed_abs, tag = 'smem constant byte address 0x4 - core index']
  #allocation1 [shape = 'u32[144,128]{1,0:T(1,128)}', space=vmem, size = 0x12000, scoped, tag = 'internal scratch']
  %s0 = inlined_call_operand.vmem [shape: f32[2,25,32], index: 0, kind: input, shape index: {}]
  %s1 = inlined_call_operand.vmem [shape: f32[2,25,32], index: 1, kind: input, shape index: {}]
  %s2 = inlined_call_operand.vmem [shape: f32[2,25,32], index: 2, kind: input, shape index: {}]
  %s3 = inlined_call_operand.vmem [shape: f32[2,25,32], index: 3, kind: output, shape index: {}]
  %s4 = sld [smem:[#allocation0]]
  $region45: #{_lambda_.27} parent=0
    _
  %s6 = ssub.s32 1, %s4
  %s7 = scalar_select 0, %s6, %s4
  loop: start=0, step=1, limit=4
  $region2: #{_lambda_.27} parent=0 // loop_pre_header
    _
  $region3: #{_lambda_.27} parent=0 // loop_header
    %s9 = sphi 0, %s13
    %p10 = scmp.ge.s32.totalorder %s9, 4
    %s16 = sphi 0, %s28
    %s17 = sphi 0, %s24
    %s18 = sphi 0, %s16
    %s19 = sphi 0, %s17
    %s20 = sphi 0, %s18
    %s21 = sphi 0, %s19
    %s33 = sphi 0, %s35
    %s36 = sphi 0, %s33
    %s37 = sphi 0, %s36
    %s53 = sphi 0, %s37
    %s61 = sphi 0, %s63
    %s64 = sphi 0, %s61
    %s65 = sphi 0, %s64
    %s81 = sphi 0, %s65
    %s89 = sphi 0, %s91
    %s92 = sphi 0, %s89
    %s93 = sphi 0, %s92
    %s109 = sphi 0, %s93
    %s117 = sphi 0, %s119
    %s120 = sphi 0, %s117
    %s121 = sphi 0, %s120
    %s137 = sphi 0, %s121
  $region4: #{_lambda_.27} parent=0 // loop_header_branch
    %12 = sbr.rel (%p10) target = $region8
  $region5: #{_lambda_.27} parent=0 // loop_body
    %s14 = ssub.s32 %s9, 1
    %s15 = ssub.s32 %s9, 2
    %s22 = sadd.s32 1, %s17
    %p23 = scmp.ge.s32.totalorder %s22, 1
    %s24 = scalar_select %p23, 0, %s22
    %s25 = sadd.s32 1, %s16
    %s26 = scalar_select %p23, %s25, %s16
    %p27 = scmp.ge.s32.totalorder %s26, 2
    %s28 = scalar_select %p27, 0, %s26
    %s29 = ssub.s32 %s16, %s28
    %s30 = ssub.s32 %s17, %s24
    %s31 = sor.u32 %s29, %s30
    %p32 = scmp.eq.s32.totalorder %s31, 0
    %s34 = sadd.s32 %s33, 1
    %s35 = scalar_select %p32, %s33, %s34
    %p38 = pneg %p32
    %p39 = scmp.eq.s32.totalorder %s9, 1
    %p40 = por %p38, %p39
    %p41 = scmp.ne.s32.totalorder %s33, %s36
    %p42 = scmp.eq.s32.totalorder %s9, 0
    %p43 = por %p41, %p42
    %p44 = scmp.ne.s32.totalorder %s33, %s36
    %p45 = scmp.eq.s32.totalorder %s14, 1
    %p46 = por %p44, %p45
    %p47 = scmp.ne.s32.totalorder %s36, %s37
    %p48 = scmp.eq.s32.totalorder %s14, 0
    %p49 = por %p47, %p48
    %p50 = scmp.ne.s32.totalorder %s36, %s37
    %p51 = scmp.eq.s32.totalorder %s15, 1
    %p52 = por %p50, %p51
    %p54 = scmp.ne.s32.totalorder %s37, %s53
    %p55 = scmp.eq.s32.totalorder %s15, 0
    %p56 = por %p54, %p55
    %s57 = ssub.s32 %s16, %s28
    %s58 = ssub.s32 %s17, %s24
    %s59 = sor.u32 %s57, %s58
    %p60 = scmp.eq.s32.totalorder %s59, 0
    %s62 = sadd.s32 %s61, 1
    %s63 = scalar_select %p60, %s61, %s62
    %p66 = pneg %p60
    %p67 = scmp.eq.s32.totalorder %s9, 1
    %p68 = por %p66, %p67
    %p69 = scmp.ne.s32.totalorder %s61, %s64
    %p70 = scmp.eq.s32.totalorder %s9, 0
    %p71 = por %p69, %p70
    %p72 = scmp.ne.s32.totalorder %s61, %s64
    %p73 = scmp.eq.s32.totalorder %s14, 1
    %p74 = por %p72, %p73
    %p75 = scmp.ne.s32.totalorder %s64, %s65
    %p76 = scmp.eq.s32.totalorder %s14, 0
    %p77 = por %p75, %p76
    %p78 = scmp.ne.s32.totalorder %s64, %s65
    %p79 = scmp.eq.s32.totalorder %s15, 1
    %p80 = por %p78, %p79
    %p82 = scmp.ne.s32.totalorder %s65, %s81
    %p83 = scmp.eq.s32.totalorder %s15, 0
    %p84 = por %p82, %p83
    %s85 = ssub.s32 %s16, %s28
    %s86 = ssub.s32 %s17, %s24
    %s87 = sor.u32 %s85, %s86
    %p88 = scmp.eq.s32.totalorder %s87, 0
    %s90 = sadd.s32 %s89, 1
    %s91 = scalar_select %p88, %s89, %s90
    %p94 = pneg %p88
    %p95 = scmp.eq.s32.totalorder %s9, 1
    %p96 = por %p94, %p95
    %p97 = scmp.ne.s32.totalorder %s89, %s92
    %p98 = scmp.eq.s32.totalorder %s9, 0
    %p99 = por %p97, %p98
    %p100 = scmp.ne.s32.totalorder %s89, %s92
    %p101 = scmp.eq.s32.totalorder %s14, 1
    %p102 = por %p100, %p101
    %p103 = scmp.ne.s32.totalorder %s92, %s93
    %p104 = scmp.eq.s32.totalorder %s14, 0
    %p105 = por %p103, %p104
    %p106 = scmp.ne.s32.totalorder %s92, %s93
    %p107 = scmp.eq.s32.totalorder %s15, 1
    %p108 = por %p106, %p107
    %p110 = scmp.ne.s32.totalorder %s93, %s109
    %p111 = scmp.eq.s32.totalorder %s15, 0
    %p112 = por %p110, %p111
    %s113 = ssub.s32 %s16, %s28
    %s114 = ssub.s32 %s17, %s24
    %s115 = sor.u32 %s113, %s114
    %p116 = scmp.eq.s32.totalorder %s115, 0
    %s118 = sadd.s32 %s117, 1
    %s119 = scalar_select %p116, %s117, %s118
    %p122 = pneg %p116
    %p123 = scmp.eq.s32.totalorder %s9, 1
    %p124 = por %p122, %p123
    %p125 = scmp.ne.s32.totalorder %s117, %s120
    %p126 = scmp.eq.s32.totalorder %s9, 0
    %p127 = por %p125, %p126
    %p128 = scmp.ne.s32.totalorder %s117, %s120
    %p129 = scmp.eq.s32.totalorder %s14, 1
    %p130 = por %p128, %p129
    %p131 = scmp.ne.s32.totalorder %s120, %s121
    %p132 = scmp.eq.s32.totalorder %s14, 0
    %p133 = por %p131, %p132
    %p134 = scmp.ne.s32.totalorder %s120, %s121
    %p135 = scmp.eq.s32.totalorder %s15, 1
    %p136 = por %p134, %p135
    %p138 = scmp.ne.s32.totalorder %s121, %s137
    %p139 = scmp.eq.s32.totalorder %s15, 0
    %p140 = por %p138, %p139
    %p141 = scmp.le.s32.totalorder 1, %s9
    %p142 = scmp.lt.s32.totalorder %s9, 3
    %p143 = pnand %p141, %p142
    %p144 = pneg %p143
    // Predicated region
    $region9: #{_lambda_.27} parent=5 // pred_check
      _
    $region10: #{_lambda_.27} parent=5 // pred_check_branch
      %146 = sbr.rel (%p143) target = $region12
    $region11: #{_lambda_.27} parent=5 // pred_region
      %s147 = ssub.s32 %s9, 1
    $region12: #{_lambda_.27} parent=5 // pred_fallthru
      _
    %p148 = scmp.lt.s32.totalorder %s9, 2
    // Predicated region
    $region13: #{_lambda_.27} parent=5 // pred_check
      %p149 = pneg %p148
    $region14: #{_lambda_.27} parent=5 // pred_check_branch
      %151 = sbr.rel (%p149) target = $region16
    $region15: #{_lambda_.27} parent=5 // pred_region
      // Predicated region
      $region17: #{_lambda_.27} parent=15 // pred_check
        %p152 = pneg %p43
      $region18: #{_lambda_.27} parent=15 // pred_check_branch
        %154 = sbr.rel (%p152) target = $region20
      $region19: #{_lambda_.27} parent=15 // pred_region
        %p155 = scmp.lt.s32.totalorder %s16, 1
        %s156 = scalar_select %p155, %s16, 1
        %p157 = scmp.lt.s32.totalorder %s17, 0
        %s158 = scalar_select %p157, %s17, 0
        %s159 = smul.addr %s156, 4
        %s160 = sadd.s32 %s158, %s159
        %s161 = smul.addr %s160, 8
        %s162 = scalar_lea.vmem %s0, %s161
      $region20: #{_lambda_.27} parent=15 // pred_fallthru
        _
      // Predicated region
      $region21: #{_lambda_.27} parent=15 // pred_check
        %p163 = pneg %p71
      $region22: #{_lambda_.27} parent=15 // pred_check_branch
        %165 = sbr.rel (%p163) target = $region24
      $region23: #{_lambda_.27} parent=15 // pred_region
        %p166 = scmp.lt.s32.totalorder %s16, 1
        %s167 = scalar_select %p166, %s16, 1
        %p168 = scmp.lt.s32.totalorder %s17, 0
        %s169 = scalar_select %p168, %s17, 0
        %s170 = smul.addr %s167, 4
        %s171 = sadd.s32 %s169, %s170
        %s172 = smul.addr %s171, 8
        %s173 = scalar_lea.vmem %s1, %s172
      $region24: #{_lambda_.27} parent=15 // pred_fallthru
        _
      // Predicated region
      $region25: #{_lambda_.27} parent=15 // pred_check
        %p174 = pneg %p99
      $region26: #{_lambda_.27} parent=15 // pred_check_branch
        %176 = sbr.rel (%p174) target = $region28
      $region27: #{_lambda_.27} parent=15 // pred_region
        %p177 = scmp.lt.s32.totalorder %s16, 1
        %s178 = scalar_select %p177, %s16, 1
        %p179 = scmp.lt.s32.totalorder %s17, 0
        %s180 = scalar_select %p179, %s17, 0
        %s181 = smul.addr %s178, 4
        %s182 = sadd.s32 %s180, %s181
        %s183 = smul.addr %s182, 8
        %s184 = scalar_lea.vmem %s2, %s183
      $region28: #{_lambda_.27} parent=15 // pred_fallthru
        _
    $region16: #{_lambda_.27} parent=5 // pred_fallthru
      _
    %p185 = scmp.le.s32.totalorder 1, %s9
    %p186 = scmp.lt.s32.totalorder %s9, 3
    %p187 = pnand %p185, %p186
    %p188 = pneg %p187
    // Predicated region
    $region29: #{_lambda_.27} parent=5 // pred_check
      _
    $region30: #{_lambda_.27} parent=5 // pred_check_branch
      %190 = sbr.rel (%p187) target = $region32
    $region31: #{_lambda_.27} parent=5 // pred_region
      %s191 = ssub.s32 %s9, 1
      %p192 = scmp.lt.s32.totalorder %s18, 1
      %s193 = scalar_select %p192, %s18, 1
      %p194 = scmp.lt.s32.totalorder %s19, 0
      %s195 = scalar_select %p194, %s19, 0
      %s196 = smul.addr %s193, 4
      %s197 = sadd.s32 %s195, %s196
      %s198 = smul.addr %s197, 8
      %s199 = scalar_lea.vmem %s0, %s198
      %p200 = pneg %p49
      %p201 = pneg %p46
      %p202 = scmp.lt.s32.totalorder %s18, 1
      %s203 = scalar_select %p202, %s18, 1
      %p204 = scmp.lt.s32.totalorder %s19, 0
      %s205 = scalar_select %p204, %s19, 0
      %s206 = smul.addr %s203, 4
      %s207 = sadd.s32 %s205, %s206
      %s208 = smul.addr %s207, 8
      %s209 = scalar_lea.vmem %s1, %s208
      %p210 = pneg %p77
      %p211 = pneg %p74
      %p212 = scmp.lt.s32.totalorder %s18, 1
      %s213 = scalar_select %p212, %s18, 1
      %p214 = scmp.lt.s32.totalorder %s19, 0
      %s215 = scalar_select %p214, %s19, 0
      %s216 = smul.addr %s213, 4
      %s217 = sadd.s32 %s215, %s216
      %s218 = smul.addr %s217, 8
      %s219 = scalar_lea.vmem %s2, %s218
      %p220 = pneg %p105
      %p221 = pneg %p102
      %p222 = pneg %p133
      %p223 = pneg %p130
      %p224 = scmp.lt.s32.totalorder %s18, 1
      %s225 = scalar_select %p224, %s18, 1
      %p226 = scmp.lt.s32.totalorder %s19, 0
      %s227 = scalar_select %p226, %s19, 0
      %s228 = smul.addr %s225, 4
      %s229 = sadd.s32 %s227, %s228
      %s230 = smul.addr %s229, 8
      %s231 = scalar_lea.vmem %s3, %s230
      %p232 = scmp.lt.s32.totalorder %s18, 1
      %s233 = scalar_select %p232, %s18, 1
      %p234 = scmp.lt.s32.totalorder %s19, 0
      %s235 = scalar_select %p234, %s19, 0
      %s236 = smul.addr %s233, 4
      %s237 = sadd.s32 %s235, %s236
      %s238 = smul.addr %s237, 8
      %s239 = scalar_lea.vmem %s0, %s238
      %p240 = scmp.lt.s32.totalorder %s18, 1
      %s241 = scalar_select %p240, %s18, 1
      %p242 = scmp.lt.s32.totalorder %s19, 0
      %s243 = scalar_select %p242, %s19, 0
      %s244 = smul.addr %s241, 4
      %s245 = sadd.s32 %s243, %s244
      %s246 = smul.addr %s245, 8
      %s247 = scalar_lea.vmem %s1, %s246
      %p248 = scmp.lt.s32.totalorder %s18, 1
      %s249 = scalar_select %p248, %s18, 1
      %p250 = scmp.lt.s32.totalorder %s19, 0
      %s251 = scalar_select %p250, %s19, 0
      %s252 = smul.addr %s249, 4
      %s253 = sadd.s32 %s251, %s252
      %s254 = smul.addr %s253, 8
      %s255 = scalar_lea.vmem %s2, %s254
      %p256 = scmp.lt.s32.totalorder %s18, 1
      %s257 = scalar_select %p256, %s18, 1
      %p258 = scmp.lt.s32.totalorder %s19, 0
      %s259 = scalar_select %p258, %s19, 0
      %s260 = smul.addr %s257, 4
      %s261 = sadd.s32 %s259, %s260
      %s262 = smul.addr %s261, 8
      %s263 = scalar_lea.vmem %s3, %s262
      %v265 = vld [vmem:[%s239] sm:$0xff]
      %v266 = vld [vmem:[%s239 + $0x8] sm:$0xff]
      %v267 = vld [vmem:[%s239 + $0x10] sm:$0xff]
      %v268 = vld [vmem:[%s239 + $0x18] sm:$0x1]
      %v269 = vmul.f32 %v265, 0.35355338
      %v270 = vmul.f32 %v266, 0.35355338
      %v271 = vmul.f32 %v267, 0.35355338
      %v272 = vmul.f32 %v268, 0.35355338
      %v273 = vld [vmem:[%s247] sm:$0xff]
      %v274 = vld [vmem:[%s247 + $0x8] sm:$0xff]
      %v275 = vld [vmem:[%s247 + $0x10] sm:$0xff]
      %v276 = vld [vmem:[%s247 + $0x18] sm:$0x1]
      %v277 = vld [vmem:[%s255] sm:$0xff]
      %v278 = vld [vmem:[%s255 + $0x8] sm:$0xff]
      %v279 = vld [vmem:[%s255 + $0x10] sm:$0xff]
      %v280 = vld [vmem:[%s255 + $0x18] sm:$0x1]
      %v281 = vpack.c.bf16 %v270, %v269
      %v282 = vpack.c.bf16 %v272, %v271
      %v283 = vpack.c.bf16 %v274, %v273
      %v284 = vpack.c.bf16 %v276, %v275
      %v285 = vpack.c.bf16 %v278, %v277
      %v286 = vpack.c.bf16 %v280, %v279
      %vm287 = vcmask 64512
      %v289 = vsel %vm287, %v281, 0
      %v292 = vsel %vm287, %v282, 0
      %v295 = vsel %vm287, %v283, 0
      %v298 = vsel %vm287, %v284, 0
      %300 = vmatprep.subr.bf16.mxu0 0
      %301 = vmatpush1.bf16.xpose.msra.mxu0 0
      %302 = vmatprep.subr.bf16.mxu0 0
      %303 = vmatpush1.bf16.xpose.msra.mxu0 0
      %304 = vmatprep.subr.bf16.mxu0 0
      %305 = vmatpush1.bf16.xpose.msra.mxu0 0
      %306 = vmatprep.subr.bf16.mxu0 0
      %307 = vmatpush1.bf16.xpose.msra.mxu0 0
      %308 = vmatprep.subr.bf16.mxu0 0
      %309 = vmatpush1.bf16.xpose.msra.mxu0 0
      %310 = vmatprep.subr.bf16.mxu0 0
      %311 = vmatpush1.bf16.xpose.msra.mxu0 0
      %312 = vmatprep.subr.bf16.mxu0 0
      %313 = vmatpush1.bf16.xpose.msra.mxu0 %v298
      %314 = vmatprep.subr.bf16.mxu0 0
      %315 = vmatpush1.bf16.xpose.msra.mxu0 %v295
      %316 = vmatprep.subr.bf16.mxu0 0
      %317 = vmatpush2.bf16.xpose.msra.mxu0 0
      %318 = vmatprep.subr.bf16.mxu0 0
      %319 = vmatpush2.bf16.xpose.msra.mxu0 0
      %320 = vmatprep.subr.bf16.mxu0 0
      %321 = vmatpush2.bf16.xpose.msra.mxu0 0
      %322 = vmatprep.subr.bf16.mxu0 0
      %323 = vmatpush2.bf16.xpose.msra.mxu0 0
      %324 = vmatprep.subr.bf16.mxu0 0
      %325 = vmatpush2.bf16.xpose.msra.mxu0 0
      %326 = vmatprep.subr.bf16.mxu0 0
      %327 = vmatpush2.bf16.xpose.msra.mxu0 0
      %328 = vmatprep.subr.bf16.mxu0 0
      %329 = vmatpush2.bf16.xpose.msra.mxu0 0
      %330 = vmatprep.subr.bf16.mxu0 0
      %331 = vmatpush2.bf16.xpose.msra.mxu0 0
      %332 = vmatprep.mubr.bf16.mxu0 0
      %333 = vmatmul.mubr.bf16.gmra.mxu0 %v289
      %v334 = vpop.f32.mrf.mxu0
      %v335 = vadd.f32 0.0, %v334
      %v336 = vpop.f32.mrf.mxu0
      %v337 = vpop.f32.mrf.mxu0
      %v338 = vadd.f32 0.0, %v337
      %v339 = vpop.f32.mrf.mxu0
      %340 = vmatprep.mubr.bf16.mxu0 0
      %341 = vmatmul.mubr.bf16.gmra.mxu0 %v292
      %v342 = vpop.f32.mrf.mxu0
      %v343 = vadd.f32 0.0, %v342
      %v344 = vpop.f32.mrf.mxu0
      %v345 = vpop.f32.mrf.mxu0
      %v346 = vadd.f32 0.0, %v345
      %v347 = vpop.f32.mrf.mxu0
      %348 = vdwg.mxu0
      %vm349 = vcmask 203776
      %v350 = vsel %vm349, %v335, -inf
      %351 = vmax.xlane.f32.xlu0 %v350
      %v352 = vpop.xlane.xlu0 %351
      %v353 = vsel %vm349, %v338, -inf
      %354 = vmax.xlane.f32.xlu0 %v353
      %v355 = vpop.xlane.xlu0 %354
      %v356 = vsel %vm349, %v343, -inf
      %357 = vmax.xlane.f32.xlu0 %v356
      %v358 = vpop.xlane.xlu0 %357
      %vm359 = vcmask 196608
      %v360 = vsel %vm359, %v346, -inf
      %361 = vmax.xlane.f32.xlu0 %v360
      %v362 = vpop.xlane.xlu0 %361
      %v363 = vsub.f32 %v335, %v352
      %v364 = vsub.f32 %v338, %v355
      %v365 = vsub.f32 %v343, %v358
      %v366 = vsub.f32 %v346, %v362
      %v367 = vmul.f32 %v363, 1.442695
      %v368 = vpow.pop %v367
      %v369 = vmul.f32 %v364, 1.442695
      %v370 = vpow.pop %v369
      %v371 = vmul.f32 %v365, 1.442695
      %v372 = vpow.pop %v371
      %v373 = vmul.f32 %v366, 1.442695
      %v374 = vpow.pop %v373
      %v375 = vsel %vm349, %v368, 0.0
      %376 = vadd.xlane.f32.xlu0 %v375
      %v377 = vpop.xlane.xlu0 %376
      %v378 = vsel %vm349, %v370, 0.0
      %379 = vadd.xlane.f32.xlu0 %v378
      %v380 = vpop.xlane.xlu0 %379
      %v381 = vsel %vm349, %v372, 0.0
      %382 = vadd.xlane.f32.xlu0 %v381
      %v383 = vpop.xlane.xlu0 %382
      %v384 = vsel %vm359, %v374, 0.0
      %385 = vadd.xlane.f32.xlu0 %v384
      %v386 = vpop.xlane.xlu0 %385
      %v387 = vrcp.pop %v377
      %v388 = vrcp.pop %v380
      %v389 = vrcp.pop %v383
      %v390 = vrcp.pop %v386
      %v391 = vmul.f32 %v368, %v387
      %v392 = vmul.f32 %v370, %v388
      %v393 = vmul.f32 %v372, %v389
      %v394 = vmul.f32 %v374, %v390
      %v395 = vpack.c.bf16 %v392, %v391
      %v396 = vpack.c.bf16 %v394, %v393
      %v398 = vsel %vm349, %v395, 0
      %v401 = vsel %vm349, %v396, 0
      %vm403 = vcmask 1043456
      %vm404 = vcmask 1044480
      %v405 = vsel %vm403, 4294967295, 65535
      %v406 = vsel %vm404, %v405, 0
      %v408 = vand.u32 %v286, %v406
      %410 = vmatprep.subr.bf16.mxu0 0
      %411 = vmatpush1.bf16.msra.mxu0 0
      %412 = vmatprep.subr.bf16.mxu0 0
      %413 = vmatpush1.bf16.msra.mxu0 0
      %414 = vmatprep.subr.bf16.mxu0 0
      %415 = vmatpush1.bf16.msra.mxu0 0
      %416 = vmatprep.subr.bf16.mxu0 0
      %417 = vmatpush1.bf16.msra.mxu0 0
      %418 = vmatprep.subr.bf16.mxu0 0
      %419 = vmatpush1.bf16.msra.mxu0 0
      %420 = vmatprep.subr.bf16.mxu0 0
      %421 = vmatpush1.bf16.msra.mxu0 0
      %422 = vmatprep.subr.bf16.mxu0 0
      %423 = vmatpush1.bf16.msra.mxu0 %v408
      %424 = vmatprep.subr.bf16.mxu0 0
      %425 = vmatpush1.bf16.msra.mxu0 %v285
      %426 = vmatprep.subr.bf16.mxu0 0
      %427 = vmatpush2.bf16.msra.mxu0 0
      %428 = vmatprep.subr.bf16.mxu0 0
      %429 = vmatpush2.bf16.msra.mxu0 0
      %430 = vmatprep.subr.bf16.mxu0 0
      %431 = vmatpush2.bf16.msra.mxu0 0
      %432 = vmatprep.subr.bf16.mxu0 0
      %433 = vmatpush2.bf16.msra.mxu0 0
      %434 = vmatprep.subr.bf16.mxu0 0
      %435 = vmatpush2.bf16.msra.mxu0 0
      %436 = vmatprep.subr.bf16.mxu0 0
      %437 = vmatpush2.bf16.msra.mxu0 0
      %438 = vmatprep.subr.bf16.mxu0 0
      %439 = vmatpush2.bf16.msra.mxu0 0
      %440 = vmatprep.subr.bf16.mxu0 0
      %441 = vmatpush2.bf16.msra.mxu0 0
      %442 = vmatprep.mubr.bf16.mxu0 0
      %443 = vmatmul.mubr.bf16.gmra.mxu0 %v398
      %v444 = vpop.f32.mrf.mxu0
      %v445 = vadd.f32 0.0, %v444
      %v446 = vpop.f32.mrf.mxu0
      %v447 = vpop.f32.mrf.mxu0
      %v448 = vadd.f32 0.0, %v447
      %v449 = vpop.f32.mrf.mxu0
      %450 = vmatprep.mubr.bf16.mxu0 0
      %451 = vmatmul.mubr.bf16.gmra.mxu0 %v401
      %v452 = vpop.f32.mrf.mxu0
      %v453 = vadd.f32 0.0, %v452
      %v454 = vpop.f32.mrf.mxu0
      %v455 = vpop.f32.mrf.mxu0
      %v456 = vadd.f32 0.0, %v455
      %v457 = vpop.f32.mrf.mxu0
      %458 = vdwg.mxu0
      %461 = vrot.lane.b32.xlu0 %v281, 120
      %v462 = vpop.permute.xlu0 %461
      %463 = vrot.lane.b32.xlu0 %v282, 120
      %v464 = vpop.permute.xlu0 %463
      %467 = vrot.lane.b32.xlu0 %v283, 120
      %v468 = vpop.permute.xlu0 %467
      %469 = vrot.lane.b32.xlu0 %v284, 120
      %v470 = vpop.permute.xlu0 %469
      %v472 = vsel %vm287, %v462, 0
      %v475 = vsel %vm287, %v464, 0
      %v478 = vsel %vm287, %v468, 0
      %v481 = vsel %vm287, %v470, 0
      %483 = vmatprep.subr.bf16.mxu0 0
      %484 = vmatpush1.bf16.xpose.msra.mxu0 0
      %485 = vmatprep.subr.bf16.mxu0 0
      %486 = vmatpush1.bf16.xpose.msra.mxu0 0
      %487 = vmatprep.subr.bf16.mxu0 0
      %488 = vmatpush1.bf16.xpose.msra.mxu0 0
      %489 = vmatprep.subr.bf16.mxu0 0
      %490 = vmatpush1.bf16.xpose.msra.mxu0 0
      %491 = vmatprep.subr.bf16.mxu0 0
      %492 = vmatpush1.bf16.xpose.msra.mxu0 0
      %493 = vmatprep.subr.bf16.mxu0 0
      %494 = vmatpush1.bf16.xpose.msra.mxu0 0
      %495 = vmatprep.subr.bf16.mxu0 0
      %496 = vmatpush1.bf16.xpose.msra.mxu0 %v481
      %497 = vmatprep.subr.bf16.mxu0 0
      %498 = vmatpush1.bf16.xpose.msra.mxu0 %v478
      %499 = vmatprep.subr.bf16.mxu0 0
      %500 = vmatpush2.bf16.xpose.msra.mxu0 0
      %501 = vmatprep.subr.bf16.mxu0 0
      %502 = vmatpush2.bf16.xpose.msra.mxu0 0
      %503 = vmatprep.subr.bf16.mxu0 0
      %504 = vmatpush2.bf16.xpose.msra.mxu0 0
      %505 = vmatprep.subr.bf16.mxu0 0
      %506 = vmatpush2.bf16.xpose.msra.mxu0 0
      %507 = vmatprep.subr.bf16.mxu0 0
      %508 = vmatpush2.bf16.xpose.msra.mxu0 0
      %509 = vmatprep.subr.bf16.mxu0 0
      %510 = vmatpush2.bf16.xpose.msra.mxu0 0
      %511 = vmatprep.subr.bf16.mxu0 0
      %512 = vmatpush2.bf16.xpose.msra.mxu0 0
      %513 = vmatprep.subr.bf16.mxu0 0
      %514 = vmatpush2.bf16.xpose.msra.mxu0 0
      %515 = vmatprep.mubr.bf16.mxu0 0
      %516 = vmatmul.mubr.bf16.gmra.mxu0 %v472
      %v517 = vpop.f32.mrf.mxu0
      %v518 = vadd.f32 0.0, %v517
      %v519 = vpop.f32.mrf.mxu0
      %v520 = vpop.f32.mrf.mxu0
      %v521 = vadd.f32 0.0, %v520
      %v522 = vpop.f32.mrf.mxu0
      %523 = vmatprep.mubr.bf16.mxu0 0
      %524 = vmatmul.mubr.bf16.gmra.mxu0 %v475
      %v525 = vpop.f32.mrf.mxu0
      %v526 = vadd.f32 0.0, %v525
      %v527 = vpop.f32.mrf.mxu0
      %v528 = vpop.f32.mrf.mxu0
      %v529 = vadd.f32 0.0, %v528
      %v530 = vpop.f32.mrf.mxu0
      %531 = vdwg.mxu0
      %v532 = vsel %vm349, %v518, -inf
      %533 = vmax.xlane.f32.xlu0 %v532
      %v534 = vpop.xlane.xlu0 %533
      %v535 = vsel %vm349, %v521, -inf
      %536 = vmax.xlane.f32.xlu0 %v535
      %v537 = vpop.xlane.xlu0 %536
      %v538 = vsel %vm349, %v526, -inf
      %539 = vmax.xlane.f32.xlu0 %v538
      %v540 = vpop.xlane.xlu0 %539
      %v541 = vsel %vm359, %v529, -inf
      %542 = vmax.xlane.f32.xlu0 %v541
      %v543 = vpop.xlane.xlu0 %542
      %v544 = vsub.f32 %v518, %v534
      %v545 = vsub.f32 %v521, %v537
      %v546 = vsub.f32 %v526, %v540
      %v547 = vsub.f32 %v529, %v543
      %v548 = vmul.f32 %v544, 1.442695
      %v549 = vpow.pop %v548
      %v550 = vmul.f32 %v545, 1.442695
      %v551 = vpow.pop %v550
      %v552 = vmul.f32 %v546, 1.442695
      %v553 = vpow.pop %v552
      %v554 = vmul.f32 %v547, 1.442695
      %v555 = vpow.pop %v554
      %v556 = vsel %vm349, %v549, 0.0
      %557 = vadd.xlane.f32.xlu0 %v556
      %v558 = vpop.xlane.xlu0 %557
      %v559 = vsel %vm349, %v551, 0.0
      %560 = vadd.xlane.f32.xlu0 %v559
      %v561 = vpop.xlane.xlu0 %560
      %v562 = vsel %vm349, %v553, 0.0
      %563 = vadd.xlane.f32.xlu0 %v562
      %v564 = vpop.xlane.xlu0 %563
      %v565 = vsel %vm359, %v555, 0.0
      %566 = vadd.xlane.f32.xlu0 %v565
      %v567 = vpop.xlane.xlu0 %566
      %v568 = vrcp.pop %v558
      %v569 = vrcp.pop %v561
      %v570 = vrcp.pop %v564
      %v571 = vrcp.pop %v567
      %v572 = vmul.f32 %v549, %v568
      %v573 = vmul.f32 %v551, %v569
      %v574 = vmul.f32 %v553, %v570
      %v575 = vmul.f32 %v555, %v571
      %v576 = vpack.c.bf16 %v573, %v572
      %v577 = vpack.c.bf16 %v575, %v574
      %580 = vrot.lane.b32.xlu0 %v285, 120
      %v581 = vpop.permute.xlu0 %580
      %582 = vrot.lane.b32.xlu0 %v286, 120
      %v583 = vpop.permute.xlu0 %582
      %v586 = vsel %vm349, %v576, 0
      %v589 = vsel %vm349, %v577, 0
      %v592 = vand.u32 %v583, %v406
      %594 = vmatprep.subr.bf16.mxu0 0
      %595 = vmatpush1.bf16.msra.mxu0 0
      %596 = vmatprep.subr.bf16.mxu0 0
      %597 = vmatpush1.bf16.msra.mxu0 0
      %598 = vmatprep.subr.bf16.mxu0 0
      %599 = vmatpush1.bf16.msra.mxu0 0
      %600 = vmatprep.subr.bf16.mxu0 0
      %601 = vmatpush1.bf16.msra.mxu0 0
      %602 = vmatprep.subr.bf16.mxu0 0
      %603 = vmatpush1.bf16.msra.mxu0 0
      %604 = vmatprep.subr.bf16.mxu0 0
      %605 = vmatpush1.bf16.msra.mxu0 0
      %606 = vmatprep.subr.bf16.mxu0 0
      %607 = vmatpush1.bf16.msra.mxu0 %v592
      %608 = vmatprep.subr.bf16.mxu0 0
      %609 = vmatpush1.bf16.msra.mxu0 %v581
      %610 = vmatprep.subr.bf16.mxu0 0
      %611 = vmatpush2.bf16.msra.mxu0 0
      %612 = vmatprep.subr.bf16.mxu0 0
      %613 = vmatpush2.bf16.msra.mxu0 0
      %614 = vmatprep.subr.bf16.mxu0 0
      %615 = vmatpush2.bf16.msra.mxu0 0
      %616 = vmatprep.subr.bf16.mxu0 0
      %617 = vmatpush2.bf16.msra.mxu0 0
      %618 = vmatprep.subr.bf16.mxu0 0
      %619 = vmatpush2.bf16.msra.mxu0 0
      %620 = vmatprep.subr.bf16.mxu0 0
      %621 = vmatpush2.bf16.msra.mxu0 0
      %622 = vmatprep.subr.bf16.mxu0 0
      %623 = vmatpush2.bf16.msra.mxu0 0
      %624 = vmatprep.subr.bf16.mxu0 0
      %625 = vmatpush2.bf16.msra.mxu0 0
      %626 = vmatprep.mubr.bf16.mxu0 0
      %627 = vmatmul.mubr.bf16.gmra.mxu0 %v586
      %v628 = vpop.f32.mrf.mxu0
      %v629 = vadd.f32 0.0, %v628
      %v630 = vpop.f32.mrf.mxu0
      %v631 = vpop.f32.mrf.mxu0
      %v632 = vadd.f32 0.0, %v631
      %v633 = vpop.f32.mrf.mxu0
      %634 = vmatprep.mubr.bf16.mxu0 0
      %635 = vmatmul.mubr.bf16.gmra.mxu0 %v589
      %v636 = vpop.f32.mrf.mxu0
      %v637 = vadd.f32 0.0, %v636
      %v638 = vpop.f32.mrf.mxu0
      %v639 = vpop.f32.mrf.mxu0
      %v640 = vadd.f32 0.0, %v639
      %v641 = vpop.f32.mrf.mxu0
      %642 = vdwg.mxu0
      %643 = vrot.lane.b32.xlu0 %v281, 112
      %v644 = vpop.permute.xlu0 %643
      %645 = vrot.lane.b32.xlu0 %v282, 112
      %v646 = vpop.permute.xlu0 %645
      %647 = vrot.lane.b32.xlu0 %v283, 112
      %v648 = vpop.permute.xlu0 %647
      %649 = vrot.lane.b32.xlu0 %v284, 112
      %v650 = vpop.permute.xlu0 %649
      %v652 = vsel %vm287, %v644, 0
      %v655 = vsel %vm287, %v646, 0
      %v658 = vsel %vm287, %v648, 0
      %v661 = vsel %vm287, %v650, 0
      %663 = vmatprep.subr.bf16.mxu0 0
      %664 = vmatpush1.bf16.xpose.msra.mxu0 0
      %665 = vmatprep.subr.bf16.mxu0 0
      %666 = vmatpush1.bf16.xpose.msra.mxu0 0
      %667 = vmatprep.subr.bf16.mxu0 0
      %668 = vmatpush1.bf16.xpose.msra.mxu0 0
      %669 = vmatprep.subr.bf16.mxu0 0
      %670 = vmatpush1.bf16.xpose.msra.mxu0 0
      %671 = vmatprep.subr.bf16.mxu0 0
      %672 = vmatpush1.bf16.xpose.msra.mxu0 0
      %673 = vmatprep.subr.bf16.mxu0 0
      %674 = vmatpush1.bf16.xpose.msra.mxu0 0
      %675 = vmatprep.subr.bf16.mxu0 0
      %676 = vmatpush1.bf16.xpose.msra.mxu0 %v661
      %677 = vmatprep.subr.bf16.mxu0 0
      %678 = vmatpush1.bf16.xpose.msra.mxu0 %v658
      %679 = vmatprep.subr.bf16.mxu0 0
      %680 = vmatpush2.bf16.xpose.msra.mxu0 0
      %681 = vmatprep.subr.bf16.mxu0 0
      %682 = vmatpush2.bf16.xpose.msra.mxu0 0
      %683 = vmatprep.subr.bf16.mxu0 0
      %684 = vmatpush2.bf16.xpose.msra.mxu0 0
      %685 = vmatprep.subr.bf16.mxu0 0
      %686 = vmatpush2.bf16.xpose.msra.mxu0 0
      %687 = vmatprep.subr.bf16.mxu0 0
      %688 = vmatpush2.bf16.xpose.msra.mxu0 0
      %689 = vmatprep.subr.bf16.mxu0 0
      %690 = vmatpush2.bf16.xpose.msra.mxu0 0
      %691 = vmatprep.subr.bf16.mxu0 0
      %692 = vmatpush2.bf16.xpose.msra.mxu0 0
      %693 = vmatprep.subr.bf16.mxu0 0
      %694 = vmatpush2.bf16.xpose.msra.mxu0 0
      %695 = vmatprep.mubr.bf16.mxu0 0
      %696 = vmatmul.mubr.bf16.gmra.mxu0 %v652
      %v697 = vpop.f32.mrf.mxu0
      %v698 = vadd.f32 0.0, %v697
      %v699 = vpop.f32.mrf.mxu0
      %v700 = vpop.f32.mrf.mxu0
      %v701 = vadd.f32 0.0, %v700
      %v702 = vpop.f32.mrf.mxu0
      %703 = vmatprep.mubr.bf16.mxu0 0
      %704 = vmatmul.mubr.bf16.gmra.mxu0 %v655
      %v705 = vpop.f32.mrf.mxu0
      %v706 = vadd.f32 0.0, %v705
      %v707 = vpop.f32.mrf.mxu0
      %v708 = vpop.f32.mrf.mxu0
      %v709 = vadd.f32 0.0, %v708
      %v710 = vpop.f32.mrf.mxu0
      %711 = vdwg.mxu0
      %v712 = vsel %vm349, %v698, -inf
      %713 = vmax.xlane.f32.xlu0 %v712
      %v714 = vpop.xlane.xlu0 %713
      %v715 = vsel %vm349, %v701, -inf
      %716 = vmax.xlane.f32.xlu0 %v715
      %v717 = vpop.xlane.xlu0 %716
      %v718 = vsel %vm349, %v706, -inf
      %719 = vmax.xlane.f32.xlu0 %v718
      %v720 = vpop.xlane.xlu0 %719
      %v721 = vsel %vm359, %v709, -inf
      %722 = vmax.xlane.f32.xlu0 %v721
      %v723 = vpop.xlane.xlu0 %722
      %v724 = vsub.f32 %v698, %v714
      %v725 = vsub.f32 %v701, %v717
      %v726 = vsub.f32 %v706, %v720
      %v727 = vsub.f32 %v709, %v723
      %v728 = vmul.f32 %v724, 1.442695
      %v729 = vpow.pop %v728
      %v730 = vmul.f32 %v725, 1.442695
      %v731 = vpow.pop %v730
      %v732 = vmul.f32 %v726, 1.442695
      %v733 = vpow.pop %v732
      %v734 = vmul.f32 %v727, 1.442695
      %v735 = vpow.pop %v734
      %v736 = vsel %vm349, %v729, 0.0
      %737 = vadd.xlane.f32.xlu0 %v736
      %v738 = vpop.xlane.xlu0 %737
      %v739 = vsel %vm349, %v731, 0.0
      %740 = vadd.xlane.f32.xlu0 %v739
      %v741 = vpop.xlane.xlu0 %740
      %v742 = vsel %vm349, %v733, 0.0
      %743 = vadd.xlane.f32.xlu0 %v742
      %v744 = vpop.xlane.xlu0 %743
      %v745 = vsel %vm359, %v735, 0.0
      %746 = vadd.xlane.f32.xlu0 %v745
      %v747 = vpop.xlane.xlu0 %746
      %v748 = vrcp.pop %v738
      %v749 = vrcp.pop %v741
      %v750 = vrcp.pop %v744
      %v751 = vrcp.pop %v747
      %v752 = vmul.f32 %v729, %v748
      %v753 = vmul.f32 %v731, %v749
      %v754 = vmul.f32 %v733, %v750
      %v755 = vmul.f32 %v735, %v751
      %v756 = vpack.c.bf16 %v753, %v752
      %v757 = vpack.c.bf16 %v755, %v754
      %758 = vrot.lane.b32.xlu0 %v285, 112
      %v759 = vpop.permute.xlu0 %758
      %760 = vrot.lane.b32.xlu0 %v286, 112
      %v761 = vpop.permute.xlu0 %760
      %v764 = vsel %vm349, %v756, 0
      %v767 = vsel %vm349, %v757, 0
      %v770 = vand.u32 %v761, %v406
      %772 = vmatprep.subr.bf16.mxu0 0
      %773 = vmatpush1.bf16.msra.mxu0 0
      %774 = vmatprep.subr.bf16.mxu0 0
      %775 = vmatpush1.bf16.msra.mxu0 0
      %776 = vmatprep.subr.bf16.mxu0 0
      %777 = vmatpush1.bf16.msra.mxu0 0
      %778 = vmatprep.subr.bf16.mxu0 0
      %779 = vmatpush1.bf16.msra.mxu0 0
      %780 = vmatprep.subr.bf16.mxu0 0
      %781 = vmatpush1.bf16.msra.mxu0 0
      %782 = vmatprep.subr.bf16.mxu0 0
      %783 = vmatpush1.bf16.msra.mxu0 0
      %784 = vmatprep.subr.bf16.mxu0 0
      %785 = vmatpush1.bf16.msra.mxu0 %v770
      %786 = vmatprep.subr.bf16.mxu0 0
      %787 = vmatpush1.bf16.msra.mxu0 %v759
      %788 = vmatprep.subr.bf16.mxu0 0
      %789 = vmatpush2.bf16.msra.mxu0 0
      %790 = vmatprep.subr.bf16.mxu0 0
      %791 = vmatpush2.bf16.msra.mxu0 0
      %792 = vmatprep.subr.bf16.mxu0 0
      %793 = vmatpush2.bf16.msra.mxu0 0
      %794 = vmatprep.subr.bf16.mxu0 0
      %795 = vmatpush2.bf16.msra.mxu0 0
      %796 = vmatprep.subr.bf16.mxu0 0
      %797 = vmatpush2.bf16.msra.mxu0 0
      %798 = vmatprep.subr.bf16.mxu0 0
      %799 = vmatpush2.bf16.msra.mxu0 0
      %800 = vmatprep.subr.bf16.mxu0 0
      %801 = vmatpush2.bf16.msra.mxu0 0
      %802 = vmatprep.subr.bf16.mxu0 0
      %803 = vmatpush2.bf16.msra.mxu0 0
      %804 = vmatprep.mubr.bf16.mxu0 0
      %805 = vmatmul.mubr.bf16.gmra.mxu0 %v764
      %v806 = vpop.f32.mrf.mxu0
      %v807 = vadd.f32 0.0, %v806
      %v808 = vpop.f32.mrf.mxu0
      %v809 = vpop.f32.mrf.mxu0
      %v810 = vadd.f32 0.0, %v809
      %v811 = vpop.f32.mrf.mxu0
      %812 = vmatprep.mubr.bf16.mxu0 0
      %813 = vmatmul.mubr.bf16.gmra.mxu0 %v767
      %v814 = vpop.f32.mrf.mxu0
      %v815 = vadd.f32 0.0, %v814
      %v816 = vpop.f32.mrf.mxu0
      %v817 = vpop.f32.mrf.mxu0
      %v818 = vadd.f32 0.0, %v817
      %v819 = vpop.f32.mrf.mxu0
      %820 = vdwg.mxu0
      %821 = vrot.lane.b32.xlu0 %v281, 104
      %v822 = vpop.permute.xlu0 %821
      %823 = vrot.lane.b32.xlu0 %v282, 104
      %v824 = vpop.permute.xlu0 %823
      %825 = vrot.lane.b32.xlu0 %v283, 104
      %v826 = vpop.permute.xlu0 %825
      %827 = vrot.lane.b32.xlu0 %v284, 104
      %v828 = vpop.permute.xlu0 %827
      %v830 = vsel %vm287, %v822, 0
      %v833 = vsel %vm287, %v824, 0
      %v836 = vsel %vm287, %v826, 0
      %v839 = vsel %vm287, %v828, 0
      %841 = vmatprep.subr.bf16.mxu0 0
      %842 = vmatpush1.bf16.xpose.msra.mxu0 0
      %843 = vmatprep.subr.bf16.mxu0 0
      %844 = vmatpush1.bf16.xpose.msra.mxu0 0
      %845 = vmatprep.subr.bf16.mxu0 0
      %846 = vmatpush1.bf16.xpose.msra.mxu0 0
      %847 = vmatprep.subr.bf16.mxu0 0
      %848 = vmatpush1.bf16.xpose.msra.mxu0 0
      %849 = vmatprep.subr.bf16.mxu0 0
      %850 = vmatpush1.bf16.xpose.msra.mxu0 0
      %851 = vmatprep.subr.bf16.mxu0 0
      %852 = vmatpush1.bf16.xpose.msra.mxu0 0
      %853 = vmatprep.subr.bf16.mxu0 0
      %854 = vmatpush1.bf16.xpose.msra.mxu0 %v839
      %855 = vmatprep.subr.bf16.mxu0 0
      %856 = vmatpush1.bf16.xpose.msra.mxu0 %v836
      %857 = vmatprep.subr.bf16.mxu0 0
      %858 = vmatpush2.bf16.xpose.msra.mxu0 0
      %859 = vmatprep.subr.bf16.mxu0 0
      %860 = vmatpush2.bf16.xpose.msra.mxu0 0
      %861 = vmatprep.subr.bf16.mxu0 0
      %862 = vmatpush2.bf16.xpose.msra.mxu0 0
      %863 = vmatprep.subr.bf16.mxu0 0
      %864 = vmatpush2.bf16.xpose.msra.mxu0 0
      %865 = vmatprep.subr.bf16.mxu0 0
      %866 = vmatpush2.bf16.xpose.msra.mxu0 0
      %867 = vmatprep.subr.bf16.mxu0 0
      %868 = vmatpush2.bf16.xpose.msra.mxu0 0
      %869 = vmatprep.subr.bf16.mxu0 0
      %870 = vmatpush2.bf16.xpose.msra.mxu0 0
      %871 = vmatprep.subr.bf16.mxu0 0
      %872 = vmatpush2.bf16.xpose.msra.mxu0 0
      %873 = vmatprep.mubr.bf16.mxu0 0
      %874 = vmatmul.mubr.bf16.gmra.mxu0 %v830
      %v875 = vpop.f32.mrf.mxu0
      %v876 = vadd.f32 0.0, %v875
      %v877 = vpop.f32.mrf.mxu0
      %v878 = vpop.f32.mrf.mxu0
      %v879 = vadd.f32 0.0, %v878
      %v880 = vpop.f32.mrf.mxu0
      %881 = vmatprep.mubr.bf16.mxu0 0
      %882 = vmatmul.mubr.bf16.gmra.mxu0 %v833
      %v883 = vpop.f32.mrf.mxu0
      %v884 = vadd.f32 0.0, %v883
      %v885 = vpop.f32.mrf.mxu0
      %v886 = vpop.f32.mrf.mxu0
      %v887 = vadd.f32 0.0, %v886
      %v888 = vpop.f32.mrf.mxu0
      %889 = vdwg.mxu0
      %v890 = vsel %vm349, %v876, -inf
      %891 = vmax.xlane.f32.xlu0 %v890
      %v892 = vpop.xlane.xlu0 %891
      %v893 = vsel %vm349, %v879, -inf
      %894 = vmax.xlane.f32.xlu0 %v893
      %v895 = vpop.xlane.xlu0 %894
      %v896 = vsel %vm349, %v884, -inf
      %897 = vmax.xlane.f32.xlu0 %v896
      %v898 = vpop.xlane.xlu0 %897
      %v899 = vsel %vm359, %v887, -inf
      %900 = vmax.xlane.f32.xlu0 %v899
      %v901 = vpop.xlane.xlu0 %900
      %v902 = vsub.f32 %v876, %v892
      %v903 = vsub.f32 %v879, %v895
      %v904 = vsub.f32 %v884, %v898
      %v905 = vsub.f32 %v887, %v901
      %v906 = vmul.f32 %v902, 1.442695
      %v907 = vpow.pop %v906
      %v908 = vmul.f32 %v903, 1.442695
      %v909 = vpow.pop %v908
      %v910 = vmul.f32 %v904, 1.442695
      %v911 = vpow.pop %v910
      %v912 = vmul.f32 %v905, 1.442695
      %v913 = vpow.pop %v912
      %v914 = vsel %vm349, %v907, 0.0
      %915 = vadd.xlane.f32.xlu0 %v914
      %v916 = vpop.xlane.xlu0 %915
      %v917 = vsel %vm349, %v909, 0.0
      %918 = vadd.xlane.f32.xlu0 %v917
      %v919 = vpop.xlane.xlu0 %918
      %v920 = vsel %vm349, %v911, 0.0
      %921 = vadd.xlane.f32.xlu0 %v920
      %v922 = vpop.xlane.xlu0 %921
      %v923 = vsel %vm359, %v913, 0.0
      %924 = vadd.xlane.f32.xlu0 %v923
      %v925 = vpop.xlane.xlu0 %924
      %v926 = vrcp.pop %v916
      %v927 = vrcp.pop %v919
      %v928 = vrcp.pop %v922
      %v929 = vrcp.pop %v925
      %v930 = vmul.f32 %v907, %v926
      %v931 = vmul.f32 %v909, %v927
      %v932 = vmul.f32 %v911, %v928
      %v933 = vmul.f32 %v913, %v929
      %v934 = vpack.c.bf16 %v931, %v930
      %v935 = vpack.c.bf16 %v933, %v932
      %936 = vrot.lane.b32.xlu0 %v285, 104
      %v937 = vpop.permute.xlu0 %936
      %938 = vrot.lane.b32.xlu0 %v286, 104
      %v939 = vpop.permute.xlu0 %938
      %v942 = vsel %vm349, %v934, 0
      %v945 = vsel %vm349, %v935, 0
      %v948 = vand.u32 %v939, %v406
      %950 = vmatprep.subr.bf16.mxu0 0
      %951 = vmatpush1.bf16.msra.mxu0 0
      %952 = vmatprep.subr.bf16.mxu0 0
      %953 = vmatpush1.bf16.msra.mxu0 0
      %954 = vmatprep.subr.bf16.mxu0 0
      %955 = vmatpush1.bf16.msra.mxu0 0
      %956 = vmatprep.subr.bf16.mxu0 0
      %957 = vmatpush1.bf16.msra.mxu0 0
      %958 = vmatprep.subr.bf16.mxu0 0
      %959 = vmatpush1.bf16.msra.mxu0 0
      %960 = vmatprep.subr.bf16.mxu0 0
      %961 = vmatpush1.bf16.msra.mxu0 0
      %962 = vmatprep.subr.bf16.mxu0 0
      %963 = vmatpush1.bf16.msra.mxu0 %v948
      %964 = vmatprep.subr.bf16.mxu0 0
      %965 = vmatpush1.bf16.msra.mxu0 %v937
      %966 = vmatprep.subr.bf16.mxu0 0
      %967 = vmatpush2.bf16.msra.mxu0 0
      %968 = vmatprep.subr.bf16.mxu0 0
      %969 = vmatpush2.bf16.msra.mxu0 0
      %970 = vmatprep.subr.bf16.mxu0 0
      %971 = vmatpush2.bf16.msra.mxu0 0
      %972 = vmatprep.subr.bf16.mxu0 0
      %973 = vmatpush2.bf16.msra.mxu0 0
      %974 = vmatprep.subr.bf16.mxu0 0
      %975 = vmatpush2.bf16.msra.mxu0 0
      %976 = vmatprep.subr.bf16.mxu0 0
      %977 = vmatpush2.bf16.msra.mxu0 0
      %978 = vmatprep.subr.bf16.mxu0 0
      %979 = vmatpush2.bf16.msra.mxu0 0
      %980 = vmatprep.subr.bf16.mxu0 0
      %981 = vmatpush2.bf16.msra.mxu0 0
      %982 = vmatprep.mubr.bf16.mxu0 0
      %983 = vmatmul.mubr.bf16.gmra.mxu0 %v942
      %v984 = vpop.f32.mrf.mxu0
      %v985 = vadd.f32 0.0, %v984
      %v986 = vpop.f32.mrf.mxu0
      %v987 = vpop.f32.mrf.mxu0
      %v988 = vadd.f32 0.0, %v987
      %v989 = vpop.f32.mrf.mxu0
      %990 = vmatprep.mubr.bf16.mxu0 0
      %991 = vmatmul.mubr.bf16.gmra.mxu0 %v945
      %v992 = vpop.f32.mrf.mxu0
      %v993 = vadd.f32 0.0, %v992
      %v994 = vpop.f32.mrf.mxu0
      %v995 = vpop.f32.mrf.mxu0
      %v996 = vadd.f32 0.0, %v995
      %v997 = vpop.f32.mrf.mxu0
      %998 = vdwg.mxu0
      %1003 = vrot.lane.b32.xlu0 %v629, 8
      %v1004 = vpop.permute.xlu0 %1003
      %1005 = vrot.lane.b32.xlu0 %v632, 8
      %v1006 = vpop.permute.xlu0 %1005
      %1007 = vrot.lane.b32.xlu0 %v637, 8
      %v1008 = vpop.permute.xlu0 %1007
      %1009 = vrot.lane.b32.xlu0 %v640, 8
      %v1010 = vpop.permute.xlu0 %1009
      %1019 = vrot.lane.b32.xlu0 %v807, 16
      %v1020 = vpop.permute.xlu0 %1019
      %1021 = vrot.lane.b32.xlu0 %v810, 16
      %v1022 = vpop.permute.xlu0 %1021
      %1023 = vrot.lane.b32.xlu0 %v815, 16
      %v1024 = vpop.permute.xlu0 %1023
      %1025 = vrot.lane.b32.xlu0 %v818, 16
      %v1026 = vpop.permute.xlu0 %1025
      %1035 = vrot.lane.b32.xlu0 %v985, 24
      %v1036 = vpop.permute.xlu0 %1035
      %1037 = vrot.lane.b32.xlu0 %v988, 24
      %v1038 = vpop.permute.xlu0 %1037
      %1039 = vrot.lane.b32.xlu0 %v993, 24
      %v1040 = vpop.permute.xlu0 %1039
      %1041 = vrot.lane.b32.xlu0 %v996, 24
      %v1042 = vpop.permute.xlu0 %1041
      %v1047 = vsel %vm287, %v445, %v1004
      %v1048 = vsel %vm287, %v448, %v1006
      %v1049 = vsel %vm287, %v453, %v1008
      %v1050 = vsel %vm287, %v456, %v1010
      %vm1051 = vcmask 130048
      %v1052 = vsel %vm1051, %v1047, %v1020
      %v1053 = vsel %vm1051, %v1048, %v1022
      %v1054 = vsel %vm1051, %v1049, %v1024
      %v1055 = vsel %vm1051, %v1050, %v1026
      %vm1056 = vcmask 195584
      %v1057 = vsel %vm1056, %v1052, %v1036
      %v1058 = vsel %vm1056, %v1053, %v1038
      %v1059 = vsel %vm1056, %v1054, %v1040
      %v1060 = vsel %vm1056, %v1055, %v1042
      %vm1061 = vcmask 261120
      %1062 = vst.msk [vmem:[%s263] sm:$0xff] %vm1061, %v1057
      %1063 = vst.msk [vmem:[%s263 + $0x8] sm:$0xff] %vm1061, %v1058
      %1064 = vst.msk [vmem:[%s263 + $0x10] sm:$0xff] %vm1061, %v1059
      %vm1065 = vcmask 253952
      %1066 = vst.msk [vmem:[%s263 + $0x18] sm:$0x1] %vm1065, %v1060
      %p1067 = scmp.lt.s32.totalorder %s18, 1
      %s1068 = scalar_select %p1067, %s18, 1
      %p1069 = scmp.lt.s32.totalorder %s19, 0
      %s1070 = scalar_select %p1069, %s19, 0
      %s1071 = smul.addr %s1068, 4
      %s1072 = sadd.s32 %s1070, %s1071
      %s1073 = smul.addr %s1072, 8
      %s1074 = scalar_lea.vmem %s3, %s1073
      // Predicated region
      $region33: #{_lambda_.27} parent=31 // pred_check
        %p1075 = pneg %p130
      $region34: #{_lambda_.27} parent=31 // pred_check_branch
        %1077 = sbr.rel (%p1075) target = $region36
      $region35: #{_lambda_.27} parent=31 // pred_region
        _
      $region36: #{_lambda_.27} parent=31 // pred_fallthru
        _
    $region32: #{_lambda_.27} parent=5 // pred_fallthru
      _
    %p1078 = scmp.le.s32.totalorder 2, %s9
    // Predicated region
    $region37: #{_lambda_.27} parent=5 // pred_check
      %p1079 = pneg %p1078
    $region38: #{_lambda_.27} parent=5 // pred_check_branch
      %1081 = sbr.rel (%p1079) target = $region40
    $region39: #{_lambda_.27} parent=5 // pred_region
      %s1082 = ssub.s32 %s9, 2
      // Predicated region
      $region41: #{_lambda_.27} parent=39 // pred_check
        %p1083 = pneg %p136
      $region42: #{_lambda_.27} parent=39 // pred_check_branch
        %1085 = sbr.rel (%p1083) target = $region44
      $region43: #{_lambda_.27} parent=39 // pred_region
        %p1086 = scmp.lt.s32.totalorder %s20, 1
        %s1087 = scalar_select %p1086, %s20, 1
        %p1088 = scmp.lt.s32.totalorder %s21, 0
        %s1089 = scalar_select %p1088, %s21, 0
        %s1090 = smul.addr %s1087, 4
        %s1091 = sadd.s32 %s1089, %s1090
        %s1092 = smul.addr %s1091, 8
        %s1093 = scalar_lea.vmem %s3, %s1092
      $region44: #{_lambda_.27} parent=39 // pred_fallthru
        _
    $region40: #{_lambda_.27} parent=5 // pred_fallthru
      _
  $region6: #{_lambda_.27} parent=0 // loop_footer
    %s13 = sadd.s32 1, %s9
  $region7: #{_lambda_.27} parent=0 // loop_footer_branch
    %8 = sbr.rel target = $region3
  $region8: #{_lambda_.27} parent=0 // loop_exit
    _

// kernel: _lambda_.28
$region0: #{_lambda_.28}
  #allocation0 [shape = 'u32[]', space=smem, size = 0x4, offset = 0x4, fixed_abs, tag = 'smem constant byte address 0x4 - core index']
  #allocation1 [shape = 'u32[144,128]{1,0:T(1,128)}', space=vmem, size = 0x12000, scoped, tag = 'internal scratch']
  #allocation2 [shape = 'f32[56,128]{1,0:T(8,128)}', space=vmem, size = 0x7000, scoped, tag = 'scratch operand']
  %s0 = inlined_call_operand.vmem [shape: f32[56,128], index: 0, kind: input, shape index: {}]
  %s1 = inlined_call_operand.vmem [shape: f32[128,128], index: 1, kind: input, shape index: {}]
  %s2 = inlined_call_operand.vmem [shape: f32[1,128], index: 2, kind: input, shape index: {}]
  %s3 = inlined_call_operand.vmem [shape: f32[56,128], index: 3, kind: input, shape index: {}]
  %s4 = inlined_call_operand.vmem [shape: f32[56,128], index: 4, kind: output, shape index: {}]
  %s5 = sld [smem:[#allocation0]]
  $region34: #{_lambda_.28} parent=0
    _
  %s7 = ssub.s32 1, %s5
  %s8 = scalar_select 0, %s7, %s5
  // Predicated region
  $region2: #{_lambda_.28} parent=0 // pred_check
    _
  $region3: #{_lambda_.28} parent=0 // pred_check_branch
    %10 = sbr.rel (0) target = $region5
  $region4: #{_lambda_.28} parent=0 // pred_region
    _
  $region5: #{_lambda_.28} parent=0 // pred_fallthru
    _
  // Predicated region
  $region6: #{_lambda_.28} parent=0 // pred_check
    _
  $region7: #{_lambda_.28} parent=0 // pred_check_branch
    %12 = sbr.rel (0) target = $region9
  $region8: #{_lambda_.28} parent=0 // pred_region
    _
  $region9: #{_lambda_.28} parent=0 // pred_fallthru
    _
  // Predicated region
  $region10: #{_lambda_.28} parent=0 // pred_check
    _
  $region11: #{_lambda_.28} parent=0 // pred_check_branch
    %14 = sbr.rel (0) target = $region13
  $region12: #{_lambda_.28} parent=0 // pred_region
    _
  $region13: #{_lambda_.28} parent=0 // pred_fallthru
    _
  // Predicated region
  $region14: #{_lambda_.28} parent=0 // pred_check
    _
  $region15: #{_lambda_.28} parent=0 // pred_check_branch
    %16 = sbr.rel (0) target = $region17
  $region16: #{_lambda_.28} parent=0 // pred_region
    _
  $region17: #{_lambda_.28} parent=0 // pred_fallthru
    _
  %v18 = vld [vmem:[%s0] sm:$0xff]
  %v19 = vld [vmem:[%s0 + $0x8] sm:$0xff]
  %v20 = vld [vmem:[%s0 + $0x10] sm:$0xff]
  %v21 = vld [vmem:[%s0 + $0x18] sm:$0xff]
  %v22 = vld [vmem:[%s0 + $0x20] sm:$0xff]
  %v23 = vld [vmem:[%s0 + $0x28] sm:$0xff]
  %v24 = vld [vmem:[%s0 + $0x30] sm:$0xff]
  %v25 = vpack.c.bf16 %v19, %v18
  %v26 = vpack.c.bf16 %v21, %v20
  %v27 = vpack.c.bf16 %v23, %v22
  %v28 = vpack.c.bf16 %v24, %v24
  %v29 = vld [vmem:[%s1] sm:$0xff]
  %v30 = vld [vmem:[%s1 + $0x8] sm:$0xff]
  %v31 = vld [vmem:[%s1 + $0x10] sm:$0xff]
  %v32 = vld [vmem:[%s1 + $0x18] sm:$0xff]
  %v33 = vld [vmem:[%s1 + $0x20] sm:$0xff]
  %v34 = vld [vmem:[%s1 + $0x28] sm:$0xff]
  %v35 = vld [vmem:[%s1 + $0x30] sm:$0xff]
  %v36 = vld [vmem:[%s1 + $0x38] sm:$0xff]
  %v37 = vld [vmem:[%s1 + $0x40] sm:$0xff]
  %v38 = vld [vmem:[%s1 + $0x48] sm:$0xff]
  %v39 = vld [vmem:[%s1 + $0x50] sm:$0xff]
  %v40 = vld [vmem:[%s1 + $0x58] sm:$0xff]
  %v41 = vld [vmem:[%s1 + $0x60] sm:$0xff]
  %v42 = vld [vmem:[%s1 + $0x68] sm:$0xff]
  %v43 = vld [vmem:[%s1 + $0x70] sm:$0xff]
  %v44 = vld [vmem:[%s1 + $0x78] sm:$0xff]
  %v45 = vpack.c.bf16 %v30, %v29
  %v46 = vpack.c.bf16 %v32, %v31
  %v47 = vpack.c.bf16 %v34, %v33
  %v48 = vpack.c.bf16 %v36, %v35
  %v49 = vpack.c.bf16 %v38, %v37
  %v50 = vpack.c.bf16 %v40, %v39
  %v51 = vpack.c.bf16 %v42, %v41
  %v52 = vpack.c.bf16 %v44, %v43
  %p53 = scmp.eq.s32.totalorder 0, 0
  // Predicated region
  $region18: #{_lambda_.28} parent=0 // pred_check
    %p54 = pneg %p53
  $region19: #{_lambda_.28} parent=0 // pred_check_branch
    %56 = sbr.rel (%p54) target = $region21
  $region20: #{_lambda_.28} parent=0 // pred_region
    %57 = vst [vmem:[#allocation2] sm:$0xff] 0.0
    %58 = vst [vmem:[#allocation2 + $0x8] sm:$0xff] 0.0
    %59 = vst [vmem:[#allocation2 + $0x10] sm:$0xff] 0.0
    %60 = vst [vmem:[#allocation2 + $0x18] sm:$0xff] 0.0
    %61 = vst [vmem:[#allocation2 + $0x20] sm:$0xff] 0.0
    %62 = vst [vmem:[#allocation2 + $0x28] sm:$0xff] 0.0
    %63 = vst [vmem:[#allocation2 + $0x30] sm:$0xff] 0.0
  $region21: #{_lambda_.28} parent=0 // pred_fallthru
    _
  %v64 = vld [vmem:[#allocation2] sm:$0xff]
  %v65 = vld [vmem:[#allocation2 + $0x8] sm:$0xff]
  %v66 = vld [vmem:[#allocation2 + $0x10] sm:$0xff]
  %v67 = vld [vmem:[#allocation2 + $0x18] sm:$0xff]
  %v68 = vld [vmem:[#allocation2 + $0x20] sm:$0xff]
  %v69 = vld [vmem:[#allocation2 + $0x28] sm:$0xff]
  %v70 = vld [vmem:[#allocation2 + $0x30] sm:$0xff]
  %71 = vmatprep.subr.bf16.mxu0 0
  %72 = vmatpush1.bf16.msra.mxu0 %v52
  %73 = vmatprep.subr.bf16.mxu0 0
  %74 = vmatpush1.bf16.msra.mxu0 %v51
  %75 = vmatprep.subr.bf16.mxu0 0
  %76 = vmatpush1.bf16.msra.mxu0 %v50
  %77 = vmatprep.subr.bf16.mxu0 0
  %78 = vmatpush1.bf16.msra.mxu0 %v49
  %79 = vmatprep.subr.bf16.mxu0 0
  %80 = vmatpush1.bf16.msra.mxu0 %v48
  %81 = vmatprep.subr.bf16.mxu0 0
  %82 = vmatpush1.bf16.msra.mxu0 %v47
  %83 = vmatprep.subr.bf16.mxu0 0
  %84 = vmatpush1.bf16.msra.mxu0 %v46
  %85 = vmatprep.subr.bf16.mxu0 0
  %86 = vmatpush1.bf16.msra.mxu0 %v45
  %87 = vmatprep.subr.bf16.mxu0 0
  %88 = vmatpush2.bf16.msra.mxu0 0
  %89 = vmatprep.subr.bf16.mxu0 0
  %90 = vmatpush2.bf16.msra.mxu0 0
  %91 = vmatprep.subr.bf16.mxu0 0
  %92 = vmatpush2.bf16.msra.mxu0 0
  %93 = vmatprep.subr.bf16.mxu0 0
  %94 = vmatpush2.bf16.msra.mxu0 0
  %95 = vmatprep.subr.bf16.mxu0 0
  %96 = vmatpush2.bf16.msra.mxu0 0
  %97 = vmatprep.subr.bf16.mxu0 0
  %98 = vmatpush2.bf16.msra.mxu0 0
  %99 = vmatprep.subr.bf16.mxu0 0
  %100 = vmatpush2.bf16.msra.mxu0 0
  %101 = vmatprep.subr.bf16.mxu0 0
  %102 = vmatpush2.bf16.msra.mxu0 0
  %103 = vmatprep.mubr.bf16.mxu0 0
  %104 = vmatmul.mubr.bf16.gmra.mxu0 %v25
  %v105 = vpop.f32.mrf.mxu0
  %v106 = vadd.f32 0.0, %v105
  %v107 = vpop.f32.mrf.mxu0
  %v108 = vpop.f32.mrf.mxu0
  %v109 = vadd.f32 0.0, %v108
  %v110 = vpop.f32.mrf.mxu0
  %111 = vmatprep.mubr.bf16.mxu0 0
  %112 = vmatmul.mubr.bf16.gmra.mxu0 %v26
  %v113 = vpop.f32.mrf.mxu0
  %v114 = vadd.f32 0.0, %v113
  %v115 = vpop.f32.mrf.mxu0
  %v116 = vpop.f32.mrf.mxu0
  %v117 = vadd.f32 0.0, %v116
  %v118 = vpop.f32.mrf.mxu0
  %119 = vmatprep.mubr.bf16.mxu0 0
  %120 = vmatmul.mubr.bf16.gmra.mxu0 %v27
  %v121 = vpop.f32.mrf.mxu0
  %v122 = vadd.f32 0.0, %v121
  %v123 = vpop.f32.mrf.mxu0
  %v124 = vpop.f32.mrf.mxu0
  %v125 = vadd.f32 0.0, %v124
  %v126 = vpop.f32.mrf.mxu0
  %127 = vmatprep.mubr.bf16.mxu0 0
  %128 = vmatmul.mubr.bf16.gmra.mxu0 %v28
  %v129 = vpop.f32.mrf.mxu0
  %v130 = vadd.f32 0.0, %v129
  %v131 = vpop.f32.mrf.mxu0
  %v132 = vpop.f32.mrf.mxu0
  %v133 = vpop.f32.mrf.mxu0
  %134 = vdwg.mxu0
  %v135 = vadd.f32 %v64, %v106
  %v136 = vadd.f32 %v65, %v109
  %v137 = vadd.f32 %v66, %v114
  %v138 = vadd.f32 %v67, %v117
  %v139 = vadd.f32 %v68, %v122
  %v140 = vadd.f32 %v69, %v125
  %v141 = vadd.f32 %v70, %v130
  %142 = vst [vmem:[#allocation2] sm:$0xff] %v135
  %143 = vst [vmem:[#allocation2 + $0x8] sm:$0xff] %v136
  %144 = vst [vmem:[#allocation2 + $0x10] sm:$0xff] %v137
  %145 = vst [vmem:[#allocation2 + $0x18] sm:$0xff] %v138
  %146 = vst [vmem:[#allocation2 + $0x20] sm:$0xff] %v139
  %147 = vst [vmem:[#allocation2 + $0x28] sm:$0xff] %v140
  %148 = vst [vmem:[#allocation2 + $0x30] sm:$0xff] %v141
  // Predicated region
  $region22: #{_lambda_.28} parent=0 // pred_check
    %p149 = pneg %p53
  $region23: #{_lambda_.28} parent=0 // pred_check_branch
    %151 = sbr.rel (%p149) target = $region25
  $region24: #{_lambda_.28} parent=0 // pred_region
    %v152 = vld [vmem:[#allocation2] sm:$0xff]
    %v153 = vld [vmem:[#allocation2 + $0x8] sm:$0xff]
    %v154 = vld [vmem:[#allocation2 + $0x10] sm:$0xff]
    %v155 = vld [vmem:[#allocation2 + $0x18] sm:$0xff]
    %v156 = vld [vmem:[#allocation2 + $0x20] sm:$0xff]
    %v157 = vld [vmem:[#allocation2 + $0x28] sm:$0xff]
    %v158 = vld [vmem:[#allocation2 + $0x30] sm:$0xff]
    %v159 = vld [vmem:[%s2] sm:$0x1]
    %v161 = vlaneseq
    %v162 = vshrl.u32 %v161, 7
    %v163 = vsub.s32 0, %v162
    %v164 = vrot.slane %v159, %v163
    %v166 = vadd.f32 %v152, %v164
    %v167 = vadd.f32 %v153, %v164
    %v168 = vadd.f32 %v154, %v164
    %v169 = vadd.f32 %v155, %v164
    %v170 = vadd.f32 %v156, %v164
    %v171 = vadd.f32 %v157, %v164
    %v172 = vadd.f32 %v158, %v164
    %v173 = vld [vmem:[%s3] sm:$0xff]
    %v174 = vld [vmem:[%s3 + $0x8] sm:$0xff]
    %v175 = vld [vmem:[%s3 + $0x10] sm:$0xff]
    %v176 = vld [vmem:[%s3 + $0x18] sm:$0xff]
    %v177 = vld [vmem:[%s3 + $0x20] sm:$0xff]
    %v178 = vld [vmem:[%s3 + $0x28] sm:$0xff]
    %v179 = vld [vmem:[%s3 + $0x30] sm:$0xff]
    %v180 = vadd.f32 %v166, %v173
    %v181 = vadd.f32 %v167, %v174
    %v182 = vadd.f32 %v168, %v175
    %v183 = vadd.f32 %v169, %v176
    %v184 = vadd.f32 %v170, %v177
    %v185 = vadd.f32 %v171, %v178
    %v186 = vadd.f32 %v172, %v179
    %187 = vst [vmem:[%s4] sm:$0xff] %v180
    %188 = vst [vmem:[%s4 + $0x8] sm:$0xff] %v181
    %189 = vst [vmem:[%s4 + $0x10] sm:$0xff] %v182
    %190 = vst [vmem:[%s4 + $0x18] sm:$0xff] %v183
    %191 = vst [vmem:[%s4 + $0x20] sm:$0xff] %v184
    %192 = vst [vmem:[%s4 + $0x28] sm:$0xff] %v185
    %193 = vst [vmem:[%s4 + $0x30] sm:$0xff] %v186
  $region25: #{_lambda_.28} parent=0 // pred_fallthru
    _
  // Predicated region
  $region26: #{_lambda_.28} parent=0 // pred_check
    _
  $region27: #{_lambda_.28} parent=0 // pred_check_branch
    %195 = sbr.rel (0) target = $region29
  $region28: #{_lambda_.28} parent=0 // pred_region
    _
  $region29: #{_lambda_.28} parent=0 // pred_fallthru
    _
  // Predicated region
  $region30: #{_lambda_.28} parent=0 // pred_check
    _
  $region31: #{_lambda_.28} parent=0 // pred_check_branch
    %197 = sbr.rel (0) target = $region33
  $region32: #{_lambda_.28} parent=0 // pred_region
    _
  $region33: #{_lambda_.28} parent=0 // pred_fallthru
    _

// kernel: _lambda_.29
$region0: #{_lambda_.29}
  #allocation0 [shape = 'u32[]', space=smem, size = 0x4, offset = 0x4, fixed_abs, tag = 'smem constant byte address 0x4 - core index']
  #allocation1 [shape = 'u32[144,128]{1,0:T(1,128)}', space=vmem, size = 0x12000, scoped, tag = 'internal scratch']
  #allocation2 [shape = 'f32[56,128]{1,0:T(8,128)}', space=vmem, size = 0x7000, scoped, tag = 'scratch operand']
  %s0 = inlined_call_operand.vmem [shape: f32[56,32], index: 0, kind: input, shape index: {}]
  %s1 = inlined_call_operand.vmem [shape: f32[32,128], index: 1, kind: input, shape index: {}]
  %s2 = inlined_call_operand.vmem [shape: f32[1,128], index: 2, kind: input, shape index: {}]
  %s3 = inlined_call_operand.vmem [shape: f32[1,32], index: 3, kind: input, shape index: {}]
  %s4 = inlined_call_operand.vmem [shape: f32[1,32], index: 4, kind: input, shape index: {}]
  %s5 = inlined_call_operand.vmem [shape: f32[56,128], index: 5, kind: output, shape index: {}]
  %s6 = sld [smem:[#allocation0]]
  $region38: #{_lambda_.29} parent=0
    _
  %s8 = ssub.s32 1, %s6
  %s9 = scalar_select 0, %s8, %s6
  // Predicated region
  $region2: #{_lambda_.29} parent=0 // pred_check
    _
  $region3: #{_lambda_.29} parent=0 // pred_check_branch
    %11 = sbr.rel (0) target = $region5
  $region4: #{_lambda_.29} parent=0 // pred_region
    _
  $region5: #{_lambda_.29} parent=0 // pred_fallthru
    _
  // Predicated region
  $region6: #{_lambda_.29} parent=0 // pred_check
    _
  $region7: #{_lambda_.29} parent=0 // pred_check_branch
    %13 = sbr.rel (0) target = $region9
  $region8: #{_lambda_.29} parent=0 // pred_region
    _
  $region9: #{_lambda_.29} parent=0 // pred_fallthru
    _
  // Predicated region
  $region10: #{_lambda_.29} parent=0 // pred_check
    _
  $region11: #{_lambda_.29} parent=0 // pred_check_branch
    %15 = sbr.rel (0) target = $region13
  $region12: #{_lambda_.29} parent=0 // pred_region
    _
  $region13: #{_lambda_.29} parent=0 // pred_fallthru
    _
  // Predicated region
  $region14: #{_lambda_.29} parent=0 // pred_check
    _
  $region15: #{_lambda_.29} parent=0 // pred_check_branch
    %17 = sbr.rel (0) target = $region17
  $region16: #{_lambda_.29} parent=0 // pred_region
    _
  $region17: #{_lambda_.29} parent=0 // pred_fallthru
    _
  // Predicated region
  $region18: #{_lambda_.29} parent=0 // pred_check
    _
  $region19: #{_lambda_.29} parent=0 // pred_check_branch
    %19 = sbr.rel (0) target = $region21
  $region20: #{_lambda_.29} parent=0 // pred_region
    _
  $region21: #{_lambda_.29} parent=0 // pred_fallthru
    _
  %v21 = vld [vmem:[%s0] sm:$0xff]
  %v22 = vld [vmem:[%s0 + $0x8] sm:$0xff]
  %v23 = vld [vmem:[%s0 + $0x10] sm:$0xff]
  %v24 = vld [vmem:[%s0 + $0x18] sm:$0xff]
  %v25 = vld [vmem:[%s0 + $0x20] sm:$0xff]
  %v26 = vld [vmem:[%s0 + $0x28] sm:$0xff]
  %v27 = vld [vmem:[%s0 + $0x30] sm:$0xff]
  %vm28 = vcmask 261120
  %v29 = vsel %vm28, %v21, 0.0
  %30 = vadd.xlane.f32.xlu0 %v29
  %v31 = vpop.xlane.xlu0 %30
  %v32 = vsel %vm28, %v22, 0.0
  %33 = vadd.xlane.f32.xlu0 %v32
  %v34 = vpop.xlane.xlu0 %33
  %v35 = vsel %vm28, %v23, 0.0
  %36 = vadd.xlane.f32.xlu0 %v35
  %v37 = vpop.xlane.xlu0 %36
  %v38 = vsel %vm28, %v24, 0.0
  %39 = vadd.xlane.f32.xlu0 %v38
  %v40 = vpop.xlane.xlu0 %39
  %v41 = vsel %vm28, %v25, 0.0
  %42 = vadd.xlane.f32.xlu0 %v41
  %v43 = vpop.xlane.xlu0 %42
  %v44 = vsel %vm28, %v26, 0.0
  %45 = vadd.xlane.f32.xlu0 %v44
  %v46 = vpop.xlane.xlu0 %45
  %v47 = vsel %vm28, %v27, 0.0
  %48 = vadd.xlane.f32.xlu0 %v47
  %v49 = vpop.xlane.xlu0 %48
  %v50 = vrcp.pop 32.0
  %v51 = vmul.f32 %v31, %v50
  %v52 = vmul.f32 %v34, %v50
  %v53 = vmul.f32 %v37, %v50
  %v54 = vmul.f32 %v40, %v50
  %v55 = vmul.f32 %v43, %v50
  %v56 = vmul.f32 %v46, %v50
  %v57 = vmul.f32 %v49, %v50
  %v58 = vsub.f32 %v21, %v51
  %v59 = vsub.f32 %v22, %v52
  %v60 = vsub.f32 %v23, %v53
  %v61 = vsub.f32 %v24, %v54
  %v62 = vsub.f32 %v25, %v55
  %v63 = vsub.f32 %v26, %v56
  %v64 = vsub.f32 %v27, %v57
  %v65 = vmul.f32 %v58, %v58
  %v66 = vmul.f32 %v59, %v59
  %v67 = vmul.f32 %v60, %v60
  %v68 = vmul.f32 %v61, %v61
  %v69 = vmul.f32 %v62, %v62
  %v70 = vmul.f32 %v63, %v63
  %v71 = vmul.f32 %v64, %v64
  %v72 = vsel %vm28, %v65, 0.0
  %73 = vadd.xlane.f32.xlu0 %v72
  %v74 = vpop.xlane.xlu0 %73
  %v75 = vsel %vm28, %v66, 0.0
  %76 = vadd.xlane.f32.xlu0 %v75
  %v77 = vpop.xlane.xlu0 %76
  %v78 = vsel %vm28, %v67, 0.0
  %79 = vadd.xlane.f32.xlu0 %v78
  %v80 = vpop.xlane.xlu0 %79
  %v81 = vsel %vm28, %v68, 0.0
  %82 = vadd.xlane.f32.xlu0 %v81
  %v83 = vpop.xlane.xlu0 %82
  %v84 = vsel %vm28, %v69, 0.0
  %85 = vadd.xlane.f32.xlu0 %v84
  %v86 = vpop.xlane.xlu0 %85
  %v87 = vsel %vm28, %v70, 0.0
  %88 = vadd.xlane.f32.xlu0 %v87
  %v89 = vpop.xlane.xlu0 %88
  %v90 = vsel %vm28, %v71, 0.0
  %91 = vadd.xlane.f32.xlu0 %v90
  %v92 = vpop.xlane.xlu0 %91
  %v93 = vmul.f32 %v74, %v50
  %v94 = vmul.f32 %v77, %v50
  %v95 = vmul.f32 %v80, %v50
  %v96 = vmul.f32 %v83, %v50
  %v97 = vmul.f32 %v86, %v50
  %v98 = vmul.f32 %v89, %v50
  %v99 = vmul.f32 %v92, %v50
  %v100 = vadd.f32 %v93, 1e-05
  %v101 = vadd.f32 %v94, 1e-05
  %v102 = vadd.f32 %v95, 1e-05
  %v103 = vadd.f32 %v96, 1e-05
  %v104 = vadd.f32 %v97, 1e-05
  %v105 = vadd.f32 %v98, 1e-05
  %v106 = vadd.f32 %v99, 1e-05
  %v107 = vrsqrt.pop %v100
  %v108 = vrsqrt.pop %v101
  %v109 = vrsqrt.pop %v102
  %v110 = vrsqrt.pop %v103
  %v111 = vrsqrt.pop %v104
  %v112 = vrsqrt.pop %v105
  %v113 = vrsqrt.pop %v106
  %v114 = vmul.f32 %v58, %v107
  %v115 = vmul.f32 %v59, %v108
  %v116 = vmul.f32 %v60, %v109
  %v117 = vmul.f32 %v61, %v110
  %v118 = vmul.f32 %v62, %v111
  %v119 = vmul.f32 %v63, %v112
  %v120 = vmul.f32 %v64, %v113
  %v121 = vld [vmem:[%s3] sm:$0x1]
  %v123 = vlaneseq
  %v124 = vshrl.u32 %v123, 7
  %v125 = vsub.s32 0, %v124
  %v126 = vrot.slane %v121, %v125
  %v128 = vmul.f32 %v114, %v126
  %v129 = vmul.f32 %v115, %v126
  %v130 = vmul.f32 %v116, %v126
  %v131 = vmul.f32 %v117, %v126
  %v132 = vmul.f32 %v118, %v126
  %v133 = vmul.f32 %v119, %v126
  %v134 = vmul.f32 %v120, %v126
  %v135 = vld [vmem:[%s4] sm:$0x1]
  %v137 = vlaneseq
  %v138 = vshrl.u32 %v137, 7
  %v139 = vsub.s32 0, %v138
  %v140 = vrot.slane %v135, %v139
  %v142 = vadd.f32 %v128, %v140
  %v143 = vadd.f32 %v129, %v140
  %v144 = vadd.f32 %v130, %v140
  %v145 = vadd.f32 %v131, %v140
  %v146 = vadd.f32 %v132, %v140
  %v147 = vadd.f32 %v133, %v140
  %v148 = vadd.f32 %v134, %v140
  %v149 = vpack.c.bf16 %v143, %v142
  %v150 = vpack.c.bf16 %v145, %v144
  %v151 = vpack.c.bf16 %v147, %v146
  %v152 = vpack.c.bf16 %v148, %v148
  %v153 = vld [vmem:[%s1] sm:$0xff]
  %v154 = vld [vmem:[%s1 + $0x8] sm:$0xff]
  %v155 = vld [vmem:[%s1 + $0x10] sm:$0xff]
  %v156 = vld [vmem:[%s1 + $0x18] sm:$0xff]
  %v157 = vpack.c.bf16 %v154, %v153
  %v158 = vpack.c.bf16 %v156, %v155
  %p159 = scmp.eq.s32.totalorder 0, 0
  // Predicated region
  $region22: #{_lambda_.29} parent=0 // pred_check
    %p160 = pneg %p159
  $region23: #{_lambda_.29} parent=0 // pred_check_branch
    %162 = sbr.rel (%p160) target = $region25
  $region24: #{_lambda_.29} parent=0 // pred_region
    %163 = vst [vmem:[#allocation2] sm:$0xff] 0.0
    %164 = vst [vmem:[#allocation2 + $0x8] sm:$0xff] 0.0
    %165 = vst [vmem:[#allocation2 + $0x10] sm:$0xff] 0.0
    %166 = vst [vmem:[#allocation2 + $0x18] sm:$0xff] 0.0
    %167 = vst [vmem:[#allocation2 + $0x20] sm:$0xff] 0.0
    %168 = vst [vmem:[#allocation2 + $0x28] sm:$0xff] 0.0
    %169 = vst [vmem:[#allocation2 + $0x30] sm:$0xff] 0.0
  $region25: #{_lambda_.29} parent=0 // pred_fallthru
    _
  %v170 = vld [vmem:[#allocation2] sm:$0xff]
  %v171 = vld [vmem:[#allocation2 + $0x8] sm:$0xff]
  %v172 = vld [vmem:[#allocation2 + $0x10] sm:$0xff]
  %v173 = vld [vmem:[#allocation2 + $0x18] sm:$0xff]
  %v174 = vld [vmem:[#allocation2 + $0x20] sm:$0xff]
  %v175 = vld [vmem:[#allocation2 + $0x28] sm:$0xff]
  %v176 = vld [vmem:[#allocation2 + $0x30] sm:$0xff]
  %v178 = vsel %vm28, %v149, 0
  %v181 = vsel %vm28, %v150, 0
  %v184 = vsel %vm28, %v151, 0
  %v187 = vsel %vm28, %v152, 0
  %189 = vmatprep.subr.bf16.mxu0 0
  %190 = vmatpush1.bf16.msra.mxu0 0
  %191 = vmatprep.subr.bf16.mxu0 0
  %192 = vmatpush1.bf16.msra.mxu0 0
  %193 = vmatprep.subr.bf16.mxu0 0
  %194 = vmatpush1.bf16.msra.mxu0 0
  %195 = vmatprep.subr.bf16.mxu0 0
  %196 = vmatpush1.bf16.msra.mxu0 0
  %197 = vmatprep.subr.bf16.mxu0 0
  %198 = vmatpush1.bf16.msra.mxu0 0
  %199 = vmatprep.subr.bf16.mxu0 0
  %200 = vmatpush1.bf16.msra.mxu0 0
  %201 = vmatprep.subr.bf16.mxu0 0
  %202 = vmatpush1.bf16.msra.mxu0 %v158
  %203 = vmatprep.subr.bf16.mxu0 0
  %204 = vmatpush1.bf16.msra.mxu0 %v157
  %205 = vmatprep.subr.bf16.mxu0 0
  %206 = vmatpush2.bf16.msra.mxu0 0
  %207 = vmatprep.subr.bf16.mxu0 0
  %208 = vmatpush2.bf16.msra.mxu0 0
  %209 = vmatprep.subr.bf16.mxu0 0
  %210 = vmatpush2.bf16.msra.mxu0 0
  %211 = vmatprep.subr.bf16.mxu0 0
  %212 = vmatpush2.bf16.msra.mxu0 0
  %213 = vmatprep.subr.bf16.mxu0 0
  %214 = vmatpush2.bf16.msra.mxu0 0
  %215 = vmatprep.subr.bf16.mxu0 0
  %216 = vmatpush2.bf16.msra.mxu0 0
  %217 = vmatprep.subr.bf16.mxu0 0
  %218 = vmatpush2.bf16.msra.mxu0 0
  %219 = vmatprep.subr.bf16.mxu0 0
  %220 = vmatpush2.bf16.msra.mxu0 0
  %221 = vmatprep.mubr.bf16.mxu0 0
  %222 = vmatmul.mubr.bf16.gmra.mxu0 %v178
  %v223 = vpop.f32.mrf.mxu0
  %v224 = vadd.f32 0.0, %v223
  %v225 = vpop.f32.mrf.mxu0
  %v226 = vpop.f32.mrf.mxu0
  %v227 = vadd.f32 0.0, %v226
  %v228 = vpop.f32.mrf.mxu0
  %229 = vmatprep.mubr.bf16.mxu0 0
  %230 = vmatmul.mubr.bf16.gmra.mxu0 %v181
  %v231 = vpop.f32.mrf.mxu0
  %v232 = vadd.f32 0.0, %v231
  %v233 = vpop.f32.mrf.mxu0
  %v234 = vpop.f32.mrf.mxu0
  %v235 = vadd.f32 0.0, %v234
  %v236 = vpop.f32.mrf.mxu0
  %237 = vmatprep.mubr.bf16.mxu0 0
  %238 = vmatmul.mubr.bf16.gmra.mxu0 %v184
  %v239 = vpop.f32.mrf.mxu0
  %v240 = vadd.f32 0.0, %v239
  %v241 = vpop.f32.mrf.mxu0
  %v242 = vpop.f32.mrf.mxu0
  %v243 = vadd.f32 0.0, %v242
  %v244 = vpop.f32.mrf.mxu0
  %245 = vmatprep.mubr.bf16.mxu0 0
  %246 = vmatmul.mubr.bf16.gmra.mxu0 %v187
  %v247 = vpop.f32.mrf.mxu0
  %v248 = vadd.f32 0.0, %v247
  %v249 = vpop.f32.mrf.mxu0
  %v250 = vpop.f32.mrf.mxu0
  %v251 = vpop.f32.mrf.mxu0
  %252 = vdwg.mxu0
  %v253 = vadd.f32 %v170, %v224
  %v254 = vadd.f32 %v171, %v227
  %v255 = vadd.f32 %v172, %v232
  %v256 = vadd.f32 %v173, %v235
  %v257 = vadd.f32 %v174, %v240
  %v258 = vadd.f32 %v175, %v243
  %v259 = vadd.f32 %v176, %v248
  %260 = vst [vmem:[#allocation2] sm:$0xff] %v253
  %261 = vst [vmem:[#allocation2 + $0x8] sm:$0xff] %v254
  %262 = vst [vmem:[#allocation2 + $0x10] sm:$0xff] %v255
  %263 = vst [vmem:[#allocation2 + $0x18] sm:$0xff] %v256
  %264 = vst [vmem:[#allocation2 + $0x20] sm:$0xff] %v257
  %265 = vst [vmem:[#allocation2 + $0x28] sm:$0xff] %v258
  %266 = vst [vmem:[#allocation2 + $0x30] sm:$0xff] %v259
  // Predicated region
  $region26: #{_lambda_.29} parent=0 // pred_check
    %p267 = pneg %p159
  $region27: #{_lambda_.29} parent=0 // pred_check_branch
    %269 = sbr.rel (%p267) target = $region29
  $region28: #{_lambda_.29} parent=0 // pred_region
    %v270 = vld [vmem:[#allocation2] sm:$0xff]
    %v271 = vld [vmem:[#allocation2 + $0x8] sm:$0xff]
    %v272 = vld [vmem:[#allocation2 + $0x10] sm:$0xff]
    %v273 = vld [vmem:[#allocation2 + $0x18] sm:$0xff]
    %v274 = vld [vmem:[#allocation2 + $0x20] sm:$0xff]
    %v275 = vld [vmem:[#allocation2 + $0x28] sm:$0xff]
    %v276 = vld [vmem:[#allocation2 + $0x30] sm:$0xff]
    %v277 = vld [vmem:[%s2] sm:$0x1]
    %v279 = vlaneseq
    %v280 = vshrl.u32 %v279, 7
    %v281 = vsub.s32 0, %v280
    %v282 = vrot.slane %v277, %v281
    %v284 = vadd.f32 %v270, %v282
    %v285 = vadd.f32 %v271, %v282
    %v286 = vadd.f32 %v272, %v282
    %v287 = vadd.f32 %v273, %v282
    %v288 = vadd.f32 %v274, %v282
    %v289 = vadd.f32 %v275, %v282
    %v290 = vadd.f32 %v276, %v282
    %v291 = vmul.f32 %v284, 1.702
    %v292 = vmul.f32 %v285, 1.702
    %v293 = vmul.f32 %v286, 1.702
    %v294 = vmul.f32 %v287, 1.702
    %v295 = vmul.f32 %v288, 1.702
    %v296 = vmul.f32 %v289, 1.702
    %v297 = vmul.f32 %v290, 1.702
    %v298 = vxor.u32 %v291, 2147483648
    %v299 = vxor.u32 %v292, 2147483648
    %v300 = vxor.u32 %v293, 2147483648
    %v301 = vxor.u32 %v294, 2147483648
    %v302 = vxor.u32 %v295, 2147483648
    %v303 = vxor.u32 %v296, 2147483648
    %v304 = vxor.u32 %v297, 2147483648
    %v305 = vmul.f32 %v298, 1.442695
    %v306 = vpow.pop %v305
    %v307 = vmul.f32 %v299, 1.442695
    %v308 = vpow.pop %v307
    %v309 = vmul.f32 %v300, 1.442695
    %v310 = vpow.pop %v309
    %v311 = vmul.f32 %v301, 1.442695
    %v312 = vpow.pop %v311
    %v313 = vmul.f32 %v302, 1.442695
    %v314 = vpow.pop %v313
    %v315 = vmul.f32 %v303, 1.442695
    %v316 = vpow.pop %v315
    %v317 = vmul.f32 %v304, 1.442695
    %v318 = vpow.pop %v317
    %v319 = vadd.f32 %v306, 1.0
    %v320 = vadd.f32 %v308, 1.0
    %v321 = vadd.f32 %v310, 1.0
    %v322 = vadd.f32 %v312, 1.0
    %v323 = vadd.f32 %v314, 1.0
    %v324 = vadd.f32 %v316, 1.0
    %v325 = vadd.f32 %v318, 1.0
    %v326 = vrcp.pop %v319
    %v327 = vmul.f32 1.0, %v326
    %v328 = vrcp.pop %v320
    %v329 = vmul.f32 1.0, %v328
    %v330 = vrcp.pop %v321
    %v331 = vmul.f32 1.0, %v330
    %v332 = vrcp.pop %v322
    %v333 = vmul.f32 1.0, %v332
    %v334 = vrcp.pop %v323
    %v335 = vmul.f32 1.0, %v334
    %v336 = vrcp.pop %v324
    %v337 = vmul.f32 1.0, %v336
    %v338 = vrcp.pop %v325
    %v339 = vmul.f32 1.0, %v338
    %v340 = vmul.f32 %v284, %v327
    %v341 = vmul.f32 %v285, %v329
    %v342 = vmul.f32 %v286, %v331
    %v343 = vmul.f32 %v287, %v333
    %v344 = vmul.f32 %v288, %v335
    %v345 = vmul.f32 %v289, %v337
    %v346 = vmul.f32 %v290, %v339
    %347 = vst [vmem:[%s5] sm:$0xff] %v340
    %348 = vst [vmem:[%s5 + $0x8] sm:$0xff] %v341
    %349 = vst [vmem:[%s5 + $0x10] sm:$0xff] %v342
    %350 = vst [vmem:[%s5 + $0x18] sm:$0xff] %v343
    %351 = vst [vmem:[%s5 + $0x20] sm:$0xff] %v344
    %352 = vst [vmem:[%s5 + $0x28] sm:$0xff] %v345
    %353 = vst [vmem:[%s5 + $0x30] sm:$0xff] %v346
  $region29: #{_lambda_.29} parent=0 // pred_fallthru
    _
  // Predicated region
  $region30: #{_lambda_.29} parent=0 // pred_check
    _
  $region31: #{_lambda_.29} parent=0 // pred_check_branch
    %355 = sbr.rel (0) target = $region33
  $region32: #{_lambda_.29} parent=0 // pred_region
    _
  $region33: #{_lambda_.29} parent=0 // pred_fallthru
    _
  // Predicated region
  $region34: #{_lambda_.29} parent=0 // pred_check
    _
  $region35: #{_lambda_.29} parent=0 // pred_check_branch
    %357 = sbr.rel (0) target = $region37
  $region36: #{_lambda_.29} parent=0 // pred_region
    _
  $region37: #{_lambda_.29} parent=0 // pred_fallthru
    _

// kernel: _lambda_.36
$region0: #{_lambda_.36}
  #allocation0 [shape = 'u32[]', space=smem, size = 0x4, offset = 0x4, fixed_abs, tag = 'smem constant byte address 0x4 - core index']
  #allocation1 [shape = 'u32[144,128]{1,0:T(1,128)}', space=vmem, size = 0x12000, scoped, tag = 'internal scratch']
  %s0 = inlined_call_operand.vmem [shape: f32[8,32], index: 0, kind: input, shape index: {}]
  %s1 = inlined_call_operand.vmem [shape: f32[1,32], index: 1, kind: input, shape index: {}]
  %s2 = inlined_call_operand.vmem [shape: f32[1,32], index: 2, kind: input, shape index: {}]
  %s3 = inlined_call_operand.vmem [shape: f32[8,32], index: 3, kind: output, shape index: {}]
  %s4 = sld [smem:[#allocation0]]
  $region22: #{_lambda_.36} parent=0
    _
  %s6 = ssub.s32 1, %s4
  %s7 = scalar_select 0, %s6, %s4
  // Predicated region
  $region2: #{_lambda_.36} parent=0 // pred_check
    _
  $region3: #{_lambda_.36} parent=0 // pred_check_branch
    %9 = sbr.rel (0) target = $region5
  $region4: #{_lambda_.36} parent=0 // pred_region
    _
  $region5: #{_lambda_.36} parent=0 // pred_fallthru
    _
  // Predicated region
  $region6: #{_lambda_.36} parent=0 // pred_check
    _
  $region7: #{_lambda_.36} parent=0 // pred_check_branch
    %11 = sbr.rel (0) target = $region9
  $region8: #{_lambda_.36} parent=0 // pred_region
    _
  $region9: #{_lambda_.36} parent=0 // pred_fallthru
    _
  // Predicated region
  $region10: #{_lambda_.36} parent=0 // pred_check
    _
  $region11: #{_lambda_.36} parent=0 // pred_check_branch
    %13 = sbr.rel (0) target = $region13
  $region12: #{_lambda_.36} parent=0 // pred_region
    _
  $region13: #{_lambda_.36} parent=0 // pred_fallthru
    _
  %v14 = vld [vmem:[%s0] sm:$0xff]
  %vm15 = vcmask 261120
  %v16 = vsel %vm15, %v14, 0.0
  %17 = vadd.xlane.f32.xlu0 %v16
  %v18 = vpop.xlane.xlu0 %17
  %v19 = vrcp.pop 32.0
  %v20 = vmul.f32 %v18, %v19
  %v21 = vsub.f32 %v14, %v20
  %v22 = vmul.f32 %v21, %v21
  %v23 = vsel %vm15, %v22, 0.0
  %24 = vadd.xlane.f32.xlu0 %v23
  %v25 = vpop.xlane.xlu0 %24
  %v26 = vmul.f32 %v25, %v19
  %v27 = vadd.f32 %v26, 1e-05
  %v28 = vrsqrt.pop %v27
  %v29 = vmul.f32 %v21, %v28
  %v30 = vld [vmem:[%s1] sm:$0x1]
  %v32 = vlaneseq
  %v33 = vshrl.u32 %v32, 7
  %v34 = vsub.s32 0, %v33
  %v35 = vrot.slane %v30, %v34
  %v37 = vmul.f32 %v29, %v35
  %v38 = vld [vmem:[%s2] sm:$0x1]
  %v40 = vlaneseq
  %v41 = vshrl.u32 %v40, 7
  %v42 = vsub.s32 0, %v41
  %v43 = vrot.slane %v38, %v42
  %v45 = vadd.f32 %v37, %v43
  %46 = vst.msk [vmem:[%s3] sm:$0xff] %vm15, %v45
  // Predicated region
  $region14: #{_lambda_.36} parent=0 // pred_check
    _
  $region15: #{_lambda_.36} parent=0 // pred_check_branch
    %48 = sbr.rel (0) target = $region17
  $region16: #{_lambda_.36} parent=0 // pred_region
    _
  $region17: #{_lambda_.36} parent=0 // pred_fallthru
    _
  // Predicated region
  $region18: #{_lambda_.36} parent=0 // pred_check
    _
  $region19: #{_lambda_.36} parent=0 // pred_check_branch
    %50 = sbr.rel (0) target = $region21
  $region20: #{_lambda_.36} parent=0 // pred_region
    _
  $region21: #{_lambda_.36} parent=0 // pred_fallthru
    _

// kernel: _lambda_.37
$region0: #{_lambda_.37}
  #allocation0 [shape = 'u32[]', space=smem, size = 0x4, offset = 0x4, fixed_abs, tag = 'smem constant byte address 0x4 - core index']
  #allocation1 [shape = 'u32[144,128]{1,0:T(1,128)}', space=vmem, size = 0x12000, scoped, tag = 'internal scratch']
  #allocation2 [shape = 'f32[8,128]{1,0:T(8,128)}', space=vmem, size = 0x1000, scoped, tag = 'scratch operand']
  %s0 = inlined_call_operand.vmem [shape: f32[8,128], index: 0, kind: input, shape index: {}]
  %s1 = inlined_call_operand.vmem [shape: f32[128,128], index: 1, kind: input, shape index: {}]
  %s2 = inlined_call_operand.vmem [shape: f32[1,128], index: 2, kind: input, shape index: {}]
  %s3 = inlined_call_operand.vmem [shape: f32[8,128], index: 3, kind: output, shape index: {}]
  %s4 = sld [smem:[#allocation0]]
  $region30: #{_lambda_.37} parent=0
    _
  %s6 = ssub.s32 1, %s4
  %s7 = scalar_select 0, %s6, %s4
  // Predicated region
  $region2: #{_lambda_.37} parent=0 // pred_check
    _
  $region3: #{_lambda_.37} parent=0 // pred_check_branch
    %9 = sbr.rel (0) target = $region5
  $region4: #{_lambda_.37} parent=0 // pred_region
    _
  $region5: #{_lambda_.37} parent=0 // pred_fallthru
    _
  // Predicated region
  $region6: #{_lambda_.37} parent=0 // pred_check
    _
  $region7: #{_lambda_.37} parent=0 // pred_check_branch
    %11 = sbr.rel (0) target = $region9
  $region8: #{_lambda_.37} parent=0 // pred_region
    _
  $region9: #{_lambda_.37} parent=0 // pred_fallthru
    _
  // Predicated region
  $region10: #{_lambda_.37} parent=0 // pred_check
    _
  $region11: #{_lambda_.37} parent=0 // pred_check_branch
    %13 = sbr.rel (0) target = $region13
  $region12: #{_lambda_.37} parent=0 // pred_region
    _
  $region13: #{_lambda_.37} parent=0 // pred_fallthru
    _
  %v15 = vld [vmem:[%s0] sm:$0xff]
  %v16 = vpack.c.bf16 %v15, %v15
  %v17 = vld [vmem:[%s1] sm:$0xff]
  %v18 = vld [vmem:[%s1 + $0x8] sm:$0xff]
  %v19 = vld [vmem:[%s1 + $0x10] sm:$0xff]
  %v20 = vld [vmem:[%s1 + $0x18] sm:$0xff]
  %v21 = vld [vmem:[%s1 + $0x20] sm:$0xff]
  %v22 = vld [vmem:[%s1 + $0x28] sm:$0xff]
  %v23 = vld [vmem:[%s1 + $0x30] sm:$0xff]
  %v24 = vld [vmem:[%s1 + $0x38] sm:$0xff]
  %v25 = vld [vmem:[%s1 + $0x40] sm:$0xff]
  %v26 = vld [vmem:[%s1 + $0x48] sm:$0xff]
  %v27 = vld [vmem:[%s1 + $0x50] sm:$0xff]
  %v28 = vld [vmem:[%s1 + $0x58] sm:$0xff]
  %v29 = vld [vmem:[%s1 + $0x60] sm:$0xff]
  %v30 = vld [vmem:[%s1 + $0x68] sm:$0xff]
  %v31 = vld [vmem:[%s1 + $0x70] sm:$0xff]
  %v32 = vld [vmem:[%s1 + $0x78] sm:$0xff]
  %v33 = vpack.c.bf16 %v18, %v17
  %v34 = vpack.c.bf16 %v20, %v19
  %v35 = vpack.c.bf16 %v22, %v21
  %v36 = vpack.c.bf16 %v24, %v23
  %v37 = vpack.c.bf16 %v26, %v25
  %v38 = vpack.c.bf16 %v28, %v27
  %v39 = vpack.c.bf16 %v30, %v29
  %v40 = vpack.c.bf16 %v32, %v31
  %p41 = scmp.eq.s32.totalorder 0, 0
  // Predicated region
  $region14: #{_lambda_.37} parent=0 // pred_check
    %p42 = pneg %p41
  $region15: #{_lambda_.37} parent=0 // pred_check_branch
    %44 = sbr.rel (%p42) target = $region17
  $region16: #{_lambda_.37} parent=0 // pred_region
    %45 = vst [vmem:[#allocation2] sm:$0xff] 0.0
  $region17: #{_lambda_.37} parent=0 // pred_fallthru
    _
  %v46 = vld [vmem:[#allocation2] sm:$0xff]
  %47 = vmatprep.subr.bf16.mxu0 0
  %48 = vmatpush1.bf16.msra.mxu0 %v40
  %49 = vmatprep.subr.bf16.mxu0 0
  %50 = vmatpush1.bf16.msra.mxu0 %v39
  %51 = vmatprep.subr.bf16.mxu0 0
  %52 = vmatpush1.bf16.msra.mxu0 %v38
  %53 = vmatprep.subr.bf16.mxu0 0
  %54 = vmatpush1.bf16.msra.mxu0 %v37
  %55 = vmatprep.subr.bf16.mxu0 0
  %56 = vmatpush1.bf16.msra.mxu0 %v36
  %57 = vmatprep.subr.bf16.mxu0 0
  %58 = vmatpush1.bf16.msra.mxu0 %v35
  %59 = vmatprep.subr.bf16.mxu0 0
  %60 = vmatpush1.bf16.msra.mxu0 %v34
  %61 = vmatprep.subr.bf16.mxu0 0
  %62 = vmatpush1.bf16.msra.mxu0 %v33
  %63 = vmatprep.subr.bf16.mxu0 0
  %64 = vmatpush2.bf16.msra.mxu0 0
  %65 = vmatprep.subr.bf16.mxu0 0
  %66 = vmatpush2.bf16.msra.mxu0 0
  %67 = vmatprep.subr.bf16.mxu0 0
  %68 = vmatpush2.bf16.msra.mxu0 0
  %69 = vmatprep.subr.bf16.mxu0 0
  %70 = vmatpush2.bf16.msra.mxu0 0
  %71 = vmatprep.subr.bf16.mxu0 0
  %72 = vmatpush2.bf16.msra.mxu0 0
  %73 = vmatprep.subr.bf16.mxu0 0
  %74 = vmatpush2.bf16.msra.mxu0 0
  %75 = vmatprep.subr.bf16.mxu0 0
  %76 = vmatpush2.bf16.msra.mxu0 0
  %77 = vmatprep.subr.bf16.mxu0 0
  %78 = vmatpush2.bf16.msra.mxu0 0
  %79 = vmatprep.mubr.bf16.mxu0 0
  %80 = vmatmul.mubr.bf16.gmra.mxu0 %v16
  %v81 = vpop.f32.mrf.mxu0
  %v82 = vadd.f32 0.0, %v81
  %v83 = vpop.f32.mrf.mxu0
  %v84 = vpop.f32.mrf.mxu0
  %v85 = vpop.f32.mrf.mxu0
  %86 = vdwg.mxu0
  %v87 = vadd.f32 %v46, %v82
  %88 = vst [vmem:[#allocation2] sm:$0xff] %v87
  // Predicated region
  $region18: #{_lambda_.37} parent=0 // pred_check
    %p89 = pneg %p41
  $region19: #{_lambda_.37} parent=0 // pred_check_branch
    %91 = sbr.rel (%p89) target = $region21
  $region20: #{_lambda_.37} parent=0 // pred_region
    %v92 = vld [vmem:[#allocation2] sm:$0xff]
    %v93 = vld [vmem:[%s2] sm:$0x1]
    %v95 = vlaneseq
    %v96 = vshrl.u32 %v95, 7
    %v97 = vsub.s32 0, %v96
    %v98 = vrot.slane %v93, %v97
    %v100 = vadd.f32 %v92, %v98
    %101 = vst [vmem:[%s3] sm:$0xff] %v100
  $region21: #{_lambda_.37} parent=0 // pred_fallthru
    _
  // Predicated region
  $region22: #{_lambda_.37} parent=0 // pred_check
    _
  $region23: #{_lambda_.37} parent=0 // pred_check_branch
    %103 = sbr.rel (0) target = $region25
  $region24: #{_lambda_.37} parent=0 // pred_region
    _
  $region25: #{_lambda_.37} parent=0 // pred_fallthru
    _
  // Predicated region
  $region26: #{_lambda_.37} parent=0 // pred_check
    _
  $region27: #{_lambda_.37} parent=0 // pred_check_branch
    %105 = sbr.rel (0) target = $region29
  $region28: #{_lambda_.37} parent=0 // pred_region
    _
  $region29: #{_lambda_.37} parent=0 // pred_fallthru
    _

</llo_original>
